<compile_context>
chip_gen: v5e
topology: v5e:2x2
jax: 0.10.0
libtpu: 0.0.40
codegen_flags: <defaults>
</compile_context>

<pallas_src>
import functools

import jax
import jax.numpy as jnp
from jax.experimental import pallas as pl
from jax.experimental.pallas import tpu as pltpu


# ---------------------------------------------------------------------------
# In-kernel helpers
# ---------------------------------------------------------------------------
def _relu(x):
    return jnp.maximum(x, 0.0)


def _gn(x, g, b):
    # nn.GroupNorm(1, C) on [rows, C]: per-row stats over the channel (lane)
    # axis, eps=1e-5, per-channel affine.  Two-pass variance for robustness.
    mean = jnp.mean(x, axis=-1, keepdims=True)
    var = jnp.mean((x - mean) * (x - mean), axis=-1, keepdims=True)
    return (x - mean) * jax.lax.rsqrt(var + 1e-5) * g + b


def _mxu(x_bf16, w_bf16):
    # bf16 operands on the MXU, f32 accumulation.
    return jnp.dot(x_bf16, w_bf16, preferred_element_type=jnp.float32)


def _round_up(x, m):
    return ((x + m - 1) // m) * m


# ---------------------------------------------------------------------------
# Fused kernel: all num_mods prediction heads + AttDest + cls head for one
# actor tile.  grid = (actor_tiles,)
# ---------------------------------------------------------------------------
def _prednet_kernel(actors_ref, ctrs_ref,
                    w1_ref, g1_ref, b1_ref, w2_ref, g2_ref, b2_ref,
                    wp_ref, bp_ref,
                    wd1_ref, bd1_ref, wd2_ref, gd_ref, bd_ref,
                    wagtd_ref, wagta_ref, gagt_ref, bagt_ref,
                    wc1_ref, gc1_ref, bc1_ref, wc2_ref, gc2_ref, bc2_ref,
                    wcls_ref, bcls_ref,
                    reg_ref, cls_ref, *, p2):
    bf16 = jnp.bfloat16
    tA = actors_ref.shape[0]
    M = w1_ref.shape[0]
    p2p = wp_ref.shape[2]          # padded (lane-dense) prediction width
    clsw = cls_ref.shape[1]        # lane-dense cls slab width (128)

    x = actors_ref[...]                                   # [tA, D] f32
    xb = x.astype(bf16)                                   # single cast, reused
    ctr_x = ctrs_ref[:, 0:1]                              # [tA, 1]
    ctr_y = ctrs_ref[:, 1:2]

    # Mode-independent actor half of the AttDest.agt (2D->D) matmul, hoisted
    # out of the mode loop: computed once per actor tile.
    a_proj = _mxu(xb, wagta_ref[...])                     # [tA, D] f32

    # even prediction lanes get ctr_x, odd lanes ctr_y
    parity = jax.lax.broadcasted_iota(jnp.int32, (1, p2p), 1) % 2
    ctr_xy = jnp.where(parity == 0, ctr_x, ctr_y)         # [tA, p2p]

    lane = jax.lax.broadcasted_iota(jnp.int32, (1, clsw), 1)
    cls_acc = jnp.zeros((tA, clsw), jnp.float32)

    wd1x = wd1_ref[0:1, :]                                # [1, D] f32
    wd1y = wd1_ref[1:2, :]
    bd1 = bd1_ref[...]

    for m in range(M):                                    # static unroll over modes
        # ---- prediction head m: LinearRes(D) + Linear(D, 2*num_preds) ----
        h = _relu(_gn(_mxu(xb, w1_ref[m]), g1_ref[m], b1_ref[m]))
        h = _gn(_mxu(h.astype(bf16), w2_ref[m]), g2_ref[m], b2_ref[m])
        h = _relu(h + x)                                  # identity shortcut (f32)
        pred = _mxu(h.astype(bf16), wp_ref[m]) + bp_ref[m]
        reg_m = pred + ctr_xy                             # centre add in-kernel
        reg_ref[:, m * p2p:(m + 1) * p2p] = reg_m         # full 128-lane store

        # ---- AttDest for this mode's destination (last timestep) ----
        dx = ctr_x - reg_m[:, p2 - 2:p2 - 1]              # [tA, 1]
        dy = ctr_y - reg_m[:, p2 - 1:p2]
        d1 = _relu(dx * wd1x + dy * wd1y + bd1)           # Linear(2, D)+ReLU (VPU, f32)
        d2 = _relu(_gn(_mxu(d1.astype(bf16), wd2_ref[...]),
                       gd_ref[...], bd_ref[...]))
        feats = _relu(_gn(_mxu(d2.astype(bf16), wagtd_ref[...]) + a_proj,
                          gagt_ref[...], bagt_ref[...]))  # [tA, D]

        # ---- cls head: LinearRes(D) + Linear(D, 1) ----
        hc = _relu(_gn(_mxu(feats.astype(bf16), wc1_ref[...]),
                       gc1_ref[...], bc1_ref[...]))
        hc = _gn(_mxu(hc.astype(bf16), wc2_ref[...]), gc2_ref[...], bc2_ref[...])
        hc = _relu(hc + feats)
        cls_m = jnp.sum(hc * wcls_ref[...], axis=-1, keepdims=True) + bcls_ref[...]
        # place this mode's score at lane m of the lane-dense cls slab
        cls_acc = cls_acc + jnp.where(lane == m, cls_m, 0.0)

    cls_ref[...] = cls_acc                                # single full-width store


# ---------------------------------------------------------------------------
# Wrapper
# ---------------------------------------------------------------------------
def prednet_forward(actors, actor_ctrs, actor_idcs, params, num_preds,
                    tile_a=128):
    """Pallas forward pass of PredNet.

    Returns (out, cls, reg): `out` matches the PyTorch module
    ({'reg': [per-batch [n_i, num_mods, num_preds, 2]]}, modes sorted by
    descending score); `cls` / `reg` are the pre-sort scores / trajectories
    (exposed for testing).
    """
    f32, bf16 = jnp.float32, jnp.bfloat16
    N, D = actors.shape
    M = len(params["pred"])
    P2 = 2 * num_preds
    p2p = pl.cdiv(P2, 128) * 128          # lane-dense padded prediction width
    CLSW = 128                            # lane-dense cls slab width

    ctrs_cat = jnp.concatenate(actor_ctrs, axis=0).astype(f32)   # [N, 2]

    # Actor tiling: use as large a tile as possible (amortises the ~0.35 us
    # per-grid-step overhead and fills MXU rows), but keep >= 2 grid steps when
    # N allows so the "parallel" axis can be split across v7x's two TensorCores.
    n8 = _round_up(N, 8)
    tile = min(tile_a, n8)
    if n8 >= 16 and tile > n8 // 2:
        tile = _round_up(n8 // 2, 8)
    tile = max(8, _round_up(tile, 8))
    n_pad = _round_up(N, tile)
    n_tiles = n_pad // tile

    actors_p = jnp.pad(actors.astype(f32), ((0, n_pad - N), (0, 0)))
    ctrs_p = jnp.pad(ctrs_cat, ((0, n_pad - N), (0, 0)))

    row = lambda v: v.reshape(1, -1).astype(f32)

    # stacked per-mode prediction-head weights (stay resident in VMEM)
    pp = params["pred"]
    w1_s = jnp.stack([p["w1"].T for p in pp]).astype(bf16)                # [M, D, D]
    w2_s = jnp.stack([p["w2"].T for p in pp]).astype(bf16)                # [M, D, D]
    wp_s = jnp.stack(
        [jnp.pad(p["wp"].T, ((0, 0), (0, p2p - P2))) for p in pp]
    ).astype(bf16)                                                        # [M, D, p2p]
    g1_s = jnp.stack([p["g1"] for p in pp]).astype(f32)[:, None, :]       # [M, 1, D]
    b1_s = jnp.stack([p["b1"] for p in pp]).astype(f32)[:, None, :]
    g2_s = jnp.stack([p["g2"] for p in pp]).astype(f32)[:, None, :]
    b2_s = jnp.stack([p["b2"] for p in pp]).astype(f32)[:, None, :]
    bp_s = jnp.stack(
        [jnp.pad(p["bp"], (0, p2p - P2)) for p in pp]
    ).astype(f32)[:, None, :]                                             # [M, 1, p2p]

    pa, pc = params["att_dest"], params["cls"]

    a_map = lambda i: (i, 0)          # per-actor-tile blocks
    w3 = lambda i: (0, 0, 0)          # resident 3-D weight stacks
    w2d = lambda i: (0, 0)            # resident 2-D weights

    flops = 2 * n_pad * (M * (6 * D * D + D * p2p) + D * D)
    bytes_acc = (4 * (actors_p.size + ctrs_p.size + n_pad * (M * p2p + CLSW))
                 + 2 * (w1_s.size + w2_s.size + wp_s.size + 5 * D * D))

    reg_wide, cls_wide = pl.pallas_call(
        functools.partial(_prednet_kernel, p2=P2),
        out_shape=(jax.ShapeDtypeStruct((n_pad, M * p2p), f32),
                   jax.ShapeDtypeStruct((n_pad, CLSW), f32)),
        grid=(n_tiles,),
        in_specs=[
            pl.BlockSpec((tile, D), a_map),        # actors
            pl.BlockSpec((tile, 2), a_map),        # actor centres
            pl.BlockSpec((M, D, D), w3),           # pred LinearRes w1^T (bf16)
            pl.BlockSpec((M, 1, D), w3),           # GN1 gamma
            pl.BlockSpec((M, 1, D), w3),           # GN1 beta
            pl.BlockSpec((M, D, D), w3),           # pred LinearRes w2^T (bf16)
            pl.BlockSpec((M, 1, D), w3),           # GN2 gamma
            pl.BlockSpec((M, 1, D), w3),           # GN2 beta
            pl.BlockSpec((M, D, p2p), w3),         # pred final Linear w^T (padded)
            pl.BlockSpec((M, 1, p2p), w3),         # pred final Linear bias (padded)
            pl.BlockSpec((2, D), w2d),             # dist Linear(2,D) weight^T (f32)
            pl.BlockSpec((1, D), w2d),             # dist Linear(2,D) bias
            pl.BlockSpec((D, D), w2d),             # dist Linear(D,D) weight^T (bf16)
            pl.BlockSpec((1, D), w2d),             # dist GN gamma
            pl.BlockSpec((1, D), w2d),             # dist GN beta
            pl.BlockSpec((D, D), w2d),             # agt weight, dist half^T (bf16)
            pl.BlockSpec((D, D), w2d),             # agt weight, actor half^T (bf16)
            pl.BlockSpec((1, D), w2d),             # agt GN gamma
            pl.BlockSpec((1, D), w2d),             # agt GN beta
            pl.BlockSpec((D, D), w2d),             # cls LinearRes w1^T (bf16)
            pl.BlockSpec((1, D), w2d),             # cls GN1 gamma
            pl.BlockSpec((1, D), w2d),             # cls GN1 beta
            pl.BlockSpec((D, D), w2d),             # cls LinearRes w2^T (bf16)
            pl.BlockSpec((1, D), w2d),             # cls GN2 gamma
            pl.BlockSpec((1, D), w2d),             # cls GN2 beta
            pl.BlockSpec((1, D), w2d),             # final cls weight row (f32)
            pl.BlockSpec((1, 1), w2d),             # final cls bias
        ],
        out_specs=(pl.BlockSpec((tile, M * p2p), a_map),     # reg (lane-dense)
                   pl.BlockSpec((tile, CLSW), a_map)),       # cls slab (lane-dense)
        compiler_params=pltpu.CompilerParams(
            dimension_semantics=("parallel",),
            vmem_limit_bytes=32 * 1024 * 1024),
        cost_estimate=pl.CostEstimate(
            flops=int(flops), transcendentals=int(6 * M * n_pad),
            bytes_accessed=int(bytes_acc)),
    )(actors_p, ctrs_p,
      w1_s, g1_s, b1_s, w2_s, g2_s, b2_s, wp_s, bp_s,
      pa["wd1"].T.astype(f32), row(pa["bd1"]),
      pa["wd2"].T.astype(bf16), row(pa["gd"]), row(pa["bd"]),
      pa["wagt"][:, :D].T.astype(bf16), pa["wagt"][:, D:].T.astype(bf16),
      row(pa["gagt"]), row(pa["bagt"]),
      pc["w1"].T.astype(bf16), row(pc["g1"]), row(pc["b1"]),
      pc["w2"].T.astype(bf16), row(pc["g2"]), row(pc["b2"]),
      pc["wcls"].astype(f32), pc["bcls"].reshape(1, 1).astype(f32))

    reg = reg_wide.reshape(n_pad, M, p2p)[:N, :, :P2].reshape(N, M, num_preds, 2)
    cls = cls_wide[:N, :M]

    # per-actor descending sort of the mode scores + gather + per-batch ragged
    # split (tiny data-dependent op; plain JAX, identical to torch.sort + indexing).
    sort_idcs = jnp.argsort(-cls, axis=1)
    reg_sorted = jnp.take_along_axis(reg, sort_idcs[:, :, None, None], axis=1)
    out = {"reg": [reg_sorted[idcs] for idcs in actor_idcs]}
    return out, cls, reg


# ---------------------------------------------------------------------------
# Parameter init (PyTorch weight layout [out, in]); GN affines perturbed from
# (1, 0) so the affine path is exercised.
# ---------------------------------------------------------------------------
def _init_linear_res(key, d):
    ks = jax.random.split(key, 6)
    s = d ** -0.5
    return dict(
        w1=s * jax.random.normal(ks[0], (d, d), jnp.float32),
        g1=1.0 + 0.1 * jax.random.normal(ks[1], (d,), jnp.float32),
        b1=0.1 * jax.random.normal(ks[2], (d,), jnp.float32),
        w2=s * jax.random.normal(ks[3], (d, d), jnp.float32),
        g2=1.0 + 0.1 * jax.random.normal(ks[4], (d,), jnp.float32),
        b2=0.1 * jax.random.normal(ks[5], (d,), jnp.float32),
    )


def init_prednet_params(key, n_actor, num_mods, num_preds):
    D, P2 = n_actor, 2 * num_preds
    keys = jax.random.split(key, num_mods + 2)

    pred = []
    for m in range(num_mods):
        km = jax.random.split(keys[m], 3)
        p = _init_linear_res(km[0], D)
        p["wp"] = (D ** -0.5) * jax.random.normal(km[1], (P2, D), jnp.float32)
        p["bp"] = 0.1 * jax.random.normal(km[2], (P2,), jnp.float32)
        pred.append(p)

    ka = jax.random.split(keys[num_mods], 8)
    att_dest = dict(
        wd1=0.7 * jax.random.normal(ka[0], (D, 2), jnp.float32),
        bd1=0.1 * jax.random.normal(ka[1], (D,), jnp.float32),
        wd2=(D ** -0.5) * jax.random.normal(ka[2], (D, D), jnp.float32),
        gd=1.0 + 0.1 * jax.random.normal(ka[3], (D,), jnp.float32),
        bd=0.1 * jax.random.normal(ka[4], (D,), jnp.float32),
        wagt=((2 * D) ** -0.5) * jax.random.normal(ka[5], (D, 2 * D), jnp.float32),
        gagt=1.0 + 0.1 * jax.random.normal(ka[6], (D,), jnp.float32),
        bagt=0.1 * jax.random.normal(ka[7], (D,), jnp.float32),
    )

    kc = jax.random.split(keys[num_mods + 1], 3)
    cls = _init_linear_res(kc[0], D)
    cls["wcls"] = (D ** -0.5) * jax.random.normal(kc[1], (1, D), jnp.float32)
    cls["bcls"] = 0.1 * jax.random.normal(kc[2], (1,), jnp.float32)

    return dict(pred=pred, att_dest=att_dest, cls=cls)


# ---------------------------------------------------------------------------
# Pure-JAX reference mirroring the PyTorch module.  It uses the same
# bf16-operand / f32-accumulation matmul policy as the kernel so the mode sort
# is stable between the two implementations.
# ---------------------------------------------------------------------------
def prednet_ref(actors, actor_ctrs, actor_idcs, params, num_preds):
    f32, bf16 = jnp.float32, jnp.bfloat16
    N, D = actors.shape
    M = len(params["pred"])
    hi = jax.lax.Precision.HIGHEST

    def gn(x, g, b):
        m = jnp.mean(x, -1, keepdims=True)
        v = jnp.mean((x - m) ** 2, -1, keepdims=True)
        return (x - m) / jnp.sqrt(v + 1e-5) * g + b

    def mm(x, w):   # torch-layout weight [out, in]
        return jnp.dot(x.astype(bf16), w.T.astype(bf16),
                       preferred_element_type=f32)

    def linear_res(x, p):
        h = jax.nn.relu(gn(mm(x, p["w1"]), p["g1"], p["b1"]))
        h = gn(mm(h, p["w2"]), p["g2"], p["b2"])
        return jax.nn.relu(h + x)

    ctrs = jnp.concatenate(actor_ctrs, axis=0).astype(f32)
    preds = [mm(linear_res(actors, p), p["wp"]) + p["bp"] for p in params["pred"]]
    reg = jnp.stack(preds, 1).reshape(N, M, num_preds, 2)
    reg = reg + ctrs[:, None, None, :]
    dest_ctrs = reg[:, :, -1]

    pa = params["att_dest"]
    dist = (ctrs[:, None, :] - dest_ctrs).reshape(-1, 2)
    d = jax.nn.relu(jnp.dot(dist, pa["wd1"].T, precision=hi) + pa["bd1"])
    d = jax.nn.relu(gn(mm(d, pa["wd2"]), pa["gd"], pa["bd"]))
    agts = jnp.repeat(actors, M, axis=0)
    feats = jax.nn.relu(gn(mm(jnp.concatenate([d, agts], axis=1), pa["wagt"]),
                           pa["gagt"], pa["bagt"]))

    pc = params["cls"]
    h = linear_res(feats, pc)
    cls = (jnp.dot(h, pc["wcls"].T, precision=hi) + pc["bcls"]).reshape(N, M)

    sort_idcs = jnp.argsort(-cls, axis=1)
    reg_sorted = jnp.take_along_axis(reg, sort_idcs[:, :, None, None], axis=1)
    out = {"reg": [reg_sorted[idcs] for idcs in actor_idcs]}
    return out, cls, reg


# ---------------------------------------------------------------------------
if __name__ == "__main__":
    n_actor = 128          # real LaneGCN width -> lane-dense channels
    num_mods = 6
    num_preds = 30
    counts = (6, 10)       # two scenes in the batch
    N = sum(counts)

    key = jax.random.PRNGKey(0)
    k_act, k_ctr, k_par = jax.random.split(key, 3)
    actors = jax.random.normal(k_act, (N, n_actor), jnp.float32)
    ctrs_all = jax.random.uniform(k_ctr, (N, 2), jnp.float32,
                                  minval=-10.0, maxval=10.0)
    actor_idcs, actor_ctrs, start = [], [], 0
    for c in counts:
        actor_idcs.append(jnp.arange(start, start + c))
        actor_ctrs.append(ctrs_all[start:start + c])
        start += c

    params = init_prednet_params(k_par, n_actor, num_mods, num_preds)

    out, cls, reg = prednet_forward(actors, actor_ctrs, actor_idcs, params,
                                    num_preds)
    out = jax.block_until_ready(out)

    ref_out, ref_cls, ref_reg = prednet_ref(actors, actor_ctrs, actor_idcs,
                                            params, num_preds)

    def _check(name, a, b):
        ok = bool(jnp.allclose(a, b, atol=2e-3, rtol=2e-3))
        assert ok, (name, float(jnp.max(jnp.abs(a - b))))

    assert cls.shape == (N, num_mods)
    assert reg.shape == (N, num_mods, num_preds, 2)
    _check("cls", cls, ref_cls)
    _check("reg", reg, ref_reg)
    for i, c in enumerate(counts):
        assert out["reg"][i].shape == (c, num_mods, num_preds, 2)
        _check(f"reg[{i}]", out["reg"][i], ref_out["reg"][i])

    print("KERNEL_OK")
</pallas_src>

<mosaic_0001>
module attributes {stable_mosaic.version = 11 : i64} {
  func.func @_prednet_kernel(%arg0: i32, %arg1: memref<8x128xf32, #tpu.memory_space<vmem>>, %arg2: memref<8x2xf32, #tpu.memory_space<vmem>>, %arg3: memref<6x128x128xbf16, #tpu.memory_space<vmem>>, %arg4: memref<6x1x128xf32, #tpu.memory_space<vmem>>, %arg5: memref<6x1x128xf32, #tpu.memory_space<vmem>>, %arg6: memref<6x128x128xbf16, #tpu.memory_space<vmem>>, %arg7: memref<6x1x128xf32, #tpu.memory_space<vmem>>, %arg8: memref<6x1x128xf32, #tpu.memory_space<vmem>>, %arg9: memref<6x128x128xbf16, #tpu.memory_space<vmem>>, %arg10: memref<6x1x128xf32, #tpu.memory_space<vmem>>, %arg11: memref<2x128xf32, #tpu.memory_space<vmem>>, %arg12: memref<1x128xf32, #tpu.memory_space<vmem>>, %arg13: memref<128x128xbf16, #tpu.memory_space<vmem>>, %arg14: memref<1x128xf32, #tpu.memory_space<vmem>>, %arg15: memref<1x128xf32, #tpu.memory_space<vmem>>, %arg16: memref<128x128xbf16, #tpu.memory_space<vmem>>, %arg17: memref<128x128xbf16, #tpu.memory_space<vmem>>, %arg18: memref<1x128xf32, #tpu.memory_space<vmem>>, %arg19: memref<1x128xf32, #tpu.memory_space<vmem>>, %arg20: memref<128x128xbf16, #tpu.memory_space<vmem>>, %arg21: memref<1x128xf32, #tpu.memory_space<vmem>>, %arg22: memref<1x128xf32, #tpu.memory_space<vmem>>, %arg23: memref<128x128xbf16, #tpu.memory_space<vmem>>, %arg24: memref<1x128xf32, #tpu.memory_space<vmem>>, %arg25: memref<1x128xf32, #tpu.memory_space<vmem>>, %arg26: memref<1x128xf32, #tpu.memory_space<vmem>>, %arg27: memref<1x1xf32, #tpu.memory_space<vmem>>, %arg28: memref<8x768xf32, #tpu.memory_space<vmem>>, %arg29: memref<8x128xf32, #tpu.memory_space<vmem>>) attributes {dimension_semantics = [#tpu.dimension_semantics<parallel>], iteration_bounds = array<i64: 2>, scalar_prefetch = 0 : i64, scratch_operands = 0 : i64, tpu.core_type = #tpu.core_type<tc>, window_params = [{transform_indices = @transform_0, window_bounds = array<i64: 8, 128>}, {transform_indices = @transform_1, window_bounds = array<i64: 8, 2>}, {pipeline_mode = #tpu.pipeline_mode<synchronous>, transform_indices = @transform_2, window_bounds = array<i64: 6, 128, 128>}, {pipeline_mode = #tpu.pipeline_mode<synchronous>, transform_indices = @transform_3, window_bounds = array<i64: 6, 1, 128>}, {pipeline_mode = #tpu.pipeline_mode<synchronous>, transform_indices = @transform_4, window_bounds = array<i64: 6, 1, 128>}, {pipeline_mode = #tpu.pipeline_mode<synchronous>, transform_indices = @transform_5, window_bounds = array<i64: 6, 128, 128>}, {pipeline_mode = #tpu.pipeline_mode<synchronous>, transform_indices = @transform_6, window_bounds = array<i64: 6, 1, 128>}, {pipeline_mode = #tpu.pipeline_mode<synchronous>, transform_indices = @transform_7, window_bounds = array<i64: 6, 1, 128>}, {pipeline_mode = #tpu.pipeline_mode<synchronous>, transform_indices = @transform_8, window_bounds = array<i64: 6, 128, 128>}, {pipeline_mode = #tpu.pipeline_mode<synchronous>, transform_indices = @transform_9, window_bounds = array<i64: 6, 1, 128>}, {pipeline_mode = #tpu.pipeline_mode<synchronous>, transform_indices = @transform_10, window_bounds = array<i64: 2, 128>}, {pipeline_mode = #tpu.pipeline_mode<synchronous>, transform_indices = @transform_11, window_bounds = array<i64: 1, 128>}, {pipeline_mode = #tpu.pipeline_mode<synchronous>, transform_indices = @transform_12, window_bounds = array<i64: 128, 128>}, {pipeline_mode = #tpu.pipeline_mode<synchronous>, transform_indices = @transform_13, window_bounds = array<i64: 1, 128>}, {pipeline_mode = #tpu.pipeline_mode<synchronous>, transform_indices = @transform_14, window_bounds = array<i64: 1, 128>}, {pipeline_mode = #tpu.pipeline_mode<synchronous>, transform_indices = @transform_15, window_bounds = array<i64: 128, 128>}, {pipeline_mode = #tpu.pipeline_mode<synchronous>, transform_indices = @transform_16, window_bounds = array<i64: 128, 128>}, {pipeline_mode = #tpu.pipeline_mode<synchronous>, transform_indices = @transform_17, window_bounds = array<i64: 1, 128>}, {pipeline_mode = #tpu.pipeline_mode<synchronous>, transform_indices = @transform_18, window_bounds = array<i64: 1, 128>}, {pipeline_mode = #tpu.pipeline_mode<synchronous>, transform_indices = @transform_19, window_bounds = array<i64: 128, 128>}, {pipeline_mode = #tpu.pipeline_mode<synchronous>, transform_indices = @transform_20, window_bounds = array<i64: 1, 128>}, {pipeline_mode = #tpu.pipeline_mode<synchronous>, transform_indices = @transform_21, window_bounds = array<i64: 1, 128>}, {pipeline_mode = #tpu.pipeline_mode<synchronous>, transform_indices = @transform_22, window_bounds = array<i64: 128, 128>}, {pipeline_mode = #tpu.pipeline_mode<synchronous>, transform_indices = @transform_23, window_bounds = array<i64: 1, 128>}, {pipeline_mode = #tpu.pipeline_mode<synchronous>, transform_indices = @transform_24, window_bounds = array<i64: 1, 128>}, {pipeline_mode = #tpu.pipeline_mode<synchronous>, transform_indices = @transform_25, window_bounds = array<i64: 1, 128>}, {pipeline_mode = #tpu.pipeline_mode<synchronous>, transform_indices = @transform_26, window_bounds = array<i64: 1, 1>}, {transform_indices = @transform_27, window_bounds = array<i64: 8, 768>}, {transform_indices = @transform_28, window_bounds = array<i64: 8, 128>}]} {
    %c0 = arith.constant 0 : index
    %c0_0 = arith.constant 0 : index
    %0 = vector.load %arg1[%c0, %c0_0] : memref<8x128xf32, #tpu.memory_space<vmem>>, vector<8x128xf32>
    %1 = arith.truncf %0 : vector<8x128xf32> to vector<8x128xbf16>
    %c0_1 = arith.constant 0 : index
    %c0_2 = arith.constant 0 : index
    %2 = vector.load %arg2[%c0_1, %c0_2] : memref<8x2xf32, #tpu.memory_space<vmem>>, vector<8x1xf32>
    %c0_3 = arith.constant 0 : index
    %c1 = arith.constant 1 : index
    %3 = vector.load %arg2[%c0_3, %c1] : memref<8x2xf32, #tpu.memory_space<vmem>>, vector<8x1xf32>
    %c0_4 = arith.constant 0 : index
    %c0_5 = arith.constant 0 : index
    %4 = vector.load %arg17[%c0_4, %c0_5] : memref<128x128xbf16, #tpu.memory_space<vmem>>, vector<128x128xbf16>
    %cst = arith.constant dense<0.000000e+00> : vector<8x128xf32>
    %5 = tpu.matmul %1, %4, %cst {dimension_numbers = #tpu.dot_dimension_numbers<[1], [0], [0], [1], [0, 0, 1, 1], [], []>} : vector<8x128xbf16>, vector<128x128xbf16>, vector<8x128xf32> -> vector<8x128xf32>
    %6 = tpu.iota {dimensions = array<i32: 1>} : vector<1x128xi32>
    %c2_i32 = arith.constant 2 : i32
    %c0_i32 = arith.constant 0 : i32
    %7 = arith.cmpi eq, %c2_i32, %c0_i32 : i32
    %c1_i32 = arith.constant 1 : i32
    %8 = arith.select %7, %c1_i32, %c2_i32 : i32
    %9 = vector.broadcast %8 : i32 to vector<1x128xi32>
    %10 = arith.remsi %6, %9 : vector<1x128xi32>
    %c0_i32_6 = arith.constant 0 : i32
    %11 = vector.broadcast %c0_i32_6 : i32 to vector<1x128xi32>
    %12 = arith.cmpi ne, %10, %11 : vector<1x128xi32>
    %c0_i32_7 = arith.constant 0 : i32
    %13 = vector.broadcast %c0_i32_7 : i32 to vector<1x128xi32>
    %14 = arith.cmpi slt, %10, %13 : vector<1x128xi32>
    %c0_i32_8 = arith.constant 0 : i32
    %15 = arith.cmpi slt, %8, %c0_i32_8 : i32
    %16 = vector.broadcast %15 : i1 to vector<1x128xi1>
    %17 = vector.broadcast %16 : vector<1x128xi1> to vector<1x128xi1>
    %18 = arith.xori %14, %17 : vector<1x128xi1>
    %19 = arith.andi %18, %12 : vector<1x128xi1>
    %20 = vector.broadcast %8 : i32 to vector<1x128xi32>
    %21 = arith.addi %10, %20 : vector<1x128xi32>
    %22 = arith.select %19, %21, %10 : vector<1x128xi1>, vector<1x128xi32>
    %c0_i32_9 = arith.constant 0 : i32
    %23 = vector.broadcast %c0_i32_9 : i32 to vector<1x128xi32>
    %24 = arith.cmpi eq, %22, %23 : vector<1x128xi32>
    %25 = vector.shape_cast %24 : vector<1x128xi1> to vector<1x128xi1>
    %26 = vector.broadcast %25 : vector<1x128xi1> to vector<8x128xi1>
    %27 = vector.shape_cast %2 : vector<8x1xf32> to vector<8x1xf32>
    %28 = vector.broadcast %27 : vector<8x1xf32> to vector<8x128xf32>
    %29 = vector.shape_cast %3 : vector<8x1xf32> to vector<8x1xf32>
    %30 = vector.broadcast %29 : vector<8x1xf32> to vector<8x128xf32>
    %31 = arith.select %26, %28, %30 : vector<8x128xi1>, vector<8x128xf32>
    %32 = tpu.iota {dimensions = array<i32: 1>} : vector<1x128xi32>
    %cst_10 = arith.constant 0.000000e+00 : f32
    %33 = vector.broadcast %cst_10 : f32 to vector<8x128xf32>
    %c0_11 = arith.constant 0 : index
    %c0_12 = arith.constant 0 : index
    %34 = vector.load %arg11[%c0_11, %c0_12] : memref<2x128xf32, #tpu.memory_space<vmem>>, vector<1x128xf32>
    %c1_13 = arith.constant 1 : index
    %c0_14 = arith.constant 0 : index
    %35 = vector.load %arg11[%c1_13, %c0_14] : memref<2x128xf32, #tpu.memory_space<vmem>>, vector<1x128xf32>
    %c0_15 = arith.constant 0 : index
    %c0_16 = arith.constant 0 : index
    %36 = vector.load %arg12[%c0_15, %c0_16] : memref<1x128xf32, #tpu.memory_space<vmem>>, vector<1x128xf32>
    %c0_17 = arith.constant 0 : index
    %c0_18 = arith.constant 0 : index
    %c0_19 = arith.constant 0 : index
    %37 = vector.load %arg3[%c0_17, %c0_18, %c0_19] : memref<6x128x128xbf16, #tpu.memory_space<vmem>>, vector<1x128x128xbf16>
    %38 = vector.shape_cast %37 : vector<1x128x128xbf16> to vector<128x128xbf16>
    %cst_20 = arith.constant dense<0.000000e+00> : vector<8x128xf32>
    %39 = tpu.matmul %1, %38, %cst_20 {dimension_numbers = #tpu.dot_dimension_numbers<[1], [0], [0], [1], [0, 0, 1, 1], [], []>} : vector<8x128xbf16>, vector<128x128xbf16>, vector<8x128xf32> -> vector<8x128xf32>
    %c0_21 = arith.constant 0 : index
    %c0_22 = arith.constant 0 : index
    %c0_23 = arith.constant 0 : index
    %40 = vector.load %arg4[%c0_21, %c0_22, %c0_23] : memref<6x1x128xf32, #tpu.memory_space<vmem>>, vector<1x1x128xf32>
    %41 = vector.shape_cast %40 : vector<1x1x128xf32> to vector<1x128xf32>
    %c0_24 = arith.constant 0 : index
    %c0_25 = arith.constant 0 : index
    %c0_26 = arith.constant 0 : index
    %42 = vector.load %arg5[%c0_24, %c0_25, %c0_26] : memref<6x1x128xf32, #tpu.memory_space<vmem>>, vector<1x1x128xf32>
    %43 = vector.shape_cast %42 : vector<1x1x128xf32> to vector<1x128xf32>
    %cst_27 = arith.constant dense<0.000000e+00> : vector<8xf32>
    %44 = vector.multi_reduction <add>, %39, %cst_27 [1] : vector<8x128xf32> to vector<8xf32>
    %45 = vector.shape_cast %44 : vector<8xf32> to vector<8x1xf32>
    %cst_28 = arith.constant 1.280000e+02 : f32
    %46 = vector.broadcast %cst_28 : f32 to vector<8x1xf32>
    %47 = arith.divf %45, %46 : vector<8x1xf32>
    %48 = vector.broadcast %47 : vector<8x1xf32> to vector<8x128xf32>
    %49 = arith.subf %39, %48 : vector<8x128xf32>
    %50 = vector.broadcast %47 : vector<8x1xf32> to vector<8x128xf32>
    %51 = arith.subf %39, %50 : vector<8x128xf32>
    %52 = arith.mulf %49, %51 : vector<8x128xf32>
    %cst_29 = arith.constant dense<0.000000e+00> : vector<8xf32>
    %53 = vector.multi_reduction <add>, %52, %cst_29 [1] : vector<8x128xf32> to vector<8xf32>
    %54 = vector.shape_cast %53 : vector<8xf32> to vector<8x1xf32>
    %cst_30 = arith.constant 1.280000e+02 : f32
    %55 = vector.broadcast %cst_30 : f32 to vector<8x1xf32>
    %56 = arith.divf %54, %55 : vector<8x1xf32>
    %57 = vector.broadcast %47 : vector<8x1xf32> to vector<8x128xf32>
    %58 = arith.subf %39, %57 : vector<8x128xf32>
    %cst_31 = arith.constant 9.99999974E-6 : f32
    %59 = vector.broadcast %cst_31 : f32 to vector<8x1xf32>
    %60 = arith.addf %56, %59 : vector<8x1xf32>
    %61 = math.rsqrt %60 : vector<8x1xf32>
    %62 = vector.broadcast %61 : vector<8x1xf32> to vector<8x128xf32>
    %63 = arith.mulf %58, %62 : vector<8x128xf32>
    %64 = vector.broadcast %41 : vector<1x128xf32> to vector<8x128xf32>
    %65 = arith.mulf %63, %64 : vector<8x128xf32>
    %66 = vector.broadcast %43 : vector<1x128xf32> to vector<8x128xf32>
    %67 = arith.addf %65, %66 : vector<8x128xf32>
    %cst_32 = arith.constant 0.000000e+00 : f32
    %68 = vector.broadcast %cst_32 : f32 to vector<8x128xf32>
    %69 = arith.maximumf %67, %68 : vector<8x128xf32>
    %70 = arith.truncf %69 : vector<8x128xf32> to vector<8x128xbf16>
    %c0_33 = arith.constant 0 : index
    %c0_34 = arith.constant 0 : index
    %c0_35 = arith.constant 0 : index
    %71 = vector.load %arg6[%c0_33, %c0_34, %c0_35] : memref<6x128x128xbf16, #tpu.memory_space<vmem>>, vector<1x128x128xbf16>
    %72 = vector.shape_cast %71 : vector<1x128x128xbf16> to vector<128x128xbf16>
    %cst_36 = arith.constant dense<0.000000e+00> : vector<8x128xf32>
    %73 = tpu.matmul %70, %72, %cst_36 {dimension_numbers = #tpu.dot_dimension_numbers<[1], [0], [0], [1], [0, 0, 1, 1], [], []>} : vector<8x128xbf16>, vector<128x128xbf16>, vector<8x128xf32> -> vector<8x128xf32>
    %c0_37 = arith.constant 0 : index
    %c0_38 = arith.constant 0 : index
    %c0_39 = arith.constant 0 : index
    %74 = vector.load %arg7[%c0_37, %c0_38, %c0_39] : memref<6x1x128xf32, #tpu.memory_space<vmem>>, vector<1x1x128xf32>
    %75 = vector.shape_cast %74 : vector<1x1x128xf32> to vector<1x128xf32>
    %c0_40 = arith.constant 0 : index
    %c0_41 = arith.constant 0 : index
    %c0_42 = arith.constant 0 : index
    %76 = vector.load %arg8[%c0_40, %c0_41, %c0_42] : memref<6x1x128xf32, #tpu.memory_space<vmem>>, vector<1x1x128xf32>
    %77 = vector.shape_cast %76 : vector<1x1x128xf32> to vector<1x128xf32>
    %cst_43 = arith.constant dense<0.000000e+00> : vector<8xf32>
    %78 = vector.multi_reduction <add>, %73, %cst_43 [1] : vector<8x128xf32> to vector<8xf32>
    %79 = vector.shape_cast %78 : vector<8xf32> to vector<8x1xf32>
    %cst_44 = arith.constant 1.280000e+02 : f32
    %80 = vector.broadcast %cst_44 : f32 to vector<8x1xf32>
    %81 = arith.divf %79, %80 : vector<8x1xf32>
    %82 = vector.broadcast %81 : vector<8x1xf32> to vector<8x128xf32>
    %83 = arith.subf %73, %82 : vector<8x128xf32>
    %84 = vector.broadcast %81 : vector<8x1xf32> to vector<8x128xf32>
    %85 = arith.subf %73, %84 : vector<8x128xf32>
    %86 = arith.mulf %83, %85 : vector<8x128xf32>
    %cst_45 = arith.constant dense<0.000000e+00> : vector<8xf32>
    %87 = vector.multi_reduction <add>, %86, %cst_45 [1] : vector<8x128xf32> to vector<8xf32>
    %88 = vector.shape_cast %87 : vector<8xf32> to vector<8x1xf32>
    %cst_46 = arith.constant 1.280000e+02 : f32
    %89 = vector.broadcast %cst_46 : f32 to vector<8x1xf32>
    %90 = arith.divf %88, %89 : vector<8x1xf32>
    %91 = vector.broadcast %81 : vector<8x1xf32> to vector<8x128xf32>
    %92 = arith.subf %73, %91 : vector<8x128xf32>
    %cst_47 = arith.constant 9.99999974E-6 : f32
    %93 = vector.broadcast %cst_47 : f32 to vector<8x1xf32>
    %94 = arith.addf %90, %93 : vector<8x1xf32>
    %95 = math.rsqrt %94 : vector<8x1xf32>
    %96 = vector.broadcast %95 : vector<8x1xf32> to vector<8x128xf32>
    %97 = arith.mulf %92, %96 : vector<8x128xf32>
    %98 = vector.broadcast %75 : vector<1x128xf32> to vector<8x128xf32>
    %99 = arith.mulf %97, %98 : vector<8x128xf32>
    %100 = vector.broadcast %77 : vector<1x128xf32> to vector<8x128xf32>
    %101 = arith.addf %99, %100 : vector<8x128xf32>
    %102 = arith.addf %101, %0 : vector<8x128xf32>
    %cst_48 = arith.constant 0.000000e+00 : f32
    %103 = vector.broadcast %cst_48 : f32 to vector<8x128xf32>
    %104 = arith.maximumf %102, %103 : vector<8x128xf32>
    %105 = arith.truncf %104 : vector<8x128xf32> to vector<8x128xbf16>
    %c0_49 = arith.constant 0 : index
    %c0_50 = arith.constant 0 : index
    %c0_51 = arith.constant 0 : index
    %106 = vector.load %arg9[%c0_49, %c0_50, %c0_51] : memref<6x128x128xbf16, #tpu.memory_space<vmem>>, vector<1x128x128xbf16>
    %107 = vector.shape_cast %106 : vector<1x128x128xbf16> to vector<128x128xbf16>
    %cst_52 = arith.constant dense<0.000000e+00> : vector<8x128xf32>
    %108 = tpu.matmul %105, %107, %cst_52 {dimension_numbers = #tpu.dot_dimension_numbers<[1], [0], [0], [1], [0, 0, 1, 1], [], []>} : vector<8x128xbf16>, vector<128x128xbf16>, vector<8x128xf32> -> vector<8x128xf32>
    %c0_53 = arith.constant 0 : index
    %c0_54 = arith.constant 0 : index
    %c0_55 = arith.constant 0 : index
    %109 = vector.load %arg10[%c0_53, %c0_54, %c0_55] : memref<6x1x128xf32, #tpu.memory_space<vmem>>, vector<1x1x128xf32>
    %110 = vector.shape_cast %109 : vector<1x1x128xf32> to vector<1x128xf32>
    %111 = vector.broadcast %110 : vector<1x128xf32> to vector<8x128xf32>
    %112 = arith.addf %108, %111 : vector<8x128xf32>
    %113 = arith.addf %112, %31 : vector<8x128xf32>
    %c0_56 = arith.constant 0 : index
    %c0_57 = arith.constant 0 : index
    %114 = vector.load %arg28[%c0_56, %c0_57] : memref<8x768xf32, #tpu.memory_space<vmem>>, vector<8x128xf32>
    tpu.vector_store %arg28[%c0_56, %c0_57], %113 {strides = array<i32>} : memref<8x768xf32, #tpu.memory_space<vmem>>, vector<8x128xf32>,
    %115 = vector.extract_strided_slice %113 {offsets = [0, 58], sizes = [8, 1], strides = [1, 1]} : vector<8x128xf32> to vector<8x1xf32>
    %116 = arith.subf %2, %115 : vector<8x1xf32>
    %117 = vector.extract_strided_slice %113 {offsets = [0, 59], sizes = [8, 1], strides = [1, 1]} : vector<8x128xf32> to vector<8x1xf32>
    %118 = arith.subf %3, %117 : vector<8x1xf32>
    %119 = vector.broadcast %116 : vector<8x1xf32> to vector<8x128xf32>
    %120 = vector.broadcast %34 : vector<1x128xf32> to vector<8x128xf32>
    %121 = arith.mulf %119, %120 : vector<8x128xf32>
    %122 = vector.broadcast %118 : vector<8x1xf32> to vector<8x128xf32>
    %123 = vector.broadcast %35 : vector<1x128xf32> to vector<8x128xf32>
    %124 = arith.mulf %122, %123 : vector<8x128xf32>
    %125 = arith.addf %121, %124 : vector<8x128xf32>
    %126 = vector.broadcast %36 : vector<1x128xf32> to vector<8x128xf32>
    %127 = arith.addf %125, %126 : vector<8x128xf32>
    %cst_58 = arith.constant 0.000000e+00 : f32
    %128 = vector.broadcast %cst_58 : f32 to vector<8x128xf32>
    %129 = arith.maximumf %127, %128 : vector<8x128xf32>
    %130 = arith.truncf %129 : vector<8x128xf32> to vector<8x128xbf16>
    %c0_59 = arith.constant 0 : index
    %c0_60 = arith.constant 0 : index
    %131 = vector.load %arg13[%c0_59, %c0_60] : memref<128x128xbf16, #tpu.memory_space<vmem>>, vector<128x128xbf16>
    %cst_61 = arith.constant dense<0.000000e+00> : vector<8x128xf32>
    %132 = tpu.matmul %130, %131, %cst_61 {dimension_numbers = #tpu.dot_dimension_numbers<[1], [0], [0], [1], [0, 0, 1, 1], [], []>} : vector<8x128xbf16>, vector<128x128xbf16>, vector<8x128xf32> -> vector<8x128xf32>
    %c0_62 = arith.constant 0 : index
    %c0_63 = arith.constant 0 : index
    %133 = vector.load %arg14[%c0_62, %c0_63] : memref<1x128xf32, #tpu.memory_space<vmem>>, vector<1x128xf32>
    %c0_64 = arith.constant 0 : index
    %c0_65 = arith.constant 0 : index
    %134 = vector.load %arg15[%c0_64, %c0_65] : memref<1x128xf32, #tpu.memory_space<vmem>>, vector<1x128xf32>
    %cst_66 = arith.constant dense<0.000000e+00> : vector<8xf32>
    %135 = vector.multi_reduction <add>, %132, %cst_66 [1] : vector<8x128xf32> to vector<8xf32>
    %136 = vector.shape_cast %135 : vector<8xf32> to vector<8x1xf32>
    %cst_67 = arith.constant 1.280000e+02 : f32
    %137 = vector.broadcast %cst_67 : f32 to vector<8x1xf32>
    %138 = arith.divf %136, %137 : vector<8x1xf32>
    %139 = vector.broadcast %138 : vector<8x1xf32> to vector<8x128xf32>
    %140 = arith.subf %132, %139 : vector<8x128xf32>
    %141 = vector.broadcast %138 : vector<8x1xf32> to vector<8x128xf32>
    %142 = arith.subf %132, %141 : vector<8x128xf32>
    %143 = arith.mulf %140, %142 : vector<8x128xf32>
    %cst_68 = arith.constant dense<0.000000e+00> : vector<8xf32>
    %144 = vector.multi_reduction <add>, %143, %cst_68 [1] : vector<8x128xf32> to vector<8xf32>
    %145 = vector.shape_cast %144 : vector<8xf32> to vector<8x1xf32>
    %cst_69 = arith.constant 1.280000e+02 : f32
    %146 = vector.broadcast %cst_69 : f32 to vector<8x1xf32>
    %147 = arith.divf %145, %146 : vector<8x1xf32>
    %148 = vector.broadcast %138 : vector<8x1xf32> to vector<8x128xf32>
    %149 = arith.subf %132, %148 : vector<8x128xf32>
    %cst_70 = arith.constant 9.99999974E-6 : f32
    %150 = vector.broadcast %cst_70 : f32 to vector<8x1xf32>
    %151 = arith.addf %147, %150 : vector<8x1xf32>
    %152 = math.rsqrt %151 : vector<8x1xf32>
    %153 = vector.broadcast %152 : vector<8x1xf32> to vector<8x128xf32>
    %154 = arith.mulf %149, %153 : vector<8x128xf32>
    %155 = vector.broadcast %133 : vector<1x128xf32> to vector<8x128xf32>
    %156 = arith.mulf %154, %155 : vector<8x128xf32>
    %157 = vector.broadcast %134 : vector<1x128xf32> to vector<8x128xf32>
    %158 = arith.addf %156, %157 : vector<8x128xf32>
    %cst_71 = arith.constant 0.000000e+00 : f32
    %159 = vector.broadcast %cst_71 : f32 to vector<8x128xf32>
    %160 = arith.maximumf %158, %159 : vector<8x128xf32>
    %161 = arith.truncf %160 : vector<8x128xf32> to vector<8x128xbf16>
    %c0_72 = arith.constant 0 : index
    %c0_73 = arith.constant 0 : index
    %162 = vector.load %arg16[%c0_72, %c0_73] : memref<128x128xbf16, #tpu.memory_space<vmem>>, vector<128x128xbf16>
    %cst_74 = arith.constant dense<0.000000e+00> : vector<8x128xf32>
    %163 = tpu.matmul %161, %162, %cst_74 {dimension_numbers = #tpu.dot_dimension_numbers<[1], [0], [0], [1], [0, 0, 1, 1], [], []>} : vector<8x128xbf16>, vector<128x128xbf16>, vector<8x128xf32> -> vector<8x128xf32>
    %164 = arith.addf %163, %5 : vector<8x128xf32>
    %c0_75 = arith.constant 0 : index
    %c0_76 = arith.constant 0 : index
    %165 = vector.load %arg18[%c0_75, %c0_76] : memref<1x128xf32, #tpu.memory_space<vmem>>, vector<1x128xf32>
    %c0_77 = arith.constant 0 : index
    %c0_78 = arith.constant 0 : index
    %166 = vector.load %arg19[%c0_77, %c0_78] : memref<1x128xf32, #tpu.memory_space<vmem>>, vector<1x128xf32>
    %cst_79 = arith.constant dense<0.000000e+00> : vector<8xf32>
    %167 = vector.multi_reduction <add>, %164, %cst_79 [1] : vector<8x128xf32> to vector<8xf32>
    %168 = vector.shape_cast %167 : vector<8xf32> to vector<8x1xf32>
    %cst_80 = arith.constant 1.280000e+02 : f32
    %169 = vector.broadcast %cst_80 : f32 to vector<8x1xf32>
    %170 = arith.divf %168, %169 : vector<8x1xf32>
    %171 = vector.broadcast %170 : vector<8x1xf32> to vector<8x128xf32>
    %172 = arith.subf %164, %171 : vector<8x128xf32>
    %173 = vector.broadcast %170 : vector<8x1xf32> to vector<8x128xf32>
    %174 = arith.subf %164, %173 : vector<8x128xf32>
    %175 = arith.mulf %172, %174 : vector<8x128xf32>
    %cst_81 = arith.constant dense<0.000000e+00> : vector<8xf32>
    %176 = vector.multi_reduction <add>, %175, %cst_81 [1] : vector<8x128xf32> to vector<8xf32>
    %177 = vector.shape_cast %176 : vector<8xf32> to vector<8x1xf32>
    %cst_82 = arith.constant 1.280000e+02 : f32
    %178 = vector.broadcast %cst_82 : f32 to vector<8x1xf32>
    %179 = arith.divf %177, %178 : vector<8x1xf32>
    %180 = vector.broadcast %170 : vector<8x1xf32> to vector<8x128xf32>
    %181 = arith.subf %164, %180 : vector<8x128xf32>
    %cst_83 = arith.constant 9.99999974E-6 : f32
    %182 = vector.broadcast %cst_83 : f32 to vector<8x1xf32>
    %183 = arith.addf %179, %182 : vector<8x1xf32>
    %184 = math.rsqrt %183 : vector<8x1xf32>
    %185 = vector.broadcast %184 : vector<8x1xf32> to vector<8x128xf32>
    %186 = arith.mulf %181, %185 : vector<8x128xf32>
    %187 = vector.broadcast %165 : vector<1x128xf32> to vector<8x128xf32>
    %188 = arith.mulf %186, %187 : vector<8x128xf32>
    %189 = vector.broadcast %166 : vector<1x128xf32> to vector<8x128xf32>
    %190 = arith.addf %188, %189 : vector<8x128xf32>
    %cst_84 = arith.constant 0.000000e+00 : f32
    %191 = vector.broadcast %cst_84 : f32 to vector<8x128xf32>
    %192 = arith.maximumf %190, %191 : vector<8x128xf32>
    %193 = arith.truncf %192 : vector<8x128xf32> to vector<8x128xbf16>
    %c0_85 = arith.constant 0 : index
    %c0_86 = arith.constant 0 : index
    %194 = vector.load %arg20[%c0_85, %c0_86] : memref<128x128xbf16, #tpu.memory_space<vmem>>, vector<128x128xbf16>
    %cst_87 = arith.constant dense<0.000000e+00> : vector<8x128xf32>
    %195 = tpu.matmul %193, %194, %cst_87 {dimension_numbers = #tpu.dot_dimension_numbers<[1], [0], [0], [1], [0, 0, 1, 1], [], []>} : vector<8x128xbf16>, vector<128x128xbf16>, vector<8x128xf32> -> vector<8x128xf32>
    %c0_88 = arith.constant 0 : index
    %c0_89 = arith.constant 0 : index
    %196 = vector.load %arg21[%c0_88, %c0_89] : memref<1x128xf32, #tpu.memory_space<vmem>>, vector<1x128xf32>
    %c0_90 = arith.constant 0 : index
    %c0_91 = arith.constant 0 : index
    %197 = vector.load %arg22[%c0_90, %c0_91] : memref<1x128xf32, #tpu.memory_space<vmem>>, vector<1x128xf32>
    %cst_92 = arith.constant dense<0.000000e+00> : vector<8xf32>
    %198 = vector.multi_reduction <add>, %195, %cst_92 [1] : vector<8x128xf32> to vector<8xf32>
    %199 = vector.shape_cast %198 : vector<8xf32> to vector<8x1xf32>
    %cst_93 = arith.constant 1.280000e+02 : f32
    %200 = vector.broadcast %cst_93 : f32 to vector<8x1xf32>
    %201 = arith.divf %199, %200 : vector<8x1xf32>
    %202 = vector.broadcast %201 : vector<8x1xf32> to vector<8x128xf32>
    %203 = arith.subf %195, %202 : vector<8x128xf32>
    %204 = vector.broadcast %201 : vector<8x1xf32> to vector<8x128xf32>
    %205 = arith.subf %195, %204 : vector<8x128xf32>
    %206 = arith.mulf %203, %205 : vector<8x128xf32>
    %cst_94 = arith.constant dense<0.000000e+00> : vector<8xf32>
    %207 = vector.multi_reduction <add>, %206, %cst_94 [1] : vector<8x128xf32> to vector<8xf32>
    %208 = vector.shape_cast %207 : vector<8xf32> to vector<8x1xf32>
    %cst_95 = arith.constant 1.280000e+02 : f32
    %209 = vector.broadcast %cst_95 : f32 to vector<8x1xf32>
    %210 = arith.divf %208, %209 : vector<8x1xf32>
    %211 = vector.broadcast %201 : vector<8x1xf32> to vector<8x128xf32>
    %212 = arith.subf %195, %211 : vector<8x128xf32>
    %cst_96 = arith.constant 9.99999974E-6 : f32
    %213 = vector.broadcast %cst_96 : f32 to vector<8x1xf32>
    %214 = arith.addf %210, %213 : vector<8x1xf32>
    %215 = math.rsqrt %214 : vector<8x1xf32>
    %216 = vector.broadcast %215 : vector<8x1xf32> to vector<8x128xf32>
    %217 = arith.mulf %212, %216 : vector<8x128xf32>
    %218 = vector.broadcast %196 : vector<1x128xf32> to vector<8x128xf32>
    %219 = arith.mulf %217, %218 : vector<8x128xf32>
    %220 = vector.broadcast %197 : vector<1x128xf32> to vector<8x128xf32>
    %221 = arith.addf %219, %220 : vector<8x128xf32>
    %cst_97 = arith.constant 0.000000e+00 : f32
    %222 = vector.broadcast %cst_97 : f32 to vector<8x128xf32>
    %223 = arith.maximumf %221, %222 : vector<8x128xf32>
    %224 = arith.truncf %223 : vector<8x128xf32> to vector<8x128xbf16>
    %c0_98 = arith.constant 0 : index
    %c0_99 = arith.constant 0 : index
    %225 = vector.load %arg23[%c0_98, %c0_99] : memref<128x128xbf16, #tpu.memory_space<vmem>>, vector<128x128xbf16>
    %cst_100 = arith.constant dense<0.000000e+00> : vector<8x128xf32>
    %226 = tpu.matmul %224, %225, %cst_100 {dimension_numbers = #tpu.dot_dimension_numbers<[1], [0], [0], [1], [0, 0, 1, 1], [], []>} : vector<8x128xbf16>, vector<128x128xbf16>, vector<8x128xf32> -> vector<8x128xf32>
    %c0_101 = arith.constant 0 : index
    %c0_102 = arith.constant 0 : index
    %227 = vector.load %arg24[%c0_101, %c0_102] : memref<1x128xf32, #tpu.memory_space<vmem>>, vector<1x128xf32>
    %c0_103 = arith.constant 0 : index
    %c0_104 = arith.constant 0 : index
    %228 = vector.load %arg25[%c0_103, %c0_104] : memref<1x128xf32, #tpu.memory_space<vmem>>, vector<1x128xf32>
    %cst_105 = arith.constant dense<0.000000e+00> : vector<8xf32>
    %229 = vector.multi_reduction <add>, %226, %cst_105 [1] : vector<8x128xf32> to vector<8xf32>
    %230 = vector.shape_cast %229 : vector<8xf32> to vector<8x1xf32>
    %cst_106 = arith.constant 1.280000e+02 : f32
    %231 = vector.broadcast %cst_106 : f32 to vector<8x1xf32>
    %232 = arith.divf %230, %231 : vector<8x1xf32>
    %233 = vector.broadcast %232 : vector<8x1xf32> to vector<8x128xf32>
    %234 = arith.subf %226, %233 : vector<8x128xf32>
    %235 = vector.broadcast %232 : vector<8x1xf32> to vector<8x128xf32>
    %236 = arith.subf %226, %235 : vector<8x128xf32>
    %237 = arith.mulf %234, %236 : vector<8x128xf32>
    %cst_107 = arith.constant dense<0.000000e+00> : vector<8xf32>
    %238 = vector.multi_reduction <add>, %237, %cst_107 [1] : vector<8x128xf32> to vector<8xf32>
    %239 = vector.shape_cast %238 : vector<8xf32> to vector<8x1xf32>
    %cst_108 = arith.constant 1.280000e+02 : f32
    %240 = vector.broadcast %cst_108 : f32 to vector<8x1xf32>
    %241 = arith.divf %239, %240 : vector<8x1xf32>
    %242 = vector.broadcast %232 : vector<8x1xf32> to vector<8x128xf32>
    %243 = arith.subf %226, %242 : vector<8x128xf32>
    %cst_109 = arith.constant 9.99999974E-6 : f32
    %244 = vector.broadcast %cst_109 : f32 to vector<8x1xf32>
    %245 = arith.addf %241, %244 : vector<8x1xf32>
    %246 = math.rsqrt %245 : vector<8x1xf32>
    %247 = vector.broadcast %246 : vector<8x1xf32> to vector<8x128xf32>
    %248 = arith.mulf %243, %247 : vector<8x128xf32>
    %249 = vector.broadcast %227 : vector<1x128xf32> to vector<8x128xf32>
    %250 = arith.mulf %248, %249 : vector<8x128xf32>
    %251 = vector.broadcast %228 : vector<1x128xf32> to vector<8x128xf32>
    %252 = arith.addf %250, %251 : vector<8x128xf32>
    %253 = arith.addf %252, %192 : vector<8x128xf32>
    %cst_110 = arith.constant 0.000000e+00 : f32
    %254 = vector.broadcast %cst_110 : f32 to vector<8x128xf32>
    %255 = arith.maximumf %253, %254 : vector<8x128xf32>
    %c0_111 = arith.constant 0 : index
    %c0_112 = arith.constant 0 : index
    %256 = vector.load %arg26[%c0_111, %c0_112] : memref<1x128xf32, #tpu.memory_space<vmem>>, vector<1x128xf32>
    %257 = vector.broadcast %256 : vector<1x128xf32> to vector<8x128xf32>
    %258 = arith.mulf %255, %257 : vector<8x128xf32>
    %cst_113 = arith.constant dense<0.000000e+00> : vector<8xf32>
    %259 = vector.multi_reduction <add>, %258, %cst_113 [1] : vector<8x128xf32> to vector<8xf32>
    %260 = vector.shape_cast %259 : vector<8xf32> to vector<8x1xf32>
    %c0_114 = arith.constant 0 : index
    %c0_115 = arith.constant 0 : index
    %261 = vector.load %arg27[%c0_114, %c0_115] : memref<1x1xf32, #tpu.memory_space<vmem>>, vector<1x1xf32>
    %262 = vector.broadcast %261 : vector<1x1xf32> to vector<8x1xf32>
    %263 = arith.addf %260, %262 : vector<8x1xf32>
    %c0_i32_116 = arith.constant 0 : i32
    %264 = vector.broadcast %c0_i32_116 : i32 to vector<1x128xi32>
    %265 = arith.cmpi eq, %32, %264 : vector<1x128xi32>
    %cst_117 = arith.constant 0.000000e+00 : f32
    %266 = vector.shape_cast %265 : vector<1x128xi1> to vector<1x128xi1>
    %267 = vector.broadcast %266 : vector<1x128xi1> to vector<8x128xi1>
    %268 = vector.shape_cast %263 : vector<8x1xf32> to vector<8x1xf32>
    %269 = vector.broadcast %268 : vector<8x1xf32> to vector<8x128xf32>
    %270 = vector.broadcast %cst_117 : f32 to vector<8x128xf32>
    %271 = arith.select %267, %269, %270 : vector<8x128xi1>, vector<8x128xf32>
    %272 = arith.addf %33, %271 : vector<8x128xf32>
    %c1_118 = arith.constant 1 : index
    %c0_119 = arith.constant 0 : index
    %c0_120 = arith.constant 0 : index
    %273 = vector.load %arg3[%c1_118, %c0_119, %c0_120] : memref<6x128x128xbf16, #tpu.memory_space<vmem>>, vector<1x128x128xbf16>
    %274 = vector.shape_cast %273 : vector<1x128x128xbf16> to vector<128x128xbf16>
    %cst_121 = arith.constant dense<0.000000e+00> : vector<8x128xf32>
    %275 = tpu.matmul %1, %274, %cst_121 {dimension_numbers = #tpu.dot_dimension_numbers<[1], [0], [0], [1], [0, 0, 1, 1], [], []>} : vector<8x128xbf16>, vector<128x128xbf16>, vector<8x128xf32> -> vector<8x128xf32>
    %c1_122 = arith.constant 1 : index
    %c0_123 = arith.constant 0 : index
    %c0_124 = arith.constant 0 : index
    %276 = vector.load %arg4[%c1_122, %c0_123, %c0_124] : memref<6x1x128xf32, #tpu.memory_space<vmem>>, vector<1x1x128xf32>
    %277 = vector.shape_cast %276 : vector<1x1x128xf32> to vector<1x128xf32>
    %c1_125 = arith.constant 1 : index
    %c0_126 = arith.constant 0 : index
    %c0_127 = arith.constant 0 : index
    %278 = vector.load %arg5[%c1_125, %c0_126, %c0_127] : memref<6x1x128xf32, #tpu.memory_space<vmem>>, vector<1x1x128xf32>
    %279 = vector.shape_cast %278 : vector<1x1x128xf32> to vector<1x128xf32>
    %cst_128 = arith.constant dense<0.000000e+00> : vector<8xf32>
    %280 = vector.multi_reduction <add>, %275, %cst_128 [1] : vector<8x128xf32> to vector<8xf32>
    %281 = vector.shape_cast %280 : vector<8xf32> to vector<8x1xf32>
    %cst_129 = arith.constant 1.280000e+02 : f32
    %282 = vector.broadcast %cst_129 : f32 to vector<8x1xf32>
    %283 = arith.divf %281, %282 : vector<8x1xf32>
    %284 = vector.broadcast %283 : vector<8x1xf32> to vector<8x128xf32>
    %285 = arith.subf %275, %284 : vector<8x128xf32>
    %286 = vector.broadcast %283 : vector<8x1xf32> to vector<8x128xf32>
    %287 = arith.subf %275, %286 : vector<8x128xf32>
    %288 = arith.mulf %285, %287 : vector<8x128xf32>
    %cst_130 = arith.constant dense<0.000000e+00> : vector<8xf32>
    %289 = vector.multi_reduction <add>, %288, %cst_130 [1] : vector<8x128xf32> to vector<8xf32>
    %290 = vector.shape_cast %289 : vector<8xf32> to vector<8x1xf32>
    %cst_131 = arith.constant 1.280000e+02 : f32
    %291 = vector.broadcast %cst_131 : f32 to vector<8x1xf32>
    %292 = arith.divf %290, %291 : vector<8x1xf32>
    %293 = vector.broadcast %283 : vector<8x1xf32> to vector<8x128xf32>
    %294 = arith.subf %275, %293 : vector<8x128xf32>
    %cst_132 = arith.constant 9.99999974E-6 : f32
    %295 = vector.broadcast %cst_132 : f32 to vector<8x1xf32>
    %296 = arith.addf %292, %295 : vector<8x1xf32>
    %297 = math.rsqrt %296 : vector<8x1xf32>
    %298 = vector.broadcast %297 : vector<8x1xf32> to vector<8x128xf32>
    %299 = arith.mulf %294, %298 : vector<8x128xf32>
    %300 = vector.broadcast %277 : vector<1x128xf32> to vector<8x128xf32>
    %301 = arith.mulf %299, %300 : vector<8x128xf32>
    %302 = vector.broadcast %279 : vector<1x128xf32> to vector<8x128xf32>
    %303 = arith.addf %301, %302 : vector<8x128xf32>
    %cst_133 = arith.constant 0.000000e+00 : f32
    %304 = vector.broadcast %cst_133 : f32 to vector<8x128xf32>
    %305 = arith.maximumf %303, %304 : vector<8x128xf32>
    %306 = arith.truncf %305 : vector<8x128xf32> to vector<8x128xbf16>
    %c1_134 = arith.constant 1 : index
    %c0_135 = arith.constant 0 : index
    %c0_136 = arith.constant 0 : index
    %307 = vector.load %arg6[%c1_134, %c0_135, %c0_136] : memref<6x128x128xbf16, #tpu.memory_space<vmem>>, vector<1x128x128xbf16>
    %308 = vector.shape_cast %307 : vector<1x128x128xbf16> to vector<128x128xbf16>
    %cst_137 = arith.constant dense<0.000000e+00> : vector<8x128xf32>
    %309 = tpu.matmul %306, %308, %cst_137 {dimension_numbers = #tpu.dot_dimension_numbers<[1], [0], [0], [1], [0, 0, 1, 1], [], []>} : vector<8x128xbf16>, vector<128x128xbf16>, vector<8x128xf32> -> vector<8x128xf32>
    %c1_138 = arith.constant 1 : index
    %c0_139 = arith.constant 0 : index
    %c0_140 = arith.constant 0 : index
    %310 = vector.load %arg7[%c1_138, %c0_139, %c0_140] : memref<6x1x128xf32, #tpu.memory_space<vmem>>, vector<1x1x128xf32>
    %311 = vector.shape_cast %310 : vector<1x1x128xf32> to vector<1x128xf32>
    %c1_141 = arith.constant 1 : index
    %c0_142 = arith.constant 0 : index
    %c0_143 = arith.constant 0 : index
    %312 = vector.load %arg8[%c1_141, %c0_142, %c0_143] : memref<6x1x128xf32, #tpu.memory_space<vmem>>, vector<1x1x128xf32>
    %313 = vector.shape_cast %312 : vector<1x1x128xf32> to vector<1x128xf32>
    %cst_144 = arith.constant dense<0.000000e+00> : vector<8xf32>
    %314 = vector.multi_reduction <add>, %309, %cst_144 [1] : vector<8x128xf32> to vector<8xf32>
    %315 = vector.shape_cast %314 : vector<8xf32> to vector<8x1xf32>
    %cst_145 = arith.constant 1.280000e+02 : f32
    %316 = vector.broadcast %cst_145 : f32 to vector<8x1xf32>
    %317 = arith.divf %315, %316 : vector<8x1xf32>
    %318 = vector.broadcast %317 : vector<8x1xf32> to vector<8x128xf32>
    %319 = arith.subf %309, %318 : vector<8x128xf32>
    %320 = vector.broadcast %317 : vector<8x1xf32> to vector<8x128xf32>
    %321 = arith.subf %309, %320 : vector<8x128xf32>
    %322 = arith.mulf %319, %321 : vector<8x128xf32>
    %cst_146 = arith.constant dense<0.000000e+00> : vector<8xf32>
    %323 = vector.multi_reduction <add>, %322, %cst_146 [1] : vector<8x128xf32> to vector<8xf32>
    %324 = vector.shape_cast %323 : vector<8xf32> to vector<8x1xf32>
    %cst_147 = arith.constant 1.280000e+02 : f32
    %325 = vector.broadcast %cst_147 : f32 to vector<8x1xf32>
    %326 = arith.divf %324, %325 : vector<8x1xf32>
    %327 = vector.broadcast %317 : vector<8x1xf32> to vector<8x128xf32>
    %328 = arith.subf %309, %327 : vector<8x128xf32>
    %cst_148 = arith.constant 9.99999974E-6 : f32
    %329 = vector.broadcast %cst_148 : f32 to vector<8x1xf32>
    %330 = arith.addf %326, %329 : vector<8x1xf32>
    %331 = math.rsqrt %330 : vector<8x1xf32>
    %332 = vector.broadcast %331 : vector<8x1xf32> to vector<8x128xf32>
    %333 = arith.mulf %328, %332 : vector<8x128xf32>
    %334 = vector.broadcast %311 : vector<1x128xf32> to vector<8x128xf32>
    %335 = arith.mulf %333, %334 : vector<8x128xf32>
    %336 = vector.broadcast %313 : vector<1x128xf32> to vector<8x128xf32>
    %337 = arith.addf %335, %336 : vector<8x128xf32>
    %338 = arith.addf %337, %0 : vector<8x128xf32>
    %cst_149 = arith.constant 0.000000e+00 : f32
    %339 = vector.broadcast %cst_149 : f32 to vector<8x128xf32>
    %340 = arith.maximumf %338, %339 : vector<8x128xf32>
    %341 = arith.truncf %340 : vector<8x128xf32> to vector<8x128xbf16>
    %c1_150 = arith.constant 1 : index
    %c0_151 = arith.constant 0 : index
    %c0_152 = arith.constant 0 : index
    %342 = vector.load %arg9[%c1_150, %c0_151, %c0_152] : memref<6x128x128xbf16, #tpu.memory_space<vmem>>, vector<1x128x128xbf16>
    %343 = vector.shape_cast %342 : vector<1x128x128xbf16> to vector<128x128xbf16>
    %cst_153 = arith.constant dense<0.000000e+00> : vector<8x128xf32>
    %344 = tpu.matmul %341, %343, %cst_153 {dimension_numbers = #tpu.dot_dimension_numbers<[1], [0], [0], [1], [0, 0, 1, 1], [], []>} : vector<8x128xbf16>, vector<128x128xbf16>, vector<8x128xf32> -> vector<8x128xf32>
    %c1_154 = arith.constant 1 : index
    %c0_155 = arith.constant 0 : index
    %c0_156 = arith.constant 0 : index
    %345 = vector.load %arg10[%c1_154, %c0_155, %c0_156] : memref<6x1x128xf32, #tpu.memory_space<vmem>>, vector<1x1x128xf32>
    %346 = vector.shape_cast %345 : vector<1x1x128xf32> to vector<1x128xf32>
    %347 = vector.broadcast %346 : vector<1x128xf32> to vector<8x128xf32>
    %348 = arith.addf %344, %347 : vector<8x128xf32>
    %349 = arith.addf %348, %31 : vector<8x128xf32>
    %c0_157 = arith.constant 0 : index
    %c128 = arith.constant 128 : index
    %350 = vector.load %arg28[%c0_157, %c128] : memref<8x768xf32, #tpu.memory_space<vmem>>, vector<8x128xf32>
    tpu.vector_store %arg28[%c0_157, %c128], %349 {strides = array<i32>} : memref<8x768xf32, #tpu.memory_space<vmem>>, vector<8x128xf32>,
    %351 = vector.extract_strided_slice %349 {offsets = [0, 58], sizes = [8, 1], strides = [1, 1]} : vector<8x128xf32> to vector<8x1xf32>
    %352 = arith.subf %2, %351 : vector<8x1xf32>
    %353 = vector.extract_strided_slice %349 {offsets = [0, 59], sizes = [8, 1], strides = [1, 1]} : vector<8x128xf32> to vector<8x1xf32>
    %354 = arith.subf %3, %353 : vector<8x1xf32>
    %355 = vector.broadcast %352 : vector<8x1xf32> to vector<8x128xf32>
    %356 = vector.broadcast %34 : vector<1x128xf32> to vector<8x128xf32>
    %357 = arith.mulf %355, %356 : vector<8x128xf32>
    %358 = vector.broadcast %354 : vector<8x1xf32> to vector<8x128xf32>
    %359 = vector.broadcast %35 : vector<1x128xf32> to vector<8x128xf32>
    %360 = arith.mulf %358, %359 : vector<8x128xf32>
    %361 = arith.addf %357, %360 : vector<8x128xf32>
    %362 = vector.broadcast %36 : vector<1x128xf32> to vector<8x128xf32>
    %363 = arith.addf %361, %362 : vector<8x128xf32>
    %cst_158 = arith.constant 0.000000e+00 : f32
    %364 = vector.broadcast %cst_158 : f32 to vector<8x128xf32>
    %365 = arith.maximumf %363, %364 : vector<8x128xf32>
    %366 = arith.truncf %365 : vector<8x128xf32> to vector<8x128xbf16>
    %c0_159 = arith.constant 0 : index
    %c0_160 = arith.constant 0 : index
    %367 = vector.load %arg13[%c0_159, %c0_160] : memref<128x128xbf16, #tpu.memory_space<vmem>>, vector<128x128xbf16>
    %cst_161 = arith.constant dense<0.000000e+00> : vector<8x128xf32>
    %368 = tpu.matmul %366, %367, %cst_161 {dimension_numbers = #tpu.dot_dimension_numbers<[1], [0], [0], [1], [0, 0, 1, 1], [], []>} : vector<8x128xbf16>, vector<128x128xbf16>, vector<8x128xf32> -> vector<8x128xf32>
    %c0_162 = arith.constant 0 : index
    %c0_163 = arith.constant 0 : index
    %369 = vector.load %arg14[%c0_162, %c0_163] : memref<1x128xf32, #tpu.memory_space<vmem>>, vector<1x128xf32>
    %c0_164 = arith.constant 0 : index
    %c0_165 = arith.constant 0 : index
    %370 = vector.load %arg15[%c0_164, %c0_165] : memref<1x128xf32, #tpu.memory_space<vmem>>, vector<1x128xf32>
    %cst_166 = arith.constant dense<0.000000e+00> : vector<8xf32>
    %371 = vector.multi_reduction <add>, %368, %cst_166 [1] : vector<8x128xf32> to vector<8xf32>
    %372 = vector.shape_cast %371 : vector<8xf32> to vector<8x1xf32>
    %cst_167 = arith.constant 1.280000e+02 : f32
    %373 = vector.broadcast %cst_167 : f32 to vector<8x1xf32>
    %374 = arith.divf %372, %373 : vector<8x1xf32>
    %375 = vector.broadcast %374 : vector<8x1xf32> to vector<8x128xf32>
    %376 = arith.subf %368, %375 : vector<8x128xf32>
    %377 = vector.broadcast %374 : vector<8x1xf32> to vector<8x128xf32>
    %378 = arith.subf %368, %377 : vector<8x128xf32>
    %379 = arith.mulf %376, %378 : vector<8x128xf32>
    %cst_168 = arith.constant dense<0.000000e+00> : vector<8xf32>
    %380 = vector.multi_reduction <add>, %379, %cst_168 [1] : vector<8x128xf32> to vector<8xf32>
    %381 = vector.shape_cast %380 : vector<8xf32> to vector<8x1xf32>
    %cst_169 = arith.constant 1.280000e+02 : f32
    %382 = vector.broadcast %cst_169 : f32 to vector<8x1xf32>
    %383 = arith.divf %381, %382 : vector<8x1xf32>
    %384 = vector.broadcast %374 : vector<8x1xf32> to vector<8x128xf32>
    %385 = arith.subf %368, %384 : vector<8x128xf32>
    %cst_170 = arith.constant 9.99999974E-6 : f32
    %386 = vector.broadcast %cst_170 : f32 to vector<8x1xf32>
    %387 = arith.addf %383, %386 : vector<8x1xf32>
    %388 = math.rsqrt %387 : vector<8x1xf32>
    %389 = vector.broadcast %388 : vector<8x1xf32> to vector<8x128xf32>
    %390 = arith.mulf %385, %389 : vector<8x128xf32>
    %391 = vector.broadcast %369 : vector<1x128xf32> to vector<8x128xf32>
    %392 = arith.mulf %390, %391 : vector<8x128xf32>
    %393 = vector.broadcast %370 : vector<1x128xf32> to vector<8x128xf32>
    %394 = arith.addf %392, %393 : vector<8x128xf32>
    %cst_171 = arith.constant 0.000000e+00 : f32
    %395 = vector.broadcast %cst_171 : f32 to vector<8x128xf32>
    %396 = arith.maximumf %394, %395 : vector<8x128xf32>
    %397 = arith.truncf %396 : vector<8x128xf32> to vector<8x128xbf16>
    %c0_172 = arith.constant 0 : index
    %c0_173 = arith.constant 0 : index
    %398 = vector.load %arg16[%c0_172, %c0_173] : memref<128x128xbf16, #tpu.memory_space<vmem>>, vector<128x128xbf16>
    %cst_174 = arith.constant dense<0.000000e+00> : vector<8x128xf32>
    %399 = tpu.matmul %397, %398, %cst_174 {dimension_numbers = #tpu.dot_dimension_numbers<[1], [0], [0], [1], [0, 0, 1, 1], [], []>} : vector<8x128xbf16>, vector<128x128xbf16>, vector<8x128xf32> -> vector<8x128xf32>
    %400 = arith.addf %399, %5 : vector<8x128xf32>
    %c0_175 = arith.constant 0 : index
    %c0_176 = arith.constant 0 : index
    %401 = vector.load %arg18[%c0_175, %c0_176] : memref<1x128xf32, #tpu.memory_space<vmem>>, vector<1x128xf32>
    %c0_177 = arith.constant 0 : index
    %c0_178 = arith.constant 0 : index
    %402 = vector.load %arg19[%c0_177, %c0_178] : memref<1x128xf32, #tpu.memory_space<vmem>>, vector<1x128xf32>
    %cst_179 = arith.constant dense<0.000000e+00> : vector<8xf32>
    %403 = vector.multi_reduction <add>, %400, %cst_179 [1] : vector<8x128xf32> to vector<8xf32>
    %404 = vector.shape_cast %403 : vector<8xf32> to vector<8x1xf32>
    %cst_180 = arith.constant 1.280000e+02 : f32
    %405 = vector.broadcast %cst_180 : f32 to vector<8x1xf32>
    %406 = arith.divf %404, %405 : vector<8x1xf32>
    %407 = vector.broadcast %406 : vector<8x1xf32> to vector<8x128xf32>
    %408 = arith.subf %400, %407 : vector<8x128xf32>
    %409 = vector.broadcast %406 : vector<8x1xf32> to vector<8x128xf32>
    %410 = arith.subf %400, %409 : vector<8x128xf32>
    %411 = arith.mulf %408, %410 : vector<8x128xf32>
    %cst_181 = arith.constant dense<0.000000e+00> : vector<8xf32>
    %412 = vector.multi_reduction <add>, %411, %cst_181 [1] : vector<8x128xf32> to vector<8xf32>
    %413 = vector.shape_cast %412 : vector<8xf32> to vector<8x1xf32>
    %cst_182 = arith.constant 1.280000e+02 : f32
    %414 = vector.broadcast %cst_182 : f32 to vector<8x1xf32>
    %415 = arith.divf %413, %414 : vector<8x1xf32>
    %416 = vector.broadcast %406 : vector<8x1xf32> to vector<8x128xf32>
    %417 = arith.subf %400, %416 : vector<8x128xf32>
    %cst_183 = arith.constant 9.99999974E-6 : f32
    %418 = vector.broadcast %cst_183 : f32 to vector<8x1xf32>
    %419 = arith.addf %415, %418 : vector<8x1xf32>
    %420 = math.rsqrt %419 : vector<8x1xf32>
    %421 = vector.broadcast %420 : vector<8x1xf32> to vector<8x128xf32>
    %422 = arith.mulf %417, %421 : vector<8x128xf32>
    %423 = vector.broadcast %401 : vector<1x128xf32> to vector<8x128xf32>
    %424 = arith.mulf %422, %423 : vector<8x128xf32>
    %425 = vector.broadcast %402 : vector<1x128xf32> to vector<8x128xf32>
    %426 = arith.addf %424, %425 : vector<8x128xf32>
    %cst_184 = arith.constant 0.000000e+00 : f32
    %427 = vector.broadcast %cst_184 : f32 to vector<8x128xf32>
    %428 = arith.maximumf %426, %427 : vector<8x128xf32>
    %429 = arith.truncf %428 : vector<8x128xf32> to vector<8x128xbf16>
    %c0_185 = arith.constant 0 : index
    %c0_186 = arith.constant 0 : index
    %430 = vector.load %arg20[%c0_185, %c0_186] : memref<128x128xbf16, #tpu.memory_space<vmem>>, vector<128x128xbf16>
    %cst_187 = arith.constant dense<0.000000e+00> : vector<8x128xf32>
    %431 = tpu.matmul %429, %430, %cst_187 {dimension_numbers = #tpu.dot_dimension_numbers<[1], [0], [0], [1], [0, 0, 1, 1], [], []>} : vector<8x128xbf16>, vector<128x128xbf16>, vector<8x128xf32> -> vector<8x128xf32>
    %c0_188 = arith.constant 0 : index
    %c0_189 = arith.constant 0 : index
    %432 = vector.load %arg21[%c0_188, %c0_189] : memref<1x128xf32, #tpu.memory_space<vmem>>, vector<1x128xf32>
    %c0_190 = arith.constant 0 : index
    %c0_191 = arith.constant 0 : index
    %433 = vector.load %arg22[%c0_190, %c0_191] : memref<1x128xf32, #tpu.memory_space<vmem>>, vector<1x128xf32>
    %cst_192 = arith.constant dense<0.000000e+00> : vector<8xf32>
    %434 = vector.multi_reduction <add>, %431, %cst_192 [1] : vector<8x128xf32> to vector<8xf32>
    %435 = vector.shape_cast %434 : vector<8xf32> to vector<8x1xf32>
    %cst_193 = arith.constant 1.280000e+02 : f32
    %436 = vector.broadcast %cst_193 : f32 to vector<8x1xf32>
    %437 = arith.divf %435, %436 : vector<8x1xf32>
    %438 = vector.broadcast %437 : vector<8x1xf32> to vector<8x128xf32>
    %439 = arith.subf %431, %438 : vector<8x128xf32>
    %440 = vector.broadcast %437 : vector<8x1xf32> to vector<8x128xf32>
    %441 = arith.subf %431, %440 : vector<8x128xf32>
    %442 = arith.mulf %439, %441 : vector<8x128xf32>
    %cst_194 = arith.constant dense<0.000000e+00> : vector<8xf32>
    %443 = vector.multi_reduction <add>, %442, %cst_194 [1] : vector<8x128xf32> to vector<8xf32>
    %444 = vector.shape_cast %443 : vector<8xf32> to vector<8x1xf32>
    %cst_195 = arith.constant 1.280000e+02 : f32
    %445 = vector.broadcast %cst_195 : f32 to vector<8x1xf32>
    %446 = arith.divf %444, %445 : vector<8x1xf32>
    %447 = vector.broadcast %437 : vector<8x1xf32> to vector<8x128xf32>
    %448 = arith.subf %431, %447 : vector<8x128xf32>
    %cst_196 = arith.constant 9.99999974E-6 : f32
    %449 = vector.broadcast %cst_196 : f32 to vector<8x1xf32>
    %450 = arith.addf %446, %449 : vector<8x1xf32>
    %451 = math.rsqrt %450 : vector<8x1xf32>
    %452 = vector.broadcast %451 : vector<8x1xf32> to vector<8x128xf32>
    %453 = arith.mulf %448, %452 : vector<8x128xf32>
    %454 = vector.broadcast %432 : vector<1x128xf32> to vector<8x128xf32>
    %455 = arith.mulf %453, %454 : vector<8x128xf32>
    %456 = vector.broadcast %433 : vector<1x128xf32> to vector<8x128xf32>
    %457 = arith.addf %455, %456 : vector<8x128xf32>
    %cst_197 = arith.constant 0.000000e+00 : f32
    %458 = vector.broadcast %cst_197 : f32 to vector<8x128xf32>
    %459 = arith.maximumf %457, %458 : vector<8x128xf32>
    %460 = arith.truncf %459 : vector<8x128xf32> to vector<8x128xbf16>
    %c0_198 = arith.constant 0 : index
    %c0_199 = arith.constant 0 : index
    %461 = vector.load %arg23[%c0_198, %c0_199] : memref<128x128xbf16, #tpu.memory_space<vmem>>, vector<128x128xbf16>
    %cst_200 = arith.constant dense<0.000000e+00> : vector<8x128xf32>
    %462 = tpu.matmul %460, %461, %cst_200 {dimension_numbers = #tpu.dot_dimension_numbers<[1], [0], [0], [1], [0, 0, 1, 1], [], []>} : vector<8x128xbf16>, vector<128x128xbf16>, vector<8x128xf32> -> vector<8x128xf32>
    %c0_201 = arith.constant 0 : index
    %c0_202 = arith.constant 0 : index
    %463 = vector.load %arg24[%c0_201, %c0_202] : memref<1x128xf32, #tpu.memory_space<vmem>>, vector<1x128xf32>
    %c0_203 = arith.constant 0 : index
    %c0_204 = arith.constant 0 : index
    %464 = vector.load %arg25[%c0_203, %c0_204] : memref<1x128xf32, #tpu.memory_space<vmem>>, vector<1x128xf32>
    %cst_205 = arith.constant dense<0.000000e+00> : vector<8xf32>
    %465 = vector.multi_reduction <add>, %462, %cst_205 [1] : vector<8x128xf32> to vector<8xf32>
    %466 = vector.shape_cast %465 : vector<8xf32> to vector<8x1xf32>
    %cst_206 = arith.constant 1.280000e+02 : f32
    %467 = vector.broadcast %cst_206 : f32 to vector<8x1xf32>
    %468 = arith.divf %466, %467 : vector<8x1xf32>
    %469 = vector.broadcast %468 : vector<8x1xf32> to vector<8x128xf32>
    %470 = arith.subf %462, %469 : vector<8x128xf32>
    %471 = vector.broadcast %468 : vector<8x1xf32> to vector<8x128xf32>
    %472 = arith.subf %462, %471 : vector<8x128xf32>
    %473 = arith.mulf %470, %472 : vector<8x128xf32>
    %cst_207 = arith.constant dense<0.000000e+00> : vector<8xf32>
    %474 = vector.multi_reduction <add>, %473, %cst_207 [1] : vector<8x128xf32> to vector<8xf32>
    %475 = vector.shape_cast %474 : vector<8xf32> to vector<8x1xf32>
    %cst_208 = arith.constant 1.280000e+02 : f32
    %476 = vector.broadcast %cst_208 : f32 to vector<8x1xf32>
    %477 = arith.divf %475, %476 : vector<8x1xf32>
    %478 = vector.broadcast %468 : vector<8x1xf32> to vector<8x128xf32>
    %479 = arith.subf %462, %478 : vector<8x128xf32>
    %cst_209 = arith.constant 9.99999974E-6 : f32
    %480 = vector.broadcast %cst_209 : f32 to vector<8x1xf32>
    %481 = arith.addf %477, %480 : vector<8x1xf32>
    %482 = math.rsqrt %481 : vector<8x1xf32>
    %483 = vector.broadcast %482 : vector<8x1xf32> to vector<8x128xf32>
    %484 = arith.mulf %479, %483 : vector<8x128xf32>
    %485 = vector.broadcast %463 : vector<1x128xf32> to vector<8x128xf32>
    %486 = arith.mulf %484, %485 : vector<8x128xf32>
    %487 = vector.broadcast %464 : vector<1x128xf32> to vector<8x128xf32>
    %488 = arith.addf %486, %487 : vector<8x128xf32>
    %489 = arith.addf %488, %428 : vector<8x128xf32>
    %cst_210 = arith.constant 0.000000e+00 : f32
    %490 = vector.broadcast %cst_210 : f32 to vector<8x128xf32>
    %491 = arith.maximumf %489, %490 : vector<8x128xf32>
    %c0_211 = arith.constant 0 : index
    %c0_212 = arith.constant 0 : index
    %492 = vector.load %arg26[%c0_211, %c0_212] : memref<1x128xf32, #tpu.memory_space<vmem>>, vector<1x128xf32>
    %493 = vector.broadcast %492 : vector<1x128xf32> to vector<8x128xf32>
    %494 = arith.mulf %491, %493 : vector<8x128xf32>
    %cst_213 = arith.constant dense<0.000000e+00> : vector<8xf32>
    %495 = vector.multi_reduction <add>, %494, %cst_213 [1] : vector<8x128xf32> to vector<8xf32>
    %496 = vector.shape_cast %495 : vector<8xf32> to vector<8x1xf32>
    %c0_214 = arith.constant 0 : index
    %c0_215 = arith.constant 0 : index
    %497 = vector.load %arg27[%c0_214, %c0_215] : memref<1x1xf32, #tpu.memory_space<vmem>>, vector<1x1xf32>
    %498 = vector.broadcast %497 : vector<1x1xf32> to vector<8x1xf32>
    %499 = arith.addf %496, %498 : vector<8x1xf32>
    %c1_i32_216 = arith.constant 1 : i32
    %500 = vector.broadcast %c1_i32_216 : i32 to vector<1x128xi32>
    %501 = arith.cmpi eq, %32, %500 : vector<1x128xi32>
    %cst_217 = arith.constant 0.000000e+00 : f32
    %502 = vector.shape_cast %501 : vector<1x128xi1> to vector<1x128xi1>
    %503 = vector.broadcast %502 : vector<1x128xi1> to vector<8x128xi1>
    %504 = vector.shape_cast %499 : vector<8x1xf32> to vector<8x1xf32>
    %505 = vector.broadcast %504 : vector<8x1xf32> to vector<8x128xf32>
    %506 = vector.broadcast %cst_217 : f32 to vector<8x128xf32>
    %507 = arith.select %503, %505, %506 : vector<8x128xi1>, vector<8x128xf32>
    %508 = arith.addf %272, %507 : vector<8x128xf32>
    %c2 = arith.constant 2 : index
    %c0_218 = arith.constant 0 : index
    %c0_219 = arith.constant 0 : index
    %509 = vector.load %arg3[%c2, %c0_218, %c0_219] : memref<6x128x128xbf16, #tpu.memory_space<vmem>>, vector<1x128x128xbf16>
    %510 = vector.shape_cast %509 : vector<1x128x128xbf16> to vector<128x128xbf16>
    %cst_220 = arith.constant dense<0.000000e+00> : vector<8x128xf32>
    %511 = tpu.matmul %1, %510, %cst_220 {dimension_numbers = #tpu.dot_dimension_numbers<[1], [0], [0], [1], [0, 0, 1, 1], [], []>} : vector<8x128xbf16>, vector<128x128xbf16>, vector<8x128xf32> -> vector<8x128xf32>
    %c2_221 = arith.constant 2 : index
    %c0_222 = arith.constant 0 : index
    %c0_223 = arith.constant 0 : index
    %512 = vector.load %arg4[%c2_221, %c0_222, %c0_223] : memref<6x1x128xf32, #tpu.memory_space<vmem>>, vector<1x1x128xf32>
    %513 = vector.shape_cast %512 : vector<1x1x128xf32> to vector<1x128xf32>
    %c2_224 = arith.constant 2 : index
    %c0_225 = arith.constant 0 : index
    %c0_226 = arith.constant 0 : index
    %514 = vector.load %arg5[%c2_224, %c0_225, %c0_226] : memref<6x1x128xf32, #tpu.memory_space<vmem>>, vector<1x1x128xf32>
    %515 = vector.shape_cast %514 : vector<1x1x128xf32> to vector<1x128xf32>
    %cst_227 = arith.constant dense<0.000000e+00> : vector<8xf32>
    %516 = vector.multi_reduction <add>, %511, %cst_227 [1] : vector<8x128xf32> to vector<8xf32>
    %517 = vector.shape_cast %516 : vector<8xf32> to vector<8x1xf32>
    %cst_228 = arith.constant 1.280000e+02 : f32
    %518 = vector.broadcast %cst_228 : f32 to vector<8x1xf32>
    %519 = arith.divf %517, %518 : vector<8x1xf32>
    %520 = vector.broadcast %519 : vector<8x1xf32> to vector<8x128xf32>
    %521 = arith.subf %511, %520 : vector<8x128xf32>
    %522 = vector.broadcast %519 : vector<8x1xf32> to vector<8x128xf32>
    %523 = arith.subf %511, %522 : vector<8x128xf32>
    %524 = arith.mulf %521, %523 : vector<8x128xf32>
    %cst_229 = arith.constant dense<0.000000e+00> : vector<8xf32>
    %525 = vector.multi_reduction <add>, %524, %cst_229 [1] : vector<8x128xf32> to vector<8xf32>
    %526 = vector.shape_cast %525 : vector<8xf32> to vector<8x1xf32>
    %cst_230 = arith.constant 1.280000e+02 : f32
    %527 = vector.broadcast %cst_230 : f32 to vector<8x1xf32>
    %528 = arith.divf %526, %527 : vector<8x1xf32>
    %529 = vector.broadcast %519 : vector<8x1xf32> to vector<8x128xf32>
    %530 = arith.subf %511, %529 : vector<8x128xf32>
    %cst_231 = arith.constant 9.99999974E-6 : f32
    %531 = vector.broadcast %cst_231 : f32 to vector<8x1xf32>
    %532 = arith.addf %528, %531 : vector<8x1xf32>
    %533 = math.rsqrt %532 : vector<8x1xf32>
    %534 = vector.broadcast %533 : vector<8x1xf32> to vector<8x128xf32>
    %535 = arith.mulf %530, %534 : vector<8x128xf32>
    %536 = vector.broadcast %513 : vector<1x128xf32> to vector<8x128xf32>
    %537 = arith.mulf %535, %536 : vector<8x128xf32>
    %538 = vector.broadcast %515 : vector<1x128xf32> to vector<8x128xf32>
    %539 = arith.addf %537, %538 : vector<8x128xf32>
    %cst_232 = arith.constant 0.000000e+00 : f32
    %540 = vector.broadcast %cst_232 : f32 to vector<8x128xf32>
    %541 = arith.maximumf %539, %540 : vector<8x128xf32>
    %542 = arith.truncf %541 : vector<8x128xf32> to vector<8x128xbf16>
    %c2_233 = arith.constant 2 : index
    %c0_234 = arith.constant 0 : index
    %c0_235 = arith.constant 0 : index
    %543 = vector.load %arg6[%c2_233, %c0_234, %c0_235] : memref<6x128x128xbf16, #tpu.memory_space<vmem>>, vector<1x128x128xbf16>
    %544 = vector.shape_cast %543 : vector<1x128x128xbf16> to vector<128x128xbf16>
    %cst_236 = arith.constant dense<0.000000e+00> : vector<8x128xf32>
    %545 = tpu.matmul %542, %544, %cst_236 {dimension_numbers = #tpu.dot_dimension_numbers<[1], [0], [0], [1], [0, 0, 1, 1], [], []>} : vector<8x128xbf16>, vector<128x128xbf16>, vector<8x128xf32> -> vector<8x128xf32>
    %c2_237 = arith.constant 2 : index
    %c0_238 = arith.constant 0 : index
    %c0_239 = arith.constant 0 : index
    %546 = vector.load %arg7[%c2_237, %c0_238, %c0_239] : memref<6x1x128xf32, #tpu.memory_space<vmem>>, vector<1x1x128xf32>
    %547 = vector.shape_cast %546 : vector<1x1x128xf32> to vector<1x128xf32>
    %c2_240 = arith.constant 2 : index
    %c0_241 = arith.constant 0 : index
    %c0_242 = arith.constant 0 : index
    %548 = vector.load %arg8[%c2_240, %c0_241, %c0_242] : memref<6x1x128xf32, #tpu.memory_space<vmem>>, vector<1x1x128xf32>
    %549 = vector.shape_cast %548 : vector<1x1x128xf32> to vector<1x128xf32>
    %cst_243 = arith.constant dense<0.000000e+00> : vector<8xf32>
    %550 = vector.multi_reduction <add>, %545, %cst_243 [1] : vector<8x128xf32> to vector<8xf32>
    %551 = vector.shape_cast %550 : vector<8xf32> to vector<8x1xf32>
    %cst_244 = arith.constant 1.280000e+02 : f32
    %552 = vector.broadcast %cst_244 : f32 to vector<8x1xf32>
    %553 = arith.divf %551, %552 : vector<8x1xf32>
    %554 = vector.broadcast %553 : vector<8x1xf32> to vector<8x128xf32>
    %555 = arith.subf %545, %554 : vector<8x128xf32>
    %556 = vector.broadcast %553 : vector<8x1xf32> to vector<8x128xf32>
    %557 = arith.subf %545, %556 : vector<8x128xf32>
    %558 = arith.mulf %555, %557 : vector<8x128xf32>
    %cst_245 = arith.constant dense<0.000000e+00> : vector<8xf32>
    %559 = vector.multi_reduction <add>, %558, %cst_245 [1] : vector<8x128xf32> to vector<8xf32>
    %560 = vector.shape_cast %559 : vector<8xf32> to vector<8x1xf32>
    %cst_246 = arith.constant 1.280000e+02 : f32
    %561 = vector.broadcast %cst_246 : f32 to vector<8x1xf32>
    %562 = arith.divf %560, %561 : vector<8x1xf32>
    %563 = vector.broadcast %553 : vector<8x1xf32> to vector<8x128xf32>
    %564 = arith.subf %545, %563 : vector<8x128xf32>
    %cst_247 = arith.constant 9.99999974E-6 : f32
    %565 = vector.broadcast %cst_247 : f32 to vector<8x1xf32>
    %566 = arith.addf %562, %565 : vector<8x1xf32>
    %567 = math.rsqrt %566 : vector<8x1xf32>
    %568 = vector.broadcast %567 : vector<8x1xf32> to vector<8x128xf32>
    %569 = arith.mulf %564, %568 : vector<8x128xf32>
    %570 = vector.broadcast %547 : vector<1x128xf32> to vector<8x128xf32>
    %571 = arith.mulf %569, %570 : vector<8x128xf32>
    %572 = vector.broadcast %549 : vector<1x128xf32> to vector<8x128xf32>
    %573 = arith.addf %571, %572 : vector<8x128xf32>
    %574 = arith.addf %573, %0 : vector<8x128xf32>
    %cst_248 = arith.constant 0.000000e+00 : f32
    %575 = vector.broadcast %cst_248 : f32 to vector<8x128xf32>
    %576 = arith.maximumf %574, %575 : vector<8x128xf32>
    %577 = arith.truncf %576 : vector<8x128xf32> to vector<8x128xbf16>
    %c2_249 = arith.constant 2 : index
    %c0_250 = arith.constant 0 : index
    %c0_251 = arith.constant 0 : index
    %578 = vector.load %arg9[%c2_249, %c0_250, %c0_251] : memref<6x128x128xbf16, #tpu.memory_space<vmem>>, vector<1x128x128xbf16>
    %579 = vector.shape_cast %578 : vector<1x128x128xbf16> to vector<128x128xbf16>
    %cst_252 = arith.constant dense<0.000000e+00> : vector<8x128xf32>
    %580 = tpu.matmul %577, %579, %cst_252 {dimension_numbers = #tpu.dot_dimension_numbers<[1], [0], [0], [1], [0, 0, 1, 1], [], []>} : vector<8x128xbf16>, vector<128x128xbf16>, vector<8x128xf32> -> vector<8x128xf32>
    %c2_253 = arith.constant 2 : index
    %c0_254 = arith.constant 0 : index
    %c0_255 = arith.constant 0 : index
    %581 = vector.load %arg10[%c2_253, %c0_254, %c0_255] : memref<6x1x128xf32, #tpu.memory_space<vmem>>, vector<1x1x128xf32>
    %582 = vector.shape_cast %581 : vector<1x1x128xf32> to vector<1x128xf32>
    %583 = vector.broadcast %582 : vector<1x128xf32> to vector<8x128xf32>
    %584 = arith.addf %580, %583 : vector<8x128xf32>
    %585 = arith.addf %584, %31 : vector<8x128xf32>
    %c0_256 = arith.constant 0 : index
    %c256 = arith.constant 256 : index
    %586 = vector.load %arg28[%c0_256, %c256] : memref<8x768xf32, #tpu.memory_space<vmem>>, vector<8x128xf32>
    tpu.vector_store %arg28[%c0_256, %c256], %585 {strides = array<i32>} : memref<8x768xf32, #tpu.memory_space<vmem>>, vector<8x128xf32>,
    %587 = vector.extract_strided_slice %585 {offsets = [0, 58], sizes = [8, 1], strides = [1, 1]} : vector<8x128xf32> to vector<8x1xf32>
    %588 = arith.subf %2, %587 : vector<8x1xf32>
    %589 = vector.extract_strided_slice %585 {offsets = [0, 59], sizes = [8, 1], strides = [1, 1]} : vector<8x128xf32> to vector<8x1xf32>
    %590 = arith.subf %3, %589 : vector<8x1xf32>
    %591 = vector.broadcast %588 : vector<8x1xf32> to vector<8x128xf32>
    %592 = vector.broadcast %34 : vector<1x128xf32> to vector<8x128xf32>
    %593 = arith.mulf %591, %592 : vector<8x128xf32>
    %594 = vector.broadcast %590 : vector<8x1xf32> to vector<8x128xf32>
    %595 = vector.broadcast %35 : vector<1x128xf32> to vector<8x128xf32>
    %596 = arith.mulf %594, %595 : vector<8x128xf32>
    %597 = arith.addf %593, %596 : vector<8x128xf32>
    %598 = vector.broadcast %36 : vector<1x128xf32> to vector<8x128xf32>
    %599 = arith.addf %597, %598 : vector<8x128xf32>
    %cst_257 = arith.constant 0.000000e+00 : f32
    %600 = vector.broadcast %cst_257 : f32 to vector<8x128xf32>
    %601 = arith.maximumf %599, %600 : vector<8x128xf32>
    %602 = arith.truncf %601 : vector<8x128xf32> to vector<8x128xbf16>
    %c0_258 = arith.constant 0 : index
    %c0_259 = arith.constant 0 : index
    %603 = vector.load %arg13[%c0_258, %c0_259] : memref<128x128xbf16, #tpu.memory_space<vmem>>, vector<128x128xbf16>
    %cst_260 = arith.constant dense<0.000000e+00> : vector<8x128xf32>
    %604 = tpu.matmul %602, %603, %cst_260 {dimension_numbers = #tpu.dot_dimension_numbers<[1], [0], [0], [1], [0, 0, 1, 1], [], []>} : vector<8x128xbf16>, vector<128x128xbf16>, vector<8x128xf32> -> vector<8x128xf32>
    %c0_261 = arith.constant 0 : index
    %c0_262 = arith.constant 0 : index
    %605 = vector.load %arg14[%c0_261, %c0_262] : memref<1x128xf32, #tpu.memory_space<vmem>>, vector<1x128xf32>
    %c0_263 = arith.constant 0 : index
    %c0_264 = arith.constant 0 : index
    %606 = vector.load %arg15[%c0_263, %c0_264] : memref<1x128xf32, #tpu.memory_space<vmem>>, vector<1x128xf32>
    %cst_265 = arith.constant dense<0.000000e+00> : vector<8xf32>
    %607 = vector.multi_reduction <add>, %604, %cst_265 [1] : vector<8x128xf32> to vector<8xf32>
    %608 = vector.shape_cast %607 : vector<8xf32> to vector<8x1xf32>
    %cst_266 = arith.constant 1.280000e+02 : f32
    %609 = vector.broadcast %cst_266 : f32 to vector<8x1xf32>
    %610 = arith.divf %608, %609 : vector<8x1xf32>
    %611 = vector.broadcast %610 : vector<8x1xf32> to vector<8x128xf32>
    %612 = arith.subf %604, %611 : vector<8x128xf32>
    %613 = vector.broadcast %610 : vector<8x1xf32> to vector<8x128xf32>
    %614 = arith.subf %604, %613 : vector<8x128xf32>
    %615 = arith.mulf %612, %614 : vector<8x128xf32>
    %cst_267 = arith.constant dense<0.000000e+00> : vector<8xf32>
    %616 = vector.multi_reduction <add>, %615, %cst_267 [1] : vector<8x128xf32> to vector<8xf32>
    %617 = vector.shape_cast %616 : vector<8xf32> to vector<8x1xf32>
    %cst_268 = arith.constant 1.280000e+02 : f32
    %618 = vector.broadcast %cst_268 : f32 to vector<8x1xf32>
    %619 = arith.divf %617, %618 : vector<8x1xf32>
    %620 = vector.broadcast %610 : vector<8x1xf32> to vector<8x128xf32>
    %621 = arith.subf %604, %620 : vector<8x128xf32>
    %cst_269 = arith.constant 9.99999974E-6 : f32
    %622 = vector.broadcast %cst_269 : f32 to vector<8x1xf32>
    %623 = arith.addf %619, %622 : vector<8x1xf32>
    %624 = math.rsqrt %623 : vector<8x1xf32>
    %625 = vector.broadcast %624 : vector<8x1xf32> to vector<8x128xf32>
    %626 = arith.mulf %621, %625 : vector<8x128xf32>
    %627 = vector.broadcast %605 : vector<1x128xf32> to vector<8x128xf32>
    %628 = arith.mulf %626, %627 : vector<8x128xf32>
    %629 = vector.broadcast %606 : vector<1x128xf32> to vector<8x128xf32>
    %630 = arith.addf %628, %629 : vector<8x128xf32>
    %cst_270 = arith.constant 0.000000e+00 : f32
    %631 = vector.broadcast %cst_270 : f32 to vector<8x128xf32>
    %632 = arith.maximumf %630, %631 : vector<8x128xf32>
    %633 = arith.truncf %632 : vector<8x128xf32> to vector<8x128xbf16>
    %c0_271 = arith.constant 0 : index
    %c0_272 = arith.constant 0 : index
    %634 = vector.load %arg16[%c0_271, %c0_272] : memref<128x128xbf16, #tpu.memory_space<vmem>>, vector<128x128xbf16>
    %cst_273 = arith.constant dense<0.000000e+00> : vector<8x128xf32>
    %635 = tpu.matmul %633, %634, %cst_273 {dimension_numbers = #tpu.dot_dimension_numbers<[1], [0], [0], [1], [0, 0, 1, 1], [], []>} : vector<8x128xbf16>, vector<128x128xbf16>, vector<8x128xf32> -> vector<8x128xf32>
    %636 = arith.addf %635, %5 : vector<8x128xf32>
    %c0_274 = arith.constant 0 : index
    %c0_275 = arith.constant 0 : index
    %637 = vector.load %arg18[%c0_274, %c0_275] : memref<1x128xf32, #tpu.memory_space<vmem>>, vector<1x128xf32>
    %c0_276 = arith.constant 0 : index
    %c0_277 = arith.constant 0 : index
    %638 = vector.load %arg19[%c0_276, %c0_277] : memref<1x128xf32, #tpu.memory_space<vmem>>, vector<1x128xf32>
    %cst_278 = arith.constant dense<0.000000e+00> : vector<8xf32>
    %639 = vector.multi_reduction <add>, %636, %cst_278 [1] : vector<8x128xf32> to vector<8xf32>
    %640 = vector.shape_cast %639 : vector<8xf32> to vector<8x1xf32>
    %cst_279 = arith.constant 1.280000e+02 : f32
    %641 = vector.broadcast %cst_279 : f32 to vector<8x1xf32>
    %642 = arith.divf %640, %641 : vector<8x1xf32>
    %643 = vector.broadcast %642 : vector<8x1xf32> to vector<8x128xf32>
    %644 = arith.subf %636, %643 : vector<8x128xf32>
    %645 = vector.broadcast %642 : vector<8x1xf32> to vector<8x128xf32>
    %646 = arith.subf %636, %645 : vector<8x128xf32>
    %647 = arith.mulf %644, %646 : vector<8x128xf32>
    %cst_280 = arith.constant dense<0.000000e+00> : vector<8xf32>
    %648 = vector.multi_reduction <add>, %647, %cst_280 [1] : vector<8x128xf32> to vector<8xf32>
    %649 = vector.shape_cast %648 : vector<8xf32> to vector<8x1xf32>
    %cst_281 = arith.constant 1.280000e+02 : f32
    %650 = vector.broadcast %cst_281 : f32 to vector<8x1xf32>
    %651 = arith.divf %649, %650 : vector<8x1xf32>
    %652 = vector.broadcast %642 : vector<8x1xf32> to vector<8x128xf32>
    %653 = arith.subf %636, %652 : vector<8x128xf32>
    %cst_282 = arith.constant 9.99999974E-6 : f32
    %654 = vector.broadcast %cst_282 : f32 to vector<8x1xf32>
    %655 = arith.addf %651, %654 : vector<8x1xf32>
    %656 = math.rsqrt %655 : vector<8x1xf32>
    %657 = vector.broadcast %656 : vector<8x1xf32> to vector<8x128xf32>
    %658 = arith.mulf %653, %657 : vector<8x128xf32>
    %659 = vector.broadcast %637 : vector<1x128xf32> to vector<8x128xf32>
    %660 = arith.mulf %658, %659 : vector<8x128xf32>
    %661 = vector.broadcast %638 : vector<1x128xf32> to vector<8x128xf32>
    %662 = arith.addf %660, %661 : vector<8x128xf32>
    %cst_283 = arith.constant 0.000000e+00 : f32
    %663 = vector.broadcast %cst_283 : f32 to vector<8x128xf32>
    %664 = arith.maximumf %662, %663 : vector<8x128xf32>
    %665 = arith.truncf %664 : vector<8x128xf32> to vector<8x128xbf16>
    %c0_284 = arith.constant 0 : index
    %c0_285 = arith.constant 0 : index
    %666 = vector.load %arg20[%c0_284, %c0_285] : memref<128x128xbf16, #tpu.memory_space<vmem>>, vector<128x128xbf16>
    %cst_286 = arith.constant dense<0.000000e+00> : vector<8x128xf32>
    %667 = tpu.matmul %665, %666, %cst_286 {dimension_numbers = #tpu.dot_dimension_numbers<[1], [0], [0], [1], [0, 0, 1, 1], [], []>} : vector<8x128xbf16>, vector<128x128xbf16>, vector<8x128xf32> -> vector<8x128xf32>
    %c0_287 = arith.constant 0 : index
    %c0_288 = arith.constant 0 : index
    %668 = vector.load %arg21[%c0_287, %c0_288] : memref<1x128xf32, #tpu.memory_space<vmem>>, vector<1x128xf32>
    %c0_289 = arith.constant 0 : index
    %c0_290 = arith.constant 0 : index
    %669 = vector.load %arg22[%c0_289, %c0_290] : memref<1x128xf32, #tpu.memory_space<vmem>>, vector<1x128xf32>
    %cst_291 = arith.constant dense<0.000000e+00> : vector<8xf32>
    %670 = vector.multi_reduction <add>, %667, %cst_291 [1] : vector<8x128xf32> to vector<8xf32>
    %671 = vector.shape_cast %670 : vector<8xf32> to vector<8x1xf32>
    %cst_292 = arith.constant 1.280000e+02 : f32
    %672 = vector.broadcast %cst_292 : f32 to vector<8x1xf32>
    %673 = arith.divf %671, %672 : vector<8x1xf32>
    %674 = vector.broadcast %673 : vector<8x1xf32> to vector<8x128xf32>
    %675 = arith.subf %667, %674 : vector<8x128xf32>
    %676 = vector.broadcast %673 : vector<8x1xf32> to vector<8x128xf32>
    %677 = arith.subf %667, %676 : vector<8x128xf32>
    %678 = arith.mulf %675, %677 : vector<8x128xf32>
    %cst_293 = arith.constant dense<0.000000e+00> : vector<8xf32>
    %679 = vector.multi_reduction <add>, %678, %cst_293 [1] : vector<8x128xf32> to vector<8xf32>
    %680 = vector.shape_cast %679 : vector<8xf32> to vector<8x1xf32>
    %cst_294 = arith.constant 1.280000e+02 : f32
    %681 = vector.broadcast %cst_294 : f32 to vector<8x1xf32>
    %682 = arith.divf %680, %681 : vector<8x1xf32>
    %683 = vector.broadcast %673 : vector<8x1xf32> to vector<8x128xf32>
    %684 = arith.subf %667, %683 : vector<8x128xf32>
    %cst_295 = arith.constant 9.99999974E-6 : f32
    %685 = vector.broadcast %cst_295 : f32 to vector<8x1xf32>
    %686 = arith.addf %682, %685 : vector<8x1xf32>
    %687 = math.rsqrt %686 : vector<8x1xf32>
    %688 = vector.broadcast %687 : vector<8x1xf32> to vector<8x128xf32>
    %689 = arith.mulf %684, %688 : vector<8x128xf32>
    %690 = vector.broadcast %668 : vector<1x128xf32> to vector<8x128xf32>
    %691 = arith.mulf %689, %690 : vector<8x128xf32>
    %692 = vector.broadcast %669 : vector<1x128xf32> to vector<8x128xf32>
    %693 = arith.addf %691, %692 : vector<8x128xf32>
    %cst_296 = arith.constant 0.000000e+00 : f32
    %694 = vector.broadcast %cst_296 : f32 to vector<8x128xf32>
    %695 = arith.maximumf %693, %694 : vector<8x128xf32>
    %696 = arith.truncf %695 : vector<8x128xf32> to vector<8x128xbf16>
    %c0_297 = arith.constant 0 : index
    %c0_298 = arith.constant 0 : index
    %697 = vector.load %arg23[%c0_297, %c0_298] : memref<128x128xbf16, #tpu.memory_space<vmem>>, vector<128x128xbf16>
    %cst_299 = arith.constant dense<0.000000e+00> : vector<8x128xf32>
    %698 = tpu.matmul %696, %697, %cst_299 {dimension_numbers = #tpu.dot_dimension_numbers<[1], [0], [0], [1], [0, 0, 1, 1], [], []>} : vector<8x128xbf16>, vector<128x128xbf16>, vector<8x128xf32> -> vector<8x128xf32>
    %c0_300 = arith.constant 0 : index
    %c0_301 = arith.constant 0 : index
    %699 = vector.load %arg24[%c0_300, %c0_301] : memref<1x128xf32, #tpu.memory_space<vmem>>, vector<1x128xf32>
    %c0_302 = arith.constant 0 : index
    %c0_303 = arith.constant 0 : index
    %700 = vector.load %arg25[%c0_302, %c0_303] : memref<1x128xf32, #tpu.memory_space<vmem>>, vector<1x128xf32>
    %cst_304 = arith.constant dense<0.000000e+00> : vector<8xf32>
    %701 = vector.multi_reduction <add>, %698, %cst_304 [1] : vector<8x128xf32> to vector<8xf32>
    %702 = vector.shape_cast %701 : vector<8xf32> to vector<8x1xf32>
    %cst_305 = arith.constant 1.280000e+02 : f32
    %703 = vector.broadcast %cst_305 : f32 to vector<8x1xf32>
    %704 = arith.divf %702, %703 : vector<8x1xf32>
    %705 = vector.broadcast %704 : vector<8x1xf32> to vector<8x128xf32>
    %706 = arith.subf %698, %705 : vector<8x128xf32>
    %707 = vector.broadcast %704 : vector<8x1xf32> to vector<8x128xf32>
    %708 = arith.subf %698, %707 : vector<8x128xf32>
    %709 = arith.mulf %706, %708 : vector<8x128xf32>
    %cst_306 = arith.constant dense<0.000000e+00> : vector<8xf32>
    %710 = vector.multi_reduction <add>, %709, %cst_306 [1] : vector<8x128xf32> to vector<8xf32>
    %711 = vector.shape_cast %710 : vector<8xf32> to vector<8x1xf32>
    %cst_307 = arith.constant 1.280000e+02 : f32
    %712 = vector.broadcast %cst_307 : f32 to vector<8x1xf32>
    %713 = arith.divf %711, %712 : vector<8x1xf32>
    %714 = vector.broadcast %704 : vector<8x1xf32> to vector<8x128xf32>
    %715 = arith.subf %698, %714 : vector<8x128xf32>
    %cst_308 = arith.constant 9.99999974E-6 : f32
    %716 = vector.broadcast %cst_308 : f32 to vector<8x1xf32>
    %717 = arith.addf %713, %716 : vector<8x1xf32>
    %718 = math.rsqrt %717 : vector<8x1xf32>
    %719 = vector.broadcast %718 : vector<8x1xf32> to vector<8x128xf32>
    %720 = arith.mulf %715, %719 : vector<8x128xf32>
    %721 = vector.broadcast %699 : vector<1x128xf32> to vector<8x128xf32>
    %722 = arith.mulf %720, %721 : vector<8x128xf32>
    %723 = vector.broadcast %700 : vector<1x128xf32> to vector<8x128xf32>
    %724 = arith.addf %722, %723 : vector<8x128xf32>
    %725 = arith.addf %724, %664 : vector<8x128xf32>
    %cst_309 = arith.constant 0.000000e+00 : f32
    %726 = vector.broadcast %cst_309 : f32 to vector<8x128xf32>
    %727 = arith.maximumf %725, %726 : vector<8x128xf32>
    %c0_310 = arith.constant 0 : index
    %c0_311 = arith.constant 0 : index
    %728 = vector.load %arg26[%c0_310, %c0_311] : memref<1x128xf32, #tpu.memory_space<vmem>>, vector<1x128xf32>
    %729 = vector.broadcast %728 : vector<1x128xf32> to vector<8x128xf32>
    %730 = arith.mulf %727, %729 : vector<8x128xf32>
    %cst_312 = arith.constant dense<0.000000e+00> : vector<8xf32>
    %731 = vector.multi_reduction <add>, %730, %cst_312 [1] : vector<8x128xf32> to vector<8xf32>
    %732 = vector.shape_cast %731 : vector<8xf32> to vector<8x1xf32>
    %c0_313 = arith.constant 0 : index
    %c0_314 = arith.constant 0 : index
    %733 = vector.load %arg27[%c0_313, %c0_314] : memref<1x1xf32, #tpu.memory_space<vmem>>, vector<1x1xf32>
    %734 = vector.broadcast %733 : vector<1x1xf32> to vector<8x1xf32>
    %735 = arith.addf %732, %734 : vector<8x1xf32>
    %c2_i32_315 = arith.constant 2 : i32
    %736 = vector.broadcast %c2_i32_315 : i32 to vector<1x128xi32>
    %737 = arith.cmpi eq, %32, %736 : vector<1x128xi32>
    %cst_316 = arith.constant 0.000000e+00 : f32
    %738 = vector.shape_cast %737 : vector<1x128xi1> to vector<1x128xi1>
    %739 = vector.broadcast %738 : vector<1x128xi1> to vector<8x128xi1>
    %740 = vector.shape_cast %735 : vector<8x1xf32> to vector<8x1xf32>
    %741 = vector.broadcast %740 : vector<8x1xf32> to vector<8x128xf32>
    %742 = vector.broadcast %cst_316 : f32 to vector<8x128xf32>
    %743 = arith.select %739, %741, %742 : vector<8x128xi1>, vector<8x128xf32>
    %744 = arith.addf %508, %743 : vector<8x128xf32>
    %c3 = arith.constant 3 : index
    %c0_317 = arith.constant 0 : index
    %c0_318 = arith.constant 0 : index
    %745 = vector.load %arg3[%c3, %c0_317, %c0_318] : memref<6x128x128xbf16, #tpu.memory_space<vmem>>, vector<1x128x128xbf16>
    %746 = vector.shape_cast %745 : vector<1x128x128xbf16> to vector<128x128xbf16>
    %cst_319 = arith.constant dense<0.000000e+00> : vector<8x128xf32>
    %747 = tpu.matmul %1, %746, %cst_319 {dimension_numbers = #tpu.dot_dimension_numbers<[1], [0], [0], [1], [0, 0, 1, 1], [], []>} : vector<8x128xbf16>, vector<128x128xbf16>, vector<8x128xf32> -> vector<8x128xf32>
    %c3_320 = arith.constant 3 : index
    %c0_321 = arith.constant 0 : index
    %c0_322 = arith.constant 0 : index
    %748 = vector.load %arg4[%c3_320, %c0_321, %c0_322] : memref<6x1x128xf32, #tpu.memory_space<vmem>>, vector<1x1x128xf32>
    %749 = vector.shape_cast %748 : vector<1x1x128xf32> to vector<1x128xf32>
    %c3_323 = arith.constant 3 : index
    %c0_324 = arith.constant 0 : index
    %c0_325 = arith.constant 0 : index
    %750 = vector.load %arg5[%c3_323, %c0_324, %c0_325] : memref<6x1x128xf32, #tpu.memory_space<vmem>>, vector<1x1x128xf32>
    %751 = vector.shape_cast %750 : vector<1x1x128xf32> to vector<1x128xf32>
    %cst_326 = arith.constant dense<0.000000e+00> : vector<8xf32>
    %752 = vector.multi_reduction <add>, %747, %cst_326 [1] : vector<8x128xf32> to vector<8xf32>
    %753 = vector.shape_cast %752 : vector<8xf32> to vector<8x1xf32>
    %cst_327 = arith.constant 1.280000e+02 : f32
    %754 = vector.broadcast %cst_327 : f32 to vector<8x1xf32>
    %755 = arith.divf %753, %754 : vector<8x1xf32>
    %756 = vector.broadcast %755 : vector<8x1xf32> to vector<8x128xf32>
    %757 = arith.subf %747, %756 : vector<8x128xf32>
    %758 = vector.broadcast %755 : vector<8x1xf32> to vector<8x128xf32>
    %759 = arith.subf %747, %758 : vector<8x128xf32>
    %760 = arith.mulf %757, %759 : vector<8x128xf32>
    %cst_328 = arith.constant dense<0.000000e+00> : vector<8xf32>
    %761 = vector.multi_reduction <add>, %760, %cst_328 [1] : vector<8x128xf32> to vector<8xf32>
    %762 = vector.shape_cast %761 : vector<8xf32> to vector<8x1xf32>
    %cst_329 = arith.constant 1.280000e+02 : f32
    %763 = vector.broadcast %cst_329 : f32 to vector<8x1xf32>
    %764 = arith.divf %762, %763 : vector<8x1xf32>
    %765 = vector.broadcast %755 : vector<8x1xf32> to vector<8x128xf32>
    %766 = arith.subf %747, %765 : vector<8x128xf32>
    %cst_330 = arith.constant 9.99999974E-6 : f32
    %767 = vector.broadcast %cst_330 : f32 to vector<8x1xf32>
    %768 = arith.addf %764, %767 : vector<8x1xf32>
    %769 = math.rsqrt %768 : vector<8x1xf32>
    %770 = vector.broadcast %769 : vector<8x1xf32> to vector<8x128xf32>
    %771 = arith.mulf %766, %770 : vector<8x128xf32>
    %772 = vector.broadcast %749 : vector<1x128xf32> to vector<8x128xf32>
    %773 = arith.mulf %771, %772 : vector<8x128xf32>
    %774 = vector.broadcast %751 : vector<1x128xf32> to vector<8x128xf32>
    %775 = arith.addf %773, %774 : vector<8x128xf32>
    %cst_331 = arith.constant 0.000000e+00 : f32
    %776 = vector.broadcast %cst_331 : f32 to vector<8x128xf32>
    %777 = arith.maximumf %775, %776 : vector<8x128xf32>
    %778 = arith.truncf %777 : vector<8x128xf32> to vector<8x128xbf16>
    %c3_332 = arith.constant 3 : index
    %c0_333 = arith.constant 0 : index
    %c0_334 = arith.constant 0 : index
    %779 = vector.load %arg6[%c3_332, %c0_333, %c0_334] : memref<6x128x128xbf16, #tpu.memory_space<vmem>>, vector<1x128x128xbf16>
    %780 = vector.shape_cast %779 : vector<1x128x128xbf16> to vector<128x128xbf16>
    %cst_335 = arith.constant dense<0.000000e+00> : vector<8x128xf32>
    %781 = tpu.matmul %778, %780, %cst_335 {dimension_numbers = #tpu.dot_dimension_numbers<[1], [0], [0], [1], [0, 0, 1, 1], [], []>} : vector<8x128xbf16>, vector<128x128xbf16>, vector<8x128xf32> -> vector<8x128xf32>
    %c3_336 = arith.constant 3 : index
    %c0_337 = arith.constant 0 : index
    %c0_338 = arith.constant 0 : index
    %782 = vector.load %arg7[%c3_336, %c0_337, %c0_338] : memref<6x1x128xf32, #tpu.memory_space<vmem>>, vector<1x1x128xf32>
    %783 = vector.shape_cast %782 : vector<1x1x128xf32> to vector<1x128xf32>
    %c3_339 = arith.constant 3 : index
    %c0_340 = arith.constant 0 : index
    %c0_341 = arith.constant 0 : index
    %784 = vector.load %arg8[%c3_339, %c0_340, %c0_341] : memref<6x1x128xf32, #tpu.memory_space<vmem>>, vector<1x1x128xf32>
    %785 = vector.shape_cast %784 : vector<1x1x128xf32> to vector<1x128xf32>
    %cst_342 = arith.constant dense<0.000000e+00> : vector<8xf32>
    %786 = vector.multi_reduction <add>, %781, %cst_342 [1] : vector<8x128xf32> to vector<8xf32>
    %787 = vector.shape_cast %786 : vector<8xf32> to vector<8x1xf32>
    %cst_343 = arith.constant 1.280000e+02 : f32
    %788 = vector.broadcast %cst_343 : f32 to vector<8x1xf32>
    %789 = arith.divf %787, %788 : vector<8x1xf32>
    %790 = vector.broadcast %789 : vector<8x1xf32> to vector<8x128xf32>
    %791 = arith.subf %781, %790 : vector<8x128xf32>
    %792 = vector.broadcast %789 : vector<8x1xf32> to vector<8x128xf32>
    %793 = arith.subf %781, %792 : vector<8x128xf32>
    %794 = arith.mulf %791, %793 : vector<8x128xf32>
    %cst_344 = arith.constant dense<0.000000e+00> : vector<8xf32>
    %795 = vector.multi_reduction <add>, %794, %cst_344 [1] : vector<8x128xf32> to vector<8xf32>
    %796 = vector.shape_cast %795 : vector<8xf32> to vector<8x1xf32>
    %cst_345 = arith.constant 1.280000e+02 : f32
    %797 = vector.broadcast %cst_345 : f32 to vector<8x1xf32>
    %798 = arith.divf %796, %797 : vector<8x1xf32>
    %799 = vector.broadcast %789 : vector<8x1xf32> to vector<8x128xf32>
    %800 = arith.subf %781, %799 : vector<8x128xf32>
    %cst_346 = arith.constant 9.99999974E-6 : f32
    %801 = vector.broadcast %cst_346 : f32 to vector<8x1xf32>
    %802 = arith.addf %798, %801 : vector<8x1xf32>
    %803 = math.rsqrt %802 : vector<8x1xf32>
    %804 = vector.broadcast %803 : vector<8x1xf32> to vector<8x128xf32>
    %805 = arith.mulf %800, %804 : vector<8x128xf32>
    %806 = vector.broadcast %783 : vector<1x128xf32> to vector<8x128xf32>
    %807 = arith.mulf %805, %806 : vector<8x128xf32>
    %808 = vector.broadcast %785 : vector<1x128xf32> to vector<8x128xf32>
    %809 = arith.addf %807, %808 : vector<8x128xf32>
    %810 = arith.addf %809, %0 : vector<8x128xf32>
    %cst_347 = arith.constant 0.000000e+00 : f32
    %811 = vector.broadcast %cst_347 : f32 to vector<8x128xf32>
    %812 = arith.maximumf %810, %811 : vector<8x128xf32>
    %813 = arith.truncf %812 : vector<8x128xf32> to vector<8x128xbf16>
    %c3_348 = arith.constant 3 : index
    %c0_349 = arith.constant 0 : index
    %c0_350 = arith.constant 0 : index
    %814 = vector.load %arg9[%c3_348, %c0_349, %c0_350] : memref<6x128x128xbf16, #tpu.memory_space<vmem>>, vector<1x128x128xbf16>
    %815 = vector.shape_cast %814 : vector<1x128x128xbf16> to vector<128x128xbf16>
    %cst_351 = arith.constant dense<0.000000e+00> : vector<8x128xf32>
    %816 = tpu.matmul %813, %815, %cst_351 {dimension_numbers = #tpu.dot_dimension_numbers<[1], [0], [0], [1], [0, 0, 1, 1], [], []>} : vector<8x128xbf16>, vector<128x128xbf16>, vector<8x128xf32> -> vector<8x128xf32>
    %c3_352 = arith.constant 3 : index
    %c0_353 = arith.constant 0 : index
    %c0_354 = arith.constant 0 : index
    %817 = vector.load %arg10[%c3_352, %c0_353, %c0_354] : memref<6x1x128xf32, #tpu.memory_space<vmem>>, vector<1x1x128xf32>
    %818 = vector.shape_cast %817 : vector<1x1x128xf32> to vector<1x128xf32>
    %819 = vector.broadcast %818 : vector<1x128xf32> to vector<8x128xf32>
    %820 = arith.addf %816, %819 : vector<8x128xf32>
    %821 = arith.addf %820, %31 : vector<8x128xf32>
    %c0_355 = arith.constant 0 : index
    %c384 = arith.constant 384 : index
    %822 = vector.load %arg28[%c0_355, %c384] : memref<8x768xf32, #tpu.memory_space<vmem>>, vector<8x128xf32>
    tpu.vector_store %arg28[%c0_355, %c384], %821 {strides = array<i32>} : memref<8x768xf32, #tpu.memory_space<vmem>>, vector<8x128xf32>,
    %823 = vector.extract_strided_slice %821 {offsets = [0, 58], sizes = [8, 1], strides = [1, 1]} : vector<8x128xf32> to vector<8x1xf32>
    %824 = arith.subf %2, %823 : vector<8x1xf32>
    %825 = vector.extract_strided_slice %821 {offsets = [0, 59], sizes = [8, 1], strides = [1, 1]} : vector<8x128xf32> to vector<8x1xf32>
    %826 = arith.subf %3, %825 : vector<8x1xf32>
    %827 = vector.broadcast %824 : vector<8x1xf32> to vector<8x128xf32>
    %828 = vector.broadcast %34 : vector<1x128xf32> to vector<8x128xf32>
    %829 = arith.mulf %827, %828 : vector<8x128xf32>
    %830 = vector.broadcast %826 : vector<8x1xf32> to vector<8x128xf32>
    %831 = vector.broadcast %35 : vector<1x128xf32> to vector<8x128xf32>
    %832 = arith.mulf %830, %831 : vector<8x128xf32>
    %833 = arith.addf %829, %832 : vector<8x128xf32>
    %834 = vector.broadcast %36 : vector<1x128xf32> to vector<8x128xf32>
    %835 = arith.addf %833, %834 : vector<8x128xf32>
    %cst_356 = arith.constant 0.000000e+00 : f32
    %836 = vector.broadcast %cst_356 : f32 to vector<8x128xf32>
    %837 = arith.maximumf %835, %836 : vector<8x128xf32>
    %838 = arith.truncf %837 : vector<8x128xf32> to vector<8x128xbf16>
    %c0_357 = arith.constant 0 : index
    %c0_358 = arith.constant 0 : index
    %839 = vector.load %arg13[%c0_357, %c0_358] : memref<128x128xbf16, #tpu.memory_space<vmem>>, vector<128x128xbf16>
    %cst_359 = arith.constant dense<0.000000e+00> : vector<8x128xf32>
    %840 = tpu.matmul %838, %839, %cst_359 {dimension_numbers = #tpu.dot_dimension_numbers<[1], [0], [0], [1], [0, 0, 1, 1], [], []>} : vector<8x128xbf16>, vector<128x128xbf16>, vector<8x128xf32> -> vector<8x128xf32>
    %c0_360 = arith.constant 0 : index
    %c0_361 = arith.constant 0 : index
    %841 = vector.load %arg14[%c0_360, %c0_361] : memref<1x128xf32, #tpu.memory_space<vmem>>, vector<1x128xf32>
    %c0_362 = arith.constant 0 : index
    %c0_363 = arith.constant 0 : index
    %842 = vector.load %arg15[%c0_362, %c0_363] : memref<1x128xf32, #tpu.memory_space<vmem>>, vector<1x128xf32>
    %cst_364 = arith.constant dense<0.000000e+00> : vector<8xf32>
    %843 = vector.multi_reduction <add>, %840, %cst_364 [1] : vector<8x128xf32> to vector<8xf32>
    %844 = vector.shape_cast %843 : vector<8xf32> to vector<8x1xf32>
    %cst_365 = arith.constant 1.280000e+02 : f32
    %845 = vector.broadcast %cst_365 : f32 to vector<8x1xf32>
    %846 = arith.divf %844, %845 : vector<8x1xf32>
    %847 = vector.broadcast %846 : vector<8x1xf32> to vector<8x128xf32>
    %848 = arith.subf %840, %847 : vector<8x128xf32>
    %849 = vector.broadcast %846 : vector<8x1xf32> to vector<8x128xf32>
    %850 = arith.subf %840, %849 : vector<8x128xf32>
    %851 = arith.mulf %848, %850 : vector<8x128xf32>
    %cst_366 = arith.constant dense<0.000000e+00> : vector<8xf32>
    %852 = vector.multi_reduction <add>, %851, %cst_366 [1] : vector<8x128xf32> to vector<8xf32>
    %853 = vector.shape_cast %852 : vector<8xf32> to vector<8x1xf32>
    %cst_367 = arith.constant 1.280000e+02 : f32
    %854 = vector.broadcast %cst_367 : f32 to vector<8x1xf32>
    %855 = arith.divf %853, %854 : vector<8x1xf32>
    %856 = vector.broadcast %846 : vector<8x1xf32> to vector<8x128xf32>
    %857 = arith.subf %840, %856 : vector<8x128xf32>
    %cst_368 = arith.constant 9.99999974E-6 : f32
    %858 = vector.broadcast %cst_368 : f32 to vector<8x1xf32>
    %859 = arith.addf %855, %858 : vector<8x1xf32>
    %860 = math.rsqrt %859 : vector<8x1xf32>
    %861 = vector.broadcast %860 : vector<8x1xf32> to vector<8x128xf32>
    %862 = arith.mulf %857, %861 : vector<8x128xf32>
    %863 = vector.broadcast %841 : vector<1x128xf32> to vector<8x128xf32>
    %864 = arith.mulf %862, %863 : vector<8x128xf32>
    %865 = vector.broadcast %842 : vector<1x128xf32> to vector<8x128xf32>
    %866 = arith.addf %864, %865 : vector<8x128xf32>
    %cst_369 = arith.constant 0.000000e+00 : f32
    %867 = vector.broadcast %cst_369 : f32 to vector<8x128xf32>
    %868 = arith.maximumf %866, %867 : vector<8x128xf32>
    %869 = arith.truncf %868 : vector<8x128xf32> to vector<8x128xbf16>
    %c0_370 = arith.constant 0 : index
    %c0_371 = arith.constant 0 : index
    %870 = vector.load %arg16[%c0_370, %c0_371] : memref<128x128xbf16, #tpu.memory_space<vmem>>, vector<128x128xbf16>
    %cst_372 = arith.constant dense<0.000000e+00> : vector<8x128xf32>
    %871 = tpu.matmul %869, %870, %cst_372 {dimension_numbers = #tpu.dot_dimension_numbers<[1], [0], [0], [1], [0, 0, 1, 1], [], []>} : vector<8x128xbf16>, vector<128x128xbf16>, vector<8x128xf32> -> vector<8x128xf32>
    %872 = arith.addf %871, %5 : vector<8x128xf32>
    %c0_373 = arith.constant 0 : index
    %c0_374 = arith.constant 0 : index
    %873 = vector.load %arg18[%c0_373, %c0_374] : memref<1x128xf32, #tpu.memory_space<vmem>>, vector<1x128xf32>
    %c0_375 = arith.constant 0 : index
    %c0_376 = arith.constant 0 : index
    %874 = vector.load %arg19[%c0_375, %c0_376] : memref<1x128xf32, #tpu.memory_space<vmem>>, vector<1x128xf32>
    %cst_377 = arith.constant dense<0.000000e+00> : vector<8xf32>
    %875 = vector.multi_reduction <add>, %872, %cst_377 [1] : vector<8x128xf32> to vector<8xf32>
    %876 = vector.shape_cast %875 : vector<8xf32> to vector<8x1xf32>
    %cst_378 = arith.constant 1.280000e+02 : f32
    %877 = vector.broadcast %cst_378 : f32 to vector<8x1xf32>
    %878 = arith.divf %876, %877 : vector<8x1xf32>
    %879 = vector.broadcast %878 : vector<8x1xf32> to vector<8x128xf32>
    %880 = arith.subf %872, %879 : vector<8x128xf32>
    %881 = vector.broadcast %878 : vector<8x1xf32> to vector<8x128xf32>
    %882 = arith.subf %872, %881 : vector<8x128xf32>
    %883 = arith.mulf %880, %882 : vector<8x128xf32>
    %cst_379 = arith.constant dense<0.000000e+00> : vector<8xf32>
    %884 = vector.multi_reduction <add>, %883, %cst_379 [1] : vector<8x128xf32> to vector<8xf32>
    %885 = vector.shape_cast %884 : vector<8xf32> to vector<8x1xf32>
    %cst_380 = arith.constant 1.280000e+02 : f32
    %886 = vector.broadcast %cst_380 : f32 to vector<8x1xf32>
    %887 = arith.divf %885, %886 : vector<8x1xf32>
    %888 = vector.broadcast %878 : vector<8x1xf32> to vector<8x128xf32>
    %889 = arith.subf %872, %888 : vector<8x128xf32>
    %cst_381 = arith.constant 9.99999974E-6 : f32
    %890 = vector.broadcast %cst_381 : f32 to vector<8x1xf32>
    %891 = arith.addf %887, %890 : vector<8x1xf32>
    %892 = math.rsqrt %891 : vector<8x1xf32>
    %893 = vector.broadcast %892 : vector<8x1xf32> to vector<8x128xf32>
    %894 = arith.mulf %889, %893 : vector<8x128xf32>
    %895 = vector.broadcast %873 : vector<1x128xf32> to vector<8x128xf32>
    %896 = arith.mulf %894, %895 : vector<8x128xf32>
    %897 = vector.broadcast %874 : vector<1x128xf32> to vector<8x128xf32>
    %898 = arith.addf %896, %897 : vector<8x128xf32>
    %cst_382 = arith.constant 0.000000e+00 : f32
    %899 = vector.broadcast %cst_382 : f32 to vector<8x128xf32>
    %900 = arith.maximumf %898, %899 : vector<8x128xf32>
    %901 = arith.truncf %900 : vector<8x128xf32> to vector<8x128xbf16>
    %c0_383 = arith.constant 0 : index
    %c0_384 = arith.constant 0 : index
    %902 = vector.load %arg20[%c0_383, %c0_384] : memref<128x128xbf16, #tpu.memory_space<vmem>>, vector<128x128xbf16>
    %cst_385 = arith.constant dense<0.000000e+00> : vector<8x128xf32>
    %903 = tpu.matmul %901, %902, %cst_385 {dimension_numbers = #tpu.dot_dimension_numbers<[1], [0], [0], [1], [0, 0, 1, 1], [], []>} : vector<8x128xbf16>, vector<128x128xbf16>, vector<8x128xf32> -> vector<8x128xf32>
    %c0_386 = arith.constant 0 : index
    %c0_387 = arith.constant 0 : index
    %904 = vector.load %arg21[%c0_386, %c0_387] : memref<1x128xf32, #tpu.memory_space<vmem>>, vector<1x128xf32>
    %c0_388 = arith.constant 0 : index
    %c0_389 = arith.constant 0 : index
    %905 = vector.load %arg22[%c0_388, %c0_389] : memref<1x128xf32, #tpu.memory_space<vmem>>, vector<1x128xf32>
    %cst_390 = arith.constant dense<0.000000e+00> : vector<8xf32>
    %906 = vector.multi_reduction <add>, %903, %cst_390 [1] : vector<8x128xf32> to vector<8xf32>
    %907 = vector.shape_cast %906 : vector<8xf32> to vector<8x1xf32>
    %cst_391 = arith.constant 1.280000e+02 : f32
    %908 = vector.broadcast %cst_391 : f32 to vector<8x1xf32>
    %909 = arith.divf %907, %908 : vector<8x1xf32>
    %910 = vector.broadcast %909 : vector<8x1xf32> to vector<8x128xf32>
    %911 = arith.subf %903, %910 : vector<8x128xf32>
    %912 = vector.broadcast %909 : vector<8x1xf32> to vector<8x128xf32>
    %913 = arith.subf %903, %912 : vector<8x128xf32>
    %914 = arith.mulf %911, %913 : vector<8x128xf32>
    %cst_392 = arith.constant dense<0.000000e+00> : vector<8xf32>
    %915 = vector.multi_reduction <add>, %914, %cst_392 [1] : vector<8x128xf32> to vector<8xf32>
    %916 = vector.shape_cast %915 : vector<8xf32> to vector<8x1xf32>
    %cst_393 = arith.constant 1.280000e+02 : f32
    %917 = vector.broadcast %cst_393 : f32 to vector<8x1xf32>
    %918 = arith.divf %916, %917 : vector<8x1xf32>
    %919 = vector.broadcast %909 : vector<8x1xf32> to vector<8x128xf32>
    %920 = arith.subf %903, %919 : vector<8x128xf32>
    %cst_394 = arith.constant 9.99999974E-6 : f32
    %921 = vector.broadcast %cst_394 : f32 to vector<8x1xf32>
    %922 = arith.addf %918, %921 : vector<8x1xf32>
    %923 = math.rsqrt %922 : vector<8x1xf32>
    %924 = vector.broadcast %923 : vector<8x1xf32> to vector<8x128xf32>
    %925 = arith.mulf %920, %924 : vector<8x128xf32>
    %926 = vector.broadcast %904 : vector<1x128xf32> to vector<8x128xf32>
    %927 = arith.mulf %925, %926 : vector<8x128xf32>
    %928 = vector.broadcast %905 : vector<1x128xf32> to vector<8x128xf32>
    %929 = arith.addf %927, %928 : vector<8x128xf32>
    %cst_395 = arith.constant 0.000000e+00 : f32
    %930 = vector.broadcast %cst_395 : f32 to vector<8x128xf32>
    %931 = arith.maximumf %929, %930 : vector<8x128xf32>
    %932 = arith.truncf %931 : vector<8x128xf32> to vector<8x128xbf16>
    %c0_396 = arith.constant 0 : index
    %c0_397 = arith.constant 0 : index
    %933 = vector.load %arg23[%c0_396, %c0_397] : memref<128x128xbf16, #tpu.memory_space<vmem>>, vector<128x128xbf16>
    %cst_398 = arith.constant dense<0.000000e+00> : vector<8x128xf32>
    %934 = tpu.matmul %932, %933, %cst_398 {dimension_numbers = #tpu.dot_dimension_numbers<[1], [0], [0], [1], [0, 0, 1, 1], [], []>} : vector<8x128xbf16>, vector<128x128xbf16>, vector<8x128xf32> -> vector<8x128xf32>
    %c0_399 = arith.constant 0 : index
    %c0_400 = arith.constant 0 : index
    %935 = vector.load %arg24[%c0_399, %c0_400] : memref<1x128xf32, #tpu.memory_space<vmem>>, vector<1x128xf32>
    %c0_401 = arith.constant 0 : index
    %c0_402 = arith.constant 0 : index
    %936 = vector.load %arg25[%c0_401, %c0_402] : memref<1x128xf32, #tpu.memory_space<vmem>>, vector<1x128xf32>
    %cst_403 = arith.constant dense<0.000000e+00> : vector<8xf32>
    %937 = vector.multi_reduction <add>, %934, %cst_403 [1] : vector<8x128xf32> to vector<8xf32>
    %938 = vector.shape_cast %937 : vector<8xf32> to vector<8x1xf32>
    %cst_404 = arith.constant 1.280000e+02 : f32
    %939 = vector.broadcast %cst_404 : f32 to vector<8x1xf32>
    %940 = arith.divf %938, %939 : vector<8x1xf32>
    %941 = vector.broadcast %940 : vector<8x1xf32> to vector<8x128xf32>
    %942 = arith.subf %934, %941 : vector<8x128xf32>
    %943 = vector.broadcast %940 : vector<8x1xf32> to vector<8x128xf32>
    %944 = arith.subf %934, %943 : vector<8x128xf32>
    %945 = arith.mulf %942, %944 : vector<8x128xf32>
    %cst_405 = arith.constant dense<0.000000e+00> : vector<8xf32>
    %946 = vector.multi_reduction <add>, %945, %cst_405 [1] : vector<8x128xf32> to vector<8xf32>
    %947 = vector.shape_cast %946 : vector<8xf32> to vector<8x1xf32>
    %cst_406 = arith.constant 1.280000e+02 : f32
    %948 = vector.broadcast %cst_406 : f32 to vector<8x1xf32>
    %949 = arith.divf %947, %948 : vector<8x1xf32>
    %950 = vector.broadcast %940 : vector<8x1xf32> to vector<8x128xf32>
    %951 = arith.subf %934, %950 : vector<8x128xf32>
    %cst_407 = arith.constant 9.99999974E-6 : f32
    %952 = vector.broadcast %cst_407 : f32 to vector<8x1xf32>
    %953 = arith.addf %949, %952 : vector<8x1xf32>
    %954 = math.rsqrt %953 : vector<8x1xf32>
    %955 = vector.broadcast %954 : vector<8x1xf32> to vector<8x128xf32>
    %956 = arith.mulf %951, %955 : vector<8x128xf32>
    %957 = vector.broadcast %935 : vector<1x128xf32> to vector<8x128xf32>
    %958 = arith.mulf %956, %957 : vector<8x128xf32>
    %959 = vector.broadcast %936 : vector<1x128xf32> to vector<8x128xf32>
    %960 = arith.addf %958, %959 : vector<8x128xf32>
    %961 = arith.addf %960, %900 : vector<8x128xf32>
    %cst_408 = arith.constant 0.000000e+00 : f32
    %962 = vector.broadcast %cst_408 : f32 to vector<8x128xf32>
    %963 = arith.maximumf %961, %962 : vector<8x128xf32>
    %c0_409 = arith.constant 0 : index
    %c0_410 = arith.constant 0 : index
    %964 = vector.load %arg26[%c0_409, %c0_410] : memref<1x128xf32, #tpu.memory_space<vmem>>, vector<1x128xf32>
    %965 = vector.broadcast %964 : vector<1x128xf32> to vector<8x128xf32>
    %966 = arith.mulf %963, %965 : vector<8x128xf32>
    %cst_411 = arith.constant dense<0.000000e+00> : vector<8xf32>
    %967 = vector.multi_reduction <add>, %966, %cst_411 [1] : vector<8x128xf32> to vector<8xf32>
    %968 = vector.shape_cast %967 : vector<8xf32> to vector<8x1xf32>
    %c0_412 = arith.constant 0 : index
    %c0_413 = arith.constant 0 : index
    %969 = vector.load %arg27[%c0_412, %c0_413] : memref<1x1xf32, #tpu.memory_space<vmem>>, vector<1x1xf32>
    %970 = vector.broadcast %969 : vector<1x1xf32> to vector<8x1xf32>
    %971 = arith.addf %968, %970 : vector<8x1xf32>
    %c3_i32 = arith.constant 3 : i32
    %972 = vector.broadcast %c3_i32 : i32 to vector<1x128xi32>
    %973 = arith.cmpi eq, %32, %972 : vector<1x128xi32>
    %cst_414 = arith.constant 0.000000e+00 : f32
    %974 = vector.shape_cast %973 : vector<1x128xi1> to vector<1x128xi1>
    %975 = vector.broadcast %974 : vector<1x128xi1> to vector<8x128xi1>
    %976 = vector.shape_cast %971 : vector<8x1xf32> to vector<8x1xf32>
    %977 = vector.broadcast %976 : vector<8x1xf32> to vector<8x128xf32>
    %978 = vector.broadcast %cst_414 : f32 to vector<8x128xf32>
    %979 = arith.select %975, %977, %978 : vector<8x128xi1>, vector<8x128xf32>
    %980 = arith.addf %744, %979 : vector<8x128xf32>
    %c4 = arith.constant 4 : index
    %c0_415 = arith.constant 0 : index
    %c0_416 = arith.constant 0 : index
    %981 = vector.load %arg3[%c4, %c0_415, %c0_416] : memref<6x128x128xbf16, #tpu.memory_space<vmem>>, vector<1x128x128xbf16>
    %982 = vector.shape_cast %981 : vector<1x128x128xbf16> to vector<128x128xbf16>
    %cst_417 = arith.constant dense<0.000000e+00> : vector<8x128xf32>
    %983 = tpu.matmul %1, %982, %cst_417 {dimension_numbers = #tpu.dot_dimension_numbers<[1], [0], [0], [1], [0, 0, 1, 1], [], []>} : vector<8x128xbf16>, vector<128x128xbf16>, vector<8x128xf32> -> vector<8x128xf32>
    %c4_418 = arith.constant 4 : index
    %c0_419 = arith.constant 0 : index
    %c0_420 = arith.constant 0 : index
    %984 = vector.load %arg4[%c4_418, %c0_419, %c0_420] : memref<6x1x128xf32, #tpu.memory_space<vmem>>, vector<1x1x128xf32>
    %985 = vector.shape_cast %984 : vector<1x1x128xf32> to vector<1x128xf32>
    %c4_421 = arith.constant 4 : index
    %c0_422 = arith.constant 0 : index
    %c0_423 = arith.constant 0 : index
    %986 = vector.load %arg5[%c4_421, %c0_422, %c0_423] : memref<6x1x128xf32, #tpu.memory_space<vmem>>, vector<1x1x128xf32>
    %987 = vector.shape_cast %986 : vector<1x1x128xf32> to vector<1x128xf32>
    %cst_424 = arith.constant dense<0.000000e+00> : vector<8xf32>
    %988 = vector.multi_reduction <add>, %983, %cst_424 [1] : vector<8x128xf32> to vector<8xf32>
    %989 = vector.shape_cast %988 : vector<8xf32> to vector<8x1xf32>
    %cst_425 = arith.constant 1.280000e+02 : f32
    %990 = vector.broadcast %cst_425 : f32 to vector<8x1xf32>
    %991 = arith.divf %989, %990 : vector<8x1xf32>
    %992 = vector.broadcast %991 : vector<8x1xf32> to vector<8x128xf32>
    %993 = arith.subf %983, %992 : vector<8x128xf32>
    %994 = vector.broadcast %991 : vector<8x1xf32> to vector<8x128xf32>
    %995 = arith.subf %983, %994 : vector<8x128xf32>
    %996 = arith.mulf %993, %995 : vector<8x128xf32>
    %cst_426 = arith.constant dense<0.000000e+00> : vector<8xf32>
    %997 = vector.multi_reduction <add>, %996, %cst_426 [1] : vector<8x128xf32> to vector<8xf32>
    %998 = vector.shape_cast %997 : vector<8xf32> to vector<8x1xf32>
    %cst_427 = arith.constant 1.280000e+02 : f32
    %999 = vector.broadcast %cst_427 : f32 to vector<8x1xf32>
    %1000 = arith.divf %998, %999 : vector<8x1xf32>
    %1001 = vector.broadcast %991 : vector<8x1xf32> to vector<8x128xf32>
    %1002 = arith.subf %983, %1001 : vector<8x128xf32>
    %cst_428 = arith.constant 9.99999974E-6 : f32
    %1003 = vector.broadcast %cst_428 : f32 to vector<8x1xf32>
    %1004 = arith.addf %1000, %1003 : vector<8x1xf32>
    %1005 = math.rsqrt %1004 : vector<8x1xf32>
    %1006 = vector.broadcast %1005 : vector<8x1xf32> to vector<8x128xf32>
    %1007 = arith.mulf %1002, %1006 : vector<8x128xf32>
    %1008 = vector.broadcast %985 : vector<1x128xf32> to vector<8x128xf32>
    %1009 = arith.mulf %1007, %1008 : vector<8x128xf32>
    %1010 = vector.broadcast %987 : vector<1x128xf32> to vector<8x128xf32>
    %1011 = arith.addf %1009, %1010 : vector<8x128xf32>
    %cst_429 = arith.constant 0.000000e+00 : f32
    %1012 = vector.broadcast %cst_429 : f32 to vector<8x128xf32>
    %1013 = arith.maximumf %1011, %1012 : vector<8x128xf32>
    %1014 = arith.truncf %1013 : vector<8x128xf32> to vector<8x128xbf16>
    %c4_430 = arith.constant 4 : index
    %c0_431 = arith.constant 0 : index
    %c0_432 = arith.constant 0 : index
    %1015 = vector.load %arg6[%c4_430, %c0_431, %c0_432] : memref<6x128x128xbf16, #tpu.memory_space<vmem>>, vector<1x128x128xbf16>
    %1016 = vector.shape_cast %1015 : vector<1x128x128xbf16> to vector<128x128xbf16>
    %cst_433 = arith.constant dense<0.000000e+00> : vector<8x128xf32>
    %1017 = tpu.matmul %1014, %1016, %cst_433 {dimension_numbers = #tpu.dot_dimension_numbers<[1], [0], [0], [1], [0, 0, 1, 1], [], []>} : vector<8x128xbf16>, vector<128x128xbf16>, vector<8x128xf32> -> vector<8x128xf32>
    %c4_434 = arith.constant 4 : index
    %c0_435 = arith.constant 0 : index
    %c0_436 = arith.constant 0 : index
    %1018 = vector.load %arg7[%c4_434, %c0_435, %c0_436] : memref<6x1x128xf32, #tpu.memory_space<vmem>>, vector<1x1x128xf32>
    %1019 = vector.shape_cast %1018 : vector<1x1x128xf32> to vector<1x128xf32>
    %c4_437 = arith.constant 4 : index
    %c0_438 = arith.constant 0 : index
    %c0_439 = arith.constant 0 : index
    %1020 = vector.load %arg8[%c4_437, %c0_438, %c0_439] : memref<6x1x128xf32, #tpu.memory_space<vmem>>, vector<1x1x128xf32>
    %1021 = vector.shape_cast %1020 : vector<1x1x128xf32> to vector<1x128xf32>
    %cst_440 = arith.constant dense<0.000000e+00> : vector<8xf32>
    %1022 = vector.multi_reduction <add>, %1017, %cst_440 [1] : vector<8x128xf32> to vector<8xf32>
    %1023 = vector.shape_cast %1022 : vector<8xf32> to vector<8x1xf32>
    %cst_441 = arith.constant 1.280000e+02 : f32
    %1024 = vector.broadcast %cst_441 : f32 to vector<8x1xf32>
    %1025 = arith.divf %1023, %1024 : vector<8x1xf32>
    %1026 = vector.broadcast %1025 : vector<8x1xf32> to vector<8x128xf32>
    %1027 = arith.subf %1017, %1026 : vector<8x128xf32>
    %1028 = vector.broadcast %1025 : vector<8x1xf32> to vector<8x128xf32>
    %1029 = arith.subf %1017, %1028 : vector<8x128xf32>
    %1030 = arith.mulf %1027, %1029 : vector<8x128xf32>
    %cst_442 = arith.constant dense<0.000000e+00> : vector<8xf32>
    %1031 = vector.multi_reduction <add>, %1030, %cst_442 [1] : vector<8x128xf32> to vector<8xf32>
    %1032 = vector.shape_cast %1031 : vector<8xf32> to vector<8x1xf32>
    %cst_443 = arith.constant 1.280000e+02 : f32
    %1033 = vector.broadcast %cst_443 : f32 to vector<8x1xf32>
    %1034 = arith.divf %1032, %1033 : vector<8x1xf32>
    %1035 = vector.broadcast %1025 : vector<8x1xf32> to vector<8x128xf32>
    %1036 = arith.subf %1017, %1035 : vector<8x128xf32>
    %cst_444 = arith.constant 9.99999974E-6 : f32
    %1037 = vector.broadcast %cst_444 : f32 to vector<8x1xf32>
    %1038 = arith.addf %1034, %1037 : vector<8x1xf32>
    %1039 = math.rsqrt %1038 : vector<8x1xf32>
    %1040 = vector.broadcast %1039 : vector<8x1xf32> to vector<8x128xf32>
    %1041 = arith.mulf %1036, %1040 : vector<8x128xf32>
    %1042 = vector.broadcast %1019 : vector<1x128xf32> to vector<8x128xf32>
    %1043 = arith.mulf %1041, %1042 : vector<8x128xf32>
    %1044 = vector.broadcast %1021 : vector<1x128xf32> to vector<8x128xf32>
    %1045 = arith.addf %1043, %1044 : vector<8x128xf32>
    %1046 = arith.addf %1045, %0 : vector<8x128xf32>
    %cst_445 = arith.constant 0.000000e+00 : f32
    %1047 = vector.broadcast %cst_445 : f32 to vector<8x128xf32>
    %1048 = arith.maximumf %1046, %1047 : vector<8x128xf32>
    %1049 = arith.truncf %1048 : vector<8x128xf32> to vector<8x128xbf16>
    %c4_446 = arith.constant 4 : index
    %c0_447 = arith.constant 0 : index
    %c0_448 = arith.constant 0 : index
    %1050 = vector.load %arg9[%c4_446, %c0_447, %c0_448] : memref<6x128x128xbf16, #tpu.memory_space<vmem>>, vector<1x128x128xbf16>
    %1051 = vector.shape_cast %1050 : vector<1x128x128xbf16> to vector<128x128xbf16>
    %cst_449 = arith.constant dense<0.000000e+00> : vector<8x128xf32>
    %1052 = tpu.matmul %1049, %1051, %cst_449 {dimension_numbers = #tpu.dot_dimension_numbers<[1], [0], [0], [1], [0, 0, 1, 1], [], []>} : vector<8x128xbf16>, vector<128x128xbf16>, vector<8x128xf32> -> vector<8x128xf32>
    %c4_450 = arith.constant 4 : index
    %c0_451 = arith.constant 0 : index
    %c0_452 = arith.constant 0 : index
    %1053 = vector.load %arg10[%c4_450, %c0_451, %c0_452] : memref<6x1x128xf32, #tpu.memory_space<vmem>>, vector<1x1x128xf32>
    %1054 = vector.shape_cast %1053 : vector<1x1x128xf32> to vector<1x128xf32>
    %1055 = vector.broadcast %1054 : vector<1x128xf32> to vector<8x128xf32>
    %1056 = arith.addf %1052, %1055 : vector<8x128xf32>
    %1057 = arith.addf %1056, %31 : vector<8x128xf32>
    %c0_453 = arith.constant 0 : index
    %c512 = arith.constant 512 : index
    %1058 = vector.load %arg28[%c0_453, %c512] : memref<8x768xf32, #tpu.memory_space<vmem>>, vector<8x128xf32>
    tpu.vector_store %arg28[%c0_453, %c512], %1057 {strides = array<i32>} : memref<8x768xf32, #tpu.memory_space<vmem>>, vector<8x128xf32>,
    %1059 = vector.extract_strided_slice %1057 {offsets = [0, 58], sizes = [8, 1], strides = [1, 1]} : vector<8x128xf32> to vector<8x1xf32>
    %1060 = arith.subf %2, %1059 : vector<8x1xf32>
    %1061 = vector.extract_strided_slice %1057 {offsets = [0, 59], sizes = [8, 1], strides = [1, 1]} : vector<8x128xf32> to vector<8x1xf32>
    %1062 = arith.subf %3, %1061 : vector<8x1xf32>
    %1063 = vector.broadcast %1060 : vector<8x1xf32> to vector<8x128xf32>
    %1064 = vector.broadcast %34 : vector<1x128xf32> to vector<8x128xf32>
    %1065 = arith.mulf %1063, %1064 : vector<8x128xf32>
    %1066 = vector.broadcast %1062 : vector<8x1xf32> to vector<8x128xf32>
    %1067 = vector.broadcast %35 : vector<1x128xf32> to vector<8x128xf32>
    %1068 = arith.mulf %1066, %1067 : vector<8x128xf32>
    %1069 = arith.addf %1065, %1068 : vector<8x128xf32>
    %1070 = vector.broadcast %36 : vector<1x128xf32> to vector<8x128xf32>
    %1071 = arith.addf %1069, %1070 : vector<8x128xf32>
    %cst_454 = arith.constant 0.000000e+00 : f32
    %1072 = vector.broadcast %cst_454 : f32 to vector<8x128xf32>
    %1073 = arith.maximumf %1071, %1072 : vector<8x128xf32>
    %1074 = arith.truncf %1073 : vector<8x128xf32> to vector<8x128xbf16>
    %c0_455 = arith.constant 0 : index
    %c0_456 = arith.constant 0 : index
    %1075 = vector.load %arg13[%c0_455, %c0_456] : memref<128x128xbf16, #tpu.memory_space<vmem>>, vector<128x128xbf16>
    %cst_457 = arith.constant dense<0.000000e+00> : vector<8x128xf32>
    %1076 = tpu.matmul %1074, %1075, %cst_457 {dimension_numbers = #tpu.dot_dimension_numbers<[1], [0], [0], [1], [0, 0, 1, 1], [], []>} : vector<8x128xbf16>, vector<128x128xbf16>, vector<8x128xf32> -> vector<8x128xf32>
    %c0_458 = arith.constant 0 : index
    %c0_459 = arith.constant 0 : index
    %1077 = vector.load %arg14[%c0_458, %c0_459] : memref<1x128xf32, #tpu.memory_space<vmem>>, vector<1x128xf32>
    %c0_460 = arith.constant 0 : index
    %c0_461 = arith.constant 0 : index
    %1078 = vector.load %arg15[%c0_460, %c0_461] : memref<1x128xf32, #tpu.memory_space<vmem>>, vector<1x128xf32>
    %cst_462 = arith.constant dense<0.000000e+00> : vector<8xf32>
    %1079 = vector.multi_reduction <add>, %1076, %cst_462 [1] : vector<8x128xf32> to vector<8xf32>
    %1080 = vector.shape_cast %1079 : vector<8xf32> to vector<8x1xf32>
    %cst_463 = arith.constant 1.280000e+02 : f32
    %1081 = vector.broadcast %cst_463 : f32 to vector<8x1xf32>
    %1082 = arith.divf %1080, %1081 : vector<8x1xf32>
    %1083 = vector.broadcast %1082 : vector<8x1xf32> to vector<8x128xf32>
    %1084 = arith.subf %1076, %1083 : vector<8x128xf32>
    %1085 = vector.broadcast %1082 : vector<8x1xf32> to vector<8x128xf32>
    %1086 = arith.subf %1076, %1085 : vector<8x128xf32>
    %1087 = arith.mulf %1084, %1086 : vector<8x128xf32>
    %cst_464 = arith.constant dense<0.000000e+00> : vector<8xf32>
    %1088 = vector.multi_reduction <add>, %1087, %cst_464 [1] : vector<8x128xf32> to vector<8xf32>
    %1089 = vector.shape_cast %1088 : vector<8xf32> to vector<8x1xf32>
    %cst_465 = arith.constant 1.280000e+02 : f32
    %1090 = vector.broadcast %cst_465 : f32 to vector<8x1xf32>
    %1091 = arith.divf %1089, %1090 : vector<8x1xf32>
    %1092 = vector.broadcast %1082 : vector<8x1xf32> to vector<8x128xf32>
    %1093 = arith.subf %1076, %1092 : vector<8x128xf32>
    %cst_466 = arith.constant 9.99999974E-6 : f32
    %1094 = vector.broadcast %cst_466 : f32 to vector<8x1xf32>
    %1095 = arith.addf %1091, %1094 : vector<8x1xf32>
    %1096 = math.rsqrt %1095 : vector<8x1xf32>
    %1097 = vector.broadcast %1096 : vector<8x1xf32> to vector<8x128xf32>
    %1098 = arith.mulf %1093, %1097 : vector<8x128xf32>
    %1099 = vector.broadcast %1077 : vector<1x128xf32> to vector<8x128xf32>
    %1100 = arith.mulf %1098, %1099 : vector<8x128xf32>
    %1101 = vector.broadcast %1078 : vector<1x128xf32> to vector<8x128xf32>
    %1102 = arith.addf %1100, %1101 : vector<8x128xf32>
    %cst_467 = arith.constant 0.000000e+00 : f32
    %1103 = vector.broadcast %cst_467 : f32 to vector<8x128xf32>
    %1104 = arith.maximumf %1102, %1103 : vector<8x128xf32>
    %1105 = arith.truncf %1104 : vector<8x128xf32> to vector<8x128xbf16>
    %c0_468 = arith.constant 0 : index
    %c0_469 = arith.constant 0 : index
    %1106 = vector.load %arg16[%c0_468, %c0_469] : memref<128x128xbf16, #tpu.memory_space<vmem>>, vector<128x128xbf16>
    %cst_470 = arith.constant dense<0.000000e+00> : vector<8x128xf32>
    %1107 = tpu.matmul %1105, %1106, %cst_470 {dimension_numbers = #tpu.dot_dimension_numbers<[1], [0], [0], [1], [0, 0, 1, 1], [], []>} : vector<8x128xbf16>, vector<128x128xbf16>, vector<8x128xf32> -> vector<8x128xf32>
    %1108 = arith.addf %1107, %5 : vector<8x128xf32>
    %c0_471 = arith.constant 0 : index
    %c0_472 = arith.constant 0 : index
    %1109 = vector.load %arg18[%c0_471, %c0_472] : memref<1x128xf32, #tpu.memory_space<vmem>>, vector<1x128xf32>
    %c0_473 = arith.constant 0 : index
    %c0_474 = arith.constant 0 : index
    %1110 = vector.load %arg19[%c0_473, %c0_474] : memref<1x128xf32, #tpu.memory_space<vmem>>, vector<1x128xf32>
    %cst_475 = arith.constant dense<0.000000e+00> : vector<8xf32>
    %1111 = vector.multi_reduction <add>, %1108, %cst_475 [1] : vector<8x128xf32> to vector<8xf32>
    %1112 = vector.shape_cast %1111 : vector<8xf32> to vector<8x1xf32>
    %cst_476 = arith.constant 1.280000e+02 : f32
    %1113 = vector.broadcast %cst_476 : f32 to vector<8x1xf32>
    %1114 = arith.divf %1112, %1113 : vector<8x1xf32>
    %1115 = vector.broadcast %1114 : vector<8x1xf32> to vector<8x128xf32>
    %1116 = arith.subf %1108, %1115 : vector<8x128xf32>
    %1117 = vector.broadcast %1114 : vector<8x1xf32> to vector<8x128xf32>
    %1118 = arith.subf %1108, %1117 : vector<8x128xf32>
    %1119 = arith.mulf %1116, %1118 : vector<8x128xf32>
    %cst_477 = arith.constant dense<0.000000e+00> : vector<8xf32>
    %1120 = vector.multi_reduction <add>, %1119, %cst_477 [1] : vector<8x128xf32> to vector<8xf32>
    %1121 = vector.shape_cast %1120 : vector<8xf32> to vector<8x1xf32>
    %cst_478 = arith.constant 1.280000e+02 : f32
    %1122 = vector.broadcast %cst_478 : f32 to vector<8x1xf32>
    %1123 = arith.divf %1121, %1122 : vector<8x1xf32>
    %1124 = vector.broadcast %1114 : vector<8x1xf32> to vector<8x128xf32>
    %1125 = arith.subf %1108, %1124 : vector<8x128xf32>
    %cst_479 = arith.constant 9.99999974E-6 : f32
    %1126 = vector.broadcast %cst_479 : f32 to vector<8x1xf32>
    %1127 = arith.addf %1123, %1126 : vector<8x1xf32>
    %1128 = math.rsqrt %1127 : vector<8x1xf32>
    %1129 = vector.broadcast %1128 : vector<8x1xf32> to vector<8x128xf32>
    %1130 = arith.mulf %1125, %1129 : vector<8x128xf32>
    %1131 = vector.broadcast %1109 : vector<1x128xf32> to vector<8x128xf32>
    %1132 = arith.mulf %1130, %1131 : vector<8x128xf32>
    %1133 = vector.broadcast %1110 : vector<1x128xf32> to vector<8x128xf32>
    %1134 = arith.addf %1132, %1133 : vector<8x128xf32>
    %cst_480 = arith.constant 0.000000e+00 : f32
    %1135 = vector.broadcast %cst_480 : f32 to vector<8x128xf32>
    %1136 = arith.maximumf %1134, %1135 : vector<8x128xf32>
    %1137 = arith.truncf %1136 : vector<8x128xf32> to vector<8x128xbf16>
    %c0_481 = arith.constant 0 : index
    %c0_482 = arith.constant 0 : index
    %1138 = vector.load %arg20[%c0_481, %c0_482] : memref<128x128xbf16, #tpu.memory_space<vmem>>, vector<128x128xbf16>
    %cst_483 = arith.constant dense<0.000000e+00> : vector<8x128xf32>
    %1139 = tpu.matmul %1137, %1138, %cst_483 {dimension_numbers = #tpu.dot_dimension_numbers<[1], [0], [0], [1], [0, 0, 1, 1], [], []>} : vector<8x128xbf16>, vector<128x128xbf16>, vector<8x128xf32> -> vector<8x128xf32>
    %c0_484 = arith.constant 0 : index
    %c0_485 = arith.constant 0 : index
    %1140 = vector.load %arg21[%c0_484, %c0_485] : memref<1x128xf32, #tpu.memory_space<vmem>>, vector<1x128xf32>
    %c0_486 = arith.constant 0 : index
    %c0_487 = arith.constant 0 : index
    %1141 = vector.load %arg22[%c0_486, %c0_487] : memref<1x128xf32, #tpu.memory_space<vmem>>, vector<1x128xf32>
    %cst_488 = arith.constant dense<0.000000e+00> : vector<8xf32>
    %1142 = vector.multi_reduction <add>, %1139, %cst_488 [1] : vector<8x128xf32> to vector<8xf32>
    %1143 = vector.shape_cast %1142 : vector<8xf32> to vector<8x1xf32>
    %cst_489 = arith.constant 1.280000e+02 : f32
    %1144 = vector.broadcast %cst_489 : f32 to vector<8x1xf32>
    %1145 = arith.divf %1143, %1144 : vector<8x1xf32>
    %1146 = vector.broadcast %1145 : vector<8x1xf32> to vector<8x128xf32>
    %1147 = arith.subf %1139, %1146 : vector<8x128xf32>
    %1148 = vector.broadcast %1145 : vector<8x1xf32> to vector<8x128xf32>
    %1149 = arith.subf %1139, %1148 : vector<8x128xf32>
    %1150 = arith.mulf %1147, %1149 : vector<8x128xf32>
    %cst_490 = arith.constant dense<0.000000e+00> : vector<8xf32>
    %1151 = vector.multi_reduction <add>, %1150, %cst_490 [1] : vector<8x128xf32> to vector<8xf32>
    %1152 = vector.shape_cast %1151 : vector<8xf32> to vector<8x1xf32>
    %cst_491 = arith.constant 1.280000e+02 : f32
    %1153 = vector.broadcast %cst_491 : f32 to vector<8x1xf32>
    %1154 = arith.divf %1152, %1153 : vector<8x1xf32>
    %1155 = vector.broadcast %1145 : vector<8x1xf32> to vector<8x128xf32>
    %1156 = arith.subf %1139, %1155 : vector<8x128xf32>
    %cst_492 = arith.constant 9.99999974E-6 : f32
    %1157 = vector.broadcast %cst_492 : f32 to vector<8x1xf32>
    %1158 = arith.addf %1154, %1157 : vector<8x1xf32>
    %1159 = math.rsqrt %1158 : vector<8x1xf32>
    %1160 = vector.broadcast %1159 : vector<8x1xf32> to vector<8x128xf32>
    %1161 = arith.mulf %1156, %1160 : vector<8x128xf32>
    %1162 = vector.broadcast %1140 : vector<1x128xf32> to vector<8x128xf32>
    %1163 = arith.mulf %1161, %1162 : vector<8x128xf32>
    %1164 = vector.broadcast %1141 : vector<1x128xf32> to vector<8x128xf32>
    %1165 = arith.addf %1163, %1164 : vector<8x128xf32>
    %cst_493 = arith.constant 0.000000e+00 : f32
    %1166 = vector.broadcast %cst_493 : f32 to vector<8x128xf32>
    %1167 = arith.maximumf %1165, %1166 : vector<8x128xf32>
    %1168 = arith.truncf %1167 : vector<8x128xf32> to vector<8x128xbf16>
    %c0_494 = arith.constant 0 : index
    %c0_495 = arith.constant 0 : index
    %1169 = vector.load %arg23[%c0_494, %c0_495] : memref<128x128xbf16, #tpu.memory_space<vmem>>, vector<128x128xbf16>
    %cst_496 = arith.constant dense<0.000000e+00> : vector<8x128xf32>
    %1170 = tpu.matmul %1168, %1169, %cst_496 {dimension_numbers = #tpu.dot_dimension_numbers<[1], [0], [0], [1], [0, 0, 1, 1], [], []>} : vector<8x128xbf16>, vector<128x128xbf16>, vector<8x128xf32> -> vector<8x128xf32>
    %c0_497 = arith.constant 0 : index
    %c0_498 = arith.constant 0 : index
    %1171 = vector.load %arg24[%c0_497, %c0_498] : memref<1x128xf32, #tpu.memory_space<vmem>>, vector<1x128xf32>
    %c0_499 = arith.constant 0 : index
    %c0_500 = arith.constant 0 : index
    %1172 = vector.load %arg25[%c0_499, %c0_500] : memref<1x128xf32, #tpu.memory_space<vmem>>, vector<1x128xf32>
    %cst_501 = arith.constant dense<0.000000e+00> : vector<8xf32>
    %1173 = vector.multi_reduction <add>, %1170, %cst_501 [1] : vector<8x128xf32> to vector<8xf32>
    %1174 = vector.shape_cast %1173 : vector<8xf32> to vector<8x1xf32>
    %cst_502 = arith.constant 1.280000e+02 : f32
    %1175 = vector.broadcast %cst_502 : f32 to vector<8x1xf32>
    %1176 = arith.divf %1174, %1175 : vector<8x1xf32>
    %1177 = vector.broadcast %1176 : vector<8x1xf32> to vector<8x128xf32>
    %1178 = arith.subf %1170, %1177 : vector<8x128xf32>
    %1179 = vector.broadcast %1176 : vector<8x1xf32> to vector<8x128xf32>
    %1180 = arith.subf %1170, %1179 : vector<8x128xf32>
    %1181 = arith.mulf %1178, %1180 : vector<8x128xf32>
    %cst_503 = arith.constant dense<0.000000e+00> : vector<8xf32>
    %1182 = vector.multi_reduction <add>, %1181, %cst_503 [1] : vector<8x128xf32> to vector<8xf32>
    %1183 = vector.shape_cast %1182 : vector<8xf32> to vector<8x1xf32>
    %cst_504 = arith.constant 1.280000e+02 : f32
    %1184 = vector.broadcast %cst_504 : f32 to vector<8x1xf32>
    %1185 = arith.divf %1183, %1184 : vector<8x1xf32>
    %1186 = vector.broadcast %1176 : vector<8x1xf32> to vector<8x128xf32>
    %1187 = arith.subf %1170, %1186 : vector<8x128xf32>
    %cst_505 = arith.constant 9.99999974E-6 : f32
    %1188 = vector.broadcast %cst_505 : f32 to vector<8x1xf32>
    %1189 = arith.addf %1185, %1188 : vector<8x1xf32>
    %1190 = math.rsqrt %1189 : vector<8x1xf32>
    %1191 = vector.broadcast %1190 : vector<8x1xf32> to vector<8x128xf32>
    %1192 = arith.mulf %1187, %1191 : vector<8x128xf32>
    %1193 = vector.broadcast %1171 : vector<1x128xf32> to vector<8x128xf32>
    %1194 = arith.mulf %1192, %1193 : vector<8x128xf32>
    %1195 = vector.broadcast %1172 : vector<1x128xf32> to vector<8x128xf32>
    %1196 = arith.addf %1194, %1195 : vector<8x128xf32>
    %1197 = arith.addf %1196, %1136 : vector<8x128xf32>
    %cst_506 = arith.constant 0.000000e+00 : f32
    %1198 = vector.broadcast %cst_506 : f32 to vector<8x128xf32>
    %1199 = arith.maximumf %1197, %1198 : vector<8x128xf32>
    %c0_507 = arith.constant 0 : index
    %c0_508 = arith.constant 0 : index
    %1200 = vector.load %arg26[%c0_507, %c0_508] : memref<1x128xf32, #tpu.memory_space<vmem>>, vector<1x128xf32>
    %1201 = vector.broadcast %1200 : vector<1x128xf32> to vector<8x128xf32>
    %1202 = arith.mulf %1199, %1201 : vector<8x128xf32>
    %cst_509 = arith.constant dense<0.000000e+00> : vector<8xf32>
    %1203 = vector.multi_reduction <add>, %1202, %cst_509 [1] : vector<8x128xf32> to vector<8xf32>
    %1204 = vector.shape_cast %1203 : vector<8xf32> to vector<8x1xf32>
    %c0_510 = arith.constant 0 : index
    %c0_511 = arith.constant 0 : index
    %1205 = vector.load %arg27[%c0_510, %c0_511] : memref<1x1xf32, #tpu.memory_space<vmem>>, vector<1x1xf32>
    %1206 = vector.broadcast %1205 : vector<1x1xf32> to vector<8x1xf32>
    %1207 = arith.addf %1204, %1206 : vector<8x1xf32>
    %c4_i32 = arith.constant 4 : i32
    %1208 = vector.broadcast %c4_i32 : i32 to vector<1x128xi32>
    %1209 = arith.cmpi eq, %32, %1208 : vector<1x128xi32>
    %cst_512 = arith.constant 0.000000e+00 : f32
    %1210 = vector.shape_cast %1209 : vector<1x128xi1> to vector<1x128xi1>
    %1211 = vector.broadcast %1210 : vector<1x128xi1> to vector<8x128xi1>
    %1212 = vector.shape_cast %1207 : vector<8x1xf32> to vector<8x1xf32>
    %1213 = vector.broadcast %1212 : vector<8x1xf32> to vector<8x128xf32>
    %1214 = vector.broadcast %cst_512 : f32 to vector<8x128xf32>
    %1215 = arith.select %1211, %1213, %1214 : vector<8x128xi1>, vector<8x128xf32>
    %1216 = arith.addf %980, %1215 : vector<8x128xf32>
    %c5 = arith.constant 5 : index
    %c0_513 = arith.constant 0 : index
    %c0_514 = arith.constant 0 : index
    %1217 = vector.load %arg3[%c5, %c0_513, %c0_514] : memref<6x128x128xbf16, #tpu.memory_space<vmem>>, vector<1x128x128xbf16>
    %1218 = vector.shape_cast %1217 : vector<1x128x128xbf16> to vector<128x128xbf16>
    %cst_515 = arith.constant dense<0.000000e+00> : vector<8x128xf32>
    %1219 = tpu.matmul %1, %1218, %cst_515 {dimension_numbers = #tpu.dot_dimension_numbers<[1], [0], [0], [1], [0, 0, 1, 1], [], []>} : vector<8x128xbf16>, vector<128x128xbf16>, vector<8x128xf32> -> vector<8x128xf32>
    %c5_516 = arith.constant 5 : index
    %c0_517 = arith.constant 0 : index
    %c0_518 = arith.constant 0 : index
    %1220 = vector.load %arg4[%c5_516, %c0_517, %c0_518] : memref<6x1x128xf32, #tpu.memory_space<vmem>>, vector<1x1x128xf32>
    %1221 = vector.shape_cast %1220 : vector<1x1x128xf32> to vector<1x128xf32>
    %c5_519 = arith.constant 5 : index
    %c0_520 = arith.constant 0 : index
    %c0_521 = arith.constant 0 : index
    %1222 = vector.load %arg5[%c5_519, %c0_520, %c0_521] : memref<6x1x128xf32, #tpu.memory_space<vmem>>, vector<1x1x128xf32>
    %1223 = vector.shape_cast %1222 : vector<1x1x128xf32> to vector<1x128xf32>
    %cst_522 = arith.constant dense<0.000000e+00> : vector<8xf32>
    %1224 = vector.multi_reduction <add>, %1219, %cst_522 [1] : vector<8x128xf32> to vector<8xf32>
    %1225 = vector.shape_cast %1224 : vector<8xf32> to vector<8x1xf32>
    %cst_523 = arith.constant 1.280000e+02 : f32
    %1226 = vector.broadcast %cst_523 : f32 to vector<8x1xf32>
    %1227 = arith.divf %1225, %1226 : vector<8x1xf32>
    %1228 = vector.broadcast %1227 : vector<8x1xf32> to vector<8x128xf32>
    %1229 = arith.subf %1219, %1228 : vector<8x128xf32>
    %1230 = vector.broadcast %1227 : vector<8x1xf32> to vector<8x128xf32>
    %1231 = arith.subf %1219, %1230 : vector<8x128xf32>
    %1232 = arith.mulf %1229, %1231 : vector<8x128xf32>
    %cst_524 = arith.constant dense<0.000000e+00> : vector<8xf32>
    %1233 = vector.multi_reduction <add>, %1232, %cst_524 [1] : vector<8x128xf32> to vector<8xf32>
    %1234 = vector.shape_cast %1233 : vector<8xf32> to vector<8x1xf32>
    %cst_525 = arith.constant 1.280000e+02 : f32
    %1235 = vector.broadcast %cst_525 : f32 to vector<8x1xf32>
    %1236 = arith.divf %1234, %1235 : vector<8x1xf32>
    %1237 = vector.broadcast %1227 : vector<8x1xf32> to vector<8x128xf32>
    %1238 = arith.subf %1219, %1237 : vector<8x128xf32>
    %cst_526 = arith.constant 9.99999974E-6 : f32
    %1239 = vector.broadcast %cst_526 : f32 to vector<8x1xf32>
    %1240 = arith.addf %1236, %1239 : vector<8x1xf32>
    %1241 = math.rsqrt %1240 : vector<8x1xf32>
    %1242 = vector.broadcast %1241 : vector<8x1xf32> to vector<8x128xf32>
    %1243 = arith.mulf %1238, %1242 : vector<8x128xf32>
    %1244 = vector.broadcast %1221 : vector<1x128xf32> to vector<8x128xf32>
    %1245 = arith.mulf %1243, %1244 : vector<8x128xf32>
    %1246 = vector.broadcast %1223 : vector<1x128xf32> to vector<8x128xf32>
    %1247 = arith.addf %1245, %1246 : vector<8x128xf32>
    %cst_527 = arith.constant 0.000000e+00 : f32
    %1248 = vector.broadcast %cst_527 : f32 to vector<8x128xf32>
    %1249 = arith.maximumf %1247, %1248 : vector<8x128xf32>
    %1250 = arith.truncf %1249 : vector<8x128xf32> to vector<8x128xbf16>
    %c5_528 = arith.constant 5 : index
    %c0_529 = arith.constant 0 : index
    %c0_530 = arith.constant 0 : index
    %1251 = vector.load %arg6[%c5_528, %c0_529, %c0_530] : memref<6x128x128xbf16, #tpu.memory_space<vmem>>, vector<1x128x128xbf16>
    %1252 = vector.shape_cast %1251 : vector<1x128x128xbf16> to vector<128x128xbf16>
    %cst_531 = arith.constant dense<0.000000e+00> : vector<8x128xf32>
    %1253 = tpu.matmul %1250, %1252, %cst_531 {dimension_numbers = #tpu.dot_dimension_numbers<[1], [0], [0], [1], [0, 0, 1, 1], [], []>} : vector<8x128xbf16>, vector<128x128xbf16>, vector<8x128xf32> -> vector<8x128xf32>
    %c5_532 = arith.constant 5 : index
    %c0_533 = arith.constant 0 : index
    %c0_534 = arith.constant 0 : index
    %1254 = vector.load %arg7[%c5_532, %c0_533, %c0_534] : memref<6x1x128xf32, #tpu.memory_space<vmem>>, vector<1x1x128xf32>
    %1255 = vector.shape_cast %1254 : vector<1x1x128xf32> to vector<1x128xf32>
    %c5_535 = arith.constant 5 : index
    %c0_536 = arith.constant 0 : index
    %c0_537 = arith.constant 0 : index
    %1256 = vector.load %arg8[%c5_535, %c0_536, %c0_537] : memref<6x1x128xf32, #tpu.memory_space<vmem>>, vector<1x1x128xf32>
    %1257 = vector.shape_cast %1256 : vector<1x1x128xf32> to vector<1x128xf32>
    %cst_538 = arith.constant dense<0.000000e+00> : vector<8xf32>
    %1258 = vector.multi_reduction <add>, %1253, %cst_538 [1] : vector<8x128xf32> to vector<8xf32>
    %1259 = vector.shape_cast %1258 : vector<8xf32> to vector<8x1xf32>
    %cst_539 = arith.constant 1.280000e+02 : f32
    %1260 = vector.broadcast %cst_539 : f32 to vector<8x1xf32>
    %1261 = arith.divf %1259, %1260 : vector<8x1xf32>
    %1262 = vector.broadcast %1261 : vector<8x1xf32> to vector<8x128xf32>
    %1263 = arith.subf %1253, %1262 : vector<8x128xf32>
    %1264 = vector.broadcast %1261 : vector<8x1xf32> to vector<8x128xf32>
    %1265 = arith.subf %1253, %1264 : vector<8x128xf32>
    %1266 = arith.mulf %1263, %1265 : vector<8x128xf32>
    %cst_540 = arith.constant dense<0.000000e+00> : vector<8xf32>
    %1267 = vector.multi_reduction <add>, %1266, %cst_540 [1] : vector<8x128xf32> to vector<8xf32>
    %1268 = vector.shape_cast %1267 : vector<8xf32> to vector<8x1xf32>
    %cst_541 = arith.constant 1.280000e+02 : f32
    %1269 = vector.broadcast %cst_541 : f32 to vector<8x1xf32>
    %1270 = arith.divf %1268, %1269 : vector<8x1xf32>
    %1271 = vector.broadcast %1261 : vector<8x1xf32> to vector<8x128xf32>
    %1272 = arith.subf %1253, %1271 : vector<8x128xf32>
    %cst_542 = arith.constant 9.99999974E-6 : f32
    %1273 = vector.broadcast %cst_542 : f32 to vector<8x1xf32>
    %1274 = arith.addf %1270, %1273 : vector<8x1xf32>
    %1275 = math.rsqrt %1274 : vector<8x1xf32>
    %1276 = vector.broadcast %1275 : vector<8x1xf32> to vector<8x128xf32>
    %1277 = arith.mulf %1272, %1276 : vector<8x128xf32>
    %1278 = vector.broadcast %1255 : vector<1x128xf32> to vector<8x128xf32>
    %1279 = arith.mulf %1277, %1278 : vector<8x128xf32>
    %1280 = vector.broadcast %1257 : vector<1x128xf32> to vector<8x128xf32>
    %1281 = arith.addf %1279, %1280 : vector<8x128xf32>
    %1282 = arith.addf %1281, %0 : vector<8x128xf32>
    %cst_543 = arith.constant 0.000000e+00 : f32
    %1283 = vector.broadcast %cst_543 : f32 to vector<8x128xf32>
    %1284 = arith.maximumf %1282, %1283 : vector<8x128xf32>
    %1285 = arith.truncf %1284 : vector<8x128xf32> to vector<8x128xbf16>
    %c5_544 = arith.constant 5 : index
    %c0_545 = arith.constant 0 : index
    %c0_546 = arith.constant 0 : index
    %1286 = vector.load %arg9[%c5_544, %c0_545, %c0_546] : memref<6x128x128xbf16, #tpu.memory_space<vmem>>, vector<1x128x128xbf16>
    %1287 = vector.shape_cast %1286 : vector<1x128x128xbf16> to vector<128x128xbf16>
    %cst_547 = arith.constant dense<0.000000e+00> : vector<8x128xf32>
    %1288 = tpu.matmul %1285, %1287, %cst_547 {dimension_numbers = #tpu.dot_dimension_numbers<[1], [0], [0], [1], [0, 0, 1, 1], [], []>} : vector<8x128xbf16>, vector<128x128xbf16>, vector<8x128xf32> -> vector<8x128xf32>
    %c5_548 = arith.constant 5 : index
    %c0_549 = arith.constant 0 : index
    %c0_550 = arith.constant 0 : index
    %1289 = vector.load %arg10[%c5_548, %c0_549, %c0_550] : memref<6x1x128xf32, #tpu.memory_space<vmem>>, vector<1x1x128xf32>
    %1290 = vector.shape_cast %1289 : vector<1x1x128xf32> to vector<1x128xf32>
    %1291 = vector.broadcast %1290 : vector<1x128xf32> to vector<8x128xf32>
    %1292 = arith.addf %1288, %1291 : vector<8x128xf32>
    %1293 = arith.addf %1292, %31 : vector<8x128xf32>
    %c0_551 = arith.constant 0 : index
    %c640 = arith.constant 640 : index
    %1294 = vector.load %arg28[%c0_551, %c640] : memref<8x768xf32, #tpu.memory_space<vmem>>, vector<8x128xf32>
    tpu.vector_store %arg28[%c0_551, %c640], %1293 {strides = array<i32>} : memref<8x768xf32, #tpu.memory_space<vmem>>, vector<8x128xf32>,
    %1295 = vector.extract_strided_slice %1293 {offsets = [0, 58], sizes = [8, 1], strides = [1, 1]} : vector<8x128xf32> to vector<8x1xf32>
    %1296 = arith.subf %2, %1295 : vector<8x1xf32>
    %1297 = vector.extract_strided_slice %1293 {offsets = [0, 59], sizes = [8, 1], strides = [1, 1]} : vector<8x128xf32> to vector<8x1xf32>
    %1298 = arith.subf %3, %1297 : vector<8x1xf32>
    %1299 = vector.broadcast %1296 : vector<8x1xf32> to vector<8x128xf32>
    %1300 = vector.broadcast %34 : vector<1x128xf32> to vector<8x128xf32>
    %1301 = arith.mulf %1299, %1300 : vector<8x128xf32>
    %1302 = vector.broadcast %1298 : vector<8x1xf32> to vector<8x128xf32>
    %1303 = vector.broadcast %35 : vector<1x128xf32> to vector<8x128xf32>
    %1304 = arith.mulf %1302, %1303 : vector<8x128xf32>
    %1305 = arith.addf %1301, %1304 : vector<8x128xf32>
    %1306 = vector.broadcast %36 : vector<1x128xf32> to vector<8x128xf32>
    %1307 = arith.addf %1305, %1306 : vector<8x128xf32>
    %cst_552 = arith.constant 0.000000e+00 : f32
    %1308 = vector.broadcast %cst_552 : f32 to vector<8x128xf32>
    %1309 = arith.maximumf %1307, %1308 : vector<8x128xf32>
    %1310 = arith.truncf %1309 : vector<8x128xf32> to vector<8x128xbf16>
    %c0_553 = arith.constant 0 : index
    %c0_554 = arith.constant 0 : index
    %1311 = vector.load %arg13[%c0_553, %c0_554] : memref<128x128xbf16, #tpu.memory_space<vmem>>, vector<128x128xbf16>
    %cst_555 = arith.constant dense<0.000000e+00> : vector<8x128xf32>
    %1312 = tpu.matmul %1310, %1311, %cst_555 {dimension_numbers = #tpu.dot_dimension_numbers<[1], [0], [0], [1], [0, 0, 1, 1], [], []>} : vector<8x128xbf16>, vector<128x128xbf16>, vector<8x128xf32> -> vector<8x128xf32>
    %c0_556 = arith.constant 0 : index
    %c0_557 = arith.constant 0 : index
    %1313 = vector.load %arg14[%c0_556, %c0_557] : memref<1x128xf32, #tpu.memory_space<vmem>>, vector<1x128xf32>
    %c0_558 = arith.constant 0 : index
    %c0_559 = arith.constant 0 : index
    %1314 = vector.load %arg15[%c0_558, %c0_559] : memref<1x128xf32, #tpu.memory_space<vmem>>, vector<1x128xf32>
    %cst_560 = arith.constant dense<0.000000e+00> : vector<8xf32>
    %1315 = vector.multi_reduction <add>, %1312, %cst_560 [1] : vector<8x128xf32> to vector<8xf32>
    %1316 = vector.shape_cast %1315 : vector<8xf32> to vector<8x1xf32>
    %cst_561 = arith.constant 1.280000e+02 : f32
    %1317 = vector.broadcast %cst_561 : f32 to vector<8x1xf32>
    %1318 = arith.divf %1316, %1317 : vector<8x1xf32>
    %1319 = vector.broadcast %1318 : vector<8x1xf32> to vector<8x128xf32>
    %1320 = arith.subf %1312, %1319 : vector<8x128xf32>
    %1321 = vector.broadcast %1318 : vector<8x1xf32> to vector<8x128xf32>
    %1322 = arith.subf %1312, %1321 : vector<8x128xf32>
    %1323 = arith.mulf %1320, %1322 : vector<8x128xf32>
    %cst_562 = arith.constant dense<0.000000e+00> : vector<8xf32>
    %1324 = vector.multi_reduction <add>, %1323, %cst_562 [1] : vector<8x128xf32> to vector<8xf32>
    %1325 = vector.shape_cast %1324 : vector<8xf32> to vector<8x1xf32>
    %cst_563 = arith.constant 1.280000e+02 : f32
    %1326 = vector.broadcast %cst_563 : f32 to vector<8x1xf32>
    %1327 = arith.divf %1325, %1326 : vector<8x1xf32>
    %1328 = vector.broadcast %1318 : vector<8x1xf32> to vector<8x128xf32>
    %1329 = arith.subf %1312, %1328 : vector<8x128xf32>
    %cst_564 = arith.constant 9.99999974E-6 : f32
    %1330 = vector.broadcast %cst_564 : f32 to vector<8x1xf32>
    %1331 = arith.addf %1327, %1330 : vector<8x1xf32>
    %1332 = math.rsqrt %1331 : vector<8x1xf32>
    %1333 = vector.broadcast %1332 : vector<8x1xf32> to vector<8x128xf32>
    %1334 = arith.mulf %1329, %1333 : vector<8x128xf32>
    %1335 = vector.broadcast %1313 : vector<1x128xf32> to vector<8x128xf32>
    %1336 = arith.mulf %1334, %1335 : vector<8x128xf32>
    %1337 = vector.broadcast %1314 : vector<1x128xf32> to vector<8x128xf32>
    %1338 = arith.addf %1336, %1337 : vector<8x128xf32>
    %cst_565 = arith.constant 0.000000e+00 : f32
    %1339 = vector.broadcast %cst_565 : f32 to vector<8x128xf32>
    %1340 = arith.maximumf %1338, %1339 : vector<8x128xf32>
    %1341 = arith.truncf %1340 : vector<8x128xf32> to vector<8x128xbf16>
    %c0_566 = arith.constant 0 : index
    %c0_567 = arith.constant 0 : index
    %1342 = vector.load %arg16[%c0_566, %c0_567] : memref<128x128xbf16, #tpu.memory_space<vmem>>, vector<128x128xbf16>
    %cst_568 = arith.constant dense<0.000000e+00> : vector<8x128xf32>
    %1343 = tpu.matmul %1341, %1342, %cst_568 {dimension_numbers = #tpu.dot_dimension_numbers<[1], [0], [0], [1], [0, 0, 1, 1], [], []>} : vector<8x128xbf16>, vector<128x128xbf16>, vector<8x128xf32> -> vector<8x128xf32>
    %1344 = arith.addf %1343, %5 : vector<8x128xf32>
    %c0_569 = arith.constant 0 : index
    %c0_570 = arith.constant 0 : index
    %1345 = vector.load %arg18[%c0_569, %c0_570] : memref<1x128xf32, #tpu.memory_space<vmem>>, vector<1x128xf32>
    %c0_571 = arith.constant 0 : index
    %c0_572 = arith.constant 0 : index
    %1346 = vector.load %arg19[%c0_571, %c0_572] : memref<1x128xf32, #tpu.memory_space<vmem>>, vector<1x128xf32>
    %cst_573 = arith.constant dense<0.000000e+00> : vector<8xf32>
    %1347 = vector.multi_reduction <add>, %1344, %cst_573 [1] : vector<8x128xf32> to vector<8xf32>
    %1348 = vector.shape_cast %1347 : vector<8xf32> to vector<8x1xf32>
    %cst_574 = arith.constant 1.280000e+02 : f32
    %1349 = vector.broadcast %cst_574 : f32 to vector<8x1xf32>
    %1350 = arith.divf %1348, %1349 : vector<8x1xf32>
    %1351 = vector.broadcast %1350 : vector<8x1xf32> to vector<8x128xf32>
    %1352 = arith.subf %1344, %1351 : vector<8x128xf32>
    %1353 = vector.broadcast %1350 : vector<8x1xf32> to vector<8x128xf32>
    %1354 = arith.subf %1344, %1353 : vector<8x128xf32>
    %1355 = arith.mulf %1352, %1354 : vector<8x128xf32>
    %cst_575 = arith.constant dense<0.000000e+00> : vector<8xf32>
    %1356 = vector.multi_reduction <add>, %1355, %cst_575 [1] : vector<8x128xf32> to vector<8xf32>
    %1357 = vector.shape_cast %1356 : vector<8xf32> to vector<8x1xf32>
    %cst_576 = arith.constant 1.280000e+02 : f32
    %1358 = vector.broadcast %cst_576 : f32 to vector<8x1xf32>
    %1359 = arith.divf %1357, %1358 : vector<8x1xf32>
    %1360 = vector.broadcast %1350 : vector<8x1xf32> to vector<8x128xf32>
    %1361 = arith.subf %1344, %1360 : vector<8x128xf32>
    %cst_577 = arith.constant 9.99999974E-6 : f32
    %1362 = vector.broadcast %cst_577 : f32 to vector<8x1xf32>
    %1363 = arith.addf %1359, %1362 : vector<8x1xf32>
    %1364 = math.rsqrt %1363 : vector<8x1xf32>
    %1365 = vector.broadcast %1364 : vector<8x1xf32> to vector<8x128xf32>
    %1366 = arith.mulf %1361, %1365 : vector<8x128xf32>
    %1367 = vector.broadcast %1345 : vector<1x128xf32> to vector<8x128xf32>
    %1368 = arith.mulf %1366, %1367 : vector<8x128xf32>
    %1369 = vector.broadcast %1346 : vector<1x128xf32> to vector<8x128xf32>
    %1370 = arith.addf %1368, %1369 : vector<8x128xf32>
    %cst_578 = arith.constant 0.000000e+00 : f32
    %1371 = vector.broadcast %cst_578 : f32 to vector<8x128xf32>
    %1372 = arith.maximumf %1370, %1371 : vector<8x128xf32>
    %1373 = arith.truncf %1372 : vector<8x128xf32> to vector<8x128xbf16>
    %c0_579 = arith.constant 0 : index
    %c0_580 = arith.constant 0 : index
    %1374 = vector.load %arg20[%c0_579, %c0_580] : memref<128x128xbf16, #tpu.memory_space<vmem>>, vector<128x128xbf16>
    %cst_581 = arith.constant dense<0.000000e+00> : vector<8x128xf32>
    %1375 = tpu.matmul %1373, %1374, %cst_581 {dimension_numbers = #tpu.dot_dimension_numbers<[1], [0], [0], [1], [0, 0, 1, 1], [], []>} : vector<8x128xbf16>, vector<128x128xbf16>, vector<8x128xf32> -> vector<8x128xf32>
    %c0_582 = arith.constant 0 : index
    %c0_583 = arith.constant 0 : index
    %1376 = vector.load %arg21[%c0_582, %c0_583] : memref<1x128xf32, #tpu.memory_space<vmem>>, vector<1x128xf32>
    %c0_584 = arith.constant 0 : index
    %c0_585 = arith.constant 0 : index
    %1377 = vector.load %arg22[%c0_584, %c0_585] : memref<1x128xf32, #tpu.memory_space<vmem>>, vector<1x128xf32>
    %cst_586 = arith.constant dense<0.000000e+00> : vector<8xf32>
    %1378 = vector.multi_reduction <add>, %1375, %cst_586 [1] : vector<8x128xf32> to vector<8xf32>
    %1379 = vector.shape_cast %1378 : vector<8xf32> to vector<8x1xf32>
    %cst_587 = arith.constant 1.280000e+02 : f32
    %1380 = vector.broadcast %cst_587 : f32 to vector<8x1xf32>
    %1381 = arith.divf %1379, %1380 : vector<8x1xf32>
    %1382 = vector.broadcast %1381 : vector<8x1xf32> to vector<8x128xf32>
    %1383 = arith.subf %1375, %1382 : vector<8x128xf32>
    %1384 = vector.broadcast %1381 : vector<8x1xf32> to vector<8x128xf32>
    %1385 = arith.subf %1375, %1384 : vector<8x128xf32>
    %1386 = arith.mulf %1383, %1385 : vector<8x128xf32>
    %cst_588 = arith.constant dense<0.000000e+00> : vector<8xf32>
    %1387 = vector.multi_reduction <add>, %1386, %cst_588 [1] : vector<8x128xf32> to vector<8xf32>
    %1388 = vector.shape_cast %1387 : vector<8xf32> to vector<8x1xf32>
    %cst_589 = arith.constant 1.280000e+02 : f32
    %1389 = vector.broadcast %cst_589 : f32 to vector<8x1xf32>
    %1390 = arith.divf %1388, %1389 : vector<8x1xf32>
    %1391 = vector.broadcast %1381 : vector<8x1xf32> to vector<8x128xf32>
    %1392 = arith.subf %1375, %1391 : vector<8x128xf32>
    %cst_590 = arith.constant 9.99999974E-6 : f32
    %1393 = vector.broadcast %cst_590 : f32 to vector<8x1xf32>
    %1394 = arith.addf %1390, %1393 : vector<8x1xf32>
    %1395 = math.rsqrt %1394 : vector<8x1xf32>
    %1396 = vector.broadcast %1395 : vector<8x1xf32> to vector<8x128xf32>
    %1397 = arith.mulf %1392, %1396 : vector<8x128xf32>
    %1398 = vector.broadcast %1376 : vector<1x128xf32> to vector<8x128xf32>
    %1399 = arith.mulf %1397, %1398 : vector<8x128xf32>
    %1400 = vector.broadcast %1377 : vector<1x128xf32> to vector<8x128xf32>
    %1401 = arith.addf %1399, %1400 : vector<8x128xf32>
    %cst_591 = arith.constant 0.000000e+00 : f32
    %1402 = vector.broadcast %cst_591 : f32 to vector<8x128xf32>
    %1403 = arith.maximumf %1401, %1402 : vector<8x128xf32>
    %1404 = arith.truncf %1403 : vector<8x128xf32> to vector<8x128xbf16>
    %c0_592 = arith.constant 0 : index
    %c0_593 = arith.constant 0 : index
    %1405 = vector.load %arg23[%c0_592, %c0_593] : memref<128x128xbf16, #tpu.memory_space<vmem>>, vector<128x128xbf16>
    %cst_594 = arith.constant dense<0.000000e+00> : vector<8x128xf32>
    %1406 = tpu.matmul %1404, %1405, %cst_594 {dimension_numbers = #tpu.dot_dimension_numbers<[1], [0], [0], [1], [0, 0, 1, 1], [], []>} : vector<8x128xbf16>, vector<128x128xbf16>, vector<8x128xf32> -> vector<8x128xf32>
    %c0_595 = arith.constant 0 : index
    %c0_596 = arith.constant 0 : index
    %1407 = vector.load %arg24[%c0_595, %c0_596] : memref<1x128xf32, #tpu.memory_space<vmem>>, vector<1x128xf32>
    %c0_597 = arith.constant 0 : index
    %c0_598 = arith.constant 0 : index
    %1408 = vector.load %arg25[%c0_597, %c0_598] : memref<1x128xf32, #tpu.memory_space<vmem>>, vector<1x128xf32>
    %cst_599 = arith.constant dense<0.000000e+00> : vector<8xf32>
    %1409 = vector.multi_reduction <add>, %1406, %cst_599 [1] : vector<8x128xf32> to vector<8xf32>
    %1410 = vector.shape_cast %1409 : vector<8xf32> to vector<8x1xf32>
    %cst_600 = arith.constant 1.280000e+02 : f32
    %1411 = vector.broadcast %cst_600 : f32 to vector<8x1xf32>
    %1412 = arith.divf %1410, %1411 : vector<8x1xf32>
    %1413 = vector.broadcast %1412 : vector<8x1xf32> to vector<8x128xf32>
    %1414 = arith.subf %1406, %1413 : vector<8x128xf32>
    %1415 = vector.broadcast %1412 : vector<8x1xf32> to vector<8x128xf32>
    %1416 = arith.subf %1406, %1415 : vector<8x128xf32>
    %1417 = arith.mulf %1414, %1416 : vector<8x128xf32>
    %cst_601 = arith.constant dense<0.000000e+00> : vector<8xf32>
    %1418 = vector.multi_reduction <add>, %1417, %cst_601 [1] : vector<8x128xf32> to vector<8xf32>
    %1419 = vector.shape_cast %1418 : vector<8xf32> to vector<8x1xf32>
    %cst_602 = arith.constant 1.280000e+02 : f32
    %1420 = vector.broadcast %cst_602 : f32 to vector<8x1xf32>
    %1421 = arith.divf %1419, %1420 : vector<8x1xf32>
    %1422 = vector.broadcast %1412 : vector<8x1xf32> to vector<8x128xf32>
    %1423 = arith.subf %1406, %1422 : vector<8x128xf32>
    %cst_603 = arith.constant 9.99999974E-6 : f32
    %1424 = vector.broadcast %cst_603 : f32 to vector<8x1xf32>
    %1425 = arith.addf %1421, %1424 : vector<8x1xf32>
    %1426 = math.rsqrt %1425 : vector<8x1xf32>
    %1427 = vector.broadcast %1426 : vector<8x1xf32> to vector<8x128xf32>
    %1428 = arith.mulf %1423, %1427 : vector<8x128xf32>
    %1429 = vector.broadcast %1407 : vector<1x128xf32> to vector<8x128xf32>
    %1430 = arith.mulf %1428, %1429 : vector<8x128xf32>
    %1431 = vector.broadcast %1408 : vector<1x128xf32> to vector<8x128xf32>
    %1432 = arith.addf %1430, %1431 : vector<8x128xf32>
    %1433 = arith.addf %1432, %1372 : vector<8x128xf32>
    %cst_604 = arith.constant 0.000000e+00 : f32
    %1434 = vector.broadcast %cst_604 : f32 to vector<8x128xf32>
    %1435 = arith.maximumf %1433, %1434 : vector<8x128xf32>
    %c0_605 = arith.constant 0 : index
    %c0_606 = arith.constant 0 : index
    %1436 = vector.load %arg26[%c0_605, %c0_606] : memref<1x128xf32, #tpu.memory_space<vmem>>, vector<1x128xf32>
    %1437 = vector.broadcast %1436 : vector<1x128xf32> to vector<8x128xf32>
    %1438 = arith.mulf %1435, %1437 : vector<8x128xf32>
    %cst_607 = arith.constant dense<0.000000e+00> : vector<8xf32>
    %1439 = vector.multi_reduction <add>, %1438, %cst_607 [1] : vector<8x128xf32> to vector<8xf32>
    %1440 = vector.shape_cast %1439 : vector<8xf32> to vector<8x1xf32>
    %c0_608 = arith.constant 0 : index
    %c0_609 = arith.constant 0 : index
    %1441 = vector.load %arg27[%c0_608, %c0_609] : memref<1x1xf32, #tpu.memory_space<vmem>>, vector<1x1xf32>
    %1442 = vector.broadcast %1441 : vector<1x1xf32> to vector<8x1xf32>
    %1443 = arith.addf %1440, %1442 : vector<8x1xf32>
    %c5_i32 = arith.constant 5 : i32
    %1444 = vector.broadcast %c5_i32 : i32 to vector<1x128xi32>
    %1445 = arith.cmpi eq, %32, %1444 : vector<1x128xi32>
    %cst_610 = arith.constant 0.000000e+00 : f32
    %1446 = vector.shape_cast %1445 : vector<1x128xi1> to vector<1x128xi1>
    %1447 = vector.broadcast %1446 : vector<1x128xi1> to vector<8x128xi1>
    %1448 = vector.shape_cast %1443 : vector<8x1xf32> to vector<8x1xf32>
    %1449 = vector.broadcast %1448 : vector<8x1xf32> to vector<8x128xf32>
    %1450 = vector.broadcast %cst_610 : f32 to vector<8x128xf32>
    %1451 = arith.select %1447, %1449, %1450 : vector<8x128xi1>, vector<8x128xf32>
    %1452 = arith.addf %1216, %1451 : vector<8x128xf32>
    %c0_611 = arith.constant 0 : index
    %c0_612 = arith.constant 0 : index
    %1453 = vector.load %arg29[%c0_611, %c0_612] : memref<8x128xf32, #tpu.memory_space<vmem>>, vector<8x128xf32>
    tpu.vector_store %arg29[%c0_611, %c0_612], %1452 {strides = array<i32>} : memref<8x128xf32, #tpu.memory_space<vmem>>, vector<8x128xf32>,
    return
  }
  func.func @transform_0(%arg0: i32) -> (i32, i32) {
    %c0_i32 = arith.constant 0 : i32
    %c0_i32_0 = arith.constant 0 : i32
    return %arg0, %c0_i32 : i32, i32
  }
  func.func @transform_1(%arg0: i32) -> (i32, i32) {
    %c0_i32 = arith.constant 0 : i32
    %c0_i32_0 = arith.constant 0 : i32
    return %arg0, %c0_i32 : i32, i32
  }
  func.func @transform_2(%arg0: i32) -> (i32, i32, i32) {
    %c0_i32 = arith.constant 0 : i32
    %c0_i32_0 = arith.constant 0 : i32
    %c0_i32_1 = arith.constant 0 : i32
    %c0_i32_2 = arith.constant 0 : i32
    return %c0_i32, %c0_i32_0, %c0_i32_1 : i32, i32, i32
  }
  func.func @transform_3(%arg0: i32) -> (i32, i32, i32) {
    %c0_i32 = arith.constant 0 : i32
    %c0_i32_0 = arith.constant 0 : i32
    %c0_i32_1 = arith.constant 0 : i32
    %c0_i32_2 = arith.constant 0 : i32
    return %c0_i32, %c0_i32_0, %c0_i32_1 : i32, i32, i32
  }
  func.func @transform_4(%arg0: i32) -> (i32, i32, i32) {
    %c0_i32 = arith.constant 0 : i32
    %c0_i32_0 = arith.constant 0 : i32
    %c0_i32_1 = arith.constant 0 : i32
    %c0_i32_2 = arith.constant 0 : i32
    return %c0_i32, %c0_i32_0, %c0_i32_1 : i32, i32, i32
  }
  func.func @transform_5(%arg0: i32) -> (i32, i32, i32) {
    %c0_i32 = arith.constant 0 : i32
    %c0_i32_0 = arith.constant 0 : i32
    %c0_i32_1 = arith.constant 0 : i32
    %c0_i32_2 = arith.constant 0 : i32
    return %c0_i32, %c0_i32_0, %c0_i32_1 : i32, i32, i32
  }
  func.func @transform_6(%arg0: i32) -> (i32, i32, i32) {
    %c0_i32 = arith.constant 0 : i32
    %c0_i32_0 = arith.constant 0 : i32
    %c0_i32_1 = arith.constant 0 : i32
    %c0_i32_2 = arith.constant 0 : i32
    return %c0_i32, %c0_i32_0, %c0_i32_1 : i32, i32, i32
  }
  func.func @transform_7(%arg0: i32) -> (i32, i32, i32) {
    %c0_i32 = arith.constant 0 : i32
    %c0_i32_0 = arith.constant 0 : i32
    %c0_i32_1 = arith.constant 0 : i32
    %c0_i32_2 = arith.constant 0 : i32
    return %c0_i32, %c0_i32_0, %c0_i32_1 : i32, i32, i32
  }
  func.func @transform_8(%arg0: i32) -> (i32, i32, i32) {
    %c0_i32 = arith.constant 0 : i32
    %c0_i32_0 = arith.constant 0 : i32
    %c0_i32_1 = arith.constant 0 : i32
    %c0_i32_2 = arith.constant 0 : i32
    return %c0_i32, %c0_i32_0, %c0_i32_1 : i32, i32, i32
  }
  func.func @transform_9(%arg0: i32) -> (i32, i32, i32) {
    %c0_i32 = arith.constant 0 : i32
    %c0_i32_0 = arith.constant 0 : i32
    %c0_i32_1 = arith.constant 0 : i32
    %c0_i32_2 = arith.constant 0 : i32
    return %c0_i32, %c0_i32_0, %c0_i32_1 : i32, i32, i32
  }
  func.func @transform_10(%arg0: i32) -> (i32, i32) {
    %c0_i32 = arith.constant 0 : i32
    %c0_i32_0 = arith.constant 0 : i32
    %c0_i32_1 = arith.constant 0 : i32
    return %c0_i32, %c0_i32_0 : i32, i32
  }
  func.func @transform_11(%arg0: i32) -> (i32, i32) {
    %c0_i32 = arith.constant 0 : i32
    %c0_i32_0 = arith.constant 0 : i32
    %c0_i32_1 = arith.constant 0 : i32
    return %c0_i32, %c0_i32_0 : i32, i32
  }
  func.func @transform_12(%arg0: i32) -> (i32, i32) {
    %c0_i32 = arith.constant 0 : i32
    %c0_i32_0 = arith.constant 0 : i32
    %c0_i32_1 = arith.constant 0 : i32
    return %c0_i32, %c0_i32_0 : i32, i32
  }
  func.func @transform_13(%arg0: i32) -> (i32, i32) {
    %c0_i32 = arith.constant 0 : i32
    %c0_i32_0 = arith.constant 0 : i32
    %c0_i32_1 = arith.constant 0 : i32
    return %c0_i32, %c0_i32_0 : i32, i32
  }
  func.func @transform_14(%arg0: i32) -> (i32, i32) {
    %c0_i32 = arith.constant 0 : i32
    %c0_i32_0 = arith.constant 0 : i32
    %c0_i32_1 = arith.constant 0 : i32
    return %c0_i32, %c0_i32_0 : i32, i32
  }
  func.func @transform_15(%arg0: i32) -> (i32, i32) {
    %c0_i32 = arith.constant 0 : i32
    %c0_i32_0 = arith.constant 0 : i32
    %c0_i32_1 = arith.constant 0 : i32
    return %c0_i32, %c0_i32_0 : i32, i32
  }
  func.func @transform_16(%arg0: i32) -> (i32, i32) {
    %c0_i32 = arith.constant 0 : i32
    %c0_i32_0 = arith.constant 0 : i32
    %c0_i32_1 = arith.constant 0 : i32
    return %c0_i32, %c0_i32_0 : i32, i32
  }
  func.func @transform_17(%arg0: i32) -> (i32, i32) {
    %c0_i32 = arith.constant 0 : i32
    %c0_i32_0 = arith.constant 0 : i32
    %c0_i32_1 = arith.constant 0 : i32
    return %c0_i32, %c0_i32_0 : i32, i32
  }
  func.func @transform_18(%arg0: i32) -> (i32, i32) {
    %c0_i32 = arith.constant 0 : i32
    %c0_i32_0 = arith.constant 0 : i32
    %c0_i32_1 = arith.constant 0 : i32
    return %c0_i32, %c0_i32_0 : i32, i32
  }
  func.func @transform_19(%arg0: i32) -> (i32, i32) {
    %c0_i32 = arith.constant 0 : i32
    %c0_i32_0 = arith.constant 0 : i32
    %c0_i32_1 = arith.constant 0 : i32
    return %c0_i32, %c0_i32_0 : i32, i32
  }
  func.func @transform_20(%arg0: i32) -> (i32, i32) {
    %c0_i32 = arith.constant 0 : i32
    %c0_i32_0 = arith.constant 0 : i32
    %c0_i32_1 = arith.constant 0 : i32
    return %c0_i32, %c0_i32_0 : i32, i32
  }
  func.func @transform_21(%arg0: i32) -> (i32, i32) {
    %c0_i32 = arith.constant 0 : i32
    %c0_i32_0 = arith.constant 0 : i32
    %c0_i32_1 = arith.constant 0 : i32
    return %c0_i32, %c0_i32_0 : i32, i32
  }
  func.func @transform_22(%arg0: i32) -> (i32, i32) {
    %c0_i32 = arith.constant 0 : i32
    %c0_i32_0 = arith.constant 0 : i32
    %c0_i32_1 = arith.constant 0 : i32
    return %c0_i32, %c0_i32_0 : i32, i32
  }
  func.func @transform_23(%arg0: i32) -> (i32, i32) {
    %c0_i32 = arith.constant 0 : i32
    %c0_i32_0 = arith.constant 0 : i32
    %c0_i32_1 = arith.constant 0 : i32
    return %c0_i32, %c0_i32_0 : i32, i32
  }
  func.func @transform_24(%arg0: i32) -> (i32, i32) {
    %c0_i32 = arith.constant 0 : i32
    %c0_i32_0 = arith.constant 0 : i32
    %c0_i32_1 = arith.constant 0 : i32
    return %c0_i32, %c0_i32_0 : i32, i32
  }
  func.func @transform_25(%arg0: i32) -> (i32, i32) {
    %c0_i32 = arith.constant 0 : i32
    %c0_i32_0 = arith.constant 0 : i32
    %c0_i32_1 = arith.constant 0 : i32
    return %c0_i32, %c0_i32_0 : i32, i32
  }
  func.func @transform_26(%arg0: i32) -> (i32, i32) {
    %c0_i32 = arith.constant 0 : i32
    %c0_i32_0 = arith.constant 0 : i32
    %c0_i32_1 = arith.constant 0 : i32
    return %c0_i32, %c0_i32_0 : i32, i32
  }
  func.func @transform_27(%arg0: i32) -> (i32, i32) {
    %c0_i32 = arith.constant 0 : i32
    %c0_i32_0 = arith.constant 0 : i32
    return %arg0, %c0_i32 : i32, i32
  }
  func.func @transform_28(%arg0: i32) -> (i32, i32) {
    %c0_i32 = arith.constant 0 : i32
    %c0_i32_0 = arith.constant 0 : i32
    return %arg0, %c0_i32 : i32, i32
  }
}

</mosaic_0001>

<llo_original>
// kernel: tpu_custom_call.1
$region0: #{tpu_custom_call.1}
  #allocation0 [shape = 'u32[]', space=smem, size = 0x4, offset = 0x4, fixed_abs, tag = 'smem constant byte address 0x4 - core index']
  #allocation1 [shape = 'u32[72,128]{1,0:T(1,128)}', space=vmem, size = 0x9000, scoped, tag = 'internal scratch']
  #allocation2 [shape = 'f32[1,1]{1,0:T(1,128)S(1)}', space=vmem, size = 0x200, scoped, tag = 'scoped memory for tpu_custom_call.1']
  %s0 = inlined_call_operand.vmem [shape: f32[16,128], index: 0, kind: input, shape index: {}]
  %s1 = inlined_call_operand.vmem [shape: f32[16,2], index: 1, kind: input, shape index: {}]
  %s2 = inlined_call_operand.hbm [shape: bf16[6,128,128], index: 2, kind: input, shape index: {}]
  %s3 = inlined_call_operand.vmem [shape: f32[6,1,128], index: 3, kind: input, shape index: {}]
  %s4 = inlined_call_operand.hbm [shape: f32[6,1,128], index: 4, kind: input, shape index: {}]
  %s5 = inlined_call_operand.hbm [shape: bf16[6,128,128], index: 5, kind: input, shape index: {}]
  %s6 = inlined_call_operand.hbm [shape: f32[6,1,128], index: 6, kind: input, shape index: {}]
  %s7 = inlined_call_operand.hbm [shape: f32[6,1,128], index: 7, kind: input, shape index: {}]
  %s8 = inlined_call_operand.hbm [shape: bf16[6,128,128], index: 8, kind: input, shape index: {}]
  %s9 = inlined_call_operand.vmem [shape: f32[6,1,128], index: 9, kind: input, shape index: {}]
  %s10 = inlined_call_operand.hbm [shape: f32[2,128], index: 10, kind: input, shape index: {}]
  %s11 = inlined_call_operand.vmem [shape: f32[1,128], index: 11, kind: input, shape index: {}]
  %s12 = inlined_call_operand.hbm [shape: bf16[128,128], index: 12, kind: input, shape index: {}]
  %s13 = inlined_call_operand.vmem [shape: f32[1,128], index: 13, kind: input, shape index: {}]
  %s14 = inlined_call_operand.vmem [shape: f32[1,128], index: 14, kind: input, shape index: {}]
  %s15 = inlined_call_operand.hbm [shape: bf16[128,128], index: 15, kind: input, shape index: {}]
  %s16 = inlined_call_operand.hbm [shape: bf16[128,128], index: 16, kind: input, shape index: {}]
  %s17 = inlined_call_operand.vmem [shape: f32[1,128], index: 17, kind: input, shape index: {}]
  %s18 = inlined_call_operand.vmem [shape: f32[1,128], index: 18, kind: input, shape index: {}]
  %s19 = inlined_call_operand.hbm [shape: bf16[128,128], index: 19, kind: input, shape index: {}]
  %s20 = inlined_call_operand.vmem [shape: f32[1,128], index: 20, kind: input, shape index: {}]
  %s21 = inlined_call_operand.vmem [shape: f32[1,128], index: 21, kind: input, shape index: {}]
  %s22 = inlined_call_operand.hbm [shape: bf16[128,128], index: 22, kind: input, shape index: {}]
  %s23 = inlined_call_operand.vmem [shape: f32[1,128], index: 23, kind: input, shape index: {}]
  %s24 = inlined_call_operand.vmem [shape: f32[1,128], index: 24, kind: input, shape index: {}]
  %s25 = inlined_call_operand.vmem [shape: f32[1,128], index: 25, kind: input, shape index: {}]
  %s26 = inlined_call_operand.<no memory space> [shape: f32[1,1], index: 26, kind: input, shape index: {}]
  %s27 = inlined_call_operand.hbm [shape: f32[16,768], index: 27, kind: output, shape index: {0}]
  %s28 = inlined_call_operand.hbm [shape: f32[16,128], index: 28, kind: output, shape index: {1}]
  %29 = xla_tuple %s27, %s28
  %s30 = sld [smem:[#allocation0]]
  $region197: #{tpu_custom_call.1} parent=0
    _
  %s32 = ssub.s32 1, %s30
  %s33 = scalar_select 0, %s32, %s30
  %v34 = vstv %s26
  %35 = vst [vmem:[#allocation2] sm:$0x1] %v34
  $region1: #{tpu_custom_call.1} parent=0
    #allocation3 [shape = 'u8[196608]{0}', space=vmem, size = 0x30000, scoped, tag = 'input window, operand 2, single buffered']
    #allocation4 [shape = 's32[2]{0}', space=sflag, size = 0x8, scoped, tag = 'scoped memory for tpu_custom_call.1']
    #allocation5 [shape = 's32[2]{0}', space=sflag, size = 0x8, scoped, tag = 'scoped memory for tpu_custom_call.1']
    #allocation6 [shape = 'u8[3072]{0}', space=vmem, size = 0xc00, scoped, tag = 'input window, operand 4, single buffered']
    #allocation7 [shape = 's32[1]{0}', space=sflag, size = 0x4, scoped, tag = 'scoped memory for tpu_custom_call.1']
    #allocation8 [shape = 'u8[196608]{0}', space=vmem, size = 0x30000, scoped, tag = 'input window, operand 5, single buffered']
    #allocation9 [shape = 'u8[3072]{0}', space=vmem, size = 0xc00, scoped, tag = 'input window, operand 6, single buffered']
    #allocation10 [shape = 's32[1]{0}', space=sflag, size = 0x4, scoped, tag = 'scoped memory for tpu_custom_call.1']
    #allocation11 [shape = 'u8[3072]{0}', space=vmem, size = 0xc00, scoped, tag = 'input window, operand 7, single buffered']
    #allocation12 [shape = 'u8[196608]{0}', space=vmem, size = 0x30000, scoped, tag = 'input window, operand 8, single buffered']
    #allocation13 [shape = 's32[1]{0}', space=sflag, size = 0x4, scoped, tag = 'scoped memory for tpu_custom_call.1']
    #allocation14 [shape = 'u8[1024]{0}', space=vmem, size = 0x400, scoped, tag = 'input window, operand 10, single buffered']
    #allocation15 [shape = 'u8[32768]{0}', space=vmem, size = 0x8000, scoped, tag = 'input window, operand 12, single buffered']
    #allocation16 [shape = 's32[1]{0}', space=sflag, size = 0x4, scoped, tag = 'scoped memory for tpu_custom_call.1']
    #allocation17 [shape = 'u8[32768]{0}', space=vmem, size = 0x8000, scoped, tag = 'input window, operand 15, single buffered']
    #allocation18 [shape = 'u8[32768]{0}', space=vmem, size = 0x8000, scoped, tag = 'input window, operand 16, single buffered']
    #allocation19 [shape = 's32[1]{0}', space=sflag, size = 0x4, scoped, tag = 'scoped memory for tpu_custom_call.1']
    #allocation20 [shape = 'u8[32768]{0}', space=vmem, size = 0x8000, scoped, tag = 'input window, operand 19, single buffered']
    #allocation21 [shape = 'u8[32768]{0}', space=vmem, size = 0x8000, scoped, tag = 'input window, operand 22, single buffered']
    #allocation22 [shape = 's32[1]{0}', space=sflag, size = 0x4, scoped, tag = 'scoped memory for tpu_custom_call.1']
    #allocation23 [shape = 'u8[49152]{0}', space=vmem, size = 0xc000, scoped, tag = 'output window, operand 0']
    #allocation24 [shape = 'u8[8192]{0}', space=vmem, size = 0x2000, scoped, tag = 'output window, operand 1']
    #allocation25 [shape = 's32[2]{0}', space=sflag, size = 0x8, scoped, tag = 'scoped memory for tpu_custom_call.1']
    %36 = vsyncpa [#allocation4], 0
    %37 = vsyncpa [#allocation7], 0
    %38 = vsyncpa [#allocation10], 0
    %39 = vsyncpa [#allocation13], 0
    %40 = vsyncpa [#allocation16], 0
    %41 = vsyncpa [#allocation19], 0
    %42 = vsyncpa [#allocation22], 0
    %43 = vsyncpa [#allocation5], 0
    %s44 = scalar_lea.sflag [#allocation5], 1
    %45 = vsyncpa %s44, 0
    %46 = vsyncpa [#allocation25], 0
    %s47 = scalar_lea.sflag [#allocation25], 1
    %48 = vsyncpa %s47, 0
    loop: start=0, step=1, limit=4
    $region2: #{tpu_custom_call.1} parent=1 // loop_pre_header
      _
    $region3: #{tpu_custom_call.1} parent=1 // loop_header
      %s50 = sphi 0, %s54
      %p51 = scmp.ge.s32.totalorder %s50, 4
      %s60 = sphi 0, %s62
      %s63 = sphi 0, %s60
      %s64 = sphi 0, %s63
      %s80 = sphi 0, %s64
      %s86 = sphi 0, %s88
      %s89 = sphi 0, %s86
      %s90 = sphi 0, %s89
      %s106 = sphi 0, %s90
      %s110 = sphi 0, %s110
      %s112 = sphi 0, %s110
      %s113 = sphi 0, %s112
      %s127 = sphi 0, %s113
      %s131 = sphi 0, %s131
      %s133 = sphi 0, %s131
      %s134 = sphi 0, %s133
      %s148 = sphi 0, %s134
      %s152 = sphi 0, %s152
      %s154 = sphi 0, %s152
      %s155 = sphi 0, %s154
      %s169 = sphi 0, %s155
      %s173 = sphi 0, %s173
      %s175 = sphi 0, %s173
      %s176 = sphi 0, %s175
      %s190 = sphi 0, %s176
      %s194 = sphi 0, %s194
      %s196 = sphi 0, %s194
      %s197 = sphi 0, %s196
      %s211 = sphi 0, %s197
      %s215 = sphi 0, %s215
      %s217 = sphi 0, %s215
      %s218 = sphi 0, %s217
      %s232 = sphi 0, %s218
      %s236 = sphi 0, %s236
      %s238 = sphi 0, %s236
      %s239 = sphi 0, %s238
      %s253 = sphi 0, %s239
      %s257 = sphi 0, %s257
      %s259 = sphi 0, %s257
      %s260 = sphi 0, %s259
      %s274 = sphi 0, %s260
      %s278 = sphi 0, %s278
      %s280 = sphi 0, %s278
      %s281 = sphi 0, %s280
      %s295 = sphi 0, %s281
      %s299 = sphi 0, %s299
      %s301 = sphi 0, %s299
      %s302 = sphi 0, %s301
      %s316 = sphi 0, %s302
      %s320 = sphi 0, %s320
      %s322 = sphi 0, %s320
      %s323 = sphi 0, %s322
      %s337 = sphi 0, %s323
      %s341 = sphi 0, %s341
      %s343 = sphi 0, %s341
      %s344 = sphi 0, %s343
      %s358 = sphi 0, %s344
      %s362 = sphi 0, %s362
      %s364 = sphi 0, %s362
      %s365 = sphi 0, %s364
      %s379 = sphi 0, %s365
      %s383 = sphi 0, %s383
      %s385 = sphi 0, %s383
      %s386 = sphi 0, %s385
      %s400 = sphi 0, %s386
      %s404 = sphi 0, %s404
      %s406 = sphi 0, %s404
      %s407 = sphi 0, %s406
      %s421 = sphi 0, %s407
      %s425 = sphi 0, %s425
      %s427 = sphi 0, %s425
      %s428 = sphi 0, %s427
      %s442 = sphi 0, %s428
      %s446 = sphi 0, %s446
      %s448 = sphi 0, %s446
      %s449 = sphi 0, %s448
      %s463 = sphi 0, %s449
      %s467 = sphi 0, %s467
      %s469 = sphi 0, %s467
      %s470 = sphi 0, %s469
      %s484 = sphi 0, %s470
      %s488 = sphi 0, %s488
      %s490 = sphi 0, %s488
      %s491 = sphi 0, %s490
      %s505 = sphi 0, %s491
      %s509 = sphi 0, %s509
      %s511 = sphi 0, %s509
      %s512 = sphi 0, %s511
      %s526 = sphi 0, %s512
      %s530 = sphi 0, %s530
      %s532 = sphi 0, %s530
      %s533 = sphi 0, %s532
      %s547 = sphi 0, %s533
      %s551 = sphi 0, %s551
      %s553 = sphi 0, %s551
      %s554 = sphi 0, %s553
      %s568 = sphi 0, %s554
      %s572 = sphi 0, %s572
      %s574 = sphi 0, %s572
      %s575 = sphi 0, %s574
      %s589 = sphi 0, %s575
      %s593 = sphi 0, %s593
      %s595 = sphi 0, %s593
      %s596 = sphi 0, %s595
      %s610 = sphi 0, %s596
      %s614 = sphi 0, %s614
      %s616 = sphi 0, %s614
      %s617 = sphi 0, %s616
      %s631 = sphi 0, %s617
      %s637 = sphi 0, %s639
      %s640 = sphi 0, %s637
      %s641 = sphi 0, %s640
      %s657 = sphi 0, %s641
      %s663 = sphi 0, %s665
      %s666 = sphi 0, %s663
      %s667 = sphi 0, %s666
      %s683 = sphi 0, %s667
    $region4: #{tpu_custom_call.1} parent=1 // loop_header_branch
      %53 = sbr.rel (%p51) target = $region8
    $region5: #{tpu_custom_call.1} parent=1 // loop_body
      %s55 = ssub.s32 %s50, 1
      %s56 = ssub.s32 %s50, 2
      %s57 = sadd.s32 %s50, 1
      %s58 = ssub.s32 %s50, %s57
      %p59 = scmp.eq.s32.totalorder %s58, 0
      %s61 = sadd.s32 %s60, 1
      %s62 = scalar_select %p59, %s60, %s61
      %p65 = pneg %p59
      %p66 = scmp.eq.s32.totalorder %s50, 1
      %p67 = por %p65, %p66
      %p68 = scmp.ne.s32.totalorder %s60, %s63
      %p69 = scmp.eq.s32.totalorder %s50, 0
      %p70 = por %p68, %p69
      %p71 = scmp.ne.s32.totalorder %s60, %s63
      %p72 = scmp.eq.s32.totalorder %s55, 1
      %p73 = por %p71, %p72
      %p74 = scmp.ne.s32.totalorder %s63, %s64
      %p75 = scmp.eq.s32.totalorder %s55, 0
      %p76 = por %p74, %p75
      %p77 = scmp.ne.s32.totalorder %s63, %s64
      %p78 = scmp.eq.s32.totalorder %s56, 1
      %p79 = por %p77, %p78
      %p81 = scmp.ne.s32.totalorder %s64, %s80
      %p82 = scmp.eq.s32.totalorder %s56, 0
      %p83 = por %p81, %p82
      %s84 = ssub.s32 %s50, %s57
      %p85 = scmp.eq.s32.totalorder %s84, 0
      %s87 = sadd.s32 %s86, 1
      %s88 = scalar_select %p85, %s86, %s87
      %p91 = pneg %p85
      %p92 = scmp.eq.s32.totalorder %s50, 1
      %p93 = por %p91, %p92
      %p94 = scmp.ne.s32.totalorder %s86, %s89
      %p95 = scmp.eq.s32.totalorder %s50, 0
      %p96 = por %p94, %p95
      %p97 = scmp.ne.s32.totalorder %s86, %s89
      %p98 = scmp.eq.s32.totalorder %s55, 1
      %p99 = por %p97, %p98
      %p100 = scmp.ne.s32.totalorder %s89, %s90
      %p101 = scmp.eq.s32.totalorder %s55, 0
      %p102 = por %p100, %p101
      %p103 = scmp.ne.s32.totalorder %s89, %s90
      %p104 = scmp.eq.s32.totalorder %s56, 1
      %p105 = por %p103, %p104
      %p107 = scmp.ne.s32.totalorder %s90, %s106
      %p108 = scmp.eq.s32.totalorder %s56, 0
      %p109 = por %p107, %p108
      %s111 = sadd.s32 %s110, 1
      %p114 = scmp.eq.s32.totalorder %s50, 1
      %p115 = scmp.ne.s32.totalorder %s110, %s112
      %p116 = scmp.eq.s32.totalorder %s50, 0
      %p117 = por %p115, %p116
      %p118 = scmp.ne.s32.totalorder %s110, %s112
      %p119 = scmp.eq.s32.totalorder %s55, 1
      %p120 = por %p118, %p119
      %p121 = scmp.ne.s32.totalorder %s112, %s113
      %p122 = scmp.eq.s32.totalorder %s55, 0
      %p123 = por %p121, %p122
      %p124 = scmp.ne.s32.totalorder %s112, %s113
      %p125 = scmp.eq.s32.totalorder %s56, 1
      %p126 = por %p124, %p125
      %p128 = scmp.ne.s32.totalorder %s113, %s127
      %p129 = scmp.eq.s32.totalorder %s56, 0
      %p130 = por %p128, %p129
      %s132 = sadd.s32 %s131, 1
      %p135 = scmp.eq.s32.totalorder %s50, 1
      %p136 = scmp.ne.s32.totalorder %s131, %s133
      %p137 = scmp.eq.s32.totalorder %s50, 0
      %p138 = por %p136, %p137
      %p139 = scmp.ne.s32.totalorder %s131, %s133
      %p140 = scmp.eq.s32.totalorder %s55, 1
      %p141 = por %p139, %p140
      %p142 = scmp.ne.s32.totalorder %s133, %s134
      %p143 = scmp.eq.s32.totalorder %s55, 0
      %p144 = por %p142, %p143
      %p145 = scmp.ne.s32.totalorder %s133, %s134
      %p146 = scmp.eq.s32.totalorder %s56, 1
      %p147 = por %p145, %p146
      %p149 = scmp.ne.s32.totalorder %s134, %s148
      %p150 = scmp.eq.s32.totalorder %s56, 0
      %p151 = por %p149, %p150
      %s153 = sadd.s32 %s152, 1
      %p156 = scmp.eq.s32.totalorder %s50, 1
      %p157 = scmp.ne.s32.totalorder %s152, %s154
      %p158 = scmp.eq.s32.totalorder %s50, 0
      %p159 = por %p157, %p158
      %p160 = scmp.ne.s32.totalorder %s152, %s154
      %p161 = scmp.eq.s32.totalorder %s55, 1
      %p162 = por %p160, %p161
      %p163 = scmp.ne.s32.totalorder %s154, %s155
      %p164 = scmp.eq.s32.totalorder %s55, 0
      %p165 = por %p163, %p164
      %p166 = scmp.ne.s32.totalorder %s154, %s155
      %p167 = scmp.eq.s32.totalorder %s56, 1
      %p168 = por %p166, %p167
      %p170 = scmp.ne.s32.totalorder %s155, %s169
      %p171 = scmp.eq.s32.totalorder %s56, 0
      %p172 = por %p170, %p171
      %s174 = sadd.s32 %s173, 1
      %p177 = scmp.eq.s32.totalorder %s50, 1
      %p178 = scmp.ne.s32.totalorder %s173, %s175
      %p179 = scmp.eq.s32.totalorder %s50, 0
      %p180 = por %p178, %p179
      %p181 = scmp.ne.s32.totalorder %s173, %s175
      %p182 = scmp.eq.s32.totalorder %s55, 1
      %p183 = por %p181, %p182
      %p184 = scmp.ne.s32.totalorder %s175, %s176
      %p185 = scmp.eq.s32.totalorder %s55, 0
      %p186 = por %p184, %p185
      %p187 = scmp.ne.s32.totalorder %s175, %s176
      %p188 = scmp.eq.s32.totalorder %s56, 1
      %p189 = por %p187, %p188
      %p191 = scmp.ne.s32.totalorder %s176, %s190
      %p192 = scmp.eq.s32.totalorder %s56, 0
      %p193 = por %p191, %p192
      %s195 = sadd.s32 %s194, 1
      %p198 = scmp.eq.s32.totalorder %s50, 1
      %p199 = scmp.ne.s32.totalorder %s194, %s196
      %p200 = scmp.eq.s32.totalorder %s50, 0
      %p201 = por %p199, %p200
      %p202 = scmp.ne.s32.totalorder %s194, %s196
      %p203 = scmp.eq.s32.totalorder %s55, 1
      %p204 = por %p202, %p203
      %p205 = scmp.ne.s32.totalorder %s196, %s197
      %p206 = scmp.eq.s32.totalorder %s55, 0
      %p207 = por %p205, %p206
      %p208 = scmp.ne.s32.totalorder %s196, %s197
      %p209 = scmp.eq.s32.totalorder %s56, 1
      %p210 = por %p208, %p209
      %p212 = scmp.ne.s32.totalorder %s197, %s211
      %p213 = scmp.eq.s32.totalorder %s56, 0
      %p214 = por %p212, %p213
      %s216 = sadd.s32 %s215, 1
      %p219 = scmp.eq.s32.totalorder %s50, 1
      %p220 = scmp.ne.s32.totalorder %s215, %s217
      %p221 = scmp.eq.s32.totalorder %s50, 0
      %p222 = por %p220, %p221
      %p223 = scmp.ne.s32.totalorder %s215, %s217
      %p224 = scmp.eq.s32.totalorder %s55, 1
      %p225 = por %p223, %p224
      %p226 = scmp.ne.s32.totalorder %s217, %s218
      %p227 = scmp.eq.s32.totalorder %s55, 0
      %p228 = por %p226, %p227
      %p229 = scmp.ne.s32.totalorder %s217, %s218
      %p230 = scmp.eq.s32.totalorder %s56, 1
      %p231 = por %p229, %p230
      %p233 = scmp.ne.s32.totalorder %s218, %s232
      %p234 = scmp.eq.s32.totalorder %s56, 0
      %p235 = por %p233, %p234
      %s237 = sadd.s32 %s236, 1
      %p240 = scmp.eq.s32.totalorder %s50, 1
      %p241 = scmp.ne.s32.totalorder %s236, %s238
      %p242 = scmp.eq.s32.totalorder %s50, 0
      %p243 = por %p241, %p242
      %p244 = scmp.ne.s32.totalorder %s236, %s238
      %p245 = scmp.eq.s32.totalorder %s55, 1
      %p246 = por %p244, %p245
      %p247 = scmp.ne.s32.totalorder %s238, %s239
      %p248 = scmp.eq.s32.totalorder %s55, 0
      %p249 = por %p247, %p248
      %p250 = scmp.ne.s32.totalorder %s238, %s239
      %p251 = scmp.eq.s32.totalorder %s56, 1
      %p252 = por %p250, %p251
      %p254 = scmp.ne.s32.totalorder %s239, %s253
      %p255 = scmp.eq.s32.totalorder %s56, 0
      %p256 = por %p254, %p255
      %s258 = sadd.s32 %s257, 1
      %p261 = scmp.eq.s32.totalorder %s50, 1
      %p262 = scmp.ne.s32.totalorder %s257, %s259
      %p263 = scmp.eq.s32.totalorder %s50, 0
      %p264 = por %p262, %p263
      %p265 = scmp.ne.s32.totalorder %s257, %s259
      %p266 = scmp.eq.s32.totalorder %s55, 1
      %p267 = por %p265, %p266
      %p268 = scmp.ne.s32.totalorder %s259, %s260
      %p269 = scmp.eq.s32.totalorder %s55, 0
      %p270 = por %p268, %p269
      %p271 = scmp.ne.s32.totalorder %s259, %s260
      %p272 = scmp.eq.s32.totalorder %s56, 1
      %p273 = por %p271, %p272
      %p275 = scmp.ne.s32.totalorder %s260, %s274
      %p276 = scmp.eq.s32.totalorder %s56, 0
      %p277 = por %p275, %p276
      %s279 = sadd.s32 %s278, 1
      %p282 = scmp.eq.s32.totalorder %s50, 1
      %p283 = scmp.ne.s32.totalorder %s278, %s280
      %p284 = scmp.eq.s32.totalorder %s50, 0
      %p285 = por %p283, %p284
      %p286 = scmp.ne.s32.totalorder %s278, %s280
      %p287 = scmp.eq.s32.totalorder %s55, 1
      %p288 = por %p286, %p287
      %p289 = scmp.ne.s32.totalorder %s280, %s281
      %p290 = scmp.eq.s32.totalorder %s55, 0
      %p291 = por %p289, %p290
      %p292 = scmp.ne.s32.totalorder %s280, %s281
      %p293 = scmp.eq.s32.totalorder %s56, 1
      %p294 = por %p292, %p293
      %p296 = scmp.ne.s32.totalorder %s281, %s295
      %p297 = scmp.eq.s32.totalorder %s56, 0
      %p298 = por %p296, %p297
      %s300 = sadd.s32 %s299, 1
      %p303 = scmp.eq.s32.totalorder %s50, 1
      %p304 = scmp.ne.s32.totalorder %s299, %s301
      %p305 = scmp.eq.s32.totalorder %s50, 0
      %p306 = por %p304, %p305
      %p307 = scmp.ne.s32.totalorder %s299, %s301
      %p308 = scmp.eq.s32.totalorder %s55, 1
      %p309 = por %p307, %p308
      %p310 = scmp.ne.s32.totalorder %s301, %s302
      %p311 = scmp.eq.s32.totalorder %s55, 0
      %p312 = por %p310, %p311
      %p313 = scmp.ne.s32.totalorder %s301, %s302
      %p314 = scmp.eq.s32.totalorder %s56, 1
      %p315 = por %p313, %p314
      %p317 = scmp.ne.s32.totalorder %s302, %s316
      %p318 = scmp.eq.s32.totalorder %s56, 0
      %p319 = por %p317, %p318
      %s321 = sadd.s32 %s320, 1
      %p324 = scmp.eq.s32.totalorder %s50, 1
      %p325 = scmp.ne.s32.totalorder %s320, %s322
      %p326 = scmp.eq.s32.totalorder %s50, 0
      %p327 = por %p325, %p326
      %p328 = scmp.ne.s32.totalorder %s320, %s322
      %p329 = scmp.eq.s32.totalorder %s55, 1
      %p330 = por %p328, %p329
      %p331 = scmp.ne.s32.totalorder %s322, %s323
      %p332 = scmp.eq.s32.totalorder %s55, 0
      %p333 = por %p331, %p332
      %p334 = scmp.ne.s32.totalorder %s322, %s323
      %p335 = scmp.eq.s32.totalorder %s56, 1
      %p336 = por %p334, %p335
      %p338 = scmp.ne.s32.totalorder %s323, %s337
      %p339 = scmp.eq.s32.totalorder %s56, 0
      %p340 = por %p338, %p339
      %s342 = sadd.s32 %s341, 1
      %p345 = scmp.eq.s32.totalorder %s50, 1
      %p346 = scmp.ne.s32.totalorder %s341, %s343
      %p347 = scmp.eq.s32.totalorder %s50, 0
      %p348 = por %p346, %p347
      %p349 = scmp.ne.s32.totalorder %s341, %s343
      %p350 = scmp.eq.s32.totalorder %s55, 1
      %p351 = por %p349, %p350
      %p352 = scmp.ne.s32.totalorder %s343, %s344
      %p353 = scmp.eq.s32.totalorder %s55, 0
      %p354 = por %p352, %p353
      %p355 = scmp.ne.s32.totalorder %s343, %s344
      %p356 = scmp.eq.s32.totalorder %s56, 1
      %p357 = por %p355, %p356
      %p359 = scmp.ne.s32.totalorder %s344, %s358
      %p360 = scmp.eq.s32.totalorder %s56, 0
      %p361 = por %p359, %p360
      %s363 = sadd.s32 %s362, 1
      %p366 = scmp.eq.s32.totalorder %s50, 1
      %p367 = scmp.ne.s32.totalorder %s362, %s364
      %p368 = scmp.eq.s32.totalorder %s50, 0
      %p369 = por %p367, %p368
      %p370 = scmp.ne.s32.totalorder %s362, %s364
      %p371 = scmp.eq.s32.totalorder %s55, 1
      %p372 = por %p370, %p371
      %p373 = scmp.ne.s32.totalorder %s364, %s365
      %p374 = scmp.eq.s32.totalorder %s55, 0
      %p375 = por %p373, %p374
      %p376 = scmp.ne.s32.totalorder %s364, %s365
      %p377 = scmp.eq.s32.totalorder %s56, 1
      %p378 = por %p376, %p377
      %p380 = scmp.ne.s32.totalorder %s365, %s379
      %p381 = scmp.eq.s32.totalorder %s56, 0
      %p382 = por %p380, %p381
      %s384 = sadd.s32 %s383, 1
      %p387 = scmp.eq.s32.totalorder %s50, 1
      %p388 = scmp.ne.s32.totalorder %s383, %s385
      %p389 = scmp.eq.s32.totalorder %s50, 0
      %p390 = por %p388, %p389
      %p391 = scmp.ne.s32.totalorder %s383, %s385
      %p392 = scmp.eq.s32.totalorder %s55, 1
      %p393 = por %p391, %p392
      %p394 = scmp.ne.s32.totalorder %s385, %s386
      %p395 = scmp.eq.s32.totalorder %s55, 0
      %p396 = por %p394, %p395
      %p397 = scmp.ne.s32.totalorder %s385, %s386
      %p398 = scmp.eq.s32.totalorder %s56, 1
      %p399 = por %p397, %p398
      %p401 = scmp.ne.s32.totalorder %s386, %s400
      %p402 = scmp.eq.s32.totalorder %s56, 0
      %p403 = por %p401, %p402
      %s405 = sadd.s32 %s404, 1
      %p408 = scmp.eq.s32.totalorder %s50, 1
      %p409 = scmp.ne.s32.totalorder %s404, %s406
      %p410 = scmp.eq.s32.totalorder %s50, 0
      %p411 = por %p409, %p410
      %p412 = scmp.ne.s32.totalorder %s404, %s406
      %p413 = scmp.eq.s32.totalorder %s55, 1
      %p414 = por %p412, %p413
      %p415 = scmp.ne.s32.totalorder %s406, %s407
      %p416 = scmp.eq.s32.totalorder %s55, 0
      %p417 = por %p415, %p416
      %p418 = scmp.ne.s32.totalorder %s406, %s407
      %p419 = scmp.eq.s32.totalorder %s56, 1
      %p420 = por %p418, %p419
      %p422 = scmp.ne.s32.totalorder %s407, %s421
      %p423 = scmp.eq.s32.totalorder %s56, 0
      %p424 = por %p422, %p423
      %s426 = sadd.s32 %s425, 1
      %p429 = scmp.eq.s32.totalorder %s50, 1
      %p430 = scmp.ne.s32.totalorder %s425, %s427
      %p431 = scmp.eq.s32.totalorder %s50, 0
      %p432 = por %p430, %p431
      %p433 = scmp.ne.s32.totalorder %s425, %s427
      %p434 = scmp.eq.s32.totalorder %s55, 1
      %p435 = por %p433, %p434
      %p436 = scmp.ne.s32.totalorder %s427, %s428
      %p437 = scmp.eq.s32.totalorder %s55, 0
      %p438 = por %p436, %p437
      %p439 = scmp.ne.s32.totalorder %s427, %s428
      %p440 = scmp.eq.s32.totalorder %s56, 1
      %p441 = por %p439, %p440
      %p443 = scmp.ne.s32.totalorder %s428, %s442
      %p444 = scmp.eq.s32.totalorder %s56, 0
      %p445 = por %p443, %p444
      %s447 = sadd.s32 %s446, 1
      %p450 = scmp.eq.s32.totalorder %s50, 1
      %p451 = scmp.ne.s32.totalorder %s446, %s448
      %p452 = scmp.eq.s32.totalorder %s50, 0
      %p453 = por %p451, %p452
      %p454 = scmp.ne.s32.totalorder %s446, %s448
      %p455 = scmp.eq.s32.totalorder %s55, 1
      %p456 = por %p454, %p455
      %p457 = scmp.ne.s32.totalorder %s448, %s449
      %p458 = scmp.eq.s32.totalorder %s55, 0
      %p459 = por %p457, %p458
      %p460 = scmp.ne.s32.totalorder %s448, %s449
      %p461 = scmp.eq.s32.totalorder %s56, 1
      %p462 = por %p460, %p461
      %p464 = scmp.ne.s32.totalorder %s449, %s463
      %p465 = scmp.eq.s32.totalorder %s56, 0
      %p466 = por %p464, %p465
      %s468 = sadd.s32 %s467, 1
      %p471 = scmp.eq.s32.totalorder %s50, 1
      %p472 = scmp.ne.s32.totalorder %s467, %s469
      %p473 = scmp.eq.s32.totalorder %s50, 0
      %p474 = por %p472, %p473
      %p475 = scmp.ne.s32.totalorder %s467, %s469
      %p476 = scmp.eq.s32.totalorder %s55, 1
      %p477 = por %p475, %p476
      %p478 = scmp.ne.s32.totalorder %s469, %s470
      %p479 = scmp.eq.s32.totalorder %s55, 0
      %p480 = por %p478, %p479
      %p481 = scmp.ne.s32.totalorder %s469, %s470
      %p482 = scmp.eq.s32.totalorder %s56, 1
      %p483 = por %p481, %p482
      %p485 = scmp.ne.s32.totalorder %s470, %s484
      %p486 = scmp.eq.s32.totalorder %s56, 0
      %p487 = por %p485, %p486
      %s489 = sadd.s32 %s488, 1
      %p492 = scmp.eq.s32.totalorder %s50, 1
      %p493 = scmp.ne.s32.totalorder %s488, %s490
      %p494 = scmp.eq.s32.totalorder %s50, 0
      %p495 = por %p493, %p494
      %p496 = scmp.ne.s32.totalorder %s488, %s490
      %p497 = scmp.eq.s32.totalorder %s55, 1
      %p498 = por %p496, %p497
      %p499 = scmp.ne.s32.totalorder %s490, %s491
      %p500 = scmp.eq.s32.totalorder %s55, 0
      %p501 = por %p499, %p500
      %p502 = scmp.ne.s32.totalorder %s490, %s491
      %p503 = scmp.eq.s32.totalorder %s56, 1
      %p504 = por %p502, %p503
      %p506 = scmp.ne.s32.totalorder %s491, %s505
      %p507 = scmp.eq.s32.totalorder %s56, 0
      %p508 = por %p506, %p507
      %s510 = sadd.s32 %s509, 1
      %p513 = scmp.eq.s32.totalorder %s50, 1
      %p514 = scmp.ne.s32.totalorder %s509, %s511
      %p515 = scmp.eq.s32.totalorder %s50, 0
      %p516 = por %p514, %p515
      %p517 = scmp.ne.s32.totalorder %s509, %s511
      %p518 = scmp.eq.s32.totalorder %s55, 1
      %p519 = por %p517, %p518
      %p520 = scmp.ne.s32.totalorder %s511, %s512
      %p521 = scmp.eq.s32.totalorder %s55, 0
      %p522 = por %p520, %p521
      %p523 = scmp.ne.s32.totalorder %s511, %s512
      %p524 = scmp.eq.s32.totalorder %s56, 1
      %p525 = por %p523, %p524
      %p527 = scmp.ne.s32.totalorder %s512, %s526
      %p528 = scmp.eq.s32.totalorder %s56, 0
      %p529 = por %p527, %p528
      %s531 = sadd.s32 %s530, 1
      %p534 = scmp.eq.s32.totalorder %s50, 1
      %p535 = scmp.ne.s32.totalorder %s530, %s532
      %p536 = scmp.eq.s32.totalorder %s50, 0
      %p537 = por %p535, %p536
      %p538 = scmp.ne.s32.totalorder %s530, %s532
      %p539 = scmp.eq.s32.totalorder %s55, 1
      %p540 = por %p538, %p539
      %p541 = scmp.ne.s32.totalorder %s532, %s533
      %p542 = scmp.eq.s32.totalorder %s55, 0
      %p543 = por %p541, %p542
      %p544 = scmp.ne.s32.totalorder %s532, %s533
      %p545 = scmp.eq.s32.totalorder %s56, 1
      %p546 = por %p544, %p545
      %p548 = scmp.ne.s32.totalorder %s533, %s547
      %p549 = scmp.eq.s32.totalorder %s56, 0
      %p550 = por %p548, %p549
      %s552 = sadd.s32 %s551, 1
      %p555 = scmp.eq.s32.totalorder %s50, 1
      %p556 = scmp.ne.s32.totalorder %s551, %s553
      %p557 = scmp.eq.s32.totalorder %s50, 0
      %p558 = por %p556, %p557
      %p559 = scmp.ne.s32.totalorder %s551, %s553
      %p560 = scmp.eq.s32.totalorder %s55, 1
      %p561 = por %p559, %p560
      %p562 = scmp.ne.s32.totalorder %s553, %s554
      %p563 = scmp.eq.s32.totalorder %s55, 0
      %p564 = por %p562, %p563
      %p565 = scmp.ne.s32.totalorder %s553, %s554
      %p566 = scmp.eq.s32.totalorder %s56, 1
      %p567 = por %p565, %p566
      %p569 = scmp.ne.s32.totalorder %s554, %s568
      %p570 = scmp.eq.s32.totalorder %s56, 0
      %p571 = por %p569, %p570
      %s573 = sadd.s32 %s572, 1
      %p576 = scmp.eq.s32.totalorder %s50, 1
      %p577 = scmp.ne.s32.totalorder %s572, %s574
      %p578 = scmp.eq.s32.totalorder %s50, 0
      %p579 = por %p577, %p578
      %p580 = scmp.ne.s32.totalorder %s572, %s574
      %p581 = scmp.eq.s32.totalorder %s55, 1
      %p582 = por %p580, %p581
      %p583 = scmp.ne.s32.totalorder %s574, %s575
      %p584 = scmp.eq.s32.totalorder %s55, 0
      %p585 = por %p583, %p584
      %p586 = scmp.ne.s32.totalorder %s574, %s575
      %p587 = scmp.eq.s32.totalorder %s56, 1
      %p588 = por %p586, %p587
      %p590 = scmp.ne.s32.totalorder %s575, %s589
      %p591 = scmp.eq.s32.totalorder %s56, 0
      %p592 = por %p590, %p591
      %s594 = sadd.s32 %s593, 1
      %p597 = scmp.eq.s32.totalorder %s50, 1
      %p598 = scmp.ne.s32.totalorder %s593, %s595
      %p599 = scmp.eq.s32.totalorder %s50, 0
      %p600 = por %p598, %p599
      %p601 = scmp.ne.s32.totalorder %s593, %s595
      %p602 = scmp.eq.s32.totalorder %s55, 1
      %p603 = por %p601, %p602
      %p604 = scmp.ne.s32.totalorder %s595, %s596
      %p605 = scmp.eq.s32.totalorder %s55, 0
      %p606 = por %p604, %p605
      %p607 = scmp.ne.s32.totalorder %s595, %s596
      %p608 = scmp.eq.s32.totalorder %s56, 1
      %p609 = por %p607, %p608
      %p611 = scmp.ne.s32.totalorder %s596, %s610
      %p612 = scmp.eq.s32.totalorder %s56, 0
      %p613 = por %p611, %p612
      %s615 = sadd.s32 %s614, 1
      %p618 = scmp.eq.s32.totalorder %s50, 1
      %p619 = scmp.ne.s32.totalorder %s614, %s616
      %p620 = scmp.eq.s32.totalorder %s50, 0
      %p621 = por %p619, %p620
      %p622 = scmp.ne.s32.totalorder %s614, %s616
      %p623 = scmp.eq.s32.totalorder %s55, 1
      %p624 = por %p622, %p623
      %p625 = scmp.ne.s32.totalorder %s616, %s617
      %p626 = scmp.eq.s32.totalorder %s55, 0
      %p627 = por %p625, %p626
      %p628 = scmp.ne.s32.totalorder %s616, %s617
      %p629 = scmp.eq.s32.totalorder %s56, 1
      %p630 = por %p628, %p629
      %p632 = scmp.ne.s32.totalorder %s617, %s631
      %p633 = scmp.eq.s32.totalorder %s56, 0
      %p634 = por %p632, %p633
      %s635 = ssub.s32 %s50, %s57
      %p636 = scmp.eq.s32.totalorder %s635, 0
      %s638 = sadd.s32 %s637, 1
      %s639 = scalar_select %p636, %s637, %s638
      %p642 = pneg %p636
      %p643 = scmp.eq.s32.totalorder %s50, 1
      %p644 = por %p642, %p643
      %p645 = scmp.ne.s32.totalorder %s637, %s640
      %p646 = scmp.eq.s32.totalorder %s50, 0
      %p647 = por %p645, %p646
      %p648 = scmp.ne.s32.totalorder %s637, %s640
      %p649 = scmp.eq.s32.totalorder %s55, 1
      %p650 = por %p648, %p649
      %p651 = scmp.ne.s32.totalorder %s640, %s641
      %p652 = scmp.eq.s32.totalorder %s55, 0
      %p653 = por %p651, %p652
      %p654 = scmp.ne.s32.totalorder %s640, %s641
      %p655 = scmp.eq.s32.totalorder %s56, 1
      %p656 = por %p654, %p655
      %p658 = scmp.ne.s32.totalorder %s641, %s657
      %p659 = scmp.eq.s32.totalorder %s56, 0
      %p660 = por %p658, %p659
      %s661 = ssub.s32 %s50, %s57
      %p662 = scmp.eq.s32.totalorder %s661, 0
      %s664 = sadd.s32 %s663, 1
      %s665 = scalar_select %p662, %s663, %s664
      %p668 = pneg %p662
      %p669 = scmp.eq.s32.totalorder %s50, 1
      %p670 = por %p668, %p669
      %p671 = scmp.ne.s32.totalorder %s663, %s666
      %p672 = scmp.eq.s32.totalorder %s50, 0
      %p673 = por %p671, %p672
      %p674 = scmp.ne.s32.totalorder %s663, %s666
      %p675 = scmp.eq.s32.totalorder %s55, 1
      %p676 = por %p674, %p675
      %p677 = scmp.ne.s32.totalorder %s666, %s667
      %p678 = scmp.eq.s32.totalorder %s55, 0
      %p679 = por %p677, %p678
      %p680 = scmp.ne.s32.totalorder %s666, %s667
      %p681 = scmp.eq.s32.totalorder %s56, 1
      %p682 = por %p680, %p681
      %p684 = scmp.ne.s32.totalorder %s667, %s683
      %p685 = scmp.eq.s32.totalorder %s56, 0
      %p686 = por %p684, %p685
      %p687 = scmp.le.s32.totalorder 1, %s50
      %p688 = scmp.lt.s32.totalorder %s50, 3
      %p689 = pnand %p687, %p688
      %p690 = pneg %p689
      // Predicated region
      $region9: #{tpu_custom_call.1} parent=5 // pred_check
        _
      $region10: #{tpu_custom_call.1} parent=5 // pred_check_branch
        %692 = sbr.rel (%p689) target = $region12
      $region11: #{tpu_custom_call.1} parent=5 // pred_region
        %s693 = ssub.s32 %s50, 1
        // Predicated region
        $region13: #{tpu_custom_call.1} parent=11 // pred_check
          %p694 = pneg %p123
        $region14: #{tpu_custom_call.1} parent=11 // pred_check_branch
          %696 = sbr.rel (%p694) target = $region16
        $region15: #{tpu_custom_call.1} parent=11 // pred_region
          %698 = vsyncadd [#allocation4], 0
          %s699 = sshll.u32 %s2, 4
          %s700 = int_to_ptr.hbm [resolvable:$true] %s699
          %s701 = sshll.u32 [#allocation3], 4
          %s702 = int_to_ptr.vmem [resolvable:$true] %s701
          %707 = dma.hbm_to_vmem [thread:$0]  %s700, 6144, %s702, [#allocation4], 64, 64, 4
        $region16: #{tpu_custom_call.1} parent=11 // pred_fallthru
          _
        // Predicated region
        $region17: #{tpu_custom_call.1} parent=11 // pred_check
          %p708 = pneg %p144
        $region18: #{tpu_custom_call.1} parent=11 // pred_check_branch
          %710 = sbr.rel (%p708) target = $region20
        $region19: #{tpu_custom_call.1} parent=11 // pred_region
          _
        $region20: #{tpu_custom_call.1} parent=11 // pred_fallthru
          _
        // Predicated region
        $region21: #{tpu_custom_call.1} parent=11 // pred_check
          %p711 = pneg %p165
        $region22: #{tpu_custom_call.1} parent=11 // pred_check_branch
          %713 = sbr.rel (%p711) target = $region24
        $region23: #{tpu_custom_call.1} parent=11 // pred_region
          %715 = vsyncadd [#allocation7], 0
          %s716 = sshll.u32 %s4, 4
          %s717 = int_to_ptr.hbm [resolvable:$true] %s716
          %s718 = sshll.u32 [#allocation6], 4
          %s719 = int_to_ptr.vmem [resolvable:$true] %s718
          %724 = dma.hbm_to_vmem [thread:$0]  %s717, 96, %s719, [#allocation7], 16, 16, 1
        $region24: #{tpu_custom_call.1} parent=11 // pred_fallthru
          _
        // Predicated region
        $region25: #{tpu_custom_call.1} parent=11 // pred_check
          %p725 = pneg %p186
        $region26: #{tpu_custom_call.1} parent=11 // pred_check_branch
          %727 = sbr.rel (%p725) target = $region28
        $region27: #{tpu_custom_call.1} parent=11 // pred_region
          %729 = vsyncadd [#allocation7], 0
          %s730 = sshll.u32 %s5, 4
          %s731 = int_to_ptr.hbm [resolvable:$true] %s730
          %s732 = sshll.u32 [#allocation8], 4
          %s733 = int_to_ptr.vmem [resolvable:$true] %s732
          %738 = dma.hbm_to_vmem [thread:$0]  %s731, 6144, %s733, [#allocation7], 64, 64, 4
        $region28: #{tpu_custom_call.1} parent=11 // pred_fallthru
          _
        // Predicated region
        $region29: #{tpu_custom_call.1} parent=11 // pred_check
          %p739 = pneg %p207
        $region30: #{tpu_custom_call.1} parent=11 // pred_check_branch
          %741 = sbr.rel (%p739) target = $region32
        $region31: #{tpu_custom_call.1} parent=11 // pred_region
          %743 = vsyncadd [#allocation10], 0
          %s744 = sshll.u32 %s6, 4
          %s745 = int_to_ptr.hbm [resolvable:$true] %s744
          %s746 = sshll.u32 [#allocation9], 4
          %s747 = int_to_ptr.vmem [resolvable:$true] %s746
          %752 = dma.hbm_to_vmem [thread:$0]  %s745, 96, %s747, [#allocation10], 16, 16, 1
        $region32: #{tpu_custom_call.1} parent=11 // pred_fallthru
          _
        // Predicated region
        $region33: #{tpu_custom_call.1} parent=11 // pred_check
          %p753 = pneg %p228
        $region34: #{tpu_custom_call.1} parent=11 // pred_check_branch
          %755 = sbr.rel (%p753) target = $region36
        $region35: #{tpu_custom_call.1} parent=11 // pred_region
          %757 = vsyncadd [#allocation10], 0
          %s758 = sshll.u32 %s7, 4
          %s759 = int_to_ptr.hbm [resolvable:$true] %s758
          %s760 = sshll.u32 [#allocation11], 4
          %s761 = int_to_ptr.vmem [resolvable:$true] %s760
          %766 = dma.hbm_to_vmem [thread:$0]  %s759, 96, %s761, [#allocation10], 16, 16, 1
        $region36: #{tpu_custom_call.1} parent=11 // pred_fallthru
          _
        // Predicated region
        $region37: #{tpu_custom_call.1} parent=11 // pred_check
          %p767 = pneg %p249
        $region38: #{tpu_custom_call.1} parent=11 // pred_check_branch
          %769 = sbr.rel (%p767) target = $region40
        $region39: #{tpu_custom_call.1} parent=11 // pred_region
          %771 = vsyncadd [#allocation13], 0
          %s772 = sshll.u32 %s8, 4
          %s773 = int_to_ptr.hbm [resolvable:$true] %s772
          %s774 = sshll.u32 [#allocation12], 4
          %s775 = int_to_ptr.vmem [resolvable:$true] %s774
          %780 = dma.hbm_to_vmem [thread:$0]  %s773, 6144, %s775, [#allocation13], 64, 64, 4
        $region40: #{tpu_custom_call.1} parent=11 // pred_fallthru
          _
        // Predicated region
        $region41: #{tpu_custom_call.1} parent=11 // pred_check
          %p781 = pneg %p270
        $region42: #{tpu_custom_call.1} parent=11 // pred_check_branch
          %783 = sbr.rel (%p781) target = $region44
        $region43: #{tpu_custom_call.1} parent=11 // pred_region
          _
        $region44: #{tpu_custom_call.1} parent=11 // pred_fallthru
          _
        // Predicated region
        $region45: #{tpu_custom_call.1} parent=11 // pred_check
          %p784 = pneg %p291
        $region46: #{tpu_custom_call.1} parent=11 // pred_check_branch
          %786 = sbr.rel (%p784) target = $region48
        $region47: #{tpu_custom_call.1} parent=11 // pred_region
          %788 = vsyncadd [#allocation13], 0
          %s790 = sshll.u32 %s10, 4
          %s791 = int_to_ptr.hbm [resolvable:$true] %s790
          %s792 = sshll.u32 [#allocation14], 4
          %s793 = int_to_ptr.vmem [resolvable:$true] %s792
          %795 = dma.hbm_to_vmem [thread:$0]  %s791, 32, %s793, [#allocation13]
        $region48: #{tpu_custom_call.1} parent=11 // pred_fallthru
          _
        // Predicated region
        $region49: #{tpu_custom_call.1} parent=11 // pred_check
          %p796 = pneg %p312
        $region50: #{tpu_custom_call.1} parent=11 // pred_check_branch
          %798 = sbr.rel (%p796) target = $region52
        $region51: #{tpu_custom_call.1} parent=11 // pred_region
          _
        $region52: #{tpu_custom_call.1} parent=11 // pred_fallthru
          _
        // Predicated region
        $region53: #{tpu_custom_call.1} parent=11 // pred_check
          %p799 = pneg %p333
        $region54: #{tpu_custom_call.1} parent=11 // pred_check_branch
          %801 = sbr.rel (%p799) target = $region56
        $region55: #{tpu_custom_call.1} parent=11 // pred_region
          %803 = vsyncadd [#allocation16], 0
          %s804 = sshll.u32 %s12, 4
          %s805 = int_to_ptr.hbm [resolvable:$true] %s804
          %s806 = sshll.u32 [#allocation15], 4
          %s807 = int_to_ptr.vmem [resolvable:$true] %s806
          %812 = dma.hbm_to_vmem [thread:$0]  %s805, 1024, %s807, [#allocation16], 64, 64, 4
        $region56: #{tpu_custom_call.1} parent=11 // pred_fallthru
          _
        // Predicated region
        $region57: #{tpu_custom_call.1} parent=11 // pred_check
          %p813 = pneg %p354
        $region58: #{tpu_custom_call.1} parent=11 // pred_check_branch
          %815 = sbr.rel (%p813) target = $region60
        $region59: #{tpu_custom_call.1} parent=11 // pred_region
          _
        $region60: #{tpu_custom_call.1} parent=11 // pred_fallthru
          _
        // Predicated region
        $region61: #{tpu_custom_call.1} parent=11 // pred_check
          %p816 = pneg %p375
        $region62: #{tpu_custom_call.1} parent=11 // pred_check_branch
          %818 = sbr.rel (%p816) target = $region64
        $region63: #{tpu_custom_call.1} parent=11 // pred_region
          _
        $region64: #{tpu_custom_call.1} parent=11 // pred_fallthru
          _
        // Predicated region
        $region65: #{tpu_custom_call.1} parent=11 // pred_check
          %p819 = pneg %p396
        $region66: #{tpu_custom_call.1} parent=11 // pred_check_branch
          %821 = sbr.rel (%p819) target = $region68
        $region67: #{tpu_custom_call.1} parent=11 // pred_region
          %823 = vsyncadd [#allocation16], 0
          %s824 = sshll.u32 %s15, 4
          %s825 = int_to_ptr.hbm [resolvable:$true] %s824
          %s826 = sshll.u32 [#allocation17], 4
          %s827 = int_to_ptr.vmem [resolvable:$true] %s826
          %832 = dma.hbm_to_vmem [thread:$0]  %s825, 1024, %s827, [#allocation16], 64, 64, 4
        $region68: #{tpu_custom_call.1} parent=11 // pred_fallthru
          _
        // Predicated region
        $region69: #{tpu_custom_call.1} parent=11 // pred_check
          %p833 = pneg %p417
        $region70: #{tpu_custom_call.1} parent=11 // pred_check_branch
          %835 = sbr.rel (%p833) target = $region72
        $region71: #{tpu_custom_call.1} parent=11 // pred_region
          %837 = vsyncadd [#allocation19], 0
          %s838 = sshll.u32 %s16, 4
          %s839 = int_to_ptr.hbm [resolvable:$true] %s838
          %s840 = sshll.u32 [#allocation18], 4
          %s841 = int_to_ptr.vmem [resolvable:$true] %s840
          %846 = dma.hbm_to_vmem [thread:$0]  %s839, 1024, %s841, [#allocation19], 64, 64, 4
        $region72: #{tpu_custom_call.1} parent=11 // pred_fallthru
          _
        // Predicated region
        $region73: #{tpu_custom_call.1} parent=11 // pred_check
          %p847 = pneg %p438
        $region74: #{tpu_custom_call.1} parent=11 // pred_check_branch
          %849 = sbr.rel (%p847) target = $region76
        $region75: #{tpu_custom_call.1} parent=11 // pred_region
          _
        $region76: #{tpu_custom_call.1} parent=11 // pred_fallthru
          _
        // Predicated region
        $region77: #{tpu_custom_call.1} parent=11 // pred_check
          %p850 = pneg %p459
        $region78: #{tpu_custom_call.1} parent=11 // pred_check_branch
          %852 = sbr.rel (%p850) target = $region80
        $region79: #{tpu_custom_call.1} parent=11 // pred_region
          _
        $region80: #{tpu_custom_call.1} parent=11 // pred_fallthru
          _
        // Predicated region
        $region81: #{tpu_custom_call.1} parent=11 // pred_check
          %p853 = pneg %p480
        $region82: #{tpu_custom_call.1} parent=11 // pred_check_branch
          %855 = sbr.rel (%p853) target = $region84
        $region83: #{tpu_custom_call.1} parent=11 // pred_region
          %857 = vsyncadd [#allocation19], 0
          %s858 = sshll.u32 %s19, 4
          %s859 = int_to_ptr.hbm [resolvable:$true] %s858
          %s860 = sshll.u32 [#allocation20], 4
          %s861 = int_to_ptr.vmem [resolvable:$true] %s860
          %866 = dma.hbm_to_vmem [thread:$0]  %s859, 1024, %s861, [#allocation19], 64, 64, 4
        $region84: #{tpu_custom_call.1} parent=11 // pred_fallthru
          _
        // Predicated region
        $region85: #{tpu_custom_call.1} parent=11 // pred_check
          %p867 = pneg %p501
        $region86: #{tpu_custom_call.1} parent=11 // pred_check_branch
          %869 = sbr.rel (%p867) target = $region88
        $region87: #{tpu_custom_call.1} parent=11 // pred_region
          _
        $region88: #{tpu_custom_call.1} parent=11 // pred_fallthru
          _
        // Predicated region
        $region89: #{tpu_custom_call.1} parent=11 // pred_check
          %p870 = pneg %p522
        $region90: #{tpu_custom_call.1} parent=11 // pred_check_branch
          %872 = sbr.rel (%p870) target = $region92
        $region91: #{tpu_custom_call.1} parent=11 // pred_region
          _
        $region92: #{tpu_custom_call.1} parent=11 // pred_fallthru
          _
        // Predicated region
        $region93: #{tpu_custom_call.1} parent=11 // pred_check
          %p873 = pneg %p543
        $region94: #{tpu_custom_call.1} parent=11 // pred_check_branch
          %875 = sbr.rel (%p873) target = $region96
        $region95: #{tpu_custom_call.1} parent=11 // pred_region
          %877 = vsyncadd [#allocation22], 0
          %s878 = sshll.u32 %s22, 4
          %s879 = int_to_ptr.hbm [resolvable:$true] %s878
          %s880 = sshll.u32 [#allocation21], 4
          %s881 = int_to_ptr.vmem [resolvable:$true] %s880
          %886 = dma.hbm_to_vmem [thread:$0]  %s879, 1024, %s881, [#allocation22], 64, 64, 4
        $region96: #{tpu_custom_call.1} parent=11 // pred_fallthru
          _
        // Predicated region
        $region97: #{tpu_custom_call.1} parent=11 // pred_check
          %p887 = pneg %p564
        $region98: #{tpu_custom_call.1} parent=11 // pred_check_branch
          %889 = sbr.rel (%p887) target = $region100
        $region99: #{tpu_custom_call.1} parent=11 // pred_region
          _
        $region100: #{tpu_custom_call.1} parent=11 // pred_fallthru
          _
        // Predicated region
        $region101: #{tpu_custom_call.1} parent=11 // pred_check
          %p890 = pneg %p585
        $region102: #{tpu_custom_call.1} parent=11 // pred_check_branch
          %892 = sbr.rel (%p890) target = $region104
        $region103: #{tpu_custom_call.1} parent=11 // pred_region
          _
        $region104: #{tpu_custom_call.1} parent=11 // pred_fallthru
          _
        // Predicated region
        $region105: #{tpu_custom_call.1} parent=11 // pred_check
          %p893 = pneg %p606
        $region106: #{tpu_custom_call.1} parent=11 // pred_check_branch
          %895 = sbr.rel (%p893) target = $region108
        $region107: #{tpu_custom_call.1} parent=11 // pred_region
          _
        $region108: #{tpu_custom_call.1} parent=11 // pred_fallthru
          _
        // Predicated region
        $region109: #{tpu_custom_call.1} parent=11 // pred_check
          %p896 = pneg %p627
        $region110: #{tpu_custom_call.1} parent=11 // pred_check_branch
          %898 = sbr.rel (%p896) target = $region112
        $region111: #{tpu_custom_call.1} parent=11 // pred_region
          _
        $region112: #{tpu_custom_call.1} parent=11 // pred_fallthru
          _
      $region12: #{tpu_custom_call.1} parent=5 // pred_fallthru
        _
      %p899 = scmp.lt.s32.totalorder %s50, 2
      // Predicated region
      $region113: #{tpu_custom_call.1} parent=5 // pred_check
        %p900 = pneg %p899
      $region114: #{tpu_custom_call.1} parent=5 // pred_check_branch
        %902 = sbr.rel (%p900) target = $region116
      $region115: #{tpu_custom_call.1} parent=5 // pred_region
        // Predicated region
        $region117: #{tpu_custom_call.1} parent=115 // pred_check
          %p903 = pneg %p70
        $region118: #{tpu_custom_call.1} parent=115 // pred_check_branch
          %905 = sbr.rel (%p903) target = $region120
        $region119: #{tpu_custom_call.1} parent=115 // pred_region
          %p906 = scmp.lt.s32.totalorder %s50, 1
          %s907 = scalar_select %p906, %s50, 1
          %s908 = smul.addr %s907, 8
          %s909 = scalar_lea.vmem %s0, %s908
        $region120: #{tpu_custom_call.1} parent=115 // pred_fallthru
          _
        // Predicated region
        $region121: #{tpu_custom_call.1} parent=115 // pred_check
          %p910 = pneg %p96
        $region122: #{tpu_custom_call.1} parent=115 // pred_check_branch
          %912 = sbr.rel (%p910) target = $region124
        $region123: #{tpu_custom_call.1} parent=115 // pred_region
          %p913 = scmp.lt.s32.totalorder %s50, 1
          %s914 = scalar_select %p913, %s50, 1
          %s915 = smul.addr %s914, 8
          %s916 = scalar_lea.vmem %s1, %s915
        $region124: #{tpu_custom_call.1} parent=115 // pred_fallthru
          _
      $region116: #{tpu_custom_call.1} parent=5 // pred_fallthru
        _
      %p917 = scmp.le.s32.totalorder 1, %s50
      %p918 = scmp.lt.s32.totalorder %s50, 3
      %p919 = pnand %p917, %p918
      %p920 = pneg %p919
      // Predicated region
      $region125: #{tpu_custom_call.1} parent=5 // pred_check
        _
      $region126: #{tpu_custom_call.1} parent=5 // pred_check_branch
        %922 = sbr.rel (%p919) target = $region128
      $region127: #{tpu_custom_call.1} parent=5 // pred_region
        %s923 = ssub.s32 %s50, 1
        // Predicated region
        $region129: #{tpu_custom_call.1} parent=127 // pred_check
          %p924 = pneg %p123
        $region130: #{tpu_custom_call.1} parent=127 // pred_check_branch
          %926 = sbr.rel (%p924) target = $region132
        $region131: #{tpu_custom_call.1} parent=127 // pred_region
          %928 = dma.done [#allocation4], 6144
        $region132: #{tpu_custom_call.1} parent=127 // pred_fallthru
          _
        // Predicated region
        $region133: #{tpu_custom_call.1} parent=127 // pred_check
          %p929 = pneg %p165
        $region134: #{tpu_custom_call.1} parent=127 // pred_check_branch
          %931 = sbr.rel (%p929) target = $region136
        $region135: #{tpu_custom_call.1} parent=127 // pred_region
          %933 = dma.done [#allocation7], 96
        $region136: #{tpu_custom_call.1} parent=127 // pred_fallthru
          _
        // Predicated region
        $region137: #{tpu_custom_call.1} parent=127 // pred_check
          %p934 = pneg %p186
        $region138: #{tpu_custom_call.1} parent=127 // pred_check_branch
          %936 = sbr.rel (%p934) target = $region140
        $region139: #{tpu_custom_call.1} parent=127 // pred_region
          %938 = dma.done [#allocation7], 6144
        $region140: #{tpu_custom_call.1} parent=127 // pred_fallthru
          _
        // Predicated region
        $region141: #{tpu_custom_call.1} parent=127 // pred_check
          %p939 = pneg %p207
        $region142: #{tpu_custom_call.1} parent=127 // pred_check_branch
          %941 = sbr.rel (%p939) target = $region144
        $region143: #{tpu_custom_call.1} parent=127 // pred_region
          %943 = dma.done [#allocation10], 96
        $region144: #{tpu_custom_call.1} parent=127 // pred_fallthru
          _
        // Predicated region
        $region145: #{tpu_custom_call.1} parent=127 // pred_check
          %p944 = pneg %p228
        $region146: #{tpu_custom_call.1} parent=127 // pred_check_branch
          %946 = sbr.rel (%p944) target = $region148
        $region147: #{tpu_custom_call.1} parent=127 // pred_region
          %948 = dma.done [#allocation10], 96
        $region148: #{tpu_custom_call.1} parent=127 // pred_fallthru
          _
        // Predicated region
        $region149: #{tpu_custom_call.1} parent=127 // pred_check
          %p949 = pneg %p249
        $region150: #{tpu_custom_call.1} parent=127 // pred_check_branch
          %951 = sbr.rel (%p949) target = $region152
        $region151: #{tpu_custom_call.1} parent=127 // pred_region
          %953 = dma.done [#allocation13], 6144
        $region152: #{tpu_custom_call.1} parent=127 // pred_fallthru
          _
        // Predicated region
        $region153: #{tpu_custom_call.1} parent=127 // pred_check
          %p954 = pneg %p291
        $region154: #{tpu_custom_call.1} parent=127 // pred_check_branch
          %956 = sbr.rel (%p954) target = $region156
        $region155: #{tpu_custom_call.1} parent=127 // pred_region
          %958 = dma.done [#allocation13], 32
        $region156: #{tpu_custom_call.1} parent=127 // pred_fallthru
          _
        // Predicated region
        $region157: #{tpu_custom_call.1} parent=127 // pred_check
          %p959 = pneg %p333
        $region158: #{tpu_custom_call.1} parent=127 // pred_check_branch
          %961 = sbr.rel (%p959) target = $region160
        $region159: #{tpu_custom_call.1} parent=127 // pred_region
          %963 = dma.done [#allocation16], 1024
        $region160: #{tpu_custom_call.1} parent=127 // pred_fallthru
          _
        // Predicated region
        $region161: #{tpu_custom_call.1} parent=127 // pred_check
          %p964 = pneg %p396
        $region162: #{tpu_custom_call.1} parent=127 // pred_check_branch
          %966 = sbr.rel (%p964) target = $region164
        $region163: #{tpu_custom_call.1} parent=127 // pred_region
          %968 = dma.done [#allocation16], 1024
        $region164: #{tpu_custom_call.1} parent=127 // pred_fallthru
          _
        // Predicated region
        $region165: #{tpu_custom_call.1} parent=127 // pred_check
          %p969 = pneg %p417
        $region166: #{tpu_custom_call.1} parent=127 // pred_check_branch
          %971 = sbr.rel (%p969) target = $region168
        $region167: #{tpu_custom_call.1} parent=127 // pred_region
          %973 = dma.done [#allocation19], 1024
        $region168: #{tpu_custom_call.1} parent=127 // pred_fallthru
          _
        // Predicated region
        $region169: #{tpu_custom_call.1} parent=127 // pred_check
          %p974 = pneg %p480
        $region170: #{tpu_custom_call.1} parent=127 // pred_check_branch
          %976 = sbr.rel (%p974) target = $region172
        $region171: #{tpu_custom_call.1} parent=127 // pred_region
          %978 = dma.done [#allocation19], 1024
        $region172: #{tpu_custom_call.1} parent=127 // pred_fallthru
          _
        // Predicated region
        $region173: #{tpu_custom_call.1} parent=127 // pred_check
          %p979 = pneg %p543
        $region174: #{tpu_custom_call.1} parent=127 // pred_check_branch
          %981 = sbr.rel (%p979) target = $region176
        $region175: #{tpu_custom_call.1} parent=127 // pred_region
          %983 = dma.done [#allocation22], 1024
        $region176: #{tpu_custom_call.1} parent=127 // pred_fallthru
          _
        %p984 = scmp.lt.s32.totalorder %s55, 1
        %s985 = scalar_select %p984, %s55, 1
        %s986 = smul.addr %s985, 8
        %s987 = scalar_lea.vmem %s0, %s986
        %p988 = pneg %p76
        %p989 = pneg %p73
        %p990 = scmp.lt.s32.totalorder %s55, 1
        %s991 = scalar_select %p990, %s55, 1
        %s992 = smul.addr %s991, 8
        %s993 = scalar_lea.vmem %s1, %s992
        %p994 = pneg %p102
        %p995 = pneg %p99
        %p996 = pneg %p123
        %p997 = pneg %p120
        %p998 = pneg %p144
        %p999 = pneg %p141
        %p1000 = pneg %p165
        %p1001 = pneg %p162
        %p1002 = pneg %p186
        %p1003 = pneg %p183
        %p1004 = pneg %p207
        %p1005 = pneg %p204
        %p1006 = pneg %p228
        %p1007 = pneg %p225
        %p1008 = pneg %p249
        %p1009 = pneg %p246
        %p1010 = pneg %p270
        %p1011 = pneg %p267
        %p1012 = pneg %p291
        %p1013 = pneg %p288
        %p1014 = pneg %p312
        %p1015 = pneg %p309
        %p1016 = pneg %p333
        %p1017 = pneg %p330
        %p1018 = pneg %p354
        %p1019 = pneg %p351
        %p1020 = pneg %p375
        %p1021 = pneg %p372
        %p1022 = pneg %p396
        %p1023 = pneg %p393
        %p1024 = pneg %p417
        %p1025 = pneg %p414
        %p1026 = pneg %p438
        %p1027 = pneg %p435
        %p1028 = pneg %p459
        %p1029 = pneg %p456
        %p1030 = pneg %p480
        %p1031 = pneg %p477
        %p1032 = pneg %p501
        %p1033 = pneg %p498
        %p1034 = pneg %p522
        %p1035 = pneg %p519
        %p1036 = pneg %p543
        %p1037 = pneg %p540
        %p1038 = pneg %p564
        %p1039 = pneg %p561
        %p1040 = pneg %p585
        %p1041 = pneg %p582
        %p1042 = pneg %p606
        %p1043 = pneg %p603
        %p1044 = pneg %p627
        %p1045 = pneg %p624
        %p1046 = pneg %p653
        %p1047 = pneg %p650
        %s1048 = sand.u32 %s640, 1
        %s1049 = scalar_lea.sflag [#allocation5], %s1048
        %s1050 = sand.u32 %s640, 1
        %s1051 = smul.addr %s1050, 48
        %s1052 = scalar_lea.vmem [#allocation23], %s1051
        %p1053 = pneg %p679
        %p1054 = pneg %p676
        %s1055 = sand.u32 %s666, 1
        %s1056 = scalar_lea.sflag [#allocation25], %s1055
        %s1057 = sand.u32 %s666, 1
        %s1058 = smul.addr %s1057, 8
        %s1059 = scalar_lea.vmem [#allocation24], %s1058
        %p1060 = scmp.lt.s32.totalorder %s55, 1
        %s1061 = scalar_select %p1060, %s55, 1
        %s1062 = smul.addr %s1061, 8
        %s1063 = scalar_lea.vmem %s0, %s1062
        %p1064 = scmp.lt.s32.totalorder %s55, 1
        %s1065 = scalar_select %p1064, %s55, 1
        %s1066 = smul.addr %s1065, 8
        %s1067 = scalar_lea.vmem %s1, %s1066
        %v1068 = vld [vmem:[%s1063] sm:$0xff]
        %v1069 = vpack.c.bf16 %v1068, %v1068
        %v1070 = vld [vmem:[%s1067] sm:$0xff]
        %v1071 = vld [vmem:[#allocation18] sm:$0xf]
        %v1072 = vld [vmem:[#allocation18 + $0x4] sm:$0xf]
        %v1073 = vld [vmem:[#allocation18 + $0x8] sm:$0xf]
        %v1074 = vld [vmem:[#allocation18 + $0xc] sm:$0xf]
        %v1075 = vld [vmem:[#allocation18 + $0x10] sm:$0xf]
        %v1076 = vld [vmem:[#allocation18 + $0x14] sm:$0xf]
        %v1077 = vld [vmem:[#allocation18 + $0x18] sm:$0xf]
        %v1078 = vld [vmem:[#allocation18 + $0x1c] sm:$0xf]
        %v1079 = vld [vmem:[#allocation18 + $0x20] sm:$0xf]
        %v1080 = vld [vmem:[#allocation18 + $0x24] sm:$0xf]
        %v1081 = vld [vmem:[#allocation18 + $0x28] sm:$0xf]
        %v1082 = vld [vmem:[#allocation18 + $0x2c] sm:$0xf]
        %v1083 = vld [vmem:[#allocation18 + $0x30] sm:$0xf]
        %v1084 = vld [vmem:[#allocation18 + $0x34] sm:$0xf]
        %v1085 = vld [vmem:[#allocation18 + $0x38] sm:$0xf]
        %v1086 = vld [vmem:[#allocation18 + $0x3c] sm:$0xf]
        %v1103 = vunpack.c.l.b16 %v1071
        %v1104 = vunpack.c.l.b16 %v1072
        %v1105 = vunpack.c.l.b16 %v1073
        %v1106 = vunpack.c.l.b16 %v1074
        %v1107 = vunpack.c.l.b16 %v1075
        %v1108 = vunpack.c.l.b16 %v1076
        %v1109 = vunpack.c.l.b16 %v1077
        %v1110 = vunpack.c.l.b16 %v1078
        %v1111 = vunpack.c.l.b16 %v1079
        %v1112 = vunpack.c.l.b16 %v1080
        %v1113 = vunpack.c.l.b16 %v1081
        %v1114 = vunpack.c.l.b16 %v1082
        %v1115 = vunpack.c.l.b16 %v1083
        %v1116 = vunpack.c.l.b16 %v1084
        %v1117 = vunpack.c.l.b16 %v1085
        %v1118 = vunpack.c.l.b16 %v1086
        %v1119 = vpack.c.b16 %v1104, %v1103
        %v1120 = vpack.c.b16 %v1106, %v1105
        %v1121 = vpack.c.b16 %v1108, %v1107
        %v1122 = vpack.c.b16 %v1110, %v1109
        %v1123 = vpack.c.b16 %v1112, %v1111
        %v1124 = vpack.c.b16 %v1114, %v1113
        %v1125 = vpack.c.b16 %v1116, %v1115
        %v1126 = vpack.c.b16 %v1118, %v1117
        %1135 = vmatpush.bf16.msra.mxu0 %v1126
        %1136 = vmatpush.bf16.msra.mxu0 %v1125
        %1137 = vmatpush.bf16.msra.mxu0 %v1124
        %1138 = vmatpush.bf16.msra.mxu0 %v1123
        %1139 = vmatpush.bf16.msra.mxu0 %v1122
        %1140 = vmatpush.bf16.msra.mxu0 %v1121
        %1141 = vmatpush.bf16.msra.mxu0 %v1120
        %1142 = vmatpush.bf16.msra.mxu0 %v1119
        %1143 = vmatmul.bf16.gmra.mxu0 %v1069
        %v1144 = vpop.f32.mrf.mxu0
        %v1145 = vadd.f32 0.0, %v1144
        %v1146 = vpop.f32.mrf.mxu0
        %1147 = vdwg.mxu0
        %v1148 = vlaneseq
        %v1149 = vand.u32 %v1148, 127
        %vm1150 = vcmp.lt.s32.totalorder %v1149, 0
        %v1151 = vsub.s32 0, %v1149
        %v1152 = vsel %vm1150, %v1151, %v1149
        %v1153 = vshrl.u32 %v1152, 1
        %v1154 = vand.u32 %v1152, 1
        %v1155 = vsub.s32 0, %v1154
        %v1156 = vsel %vm1150, %v1155, %v1154
        %vm1157 = vcmp.ne.s32.totalorder %v1156, 0
        %vm1158 = vcmp.lt.s32.totalorder %v1156, 0
        %vm1159 = vmand %vm1158, %vm1157
        %v1160 = vadd.s32 %v1156, 2
        %v1161 = vsel %vm1159, %v1160, %v1156
        %vm1162 = vcmp.eq.s32.totalorder %v1161, 0
        %v1163 = vsel %vm1162, 1, 0
        %vm1164 = vcmp.eq.s32.totalorder %v1163, 1
        %1166 = vset.pattern.permute.xlu0 0
        %1167 = vperm.xlu0 %1166, %v1070
        %v1168 = vpop.permute.xlu0 %1167
        %1170 = vset.pattern.permute.xlu0 1
        %1171 = vperm.xlu0 %1170, %v1070
        %v1172 = vpop.permute.xlu0 %1171
        %v1174 = vsel %vm1164, %v1168, %v1172
        %v1175 = vld [vmem:[#allocation14] sm:$0x1]
        %v1176 = vld [vmem:[#allocation14 + $0x1] sm:$0x1]
        %v1177 = vld [vmem:[%s11] sm:$0x1]
        %v1178 = vld [vmem:[#allocation3] sm:$0xf]
        %v1179 = vld [vmem:[#allocation3 + $0x4] sm:$0xf]
        %v1180 = vld [vmem:[#allocation3 + $0x8] sm:$0xf]
        %v1181 = vld [vmem:[#allocation3 + $0xc] sm:$0xf]
        %v1182 = vld [vmem:[#allocation3 + $0x10] sm:$0xf]
        %v1183 = vld [vmem:[#allocation3 + $0x14] sm:$0xf]
        %v1184 = vld [vmem:[#allocation3 + $0x18] sm:$0xf]
        %v1185 = vld [vmem:[#allocation3 + $0x1c] sm:$0xf]
        %v1186 = vld [vmem:[#allocation3 + $0x20] sm:$0xf]
        %v1187 = vld [vmem:[#allocation3 + $0x24] sm:$0xf]
        %v1188 = vld [vmem:[#allocation3 + $0x28] sm:$0xf]
        %v1189 = vld [vmem:[#allocation3 + $0x2c] sm:$0xf]
        %v1190 = vld [vmem:[#allocation3 + $0x30] sm:$0xf]
        %v1191 = vld [vmem:[#allocation3 + $0x34] sm:$0xf]
        %v1192 = vld [vmem:[#allocation3 + $0x38] sm:$0xf]
        %v1193 = vld [vmem:[#allocation3 + $0x3c] sm:$0xf]
        %v1210 = vunpack.c.l.b16 %v1178
        %v1211 = vunpack.c.l.b16 %v1179
        %v1212 = vunpack.c.l.b16 %v1180
        %v1213 = vunpack.c.l.b16 %v1181
        %v1214 = vunpack.c.l.b16 %v1182
        %v1215 = vunpack.c.l.b16 %v1183
        %v1216 = vunpack.c.l.b16 %v1184
        %v1217 = vunpack.c.l.b16 %v1185
        %v1218 = vunpack.c.l.b16 %v1186
        %v1219 = vunpack.c.l.b16 %v1187
        %v1220 = vunpack.c.l.b16 %v1188
        %v1221 = vunpack.c.l.b16 %v1189
        %v1222 = vunpack.c.l.b16 %v1190
        %v1223 = vunpack.c.l.b16 %v1191
        %v1224 = vunpack.c.l.b16 %v1192
        %v1225 = vunpack.c.l.b16 %v1193
        %v1226 = vpack.c.b16 %v1211, %v1210
        %v1227 = vpack.c.b16 %v1213, %v1212
        %v1228 = vpack.c.b16 %v1215, %v1214
        %v1229 = vpack.c.b16 %v1217, %v1216
        %v1230 = vpack.c.b16 %v1219, %v1218
        %v1231 = vpack.c.b16 %v1221, %v1220
        %v1232 = vpack.c.b16 %v1223, %v1222
        %v1233 = vpack.c.b16 %v1225, %v1224
        %1242 = vmatpush.bf16.msra.mxu0 %v1233
        %1243 = vmatpush.bf16.msra.mxu0 %v1232
        %1244 = vmatpush.bf16.msra.mxu0 %v1231
        %1245 = vmatpush.bf16.msra.mxu0 %v1230
        %1246 = vmatpush.bf16.msra.mxu0 %v1229
        %1247 = vmatpush.bf16.msra.mxu0 %v1228
        %1248 = vmatpush.bf16.msra.mxu0 %v1227
        %1249 = vmatpush.bf16.msra.mxu0 %v1226
        %1250 = vmatmul.bf16.gmra.mxu0 %v1069
        %v1251 = vpop.f32.mrf.mxu0
        %v1252 = vadd.f32 0.0, %v1251
        %v1253 = vpop.f32.mrf.mxu0
        %1254 = vdwg.mxu0
        %v1255 = vld [vmem:[%s3] sm:$0x1]
        %v1256 = vld [vmem:[#allocation6] sm:$0x1]
        %1257 = vadd.xlane.f32.xlu0 %v1252
        %v1258 = vpop.xlane.xlu0 %1257
        %v1259 = vrcp.pop 128.0
        %v1260 = vmul.f32 128.0, %v1259
        %v1261 = vsub.f32 1.0, %v1260
        %v1262 = vmul.f32 %v1259, %v1261
        %v1263 = vadd.f32 %v1259, %v1262
        %vm1264 = vweird.f32 %v1259
        %v1265 = vsel %vm1264, %v1259, %v1263
        %v1266 = vmul.f32 %v1258, %v1265
        %v1267 = vsub.f32 %v1252, %v1266
        %v1268 = vmul.f32 %v1267, %v1267
        %1269 = vadd.xlane.f32.xlu0 %v1268
        %v1270 = vpop.xlane.xlu0 %1269
        %v1271 = vmul.f32 %v1270, %v1265
        %v1272 = vadd.f32 %v1271, 1e-05
        %v1273 = vrsqrt.pop %v1272
        %v1274 = vmul.f32 %v1273, %v1272
        %v1275 = vmul.f32 %v1274, %v1273
        %v1276 = vmul.f32 0.5, %v1275
        %v1277 = vsub.f32 1.5, %v1276
        %v1278 = vmul.f32 %v1273, %v1277
        %vm1279 = vweird.f32 %v1272
        %vm1280 = vweird.f32 %v1273
        %vm1281 = vmor %vm1279, %vm1280
        %v1282 = vsel %vm1281, %v1273, %v1278
        %v1283 = vmul.f32 %v1267, %v1282
        %v1285 = vperm.slane %v1255, 0
        %v1287 = vmul.f32 %v1283, %v1285
        %v1289 = vperm.slane %v1256, 0
        %v1291 = vadd.f32 %v1287, %v1289
        %v1292 = vmax.f32 %v1291, 0.0
        %v1293 = vpack.c.bf16 %v1292, %v1292
        %v1294 = vld [vmem:[#allocation8] sm:$0xf]
        %v1295 = vld [vmem:[#allocation8 + $0x4] sm:$0xf]
        %v1296 = vld [vmem:[#allocation8 + $0x8] sm:$0xf]
        %v1297 = vld [vmem:[#allocation8 + $0xc] sm:$0xf]
        %v1298 = vld [vmem:[#allocation8 + $0x10] sm:$0xf]
        %v1299 = vld [vmem:[#allocation8 + $0x14] sm:$0xf]
        %v1300 = vld [vmem:[#allocation8 + $0x18] sm:$0xf]
        %v1301 = vld [vmem:[#allocation8 + $0x1c] sm:$0xf]
        %v1302 = vld [vmem:[#allocation8 + $0x20] sm:$0xf]
        %v1303 = vld [vmem:[#allocation8 + $0x24] sm:$0xf]
        %v1304 = vld [vmem:[#allocation8 + $0x28] sm:$0xf]
        %v1305 = vld [vmem:[#allocation8 + $0x2c] sm:$0xf]
        %v1306 = vld [vmem:[#allocation8 + $0x30] sm:$0xf]
        %v1307 = vld [vmem:[#allocation8 + $0x34] sm:$0xf]
        %v1308 = vld [vmem:[#allocation8 + $0x38] sm:$0xf]
        %v1309 = vld [vmem:[#allocation8 + $0x3c] sm:$0xf]
        %v1326 = vunpack.c.l.b16 %v1294
        %v1327 = vunpack.c.l.b16 %v1295
        %v1328 = vunpack.c.l.b16 %v1296
        %v1329 = vunpack.c.l.b16 %v1297
        %v1330 = vunpack.c.l.b16 %v1298
        %v1331 = vunpack.c.l.b16 %v1299
        %v1332 = vunpack.c.l.b16 %v1300
        %v1333 = vunpack.c.l.b16 %v1301
        %v1334 = vunpack.c.l.b16 %v1302
        %v1335 = vunpack.c.l.b16 %v1303
        %v1336 = vunpack.c.l.b16 %v1304
        %v1337 = vunpack.c.l.b16 %v1305
        %v1338 = vunpack.c.l.b16 %v1306
        %v1339 = vunpack.c.l.b16 %v1307
        %v1340 = vunpack.c.l.b16 %v1308
        %v1341 = vunpack.c.l.b16 %v1309
        %v1342 = vpack.c.b16 %v1327, %v1326
        %v1343 = vpack.c.b16 %v1329, %v1328
        %v1344 = vpack.c.b16 %v1331, %v1330
        %v1345 = vpack.c.b16 %v1333, %v1332
        %v1346 = vpack.c.b16 %v1335, %v1334
        %v1347 = vpack.c.b16 %v1337, %v1336
        %v1348 = vpack.c.b16 %v1339, %v1338
        %v1349 = vpack.c.b16 %v1341, %v1340
        %1358 = vmatpush.bf16.msra.mxu0 %v1349
        %1359 = vmatpush.bf16.msra.mxu0 %v1348
        %1360 = vmatpush.bf16.msra.mxu0 %v1347
        %1361 = vmatpush.bf16.msra.mxu0 %v1346
        %1362 = vmatpush.bf16.msra.mxu0 %v1345
        %1363 = vmatpush.bf16.msra.mxu0 %v1344
        %1364 = vmatpush.bf16.msra.mxu0 %v1343
        %1365 = vmatpush.bf16.msra.mxu0 %v1342
        %1366 = vmatmul.bf16.gmra.mxu0 %v1293
        %v1367 = vpop.f32.mrf.mxu0
        %v1368 = vadd.f32 0.0, %v1367
        %v1369 = vpop.f32.mrf.mxu0
        %1370 = vdwg.mxu0
        %v1371 = vld [vmem:[#allocation9] sm:$0x1]
        %v1372 = vld [vmem:[#allocation11] sm:$0x1]
        %1373 = vadd.xlane.f32.xlu0 %v1368
        %v1374 = vpop.xlane.xlu0 %1373
        %v1375 = vmul.f32 %v1374, %v1265
        %v1376 = vsub.f32 %v1368, %v1375
        %v1377 = vmul.f32 %v1376, %v1376
        %1378 = vadd.xlane.f32.xlu0 %v1377
        %v1379 = vpop.xlane.xlu0 %1378
        %v1380 = vmul.f32 %v1379, %v1265
        %v1381 = vadd.f32 %v1380, 1e-05
        %v1382 = vrsqrt.pop %v1381
        %v1383 = vmul.f32 %v1382, %v1381
        %v1384 = vmul.f32 %v1383, %v1382
        %v1385 = vmul.f32 0.5, %v1384
        %v1386 = vsub.f32 1.5, %v1385
        %v1387 = vmul.f32 %v1382, %v1386
        %vm1388 = vweird.f32 %v1381
        %vm1389 = vweird.f32 %v1382
        %vm1390 = vmor %vm1388, %vm1389
        %v1391 = vsel %vm1390, %v1382, %v1387
        %v1392 = vmul.f32 %v1376, %v1391
        %v1394 = vperm.slane %v1371, 0
        %v1396 = vmul.f32 %v1392, %v1394
        %v1398 = vperm.slane %v1372, 0
        %v1400 = vadd.f32 %v1396, %v1398
        %v1401 = vadd.f32 %v1400, %v1068
        %v1402 = vmax.f32 %v1401, 0.0
        %v1403 = vpack.c.bf16 %v1402, %v1402
        %v1404 = vld [vmem:[#allocation12] sm:$0xf]
        %v1405 = vld [vmem:[#allocation12 + $0x4] sm:$0xf]
        %v1406 = vld [vmem:[#allocation12 + $0x8] sm:$0xf]
        %v1407 = vld [vmem:[#allocation12 + $0xc] sm:$0xf]
        %v1408 = vld [vmem:[#allocation12 + $0x10] sm:$0xf]
        %v1409 = vld [vmem:[#allocation12 + $0x14] sm:$0xf]
        %v1410 = vld [vmem:[#allocation12 + $0x18] sm:$0xf]
        %v1411 = vld [vmem:[#allocation12 + $0x1c] sm:$0xf]
        %v1412 = vld [vmem:[#allocation12 + $0x20] sm:$0xf]
        %v1413 = vld [vmem:[#allocation12 + $0x24] sm:$0xf]
        %v1414 = vld [vmem:[#allocation12 + $0x28] sm:$0xf]
        %v1415 = vld [vmem:[#allocation12 + $0x2c] sm:$0xf]
        %v1416 = vld [vmem:[#allocation12 + $0x30] sm:$0xf]
        %v1417 = vld [vmem:[#allocation12 + $0x34] sm:$0xf]
        %v1418 = vld [vmem:[#allocation12 + $0x38] sm:$0xf]
        %v1419 = vld [vmem:[#allocation12 + $0x3c] sm:$0xf]
        %v1420 = vld [vmem:[%s9] sm:$0x1]
        %v1422 = vperm.slane %v1420, 0
        %v1440 = vunpack.c.l.b16 %v1404
        %v1441 = vunpack.c.l.b16 %v1405
        %v1442 = vunpack.c.l.b16 %v1406
        %v1443 = vunpack.c.l.b16 %v1407
        %v1444 = vunpack.c.l.b16 %v1408
        %v1445 = vunpack.c.l.b16 %v1409
        %v1446 = vunpack.c.l.b16 %v1410
        %v1447 = vunpack.c.l.b16 %v1411
        %v1448 = vunpack.c.l.b16 %v1412
        %v1449 = vunpack.c.l.b16 %v1413
        %v1450 = vunpack.c.l.b16 %v1414
        %v1451 = vunpack.c.l.b16 %v1415
        %v1452 = vunpack.c.l.b16 %v1416
        %v1453 = vunpack.c.l.b16 %v1417
        %v1454 = vunpack.c.l.b16 %v1418
        %v1455 = vunpack.c.l.b16 %v1419
        %v1456 = vpack.c.b16 %v1441, %v1440
        %v1457 = vpack.c.b16 %v1443, %v1442
        %v1458 = vpack.c.b16 %v1445, %v1444
        %v1459 = vpack.c.b16 %v1447, %v1446
        %v1460 = vpack.c.b16 %v1449, %v1448
        %v1461 = vpack.c.b16 %v1451, %v1450
        %v1462 = vpack.c.b16 %v1453, %v1452
        %v1463 = vpack.c.b16 %v1455, %v1454
        %1472 = vmatpush.bf16.msra.mxu0 %v1463
        %1473 = vmatpush.bf16.msra.mxu0 %v1462
        %1474 = vmatpush.bf16.msra.mxu0 %v1461
        %1475 = vmatpush.bf16.msra.mxu0 %v1460
        %1476 = vmatpush.bf16.msra.mxu0 %v1459
        %1477 = vmatpush.bf16.msra.mxu0 %v1458
        %1478 = vmatpush.bf16.msra.mxu0 %v1457
        %1479 = vmatpush.bf16.msra.mxu0 %v1456
        %1480 = vmatmul.bf16.gmra.mxu0 %v1403
        %v1481 = vpop.f32.mrf.mxu0
        %v1482 = vadd.f32 %v1422, %v1481
        %v1483 = vpop.f32.mrf.mxu0
        %1484 = vdwg.mxu0
        %v1485 = vadd.f32 %v1482, %v1174
        %1486 = vst [vmem:[%s1052] sm:$0xff] %v1485
        %1488 = vrot.lane.b32.xlu0 %v1485, 70
        %v1489 = vpop.permute.xlu0 %1488
        %v1491 = vsub.f32 %v1070, %v1489
        %1493 = vset.pattern.permute.xlu0 0
        %1494 = vperm.xlu0 %1493, %v1491
        %v1495 = vpop.permute.xlu0 %1494
        %v1497 = vperm.slane %v1175, 0
        %v1498 = vmul.f32 %v1495, %v1497
        %1499 = vset.pattern.permute.xlu0 1
        %1500 = vperm.xlu0 %1499, %v1491
        %v1501 = vpop.permute.xlu0 %1500
        %v1503 = vperm.slane %v1176, 0
        %v1504 = vmul.f32 %v1501, %v1503
        %v1505 = vadd.f32 %v1498, %v1504
        %v1507 = vperm.slane %v1177, 0
        %v1509 = vadd.f32 %v1505, %v1507
        %v1510 = vmax.f32 %v1509, 0.0
        %v1511 = vpack.c.bf16 %v1510, %v1510
        %v1512 = vld [vmem:[#allocation15] sm:$0xf]
        %v1513 = vld [vmem:[#allocation15 + $0x4] sm:$0xf]
        %v1514 = vld [vmem:[#allocation15 + $0x8] sm:$0xf]
        %v1515 = vld [vmem:[#allocation15 + $0xc] sm:$0xf]
        %v1516 = vld [vmem:[#allocation15 + $0x10] sm:$0xf]
        %v1517 = vld [vmem:[#allocation15 + $0x14] sm:$0xf]
        %v1518 = vld [vmem:[#allocation15 + $0x18] sm:$0xf]
        %v1519 = vld [vmem:[#allocation15 + $0x1c] sm:$0xf]
        %v1520 = vld [vmem:[#allocation15 + $0x20] sm:$0xf]
        %v1521 = vld [vmem:[#allocation15 + $0x24] sm:$0xf]
        %v1522 = vld [vmem:[#allocation15 + $0x28] sm:$0xf]
        %v1523 = vld [vmem:[#allocation15 + $0x2c] sm:$0xf]
        %v1524 = vld [vmem:[#allocation15 + $0x30] sm:$0xf]
        %v1525 = vld [vmem:[#allocation15 + $0x34] sm:$0xf]
        %v1526 = vld [vmem:[#allocation15 + $0x38] sm:$0xf]
        %v1527 = vld [vmem:[#allocation15 + $0x3c] sm:$0xf]
        %v1544 = vunpack.c.l.b16 %v1512
        %v1545 = vunpack.c.l.b16 %v1513
        %v1546 = vunpack.c.l.b16 %v1514
        %v1547 = vunpack.c.l.b16 %v1515
        %v1548 = vunpack.c.l.b16 %v1516
        %v1549 = vunpack.c.l.b16 %v1517
        %v1550 = vunpack.c.l.b16 %v1518
        %v1551 = vunpack.c.l.b16 %v1519
        %v1552 = vunpack.c.l.b16 %v1520
        %v1553 = vunpack.c.l.b16 %v1521
        %v1554 = vunpack.c.l.b16 %v1522
        %v1555 = vunpack.c.l.b16 %v1523
        %v1556 = vunpack.c.l.b16 %v1524
        %v1557 = vunpack.c.l.b16 %v1525
        %v1558 = vunpack.c.l.b16 %v1526
        %v1559 = vunpack.c.l.b16 %v1527
        %v1560 = vpack.c.b16 %v1545, %v1544
        %v1561 = vpack.c.b16 %v1547, %v1546
        %v1562 = vpack.c.b16 %v1549, %v1548
        %v1563 = vpack.c.b16 %v1551, %v1550
        %v1564 = vpack.c.b16 %v1553, %v1552
        %v1565 = vpack.c.b16 %v1555, %v1554
        %v1566 = vpack.c.b16 %v1557, %v1556
        %v1567 = vpack.c.b16 %v1559, %v1558
        %1576 = vmatpush.bf16.msra.mxu0 %v1567
        %1577 = vmatpush.bf16.msra.mxu0 %v1566
        %1578 = vmatpush.bf16.msra.mxu0 %v1565
        %1579 = vmatpush.bf16.msra.mxu0 %v1564
        %1580 = vmatpush.bf16.msra.mxu0 %v1563
        %1581 = vmatpush.bf16.msra.mxu0 %v1562
        %1582 = vmatpush.bf16.msra.mxu0 %v1561
        %1583 = vmatpush.bf16.msra.mxu0 %v1560
        %1584 = vmatmul.bf16.gmra.mxu0 %v1511
        %v1585 = vpop.f32.mrf.mxu0
        %v1586 = vadd.f32 0.0, %v1585
        %v1587 = vpop.f32.mrf.mxu0
        %1588 = vdwg.mxu0
        %v1589 = vld [vmem:[%s13] sm:$0x1]
        %v1590 = vld [vmem:[%s14] sm:$0x1]
        %1591 = vadd.xlane.f32.xlu0 %v1586
        %v1592 = vpop.xlane.xlu0 %1591
        %v1593 = vmul.f32 %v1592, %v1265
        %v1594 = vsub.f32 %v1586, %v1593
        %v1595 = vmul.f32 %v1594, %v1594
        %1596 = vadd.xlane.f32.xlu0 %v1595
        %v1597 = vpop.xlane.xlu0 %1596
        %v1598 = vmul.f32 %v1597, %v1265
        %v1599 = vadd.f32 %v1598, 1e-05
        %v1600 = vrsqrt.pop %v1599
        %v1601 = vmul.f32 %v1600, %v1599
        %v1602 = vmul.f32 %v1601, %v1600
        %v1603 = vmul.f32 0.5, %v1602
        %v1604 = vsub.f32 1.5, %v1603
        %v1605 = vmul.f32 %v1600, %v1604
        %vm1606 = vweird.f32 %v1599
        %vm1607 = vweird.f32 %v1600
        %vm1608 = vmor %vm1606, %vm1607
        %v1609 = vsel %vm1608, %v1600, %v1605
        %v1610 = vmul.f32 %v1594, %v1609
        %v1612 = vperm.slane %v1589, 0
        %v1614 = vmul.f32 %v1610, %v1612
        %v1616 = vperm.slane %v1590, 0
        %v1618 = vadd.f32 %v1614, %v1616
        %v1619 = vmax.f32 %v1618, 0.0
        %v1620 = vpack.c.bf16 %v1619, %v1619
        %v1621 = vld [vmem:[#allocation17] sm:$0xf]
        %v1622 = vld [vmem:[#allocation17 + $0x4] sm:$0xf]
        %v1623 = vld [vmem:[#allocation17 + $0x8] sm:$0xf]
        %v1624 = vld [vmem:[#allocation17 + $0xc] sm:$0xf]
        %v1625 = vld [vmem:[#allocation17 + $0x10] sm:$0xf]
        %v1626 = vld [vmem:[#allocation17 + $0x14] sm:$0xf]
        %v1627 = vld [vmem:[#allocation17 + $0x18] sm:$0xf]
        %v1628 = vld [vmem:[#allocation17 + $0x1c] sm:$0xf]
        %v1629 = vld [vmem:[#allocation17 + $0x20] sm:$0xf]
        %v1630 = vld [vmem:[#allocation17 + $0x24] sm:$0xf]
        %v1631 = vld [vmem:[#allocation17 + $0x28] sm:$0xf]
        %v1632 = vld [vmem:[#allocation17 + $0x2c] sm:$0xf]
        %v1633 = vld [vmem:[#allocation17 + $0x30] sm:$0xf]
        %v1634 = vld [vmem:[#allocation17 + $0x34] sm:$0xf]
        %v1635 = vld [vmem:[#allocation17 + $0x38] sm:$0xf]
        %v1636 = vld [vmem:[#allocation17 + $0x3c] sm:$0xf]
        %v1653 = vunpack.c.l.b16 %v1621
        %v1654 = vunpack.c.l.b16 %v1622
        %v1655 = vunpack.c.l.b16 %v1623
        %v1656 = vunpack.c.l.b16 %v1624
        %v1657 = vunpack.c.l.b16 %v1625
        %v1658 = vunpack.c.l.b16 %v1626
        %v1659 = vunpack.c.l.b16 %v1627
        %v1660 = vunpack.c.l.b16 %v1628
        %v1661 = vunpack.c.l.b16 %v1629
        %v1662 = vunpack.c.l.b16 %v1630
        %v1663 = vunpack.c.l.b16 %v1631
        %v1664 = vunpack.c.l.b16 %v1632
        %v1665 = vunpack.c.l.b16 %v1633
        %v1666 = vunpack.c.l.b16 %v1634
        %v1667 = vunpack.c.l.b16 %v1635
        %v1668 = vunpack.c.l.b16 %v1636
        %v1669 = vpack.c.b16 %v1654, %v1653
        %v1670 = vpack.c.b16 %v1656, %v1655
        %v1671 = vpack.c.b16 %v1658, %v1657
        %v1672 = vpack.c.b16 %v1660, %v1659
        %v1673 = vpack.c.b16 %v1662, %v1661
        %v1674 = vpack.c.b16 %v1664, %v1663
        %v1675 = vpack.c.b16 %v1666, %v1665
        %v1676 = vpack.c.b16 %v1668, %v1667
        %1685 = vmatpush.bf16.msra.mxu0 %v1676
        %1686 = vmatpush.bf16.msra.mxu0 %v1675
        %1687 = vmatpush.bf16.msra.mxu0 %v1674
        %1688 = vmatpush.bf16.msra.mxu0 %v1673
        %1689 = vmatpush.bf16.msra.mxu0 %v1672
        %1690 = vmatpush.bf16.msra.mxu0 %v1671
        %1691 = vmatpush.bf16.msra.mxu0 %v1670
        %1692 = vmatpush.bf16.msra.mxu0 %v1669
        %1693 = vmatmul.bf16.gmra.mxu0 %v1620
        %v1694 = vpop.f32.mrf.mxu0
        %v1695 = vadd.f32 %v1145, %v1694
        %v1696 = vpop.f32.mrf.mxu0
        %1697 = vdwg.mxu0
        %v1698 = vld [vmem:[%s17] sm:$0x1]
        %v1699 = vld [vmem:[%s18] sm:$0x1]
        %1700 = vadd.xlane.f32.xlu0 %v1695
        %v1701 = vpop.xlane.xlu0 %1700
        %v1702 = vmul.f32 %v1701, %v1265
        %v1703 = vsub.f32 %v1695, %v1702
        %v1704 = vmul.f32 %v1703, %v1703
        %1705 = vadd.xlane.f32.xlu0 %v1704
        %v1706 = vpop.xlane.xlu0 %1705
        %v1707 = vmul.f32 %v1706, %v1265
        %v1708 = vadd.f32 %v1707, 1e-05
        %v1709 = vrsqrt.pop %v1708
        %v1710 = vmul.f32 %v1709, %v1708
        %v1711 = vmul.f32 %v1710, %v1709
        %v1712 = vmul.f32 0.5, %v1711
        %v1713 = vsub.f32 1.5, %v1712
        %v1714 = vmul.f32 %v1709, %v1713
        %vm1715 = vweird.f32 %v1708
        %vm1716 = vweird.f32 %v1709
        %vm1717 = vmor %vm1715, %vm1716
        %v1718 = vsel %vm1717, %v1709, %v1714
        %v1719 = vmul.f32 %v1703, %v1718
        %v1721 = vperm.slane %v1698, 0
        %v1723 = vmul.f32 %v1719, %v1721
        %v1725 = vperm.slane %v1699, 0
        %v1727 = vadd.f32 %v1723, %v1725
        %v1728 = vmax.f32 %v1727, 0.0
        %v1729 = vpack.c.bf16 %v1728, %v1728
        %v1730 = vld [vmem:[#allocation20] sm:$0xf]
        %v1731 = vld [vmem:[#allocation20 + $0x4] sm:$0xf]
        %v1732 = vld [vmem:[#allocation20 + $0x8] sm:$0xf]
        %v1733 = vld [vmem:[#allocation20 + $0xc] sm:$0xf]
        %v1734 = vld [vmem:[#allocation20 + $0x10] sm:$0xf]
        %v1735 = vld [vmem:[#allocation20 + $0x14] sm:$0xf]
        %v1736 = vld [vmem:[#allocation20 + $0x18] sm:$0xf]
        %v1737 = vld [vmem:[#allocation20 + $0x1c] sm:$0xf]
        %v1738 = vld [vmem:[#allocation20 + $0x20] sm:$0xf]
        %v1739 = vld [vmem:[#allocation20 + $0x24] sm:$0xf]
        %v1740 = vld [vmem:[#allocation20 + $0x28] sm:$0xf]
        %v1741 = vld [vmem:[#allocation20 + $0x2c] sm:$0xf]
        %v1742 = vld [vmem:[#allocation20 + $0x30] sm:$0xf]
        %v1743 = vld [vmem:[#allocation20 + $0x34] sm:$0xf]
        %v1744 = vld [vmem:[#allocation20 + $0x38] sm:$0xf]
        %v1745 = vld [vmem:[#allocation20 + $0x3c] sm:$0xf]
        %v1762 = vunpack.c.l.b16 %v1730
        %v1763 = vunpack.c.l.b16 %v1731
        %v1764 = vunpack.c.l.b16 %v1732
        %v1765 = vunpack.c.l.b16 %v1733
        %v1766 = vunpack.c.l.b16 %v1734
        %v1767 = vunpack.c.l.b16 %v1735
        %v1768 = vunpack.c.l.b16 %v1736
        %v1769 = vunpack.c.l.b16 %v1737
        %v1770 = vunpack.c.l.b16 %v1738
        %v1771 = vunpack.c.l.b16 %v1739
        %v1772 = vunpack.c.l.b16 %v1740
        %v1773 = vunpack.c.l.b16 %v1741
        %v1774 = vunpack.c.l.b16 %v1742
        %v1775 = vunpack.c.l.b16 %v1743
        %v1776 = vunpack.c.l.b16 %v1744
        %v1777 = vunpack.c.l.b16 %v1745
        %v1778 = vpack.c.b16 %v1763, %v1762
        %v1779 = vpack.c.b16 %v1765, %v1764
        %v1780 = vpack.c.b16 %v1767, %v1766
        %v1781 = vpack.c.b16 %v1769, %v1768
        %v1782 = vpack.c.b16 %v1771, %v1770
        %v1783 = vpack.c.b16 %v1773, %v1772
        %v1784 = vpack.c.b16 %v1775, %v1774
        %v1785 = vpack.c.b16 %v1777, %v1776
        %1794 = vmatpush.bf16.msra.mxu0 %v1785
        %1795 = vmatpush.bf16.msra.mxu0 %v1784
        %1796 = vmatpush.bf16.msra.mxu0 %v1783
        %1797 = vmatpush.bf16.msra.mxu0 %v1782
        %1798 = vmatpush.bf16.msra.mxu0 %v1781
        %1799 = vmatpush.bf16.msra.mxu0 %v1780
        %1800 = vmatpush.bf16.msra.mxu0 %v1779
        %1801 = vmatpush.bf16.msra.mxu0 %v1778
        %1802 = vmatmul.bf16.gmra.mxu0 %v1729
        %v1803 = vpop.f32.mrf.mxu0
        %v1804 = vadd.f32 0.0, %v1803
        %v1805 = vpop.f32.mrf.mxu0
        %1806 = vdwg.mxu0
        %v1807 = vld [vmem:[%s20] sm:$0x1]
        %v1808 = vld [vmem:[%s21] sm:$0x1]
        %1809 = vadd.xlane.f32.xlu0 %v1804
        %v1810 = vpop.xlane.xlu0 %1809
        %v1811 = vmul.f32 %v1810, %v1265
        %v1812 = vsub.f32 %v1804, %v1811
        %v1813 = vmul.f32 %v1812, %v1812
        %1814 = vadd.xlane.f32.xlu0 %v1813
        %v1815 = vpop.xlane.xlu0 %1814
        %v1816 = vmul.f32 %v1815, %v1265
        %v1817 = vadd.f32 %v1816, 1e-05
        %v1818 = vrsqrt.pop %v1817
        %v1819 = vmul.f32 %v1818, %v1817
        %v1820 = vmul.f32 %v1819, %v1818
        %v1821 = vmul.f32 0.5, %v1820
        %v1822 = vsub.f32 1.5, %v1821
        %v1823 = vmul.f32 %v1818, %v1822
        %vm1824 = vweird.f32 %v1817
        %vm1825 = vweird.f32 %v1818
        %vm1826 = vmor %vm1824, %vm1825
        %v1827 = vsel %vm1826, %v1818, %v1823
        %v1828 = vmul.f32 %v1812, %v1827
        %v1830 = vperm.slane %v1807, 0
        %v1832 = vmul.f32 %v1828, %v1830
        %v1834 = vperm.slane %v1808, 0
        %v1836 = vadd.f32 %v1832, %v1834
        %v1837 = vmax.f32 %v1836, 0.0
        %v1838 = vpack.c.bf16 %v1837, %v1837
        %v1839 = vld [vmem:[#allocation21] sm:$0xf]
        %v1840 = vld [vmem:[#allocation21 + $0x4] sm:$0xf]
        %v1841 = vld [vmem:[#allocation21 + $0x8] sm:$0xf]
        %v1842 = vld [vmem:[#allocation21 + $0xc] sm:$0xf]
        %v1843 = vld [vmem:[#allocation21 + $0x10] sm:$0xf]
        %v1844 = vld [vmem:[#allocation21 + $0x14] sm:$0xf]
        %v1845 = vld [vmem:[#allocation21 + $0x18] sm:$0xf]
        %v1846 = vld [vmem:[#allocation21 + $0x1c] sm:$0xf]
        %v1847 = vld [vmem:[#allocation21 + $0x20] sm:$0xf]
        %v1848 = vld [vmem:[#allocation21 + $0x24] sm:$0xf]
        %v1849 = vld [vmem:[#allocation21 + $0x28] sm:$0xf]
        %v1850 = vld [vmem:[#allocation21 + $0x2c] sm:$0xf]
        %v1851 = vld [vmem:[#allocation21 + $0x30] sm:$0xf]
        %v1852 = vld [vmem:[#allocation21 + $0x34] sm:$0xf]
        %v1853 = vld [vmem:[#allocation21 + $0x38] sm:$0xf]
        %v1854 = vld [vmem:[#allocation21 + $0x3c] sm:$0xf]
        %v1871 = vunpack.c.l.b16 %v1839
        %v1872 = vunpack.c.l.b16 %v1840
        %v1873 = vunpack.c.l.b16 %v1841
        %v1874 = vunpack.c.l.b16 %v1842
        %v1875 = vunpack.c.l.b16 %v1843
        %v1876 = vunpack.c.l.b16 %v1844
        %v1877 = vunpack.c.l.b16 %v1845
        %v1878 = vunpack.c.l.b16 %v1846
        %v1879 = vunpack.c.l.b16 %v1847
        %v1880 = vunpack.c.l.b16 %v1848
        %v1881 = vunpack.c.l.b16 %v1849
        %v1882 = vunpack.c.l.b16 %v1850
        %v1883 = vunpack.c.l.b16 %v1851
        %v1884 = vunpack.c.l.b16 %v1852
        %v1885 = vunpack.c.l.b16 %v1853
        %v1886 = vunpack.c.l.b16 %v1854
        %v1887 = vpack.c.b16 %v1872, %v1871
        %v1888 = vpack.c.b16 %v1874, %v1873
        %v1889 = vpack.c.b16 %v1876, %v1875
        %v1890 = vpack.c.b16 %v1878, %v1877
        %v1891 = vpack.c.b16 %v1880, %v1879
        %v1892 = vpack.c.b16 %v1882, %v1881
        %v1893 = vpack.c.b16 %v1884, %v1883
        %v1894 = vpack.c.b16 %v1886, %v1885
        %1903 = vmatpush.bf16.msra.mxu0 %v1894
        %1904 = vmatpush.bf16.msra.mxu0 %v1893
        %1905 = vmatpush.bf16.msra.mxu0 %v1892
        %1906 = vmatpush.bf16.msra.mxu0 %v1891
        %1907 = vmatpush.bf16.msra.mxu0 %v1890
        %1908 = vmatpush.bf16.msra.mxu0 %v1889
        %1909 = vmatpush.bf16.msra.mxu0 %v1888
        %1910 = vmatpush.bf16.msra.mxu0 %v1887
        %1911 = vmatmul.bf16.gmra.mxu0 %v1838
        %v1912 = vpop.f32.mrf.mxu0
        %v1913 = vadd.f32 0.0, %v1912
        %v1914 = vpop.f32.mrf.mxu0
        %1915 = vdwg.mxu0
        %v1916 = vld [vmem:[%s23] sm:$0x1]
        %v1917 = vld [vmem:[%s24] sm:$0x1]
        %1918 = vadd.xlane.f32.xlu0 %v1913
        %v1919 = vpop.xlane.xlu0 %1918
        %v1920 = vmul.f32 %v1919, %v1265
        %v1921 = vsub.f32 %v1913, %v1920
        %v1922 = vmul.f32 %v1921, %v1921
        %1923 = vadd.xlane.f32.xlu0 %v1922
        %v1924 = vpop.xlane.xlu0 %1923
        %v1925 = vmul.f32 %v1924, %v1265
        %v1926 = vadd.f32 %v1925, 1e-05
        %v1927 = vrsqrt.pop %v1926
        %v1928 = vmul.f32 %v1927, %v1926
        %v1929 = vmul.f32 %v1928, %v1927
        %v1930 = vmul.f32 0.5, %v1929
        %v1931 = vsub.f32 1.5, %v1930
        %v1932 = vmul.f32 %v1927, %v1931
        %vm1933 = vweird.f32 %v1926
        %vm1934 = vweird.f32 %v1927
        %vm1935 = vmor %vm1933, %vm1934
        %v1936 = vsel %vm1935, %v1927, %v1932
        %v1937 = vmul.f32 %v1921, %v1936
        %v1939 = vperm.slane %v1916, 0
        %v1941 = vmul.f32 %v1937, %v1939
        %v1943 = vperm.slane %v1917, 0
        %v1945 = vadd.f32 %v1941, %v1943
        %v1946 = vadd.f32 %v1945, %v1728
        %v1947 = vmax.f32 %v1946, 0.0
        %v1948 = vld [vmem:[%s25] sm:$0x1]
        %v1950 = vperm.slane %v1948, 0
        %v1952 = vmul.f32 %v1947, %v1950
        %1953 = vadd.xlane.f32.xlu0 %v1952
        %v1954 = vpop.xlane.xlu0 %1953
        %v1955 = vld [vmem:[#allocation2] sm:$0x1]
        %v1957 = vperm.slane %v1955, 0
        %v1959 = vadd.f32 %v1954, %v1957
        %vm1960 = vcmp.eq.s32.totalorder %v1149, 0
        %v1961 = vsel %vm1960, 1, 0
        %vm1962 = vcmp.eq.s32.totalorder %v1961, 1
        %1964 = vset.pattern.permute.xlu0 0
        %1965 = vperm.xlu0 %1964, %v1959
        %v1966 = vpop.permute.xlu0 %1965
        %v1968 = vsel %vm1962, %v1966, 0.0
        %v1969 = vadd.f32 %v1968, 0.0
        %s1970 = scalar_lea.vmem [#allocation3], 64
        %v1971 = vld [vmem:[%s1970] sm:$0xf]
        %v1972 = vld [vmem:[%s1970 + $0x4] sm:$0xf]
        %v1973 = vld [vmem:[%s1970 + $0x8] sm:$0xf]
        %v1974 = vld [vmem:[%s1970 + $0xc] sm:$0xf]
        %v1975 = vld [vmem:[%s1970 + $0x10] sm:$0xf]
        %v1976 = vld [vmem:[%s1970 + $0x14] sm:$0xf]
        %v1977 = vld [vmem:[%s1970 + $0x18] sm:$0xf]
        %v1978 = vld [vmem:[%s1970 + $0x1c] sm:$0xf]
        %v1979 = vld [vmem:[%s1970 + $0x20] sm:$0xf]
        %v1980 = vld [vmem:[%s1970 + $0x24] sm:$0xf]
        %v1981 = vld [vmem:[%s1970 + $0x28] sm:$0xf]
        %v1982 = vld [vmem:[%s1970 + $0x2c] sm:$0xf]
        %v1983 = vld [vmem:[%s1970 + $0x30] sm:$0xf]
        %v1984 = vld [vmem:[%s1970 + $0x34] sm:$0xf]
        %v1985 = vld [vmem:[%s1970 + $0x38] sm:$0xf]
        %v1986 = vld [vmem:[%s1970 + $0x3c] sm:$0xf]
        %v2003 = vunpack.c.l.b16 %v1971
        %v2004 = vunpack.c.l.b16 %v1972
        %v2005 = vunpack.c.l.b16 %v1973
        %v2006 = vunpack.c.l.b16 %v1974
        %v2007 = vunpack.c.l.b16 %v1975
        %v2008 = vunpack.c.l.b16 %v1976
        %v2009 = vunpack.c.l.b16 %v1977
        %v2010 = vunpack.c.l.b16 %v1978
        %v2011 = vunpack.c.l.b16 %v1979
        %v2012 = vunpack.c.l.b16 %v1980
        %v2013 = vunpack.c.l.b16 %v1981
        %v2014 = vunpack.c.l.b16 %v1982
        %v2015 = vunpack.c.l.b16 %v1983
        %v2016 = vunpack.c.l.b16 %v1984
        %v2017 = vunpack.c.l.b16 %v1985
        %v2018 = vunpack.c.l.b16 %v1986
        %v2019 = vpack.c.b16 %v2004, %v2003
        %v2020 = vpack.c.b16 %v2006, %v2005
        %v2021 = vpack.c.b16 %v2008, %v2007
        %v2022 = vpack.c.b16 %v2010, %v2009
        %v2023 = vpack.c.b16 %v2012, %v2011
        %v2024 = vpack.c.b16 %v2014, %v2013
        %v2025 = vpack.c.b16 %v2016, %v2015
        %v2026 = vpack.c.b16 %v2018, %v2017
        %2035 = vmatpush.bf16.msra.mxu0 %v2026
        %2036 = vmatpush.bf16.msra.mxu0 %v2025
        %2037 = vmatpush.bf16.msra.mxu0 %v2024
        %2038 = vmatpush.bf16.msra.mxu0 %v2023
        %2039 = vmatpush.bf16.msra.mxu0 %v2022
        %2040 = vmatpush.bf16.msra.mxu0 %v2021
        %2041 = vmatpush.bf16.msra.mxu0 %v2020
        %2042 = vmatpush.bf16.msra.mxu0 %v2019
        %2043 = vmatmul.bf16.gmra.mxu0 %v1069
        %v2044 = vpop.f32.mrf.mxu0
        %v2045 = vadd.f32 0.0, %v2044
        %v2046 = vpop.f32.mrf.mxu0
        %2047 = vdwg.mxu0
        %s2048 = scalar_lea.vmem %s3, 1
        %v2049 = vld [vmem:[%s2048] sm:$0x1]
        %s2050 = scalar_lea.vmem [#allocation6], 1
        %v2051 = vld [vmem:[%s2050] sm:$0x1]
        %2052 = vadd.xlane.f32.xlu0 %v2045
        %v2053 = vpop.xlane.xlu0 %2052
        %v2054 = vmul.f32 %v2053, %v1265
        %v2055 = vsub.f32 %v2045, %v2054
        %v2056 = vmul.f32 %v2055, %v2055
        %2057 = vadd.xlane.f32.xlu0 %v2056
        %v2058 = vpop.xlane.xlu0 %2057
        %v2059 = vmul.f32 %v2058, %v1265
        %v2060 = vadd.f32 %v2059, 1e-05
        %v2061 = vrsqrt.pop %v2060
        %v2062 = vmul.f32 %v2061, %v2060
        %v2063 = vmul.f32 %v2062, %v2061
        %v2064 = vmul.f32 0.5, %v2063
        %v2065 = vsub.f32 1.5, %v2064
        %v2066 = vmul.f32 %v2061, %v2065
        %vm2067 = vweird.f32 %v2060
        %vm2068 = vweird.f32 %v2061
        %vm2069 = vmor %vm2067, %vm2068
        %v2070 = vsel %vm2069, %v2061, %v2066
        %v2071 = vmul.f32 %v2055, %v2070
        %v2073 = vperm.slane %v2049, 0
        %v2075 = vmul.f32 %v2071, %v2073
        %v2077 = vperm.slane %v2051, 0
        %v2079 = vadd.f32 %v2075, %v2077
        %v2080 = vmax.f32 %v2079, 0.0
        %v2081 = vpack.c.bf16 %v2080, %v2080
        %s2082 = scalar_lea.vmem [#allocation8], 64
        %v2083 = vld [vmem:[%s2082] sm:$0xf]
        %v2084 = vld [vmem:[%s2082 + $0x4] sm:$0xf]
        %v2085 = vld [vmem:[%s2082 + $0x8] sm:$0xf]
        %v2086 = vld [vmem:[%s2082 + $0xc] sm:$0xf]
        %v2087 = vld [vmem:[%s2082 + $0x10] sm:$0xf]
        %v2088 = vld [vmem:[%s2082 + $0x14] sm:$0xf]
        %v2089 = vld [vmem:[%s2082 + $0x18] sm:$0xf]
        %v2090 = vld [vmem:[%s2082 + $0x1c] sm:$0xf]
        %v2091 = vld [vmem:[%s2082 + $0x20] sm:$0xf]
        %v2092 = vld [vmem:[%s2082 + $0x24] sm:$0xf]
        %v2093 = vld [vmem:[%s2082 + $0x28] sm:$0xf]
        %v2094 = vld [vmem:[%s2082 + $0x2c] sm:$0xf]
        %v2095 = vld [vmem:[%s2082 + $0x30] sm:$0xf]
        %v2096 = vld [vmem:[%s2082 + $0x34] sm:$0xf]
        %v2097 = vld [vmem:[%s2082 + $0x38] sm:$0xf]
        %v2098 = vld [vmem:[%s2082 + $0x3c] sm:$0xf]
        %v2115 = vunpack.c.l.b16 %v2083
        %v2116 = vunpack.c.l.b16 %v2084
        %v2117 = vunpack.c.l.b16 %v2085
        %v2118 = vunpack.c.l.b16 %v2086
        %v2119 = vunpack.c.l.b16 %v2087
        %v2120 = vunpack.c.l.b16 %v2088
        %v2121 = vunpack.c.l.b16 %v2089
        %v2122 = vunpack.c.l.b16 %v2090
        %v2123 = vunpack.c.l.b16 %v2091
        %v2124 = vunpack.c.l.b16 %v2092
        %v2125 = vunpack.c.l.b16 %v2093
        %v2126 = vunpack.c.l.b16 %v2094
        %v2127 = vunpack.c.l.b16 %v2095
        %v2128 = vunpack.c.l.b16 %v2096
        %v2129 = vunpack.c.l.b16 %v2097
        %v2130 = vunpack.c.l.b16 %v2098
        %v2131 = vpack.c.b16 %v2116, %v2115
        %v2132 = vpack.c.b16 %v2118, %v2117
        %v2133 = vpack.c.b16 %v2120, %v2119
        %v2134 = vpack.c.b16 %v2122, %v2121
        %v2135 = vpack.c.b16 %v2124, %v2123
        %v2136 = vpack.c.b16 %v2126, %v2125
        %v2137 = vpack.c.b16 %v2128, %v2127
        %v2138 = vpack.c.b16 %v2130, %v2129
        %2147 = vmatpush.bf16.msra.mxu0 %v2138
        %2148 = vmatpush.bf16.msra.mxu0 %v2137
        %2149 = vmatpush.bf16.msra.mxu0 %v2136
        %2150 = vmatpush.bf16.msra.mxu0 %v2135
        %2151 = vmatpush.bf16.msra.mxu0 %v2134
        %2152 = vmatpush.bf16.msra.mxu0 %v2133
        %2153 = vmatpush.bf16.msra.mxu0 %v2132
        %2154 = vmatpush.bf16.msra.mxu0 %v2131
        %2155 = vmatmul.bf16.gmra.mxu0 %v2081
        %v2156 = vpop.f32.mrf.mxu0
        %v2157 = vadd.f32 0.0, %v2156
        %v2158 = vpop.f32.mrf.mxu0
        %2159 = vdwg.mxu0
        %s2160 = scalar_lea.vmem [#allocation9], 1
        %v2161 = vld [vmem:[%s2160] sm:$0x1]
        %s2162 = scalar_lea.vmem [#allocation11], 1
        %v2163 = vld [vmem:[%s2162] sm:$0x1]
        %2164 = vadd.xlane.f32.xlu0 %v2157
        %v2165 = vpop.xlane.xlu0 %2164
        %v2166 = vmul.f32 %v2165, %v1265
        %v2167 = vsub.f32 %v2157, %v2166
        %v2168 = vmul.f32 %v2167, %v2167
        %2169 = vadd.xlane.f32.xlu0 %v2168
        %v2170 = vpop.xlane.xlu0 %2169
        %v2171 = vmul.f32 %v2170, %v1265
        %v2172 = vadd.f32 %v2171, 1e-05
        %v2173 = vrsqrt.pop %v2172
        %v2174 = vmul.f32 %v2173, %v2172
        %v2175 = vmul.f32 %v2174, %v2173
        %v2176 = vmul.f32 0.5, %v2175
        %v2177 = vsub.f32 1.5, %v2176
        %v2178 = vmul.f32 %v2173, %v2177
        %vm2179 = vweird.f32 %v2172
        %vm2180 = vweird.f32 %v2173
        %vm2181 = vmor %vm2179, %vm2180
        %v2182 = vsel %vm2181, %v2173, %v2178
        %v2183 = vmul.f32 %v2167, %v2182
        %v2185 = vperm.slane %v2161, 0
        %v2187 = vmul.f32 %v2183, %v2185
        %v2189 = vperm.slane %v2163, 0
        %v2191 = vadd.f32 %v2187, %v2189
        %v2192 = vadd.f32 %v2191, %v1068
        %v2193 = vmax.f32 %v2192, 0.0
        %v2194 = vpack.c.bf16 %v2193, %v2193
        %s2195 = scalar_lea.vmem [#allocation12], 64
        %v2196 = vld [vmem:[%s2195] sm:$0xf]
        %v2197 = vld [vmem:[%s2195 + $0x4] sm:$0xf]
        %v2198 = vld [vmem:[%s2195 + $0x8] sm:$0xf]
        %v2199 = vld [vmem:[%s2195 + $0xc] sm:$0xf]
        %v2200 = vld [vmem:[%s2195 + $0x10] sm:$0xf]
        %v2201 = vld [vmem:[%s2195 + $0x14] sm:$0xf]
        %v2202 = vld [vmem:[%s2195 + $0x18] sm:$0xf]
        %v2203 = vld [vmem:[%s2195 + $0x1c] sm:$0xf]
        %v2204 = vld [vmem:[%s2195 + $0x20] sm:$0xf]
        %v2205 = vld [vmem:[%s2195 + $0x24] sm:$0xf]
        %v2206 = vld [vmem:[%s2195 + $0x28] sm:$0xf]
        %v2207 = vld [vmem:[%s2195 + $0x2c] sm:$0xf]
        %v2208 = vld [vmem:[%s2195 + $0x30] sm:$0xf]
        %v2209 = vld [vmem:[%s2195 + $0x34] sm:$0xf]
        %v2210 = vld [vmem:[%s2195 + $0x38] sm:$0xf]
        %v2211 = vld [vmem:[%s2195 + $0x3c] sm:$0xf]
        %s2212 = scalar_lea.vmem %s9, 1
        %v2213 = vld [vmem:[%s2212] sm:$0x1]
        %v2215 = vperm.slane %v2213, 0
        %v2233 = vunpack.c.l.b16 %v2196
        %v2234 = vunpack.c.l.b16 %v2197
        %v2235 = vunpack.c.l.b16 %v2198
        %v2236 = vunpack.c.l.b16 %v2199
        %v2237 = vunpack.c.l.b16 %v2200
        %v2238 = vunpack.c.l.b16 %v2201
        %v2239 = vunpack.c.l.b16 %v2202
        %v2240 = vunpack.c.l.b16 %v2203
        %v2241 = vunpack.c.l.b16 %v2204
        %v2242 = vunpack.c.l.b16 %v2205
        %v2243 = vunpack.c.l.b16 %v2206
        %v2244 = vunpack.c.l.b16 %v2207
        %v2245 = vunpack.c.l.b16 %v2208
        %v2246 = vunpack.c.l.b16 %v2209
        %v2247 = vunpack.c.l.b16 %v2210
        %v2248 = vunpack.c.l.b16 %v2211
        %v2249 = vpack.c.b16 %v2234, %v2233
        %v2250 = vpack.c.b16 %v2236, %v2235
        %v2251 = vpack.c.b16 %v2238, %v2237
        %v2252 = vpack.c.b16 %v2240, %v2239
        %v2253 = vpack.c.b16 %v2242, %v2241
        %v2254 = vpack.c.b16 %v2244, %v2243
        %v2255 = vpack.c.b16 %v2246, %v2245
        %v2256 = vpack.c.b16 %v2248, %v2247
        %2265 = vmatpush.bf16.msra.mxu0 %v2256
        %2266 = vmatpush.bf16.msra.mxu0 %v2255
        %2267 = vmatpush.bf16.msra.mxu0 %v2254
        %2268 = vmatpush.bf16.msra.mxu0 %v2253
        %2269 = vmatpush.bf16.msra.mxu0 %v2252
        %2270 = vmatpush.bf16.msra.mxu0 %v2251
        %2271 = vmatpush.bf16.msra.mxu0 %v2250
        %2272 = vmatpush.bf16.msra.mxu0 %v2249
        %2273 = vmatmul.bf16.gmra.mxu0 %v2194
        %v2274 = vpop.f32.mrf.mxu0
        %v2275 = vadd.f32 %v2215, %v2274
        %v2276 = vpop.f32.mrf.mxu0
        %2277 = vdwg.mxu0
        %v2278 = vadd.f32 %v2275, %v1174
        %2279 = vst [vmem:[%s1052 + $0x8] sm:$0xff] %v2278
        %2281 = vrot.lane.b32.xlu0 %v2278, 70
        %v2282 = vpop.permute.xlu0 %2281
        %v2284 = vsub.f32 %v1070, %v2282
        %2286 = vset.pattern.permute.xlu0 0
        %2287 = vperm.xlu0 %2286, %v2284
        %v2288 = vpop.permute.xlu0 %2287
        %v2290 = vmul.f32 %v2288, %v1497
        %2291 = vset.pattern.permute.xlu0 1
        %2292 = vperm.xlu0 %2291, %v2284
        %v2293 = vpop.permute.xlu0 %2292
        %v2295 = vmul.f32 %v2293, %v1503
        %v2296 = vadd.f32 %v2290, %v2295
        %v2297 = vadd.f32 %v2296, %v1507
        %v2298 = vmax.f32 %v2297, 0.0
        %v2299 = vpack.c.bf16 %v2298, %v2298
        %v2300 = vld [vmem:[#allocation15] sm:$0xf]
        %v2301 = vld [vmem:[#allocation15 + $0x4] sm:$0xf]
        %v2302 = vld [vmem:[#allocation15 + $0x8] sm:$0xf]
        %v2303 = vld [vmem:[#allocation15 + $0xc] sm:$0xf]
        %v2304 = vld [vmem:[#allocation15 + $0x10] sm:$0xf]
        %v2305 = vld [vmem:[#allocation15 + $0x14] sm:$0xf]
        %v2306 = vld [vmem:[#allocation15 + $0x18] sm:$0xf]
        %v2307 = vld [vmem:[#allocation15 + $0x1c] sm:$0xf]
        %v2308 = vld [vmem:[#allocation15 + $0x20] sm:$0xf]
        %v2309 = vld [vmem:[#allocation15 + $0x24] sm:$0xf]
        %v2310 = vld [vmem:[#allocation15 + $0x28] sm:$0xf]
        %v2311 = vld [vmem:[#allocation15 + $0x2c] sm:$0xf]
        %v2312 = vld [vmem:[#allocation15 + $0x30] sm:$0xf]
        %v2313 = vld [vmem:[#allocation15 + $0x34] sm:$0xf]
        %v2314 = vld [vmem:[#allocation15 + $0x38] sm:$0xf]
        %v2315 = vld [vmem:[#allocation15 + $0x3c] sm:$0xf]
        %v2332 = vunpack.c.l.b16 %v2300
        %v2333 = vunpack.c.l.b16 %v2301
        %v2334 = vunpack.c.l.b16 %v2302
        %v2335 = vunpack.c.l.b16 %v2303
        %v2336 = vunpack.c.l.b16 %v2304
        %v2337 = vunpack.c.l.b16 %v2305
        %v2338 = vunpack.c.l.b16 %v2306
        %v2339 = vunpack.c.l.b16 %v2307
        %v2340 = vunpack.c.l.b16 %v2308
        %v2341 = vunpack.c.l.b16 %v2309
        %v2342 = vunpack.c.l.b16 %v2310
        %v2343 = vunpack.c.l.b16 %v2311
        %v2344 = vunpack.c.l.b16 %v2312
        %v2345 = vunpack.c.l.b16 %v2313
        %v2346 = vunpack.c.l.b16 %v2314
        %v2347 = vunpack.c.l.b16 %v2315
        %v2348 = vpack.c.b16 %v2333, %v2332
        %v2349 = vpack.c.b16 %v2335, %v2334
        %v2350 = vpack.c.b16 %v2337, %v2336
        %v2351 = vpack.c.b16 %v2339, %v2338
        %v2352 = vpack.c.b16 %v2341, %v2340
        %v2353 = vpack.c.b16 %v2343, %v2342
        %v2354 = vpack.c.b16 %v2345, %v2344
        %v2355 = vpack.c.b16 %v2347, %v2346
        %2364 = vmatpush.bf16.msra.mxu0 %v2355
        %2365 = vmatpush.bf16.msra.mxu0 %v2354
        %2366 = vmatpush.bf16.msra.mxu0 %v2353
        %2367 = vmatpush.bf16.msra.mxu0 %v2352
        %2368 = vmatpush.bf16.msra.mxu0 %v2351
        %2369 = vmatpush.bf16.msra.mxu0 %v2350
        %2370 = vmatpush.bf16.msra.mxu0 %v2349
        %2371 = vmatpush.bf16.msra.mxu0 %v2348
        %2372 = vmatmul.bf16.gmra.mxu0 %v2299
        %v2373 = vpop.f32.mrf.mxu0
        %v2374 = vadd.f32 0.0, %v2373
        %v2375 = vpop.f32.mrf.mxu0
        %2376 = vdwg.mxu0
        %v2377 = vld [vmem:[%s13] sm:$0x1]
        %v2378 = vld [vmem:[%s14] sm:$0x1]
        %2379 = vadd.xlane.f32.xlu0 %v2374
        %v2380 = vpop.xlane.xlu0 %2379
        %v2381 = vmul.f32 %v2380, %v1265
        %v2382 = vsub.f32 %v2374, %v2381
        %v2383 = vmul.f32 %v2382, %v2382
        %2384 = vadd.xlane.f32.xlu0 %v2383
        %v2385 = vpop.xlane.xlu0 %2384
        %v2386 = vmul.f32 %v2385, %v1265
        %v2387 = vadd.f32 %v2386, 1e-05
        %v2388 = vrsqrt.pop %v2387
        %v2389 = vmul.f32 %v2388, %v2387
        %v2390 = vmul.f32 %v2389, %v2388
        %v2391 = vmul.f32 0.5, %v2390
        %v2392 = vsub.f32 1.5, %v2391
        %v2393 = vmul.f32 %v2388, %v2392
        %vm2394 = vweird.f32 %v2387
        %vm2395 = vweird.f32 %v2388
        %vm2396 = vmor %vm2394, %vm2395
        %v2397 = vsel %vm2396, %v2388, %v2393
        %v2398 = vmul.f32 %v2382, %v2397
        %v2400 = vperm.slane %v2377, 0
        %v2402 = vmul.f32 %v2398, %v2400
        %v2404 = vperm.slane %v2378, 0
        %v2406 = vadd.f32 %v2402, %v2404
        %v2407 = vmax.f32 %v2406, 0.0
        %v2408 = vpack.c.bf16 %v2407, %v2407
        %v2409 = vld [vmem:[#allocation17] sm:$0xf]
        %v2410 = vld [vmem:[#allocation17 + $0x4] sm:$0xf]
        %v2411 = vld [vmem:[#allocation17 + $0x8] sm:$0xf]
        %v2412 = vld [vmem:[#allocation17 + $0xc] sm:$0xf]
        %v2413 = vld [vmem:[#allocation17 + $0x10] sm:$0xf]
        %v2414 = vld [vmem:[#allocation17 + $0x14] sm:$0xf]
        %v2415 = vld [vmem:[#allocation17 + $0x18] sm:$0xf]
        %v2416 = vld [vmem:[#allocation17 + $0x1c] sm:$0xf]
        %v2417 = vld [vmem:[#allocation17 + $0x20] sm:$0xf]
        %v2418 = vld [vmem:[#allocation17 + $0x24] sm:$0xf]
        %v2419 = vld [vmem:[#allocation17 + $0x28] sm:$0xf]
        %v2420 = vld [vmem:[#allocation17 + $0x2c] sm:$0xf]
        %v2421 = vld [vmem:[#allocation17 + $0x30] sm:$0xf]
        %v2422 = vld [vmem:[#allocation17 + $0x34] sm:$0xf]
        %v2423 = vld [vmem:[#allocation17 + $0x38] sm:$0xf]
        %v2424 = vld [vmem:[#allocation17 + $0x3c] sm:$0xf]
        %v2441 = vunpack.c.l.b16 %v2409
        %v2442 = vunpack.c.l.b16 %v2410
        %v2443 = vunpack.c.l.b16 %v2411
        %v2444 = vunpack.c.l.b16 %v2412
        %v2445 = vunpack.c.l.b16 %v2413
        %v2446 = vunpack.c.l.b16 %v2414
        %v2447 = vunpack.c.l.b16 %v2415
        %v2448 = vunpack.c.l.b16 %v2416
        %v2449 = vunpack.c.l.b16 %v2417
        %v2450 = vunpack.c.l.b16 %v2418
        %v2451 = vunpack.c.l.b16 %v2419
        %v2452 = vunpack.c.l.b16 %v2420
        %v2453 = vunpack.c.l.b16 %v2421
        %v2454 = vunpack.c.l.b16 %v2422
        %v2455 = vunpack.c.l.b16 %v2423
        %v2456 = vunpack.c.l.b16 %v2424
        %v2457 = vpack.c.b16 %v2442, %v2441
        %v2458 = vpack.c.b16 %v2444, %v2443
        %v2459 = vpack.c.b16 %v2446, %v2445
        %v2460 = vpack.c.b16 %v2448, %v2447
        %v2461 = vpack.c.b16 %v2450, %v2449
        %v2462 = vpack.c.b16 %v2452, %v2451
        %v2463 = vpack.c.b16 %v2454, %v2453
        %v2464 = vpack.c.b16 %v2456, %v2455
        %2473 = vmatpush.bf16.msra.mxu0 %v2464
        %2474 = vmatpush.bf16.msra.mxu0 %v2463
        %2475 = vmatpush.bf16.msra.mxu0 %v2462
        %2476 = vmatpush.bf16.msra.mxu0 %v2461
        %2477 = vmatpush.bf16.msra.mxu0 %v2460
        %2478 = vmatpush.bf16.msra.mxu0 %v2459
        %2479 = vmatpush.bf16.msra.mxu0 %v2458
        %2480 = vmatpush.bf16.msra.mxu0 %v2457
        %2481 = vmatmul.bf16.gmra.mxu0 %v2408
        %v2482 = vpop.f32.mrf.mxu0
        %v2483 = vadd.f32 %v1145, %v2482
        %v2484 = vpop.f32.mrf.mxu0
        %2485 = vdwg.mxu0
        %v2486 = vld [vmem:[%s17] sm:$0x1]
        %v2487 = vld [vmem:[%s18] sm:$0x1]
        %2488 = vadd.xlane.f32.xlu0 %v2483
        %v2489 = vpop.xlane.xlu0 %2488
        %v2490 = vmul.f32 %v2489, %v1265
        %v2491 = vsub.f32 %v2483, %v2490
        %v2492 = vmul.f32 %v2491, %v2491
        %2493 = vadd.xlane.f32.xlu0 %v2492
        %v2494 = vpop.xlane.xlu0 %2493
        %v2495 = vmul.f32 %v2494, %v1265
        %v2496 = vadd.f32 %v2495, 1e-05
        %v2497 = vrsqrt.pop %v2496
        %v2498 = vmul.f32 %v2497, %v2496
        %v2499 = vmul.f32 %v2498, %v2497
        %v2500 = vmul.f32 0.5, %v2499
        %v2501 = vsub.f32 1.5, %v2500
        %v2502 = vmul.f32 %v2497, %v2501
        %vm2503 = vweird.f32 %v2496
        %vm2504 = vweird.f32 %v2497
        %vm2505 = vmor %vm2503, %vm2504
        %v2506 = vsel %vm2505, %v2497, %v2502
        %v2507 = vmul.f32 %v2491, %v2506
        %v2509 = vperm.slane %v2486, 0
        %v2511 = vmul.f32 %v2507, %v2509
        %v2513 = vperm.slane %v2487, 0
        %v2515 = vadd.f32 %v2511, %v2513
        %v2516 = vmax.f32 %v2515, 0.0
        %v2517 = vpack.c.bf16 %v2516, %v2516
        %v2518 = vld [vmem:[#allocation20] sm:$0xf]
        %v2519 = vld [vmem:[#allocation20 + $0x4] sm:$0xf]
        %v2520 = vld [vmem:[#allocation20 + $0x8] sm:$0xf]
        %v2521 = vld [vmem:[#allocation20 + $0xc] sm:$0xf]
        %v2522 = vld [vmem:[#allocation20 + $0x10] sm:$0xf]
        %v2523 = vld [vmem:[#allocation20 + $0x14] sm:$0xf]
        %v2524 = vld [vmem:[#allocation20 + $0x18] sm:$0xf]
        %v2525 = vld [vmem:[#allocation20 + $0x1c] sm:$0xf]
        %v2526 = vld [vmem:[#allocation20 + $0x20] sm:$0xf]
        %v2527 = vld [vmem:[#allocation20 + $0x24] sm:$0xf]
        %v2528 = vld [vmem:[#allocation20 + $0x28] sm:$0xf]
        %v2529 = vld [vmem:[#allocation20 + $0x2c] sm:$0xf]
        %v2530 = vld [vmem:[#allocation20 + $0x30] sm:$0xf]
        %v2531 = vld [vmem:[#allocation20 + $0x34] sm:$0xf]
        %v2532 = vld [vmem:[#allocation20 + $0x38] sm:$0xf]
        %v2533 = vld [vmem:[#allocation20 + $0x3c] sm:$0xf]
        %v2550 = vunpack.c.l.b16 %v2518
        %v2551 = vunpack.c.l.b16 %v2519
        %v2552 = vunpack.c.l.b16 %v2520
        %v2553 = vunpack.c.l.b16 %v2521
        %v2554 = vunpack.c.l.b16 %v2522
        %v2555 = vunpack.c.l.b16 %v2523
        %v2556 = vunpack.c.l.b16 %v2524
        %v2557 = vunpack.c.l.b16 %v2525
        %v2558 = vunpack.c.l.b16 %v2526
        %v2559 = vunpack.c.l.b16 %v2527
        %v2560 = vunpack.c.l.b16 %v2528
        %v2561 = vunpack.c.l.b16 %v2529
        %v2562 = vunpack.c.l.b16 %v2530
        %v2563 = vunpack.c.l.b16 %v2531
        %v2564 = vunpack.c.l.b16 %v2532
        %v2565 = vunpack.c.l.b16 %v2533
        %v2566 = vpack.c.b16 %v2551, %v2550
        %v2567 = vpack.c.b16 %v2553, %v2552
        %v2568 = vpack.c.b16 %v2555, %v2554
        %v2569 = vpack.c.b16 %v2557, %v2556
        %v2570 = vpack.c.b16 %v2559, %v2558
        %v2571 = vpack.c.b16 %v2561, %v2560
        %v2572 = vpack.c.b16 %v2563, %v2562
        %v2573 = vpack.c.b16 %v2565, %v2564
        %2582 = vmatpush.bf16.msra.mxu0 %v2573
        %2583 = vmatpush.bf16.msra.mxu0 %v2572
        %2584 = vmatpush.bf16.msra.mxu0 %v2571
        %2585 = vmatpush.bf16.msra.mxu0 %v2570
        %2586 = vmatpush.bf16.msra.mxu0 %v2569
        %2587 = vmatpush.bf16.msra.mxu0 %v2568
        %2588 = vmatpush.bf16.msra.mxu0 %v2567
        %2589 = vmatpush.bf16.msra.mxu0 %v2566
        %2590 = vmatmul.bf16.gmra.mxu0 %v2517
        %v2591 = vpop.f32.mrf.mxu0
        %v2592 = vadd.f32 0.0, %v2591
        %v2593 = vpop.f32.mrf.mxu0
        %2594 = vdwg.mxu0
        %v2595 = vld [vmem:[%s20] sm:$0x1]
        %v2596 = vld [vmem:[%s21] sm:$0x1]
        %2597 = vadd.xlane.f32.xlu0 %v2592
        %v2598 = vpop.xlane.xlu0 %2597
        %v2599 = vmul.f32 %v2598, %v1265
        %v2600 = vsub.f32 %v2592, %v2599
        %v2601 = vmul.f32 %v2600, %v2600
        %2602 = vadd.xlane.f32.xlu0 %v2601
        %v2603 = vpop.xlane.xlu0 %2602
        %v2604 = vmul.f32 %v2603, %v1265
        %v2605 = vadd.f32 %v2604, 1e-05
        %v2606 = vrsqrt.pop %v2605
        %v2607 = vmul.f32 %v2606, %v2605
        %v2608 = vmul.f32 %v2607, %v2606
        %v2609 = vmul.f32 0.5, %v2608
        %v2610 = vsub.f32 1.5, %v2609
        %v2611 = vmul.f32 %v2606, %v2610
        %vm2612 = vweird.f32 %v2605
        %vm2613 = vweird.f32 %v2606
        %vm2614 = vmor %vm2612, %vm2613
        %v2615 = vsel %vm2614, %v2606, %v2611
        %v2616 = vmul.f32 %v2600, %v2615
        %v2618 = vperm.slane %v2595, 0
        %v2620 = vmul.f32 %v2616, %v2618
        %v2622 = vperm.slane %v2596, 0
        %v2624 = vadd.f32 %v2620, %v2622
        %v2625 = vmax.f32 %v2624, 0.0
        %v2626 = vpack.c.bf16 %v2625, %v2625
        %v2627 = vld [vmem:[#allocation21] sm:$0xf]
        %v2628 = vld [vmem:[#allocation21 + $0x4] sm:$0xf]
        %v2629 = vld [vmem:[#allocation21 + $0x8] sm:$0xf]
        %v2630 = vld [vmem:[#allocation21 + $0xc] sm:$0xf]
        %v2631 = vld [vmem:[#allocation21 + $0x10] sm:$0xf]
        %v2632 = vld [vmem:[#allocation21 + $0x14] sm:$0xf]
        %v2633 = vld [vmem:[#allocation21 + $0x18] sm:$0xf]
        %v2634 = vld [vmem:[#allocation21 + $0x1c] sm:$0xf]
        %v2635 = vld [vmem:[#allocation21 + $0x20] sm:$0xf]
        %v2636 = vld [vmem:[#allocation21 + $0x24] sm:$0xf]
        %v2637 = vld [vmem:[#allocation21 + $0x28] sm:$0xf]
        %v2638 = vld [vmem:[#allocation21 + $0x2c] sm:$0xf]
        %v2639 = vld [vmem:[#allocation21 + $0x30] sm:$0xf]
        %v2640 = vld [vmem:[#allocation21 + $0x34] sm:$0xf]
        %v2641 = vld [vmem:[#allocation21 + $0x38] sm:$0xf]
        %v2642 = vld [vmem:[#allocation21 + $0x3c] sm:$0xf]
        %v2659 = vunpack.c.l.b16 %v2627
        %v2660 = vunpack.c.l.b16 %v2628
        %v2661 = vunpack.c.l.b16 %v2629
        %v2662 = vunpack.c.l.b16 %v2630
        %v2663 = vunpack.c.l.b16 %v2631
        %v2664 = vunpack.c.l.b16 %v2632
        %v2665 = vunpack.c.l.b16 %v2633
        %v2666 = vunpack.c.l.b16 %v2634
        %v2667 = vunpack.c.l.b16 %v2635
        %v2668 = vunpack.c.l.b16 %v2636
        %v2669 = vunpack.c.l.b16 %v2637
        %v2670 = vunpack.c.l.b16 %v2638
        %v2671 = vunpack.c.l.b16 %v2639
        %v2672 = vunpack.c.l.b16 %v2640
        %v2673 = vunpack.c.l.b16 %v2641
        %v2674 = vunpack.c.l.b16 %v2642
        %v2675 = vpack.c.b16 %v2660, %v2659
        %v2676 = vpack.c.b16 %v2662, %v2661
        %v2677 = vpack.c.b16 %v2664, %v2663
        %v2678 = vpack.c.b16 %v2666, %v2665
        %v2679 = vpack.c.b16 %v2668, %v2667
        %v2680 = vpack.c.b16 %v2670, %v2669
        %v2681 = vpack.c.b16 %v2672, %v2671
        %v2682 = vpack.c.b16 %v2674, %v2673
        %2691 = vmatpush.bf16.msra.mxu0 %v2682
        %2692 = vmatpush.bf16.msra.mxu0 %v2681
        %2693 = vmatpush.bf16.msra.mxu0 %v2680
        %2694 = vmatpush.bf16.msra.mxu0 %v2679
        %2695 = vmatpush.bf16.msra.mxu0 %v2678
        %2696 = vmatpush.bf16.msra.mxu0 %v2677
        %2697 = vmatpush.bf16.msra.mxu0 %v2676
        %2698 = vmatpush.bf16.msra.mxu0 %v2675
        %2699 = vmatmul.bf16.gmra.mxu0 %v2626
        %v2700 = vpop.f32.mrf.mxu0
        %v2701 = vadd.f32 0.0, %v2700
        %v2702 = vpop.f32.mrf.mxu0
        %2703 = vdwg.mxu0
        %v2704 = vld [vmem:[%s23] sm:$0x1]
        %v2705 = vld [vmem:[%s24] sm:$0x1]
        %2706 = vadd.xlane.f32.xlu0 %v2701
        %v2707 = vpop.xlane.xlu0 %2706
        %v2708 = vmul.f32 %v2707, %v1265
        %v2709 = vsub.f32 %v2701, %v2708
        %v2710 = vmul.f32 %v2709, %v2709
        %2711 = vadd.xlane.f32.xlu0 %v2710
        %v2712 = vpop.xlane.xlu0 %2711
        %v2713 = vmul.f32 %v2712, %v1265
        %v2714 = vadd.f32 %v2713, 1e-05
        %v2715 = vrsqrt.pop %v2714
        %v2716 = vmul.f32 %v2715, %v2714
        %v2717 = vmul.f32 %v2716, %v2715
        %v2718 = vmul.f32 0.5, %v2717
        %v2719 = vsub.f32 1.5, %v2718
        %v2720 = vmul.f32 %v2715, %v2719
        %vm2721 = vweird.f32 %v2714
        %vm2722 = vweird.f32 %v2715
        %vm2723 = vmor %vm2721, %vm2722
        %v2724 = vsel %vm2723, %v2715, %v2720
        %v2725 = vmul.f32 %v2709, %v2724
        %v2727 = vperm.slane %v2704, 0
        %v2729 = vmul.f32 %v2725, %v2727
        %v2731 = vperm.slane %v2705, 0
        %v2733 = vadd.f32 %v2729, %v2731
        %v2734 = vadd.f32 %v2733, %v2516
        %v2735 = vmax.f32 %v2734, 0.0
        %v2736 = vld [vmem:[%s25] sm:$0x1]
        %v2738 = vperm.slane %v2736, 0
        %v2740 = vmul.f32 %v2735, %v2738
        %2741 = vadd.xlane.f32.xlu0 %v2740
        %v2742 = vpop.xlane.xlu0 %2741
        %v2743 = vld [vmem:[#allocation2] sm:$0x1]
        %v2745 = vperm.slane %v2743, 0
        %v2747 = vadd.f32 %v2742, %v2745
        %vm2748 = vcmp.eq.s32.totalorder %v1149, 1
        %v2749 = vsel %vm2748, 1, 0
        %vm2750 = vcmp.eq.s32.totalorder %v2749, 1
        %2752 = vset.pattern.permute.xlu0 0
        %2753 = vperm.xlu0 %2752, %v2747
        %v2754 = vpop.permute.xlu0 %2753
        %v2756 = vsel %vm2750, %v2754, 0.0
        %v2757 = vadd.f32 %v1969, %v2756
        %s2758 = scalar_lea.vmem [#allocation3], 128
        %v2759 = vld [vmem:[%s2758] sm:$0xf]
        %v2760 = vld [vmem:[%s2758 + $0x4] sm:$0xf]
        %v2761 = vld [vmem:[%s2758 + $0x8] sm:$0xf]
        %v2762 = vld [vmem:[%s2758 + $0xc] sm:$0xf]
        %v2763 = vld [vmem:[%s2758 + $0x10] sm:$0xf]
        %v2764 = vld [vmem:[%s2758 + $0x14] sm:$0xf]
        %v2765 = vld [vmem:[%s2758 + $0x18] sm:$0xf]
        %v2766 = vld [vmem:[%s2758 + $0x1c] sm:$0xf]
        %v2767 = vld [vmem:[%s2758 + $0x20] sm:$0xf]
        %v2768 = vld [vmem:[%s2758 + $0x24] sm:$0xf]
        %v2769 = vld [vmem:[%s2758 + $0x28] sm:$0xf]
        %v2770 = vld [vmem:[%s2758 + $0x2c] sm:$0xf]
        %v2771 = vld [vmem:[%s2758 + $0x30] sm:$0xf]
        %v2772 = vld [vmem:[%s2758 + $0x34] sm:$0xf]
        %v2773 = vld [vmem:[%s2758 + $0x38] sm:$0xf]
        %v2774 = vld [vmem:[%s2758 + $0x3c] sm:$0xf]
        %v2791 = vunpack.c.l.b16 %v2759
        %v2792 = vunpack.c.l.b16 %v2760
        %v2793 = vunpack.c.l.b16 %v2761
        %v2794 = vunpack.c.l.b16 %v2762
        %v2795 = vunpack.c.l.b16 %v2763
        %v2796 = vunpack.c.l.b16 %v2764
        %v2797 = vunpack.c.l.b16 %v2765
        %v2798 = vunpack.c.l.b16 %v2766
        %v2799 = vunpack.c.l.b16 %v2767
        %v2800 = vunpack.c.l.b16 %v2768
        %v2801 = vunpack.c.l.b16 %v2769
        %v2802 = vunpack.c.l.b16 %v2770
        %v2803 = vunpack.c.l.b16 %v2771
        %v2804 = vunpack.c.l.b16 %v2772
        %v2805 = vunpack.c.l.b16 %v2773
        %v2806 = vunpack.c.l.b16 %v2774
        %v2807 = vpack.c.b16 %v2792, %v2791
        %v2808 = vpack.c.b16 %v2794, %v2793
        %v2809 = vpack.c.b16 %v2796, %v2795
        %v2810 = vpack.c.b16 %v2798, %v2797
        %v2811 = vpack.c.b16 %v2800, %v2799
        %v2812 = vpack.c.b16 %v2802, %v2801
        %v2813 = vpack.c.b16 %v2804, %v2803
        %v2814 = vpack.c.b16 %v2806, %v2805
        %2823 = vmatpush.bf16.msra.mxu0 %v2814
        %2824 = vmatpush.bf16.msra.mxu0 %v2813
        %2825 = vmatpush.bf16.msra.mxu0 %v2812
        %2826 = vmatpush.bf16.msra.mxu0 %v2811
        %2827 = vmatpush.bf16.msra.mxu0 %v2810
        %2828 = vmatpush.bf16.msra.mxu0 %v2809
        %2829 = vmatpush.bf16.msra.mxu0 %v2808
        %2830 = vmatpush.bf16.msra.mxu0 %v2807
        %2831 = vmatmul.bf16.gmra.mxu0 %v1069
        %v2832 = vpop.f32.mrf.mxu0
        %v2833 = vadd.f32 0.0, %v2832
        %v2834 = vpop.f32.mrf.mxu0
        %2835 = vdwg.mxu0
        %s2836 = scalar_lea.vmem %s3, 2
        %v2837 = vld [vmem:[%s2836] sm:$0x1]
        %s2838 = scalar_lea.vmem [#allocation6], 2
        %v2839 = vld [vmem:[%s2838] sm:$0x1]
        %2840 = vadd.xlane.f32.xlu0 %v2833
        %v2841 = vpop.xlane.xlu0 %2840
        %v2842 = vmul.f32 %v2841, %v1265
        %v2843 = vsub.f32 %v2833, %v2842
        %v2844 = vmul.f32 %v2843, %v2843
        %2845 = vadd.xlane.f32.xlu0 %v2844
        %v2846 = vpop.xlane.xlu0 %2845
        %v2847 = vmul.f32 %v2846, %v1265
        %v2848 = vadd.f32 %v2847, 1e-05
        %v2849 = vrsqrt.pop %v2848
        %v2850 = vmul.f32 %v2849, %v2848
        %v2851 = vmul.f32 %v2850, %v2849
        %v2852 = vmul.f32 0.5, %v2851
        %v2853 = vsub.f32 1.5, %v2852
        %v2854 = vmul.f32 %v2849, %v2853
        %vm2855 = vweird.f32 %v2848
        %vm2856 = vweird.f32 %v2849
        %vm2857 = vmor %vm2855, %vm2856
        %v2858 = vsel %vm2857, %v2849, %v2854
        %v2859 = vmul.f32 %v2843, %v2858
        %v2861 = vperm.slane %v2837, 0
        %v2863 = vmul.f32 %v2859, %v2861
        %v2865 = vperm.slane %v2839, 0
        %v2867 = vadd.f32 %v2863, %v2865
        %v2868 = vmax.f32 %v2867, 0.0
        %v2869 = vpack.c.bf16 %v2868, %v2868
        %s2870 = scalar_lea.vmem [#allocation8], 128
        %v2871 = vld [vmem:[%s2870] sm:$0xf]
        %v2872 = vld [vmem:[%s2870 + $0x4] sm:$0xf]
        %v2873 = vld [vmem:[%s2870 + $0x8] sm:$0xf]
        %v2874 = vld [vmem:[%s2870 + $0xc] sm:$0xf]
        %v2875 = vld [vmem:[%s2870 + $0x10] sm:$0xf]
        %v2876 = vld [vmem:[%s2870 + $0x14] sm:$0xf]
        %v2877 = vld [vmem:[%s2870 + $0x18] sm:$0xf]
        %v2878 = vld [vmem:[%s2870 + $0x1c] sm:$0xf]
        %v2879 = vld [vmem:[%s2870 + $0x20] sm:$0xf]
        %v2880 = vld [vmem:[%s2870 + $0x24] sm:$0xf]
        %v2881 = vld [vmem:[%s2870 + $0x28] sm:$0xf]
        %v2882 = vld [vmem:[%s2870 + $0x2c] sm:$0xf]
        %v2883 = vld [vmem:[%s2870 + $0x30] sm:$0xf]
        %v2884 = vld [vmem:[%s2870 + $0x34] sm:$0xf]
        %v2885 = vld [vmem:[%s2870 + $0x38] sm:$0xf]
        %v2886 = vld [vmem:[%s2870 + $0x3c] sm:$0xf]
        %v2903 = vunpack.c.l.b16 %v2871
        %v2904 = vunpack.c.l.b16 %v2872
        %v2905 = vunpack.c.l.b16 %v2873
        %v2906 = vunpack.c.l.b16 %v2874
        %v2907 = vunpack.c.l.b16 %v2875
        %v2908 = vunpack.c.l.b16 %v2876
        %v2909 = vunpack.c.l.b16 %v2877
        %v2910 = vunpack.c.l.b16 %v2878
        %v2911 = vunpack.c.l.b16 %v2879
        %v2912 = vunpack.c.l.b16 %v2880
        %v2913 = vunpack.c.l.b16 %v2881
        %v2914 = vunpack.c.l.b16 %v2882
        %v2915 = vunpack.c.l.b16 %v2883
        %v2916 = vunpack.c.l.b16 %v2884
        %v2917 = vunpack.c.l.b16 %v2885
        %v2918 = vunpack.c.l.b16 %v2886
        %v2919 = vpack.c.b16 %v2904, %v2903
        %v2920 = vpack.c.b16 %v2906, %v2905
        %v2921 = vpack.c.b16 %v2908, %v2907
        %v2922 = vpack.c.b16 %v2910, %v2909
        %v2923 = vpack.c.b16 %v2912, %v2911
        %v2924 = vpack.c.b16 %v2914, %v2913
        %v2925 = vpack.c.b16 %v2916, %v2915
        %v2926 = vpack.c.b16 %v2918, %v2917
        %2935 = vmatpush.bf16.msra.mxu0 %v2926
        %2936 = vmatpush.bf16.msra.mxu0 %v2925
        %2937 = vmatpush.bf16.msra.mxu0 %v2924
        %2938 = vmatpush.bf16.msra.mxu0 %v2923
        %2939 = vmatpush.bf16.msra.mxu0 %v2922
        %2940 = vmatpush.bf16.msra.mxu0 %v2921
        %2941 = vmatpush.bf16.msra.mxu0 %v2920
        %2942 = vmatpush.bf16.msra.mxu0 %v2919
        %2943 = vmatmul.bf16.gmra.mxu0 %v2869
        %v2944 = vpop.f32.mrf.mxu0
        %v2945 = vadd.f32 0.0, %v2944
        %v2946 = vpop.f32.mrf.mxu0
        %2947 = vdwg.mxu0
        %s2948 = scalar_lea.vmem [#allocation9], 2
        %v2949 = vld [vmem:[%s2948] sm:$0x1]
        %s2950 = scalar_lea.vmem [#allocation11], 2
        %v2951 = vld [vmem:[%s2950] sm:$0x1]
        %2952 = vadd.xlane.f32.xlu0 %v2945
        %v2953 = vpop.xlane.xlu0 %2952
        %v2954 = vmul.f32 %v2953, %v1265
        %v2955 = vsub.f32 %v2945, %v2954
        %v2956 = vmul.f32 %v2955, %v2955
        %2957 = vadd.xlane.f32.xlu0 %v2956
        %v2958 = vpop.xlane.xlu0 %2957
        %v2959 = vmul.f32 %v2958, %v1265
        %v2960 = vadd.f32 %v2959, 1e-05
        %v2961 = vrsqrt.pop %v2960
        %v2962 = vmul.f32 %v2961, %v2960
        %v2963 = vmul.f32 %v2962, %v2961
        %v2964 = vmul.f32 0.5, %v2963
        %v2965 = vsub.f32 1.5, %v2964
        %v2966 = vmul.f32 %v2961, %v2965
        %vm2967 = vweird.f32 %v2960
        %vm2968 = vweird.f32 %v2961
        %vm2969 = vmor %vm2967, %vm2968
        %v2970 = vsel %vm2969, %v2961, %v2966
        %v2971 = vmul.f32 %v2955, %v2970
        %v2973 = vperm.slane %v2949, 0
        %v2975 = vmul.f32 %v2971, %v2973
        %v2977 = vperm.slane %v2951, 0
        %v2979 = vadd.f32 %v2975, %v2977
        %v2980 = vadd.f32 %v2979, %v1068
        %v2981 = vmax.f32 %v2980, 0.0
        %v2982 = vpack.c.bf16 %v2981, %v2981
        %s2983 = scalar_lea.vmem [#allocation12], 128
        %v2984 = vld [vmem:[%s2983] sm:$0xf]
        %v2985 = vld [vmem:[%s2983 + $0x4] sm:$0xf]
        %v2986 = vld [vmem:[%s2983 + $0x8] sm:$0xf]
        %v2987 = vld [vmem:[%s2983 + $0xc] sm:$0xf]
        %v2988 = vld [vmem:[%s2983 + $0x10] sm:$0xf]
        %v2989 = vld [vmem:[%s2983 + $0x14] sm:$0xf]
        %v2990 = vld [vmem:[%s2983 + $0x18] sm:$0xf]
        %v2991 = vld [vmem:[%s2983 + $0x1c] sm:$0xf]
        %v2992 = vld [vmem:[%s2983 + $0x20] sm:$0xf]
        %v2993 = vld [vmem:[%s2983 + $0x24] sm:$0xf]
        %v2994 = vld [vmem:[%s2983 + $0x28] sm:$0xf]
        %v2995 = vld [vmem:[%s2983 + $0x2c] sm:$0xf]
        %v2996 = vld [vmem:[%s2983 + $0x30] sm:$0xf]
        %v2997 = vld [vmem:[%s2983 + $0x34] sm:$0xf]
        %v2998 = vld [vmem:[%s2983 + $0x38] sm:$0xf]
        %v2999 = vld [vmem:[%s2983 + $0x3c] sm:$0xf]
        %s3000 = scalar_lea.vmem %s9, 2
        %v3001 = vld [vmem:[%s3000] sm:$0x1]
        %v3003 = vperm.slane %v3001, 0
        %v3021 = vunpack.c.l.b16 %v2984
        %v3022 = vunpack.c.l.b16 %v2985
        %v3023 = vunpack.c.l.b16 %v2986
        %v3024 = vunpack.c.l.b16 %v2987
        %v3025 = vunpack.c.l.b16 %v2988
        %v3026 = vunpack.c.l.b16 %v2989
        %v3027 = vunpack.c.l.b16 %v2990
        %v3028 = vunpack.c.l.b16 %v2991
        %v3029 = vunpack.c.l.b16 %v2992
        %v3030 = vunpack.c.l.b16 %v2993
        %v3031 = vunpack.c.l.b16 %v2994
        %v3032 = vunpack.c.l.b16 %v2995
        %v3033 = vunpack.c.l.b16 %v2996
        %v3034 = vunpack.c.l.b16 %v2997
        %v3035 = vunpack.c.l.b16 %v2998
        %v3036 = vunpack.c.l.b16 %v2999
        %v3037 = vpack.c.b16 %v3022, %v3021
        %v3038 = vpack.c.b16 %v3024, %v3023
        %v3039 = vpack.c.b16 %v3026, %v3025
        %v3040 = vpack.c.b16 %v3028, %v3027
        %v3041 = vpack.c.b16 %v3030, %v3029
        %v3042 = vpack.c.b16 %v3032, %v3031
        %v3043 = vpack.c.b16 %v3034, %v3033
        %v3044 = vpack.c.b16 %v3036, %v3035
        %3053 = vmatpush.bf16.msra.mxu0 %v3044
        %3054 = vmatpush.bf16.msra.mxu0 %v3043
        %3055 = vmatpush.bf16.msra.mxu0 %v3042
        %3056 = vmatpush.bf16.msra.mxu0 %v3041
        %3057 = vmatpush.bf16.msra.mxu0 %v3040
        %3058 = vmatpush.bf16.msra.mxu0 %v3039
        %3059 = vmatpush.bf16.msra.mxu0 %v3038
        %3060 = vmatpush.bf16.msra.mxu0 %v3037
        %3061 = vmatmul.bf16.gmra.mxu0 %v2982
        %v3062 = vpop.f32.mrf.mxu0
        %v3063 = vadd.f32 %v3003, %v3062
        %v3064 = vpop.f32.mrf.mxu0
        %3065 = vdwg.mxu0
        %v3066 = vadd.f32 %v3063, %v1174
        %3067 = vst [vmem:[%s1052 + $0x10] sm:$0xff] %v3066
        %3069 = vrot.lane.b32.xlu0 %v3066, 70
        %v3070 = vpop.permute.xlu0 %3069
        %v3072 = vsub.f32 %v1070, %v3070
        %3074 = vset.pattern.permute.xlu0 0
        %3075 = vperm.xlu0 %3074, %v3072
        %v3076 = vpop.permute.xlu0 %3075
        %v3078 = vmul.f32 %v3076, %v1497
        %3079 = vset.pattern.permute.xlu0 1
        %3080 = vperm.xlu0 %3079, %v3072
        %v3081 = vpop.permute.xlu0 %3080
        %v3083 = vmul.f32 %v3081, %v1503
        %v3084 = vadd.f32 %v3078, %v3083
        %v3085 = vadd.f32 %v3084, %v1507
        %v3086 = vmax.f32 %v3085, 0.0
        %v3087 = vpack.c.bf16 %v3086, %v3086
        %v3088 = vld [vmem:[#allocation15] sm:$0xf]
        %v3089 = vld [vmem:[#allocation15 + $0x4] sm:$0xf]
        %v3090 = vld [vmem:[#allocation15 + $0x8] sm:$0xf]
        %v3091 = vld [vmem:[#allocation15 + $0xc] sm:$0xf]
        %v3092 = vld [vmem:[#allocation15 + $0x10] sm:$0xf]
        %v3093 = vld [vmem:[#allocation15 + $0x14] sm:$0xf]
        %v3094 = vld [vmem:[#allocation15 + $0x18] sm:$0xf]
        %v3095 = vld [vmem:[#allocation15 + $0x1c] sm:$0xf]
        %v3096 = vld [vmem:[#allocation15 + $0x20] sm:$0xf]
        %v3097 = vld [vmem:[#allocation15 + $0x24] sm:$0xf]
        %v3098 = vld [vmem:[#allocation15 + $0x28] sm:$0xf]
        %v3099 = vld [vmem:[#allocation15 + $0x2c] sm:$0xf]
        %v3100 = vld [vmem:[#allocation15 + $0x30] sm:$0xf]
        %v3101 = vld [vmem:[#allocation15 + $0x34] sm:$0xf]
        %v3102 = vld [vmem:[#allocation15 + $0x38] sm:$0xf]
        %v3103 = vld [vmem:[#allocation15 + $0x3c] sm:$0xf]
        %v3120 = vunpack.c.l.b16 %v3088
        %v3121 = vunpack.c.l.b16 %v3089
        %v3122 = vunpack.c.l.b16 %v3090
        %v3123 = vunpack.c.l.b16 %v3091
        %v3124 = vunpack.c.l.b16 %v3092
        %v3125 = vunpack.c.l.b16 %v3093
        %v3126 = vunpack.c.l.b16 %v3094
        %v3127 = vunpack.c.l.b16 %v3095
        %v3128 = vunpack.c.l.b16 %v3096
        %v3129 = vunpack.c.l.b16 %v3097
        %v3130 = vunpack.c.l.b16 %v3098
        %v3131 = vunpack.c.l.b16 %v3099
        %v3132 = vunpack.c.l.b16 %v3100
        %v3133 = vunpack.c.l.b16 %v3101
        %v3134 = vunpack.c.l.b16 %v3102
        %v3135 = vunpack.c.l.b16 %v3103
        %v3136 = vpack.c.b16 %v3121, %v3120
        %v3137 = vpack.c.b16 %v3123, %v3122
        %v3138 = vpack.c.b16 %v3125, %v3124
        %v3139 = vpack.c.b16 %v3127, %v3126
        %v3140 = vpack.c.b16 %v3129, %v3128
        %v3141 = vpack.c.b16 %v3131, %v3130
        %v3142 = vpack.c.b16 %v3133, %v3132
        %v3143 = vpack.c.b16 %v3135, %v3134
        %3152 = vmatpush.bf16.msra.mxu0 %v3143
        %3153 = vmatpush.bf16.msra.mxu0 %v3142
        %3154 = vmatpush.bf16.msra.mxu0 %v3141
        %3155 = vmatpush.bf16.msra.mxu0 %v3140
        %3156 = vmatpush.bf16.msra.mxu0 %v3139
        %3157 = vmatpush.bf16.msra.mxu0 %v3138
        %3158 = vmatpush.bf16.msra.mxu0 %v3137
        %3159 = vmatpush.bf16.msra.mxu0 %v3136
        %3160 = vmatmul.bf16.gmra.mxu0 %v3087
        %v3161 = vpop.f32.mrf.mxu0
        %v3162 = vadd.f32 0.0, %v3161
        %v3163 = vpop.f32.mrf.mxu0
        %3164 = vdwg.mxu0
        %v3165 = vld [vmem:[%s13] sm:$0x1]
        %v3166 = vld [vmem:[%s14] sm:$0x1]
        %3167 = vadd.xlane.f32.xlu0 %v3162
        %v3168 = vpop.xlane.xlu0 %3167
        %v3169 = vmul.f32 %v3168, %v1265
        %v3170 = vsub.f32 %v3162, %v3169
        %v3171 = vmul.f32 %v3170, %v3170
        %3172 = vadd.xlane.f32.xlu0 %v3171
        %v3173 = vpop.xlane.xlu0 %3172
        %v3174 = vmul.f32 %v3173, %v1265
        %v3175 = vadd.f32 %v3174, 1e-05
        %v3176 = vrsqrt.pop %v3175
        %v3177 = vmul.f32 %v3176, %v3175
        %v3178 = vmul.f32 %v3177, %v3176
        %v3179 = vmul.f32 0.5, %v3178
        %v3180 = vsub.f32 1.5, %v3179
        %v3181 = vmul.f32 %v3176, %v3180
        %vm3182 = vweird.f32 %v3175
        %vm3183 = vweird.f32 %v3176
        %vm3184 = vmor %vm3182, %vm3183
        %v3185 = vsel %vm3184, %v3176, %v3181
        %v3186 = vmul.f32 %v3170, %v3185
        %v3188 = vperm.slane %v3165, 0
        %v3190 = vmul.f32 %v3186, %v3188
        %v3192 = vperm.slane %v3166, 0
        %v3194 = vadd.f32 %v3190, %v3192
        %v3195 = vmax.f32 %v3194, 0.0
        %v3196 = vpack.c.bf16 %v3195, %v3195
        %v3197 = vld [vmem:[#allocation17] sm:$0xf]
        %v3198 = vld [vmem:[#allocation17 + $0x4] sm:$0xf]
        %v3199 = vld [vmem:[#allocation17 + $0x8] sm:$0xf]
        %v3200 = vld [vmem:[#allocation17 + $0xc] sm:$0xf]
        %v3201 = vld [vmem:[#allocation17 + $0x10] sm:$0xf]
        %v3202 = vld [vmem:[#allocation17 + $0x14] sm:$0xf]
        %v3203 = vld [vmem:[#allocation17 + $0x18] sm:$0xf]
        %v3204 = vld [vmem:[#allocation17 + $0x1c] sm:$0xf]
        %v3205 = vld [vmem:[#allocation17 + $0x20] sm:$0xf]
        %v3206 = vld [vmem:[#allocation17 + $0x24] sm:$0xf]
        %v3207 = vld [vmem:[#allocation17 + $0x28] sm:$0xf]
        %v3208 = vld [vmem:[#allocation17 + $0x2c] sm:$0xf]
        %v3209 = vld [vmem:[#allocation17 + $0x30] sm:$0xf]
        %v3210 = vld [vmem:[#allocation17 + $0x34] sm:$0xf]
        %v3211 = vld [vmem:[#allocation17 + $0x38] sm:$0xf]
        %v3212 = vld [vmem:[#allocation17 + $0x3c] sm:$0xf]
        %v3229 = vunpack.c.l.b16 %v3197
        %v3230 = vunpack.c.l.b16 %v3198
        %v3231 = vunpack.c.l.b16 %v3199
        %v3232 = vunpack.c.l.b16 %v3200
        %v3233 = vunpack.c.l.b16 %v3201
        %v3234 = vunpack.c.l.b16 %v3202
        %v3235 = vunpack.c.l.b16 %v3203
        %v3236 = vunpack.c.l.b16 %v3204
        %v3237 = vunpack.c.l.b16 %v3205
        %v3238 = vunpack.c.l.b16 %v3206
        %v3239 = vunpack.c.l.b16 %v3207
        %v3240 = vunpack.c.l.b16 %v3208
        %v3241 = vunpack.c.l.b16 %v3209
        %v3242 = vunpack.c.l.b16 %v3210
        %v3243 = vunpack.c.l.b16 %v3211
        %v3244 = vunpack.c.l.b16 %v3212
        %v3245 = vpack.c.b16 %v3230, %v3229
        %v3246 = vpack.c.b16 %v3232, %v3231
        %v3247 = vpack.c.b16 %v3234, %v3233
        %v3248 = vpack.c.b16 %v3236, %v3235
        %v3249 = vpack.c.b16 %v3238, %v3237
        %v3250 = vpack.c.b16 %v3240, %v3239
        %v3251 = vpack.c.b16 %v3242, %v3241
        %v3252 = vpack.c.b16 %v3244, %v3243
        %3261 = vmatpush.bf16.msra.mxu0 %v3252
        %3262 = vmatpush.bf16.msra.mxu0 %v3251
        %3263 = vmatpush.bf16.msra.mxu0 %v3250
        %3264 = vmatpush.bf16.msra.mxu0 %v3249
        %3265 = vmatpush.bf16.msra.mxu0 %v3248
        %3266 = vmatpush.bf16.msra.mxu0 %v3247
        %3267 = vmatpush.bf16.msra.mxu0 %v3246
        %3268 = vmatpush.bf16.msra.mxu0 %v3245
        %3269 = vmatmul.bf16.gmra.mxu0 %v3196
        %v3270 = vpop.f32.mrf.mxu0
        %v3271 = vadd.f32 %v1145, %v3270
        %v3272 = vpop.f32.mrf.mxu0
        %3273 = vdwg.mxu0
        %v3274 = vld [vmem:[%s17] sm:$0x1]
        %v3275 = vld [vmem:[%s18] sm:$0x1]
        %3276 = vadd.xlane.f32.xlu0 %v3271
        %v3277 = vpop.xlane.xlu0 %3276
        %v3278 = vmul.f32 %v3277, %v1265
        %v3279 = vsub.f32 %v3271, %v3278
        %v3280 = vmul.f32 %v3279, %v3279
        %3281 = vadd.xlane.f32.xlu0 %v3280
        %v3282 = vpop.xlane.xlu0 %3281
        %v3283 = vmul.f32 %v3282, %v1265
        %v3284 = vadd.f32 %v3283, 1e-05
        %v3285 = vrsqrt.pop %v3284
        %v3286 = vmul.f32 %v3285, %v3284
        %v3287 = vmul.f32 %v3286, %v3285
        %v3288 = vmul.f32 0.5, %v3287
        %v3289 = vsub.f32 1.5, %v3288
        %v3290 = vmul.f32 %v3285, %v3289
        %vm3291 = vweird.f32 %v3284
        %vm3292 = vweird.f32 %v3285
        %vm3293 = vmor %vm3291, %vm3292
        %v3294 = vsel %vm3293, %v3285, %v3290
        %v3295 = vmul.f32 %v3279, %v3294
        %v3297 = vperm.slane %v3274, 0
        %v3299 = vmul.f32 %v3295, %v3297
        %v3301 = vperm.slane %v3275, 0
        %v3303 = vadd.f32 %v3299, %v3301
        %v3304 = vmax.f32 %v3303, 0.0
        %v3305 = vpack.c.bf16 %v3304, %v3304
        %v3306 = vld [vmem:[#allocation20] sm:$0xf]
        %v3307 = vld [vmem:[#allocation20 + $0x4] sm:$0xf]
        %v3308 = vld [vmem:[#allocation20 + $0x8] sm:$0xf]
        %v3309 = vld [vmem:[#allocation20 + $0xc] sm:$0xf]
        %v3310 = vld [vmem:[#allocation20 + $0x10] sm:$0xf]
        %v3311 = vld [vmem:[#allocation20 + $0x14] sm:$0xf]
        %v3312 = vld [vmem:[#allocation20 + $0x18] sm:$0xf]
        %v3313 = vld [vmem:[#allocation20 + $0x1c] sm:$0xf]
        %v3314 = vld [vmem:[#allocation20 + $0x20] sm:$0xf]
        %v3315 = vld [vmem:[#allocation20 + $0x24] sm:$0xf]
        %v3316 = vld [vmem:[#allocation20 + $0x28] sm:$0xf]
        %v3317 = vld [vmem:[#allocation20 + $0x2c] sm:$0xf]
        %v3318 = vld [vmem:[#allocation20 + $0x30] sm:$0xf]
        %v3319 = vld [vmem:[#allocation20 + $0x34] sm:$0xf]
        %v3320 = vld [vmem:[#allocation20 + $0x38] sm:$0xf]
        %v3321 = vld [vmem:[#allocation20 + $0x3c] sm:$0xf]
        %v3338 = vunpack.c.l.b16 %v3306
        %v3339 = vunpack.c.l.b16 %v3307
        %v3340 = vunpack.c.l.b16 %v3308
        %v3341 = vunpack.c.l.b16 %v3309
        %v3342 = vunpack.c.l.b16 %v3310
        %v3343 = vunpack.c.l.b16 %v3311
        %v3344 = vunpack.c.l.b16 %v3312
        %v3345 = vunpack.c.l.b16 %v3313
        %v3346 = vunpack.c.l.b16 %v3314
        %v3347 = vunpack.c.l.b16 %v3315
        %v3348 = vunpack.c.l.b16 %v3316
        %v3349 = vunpack.c.l.b16 %v3317
        %v3350 = vunpack.c.l.b16 %v3318
        %v3351 = vunpack.c.l.b16 %v3319
        %v3352 = vunpack.c.l.b16 %v3320
        %v3353 = vunpack.c.l.b16 %v3321
        %v3354 = vpack.c.b16 %v3339, %v3338
        %v3355 = vpack.c.b16 %v3341, %v3340
        %v3356 = vpack.c.b16 %v3343, %v3342
        %v3357 = vpack.c.b16 %v3345, %v3344
        %v3358 = vpack.c.b16 %v3347, %v3346
        %v3359 = vpack.c.b16 %v3349, %v3348
        %v3360 = vpack.c.b16 %v3351, %v3350
        %v3361 = vpack.c.b16 %v3353, %v3352
        %3370 = vmatpush.bf16.msra.mxu0 %v3361
        %3371 = vmatpush.bf16.msra.mxu0 %v3360
        %3372 = vmatpush.bf16.msra.mxu0 %v3359
        %3373 = vmatpush.bf16.msra.mxu0 %v3358
        %3374 = vmatpush.bf16.msra.mxu0 %v3357
        %3375 = vmatpush.bf16.msra.mxu0 %v3356
        %3376 = vmatpush.bf16.msra.mxu0 %v3355
        %3377 = vmatpush.bf16.msra.mxu0 %v3354
        %3378 = vmatmul.bf16.gmra.mxu0 %v3305
        %v3379 = vpop.f32.mrf.mxu0
        %v3380 = vadd.f32 0.0, %v3379
        %v3381 = vpop.f32.mrf.mxu0
        %3382 = vdwg.mxu0
        %v3383 = vld [vmem:[%s20] sm:$0x1]
        %v3384 = vld [vmem:[%s21] sm:$0x1]
        %3385 = vadd.xlane.f32.xlu0 %v3380
        %v3386 = vpop.xlane.xlu0 %3385
        %v3387 = vmul.f32 %v3386, %v1265
        %v3388 = vsub.f32 %v3380, %v3387
        %v3389 = vmul.f32 %v3388, %v3388
        %3390 = vadd.xlane.f32.xlu0 %v3389
        %v3391 = vpop.xlane.xlu0 %3390
        %v3392 = vmul.f32 %v3391, %v1265
        %v3393 = vadd.f32 %v3392, 1e-05
        %v3394 = vrsqrt.pop %v3393
        %v3395 = vmul.f32 %v3394, %v3393
        %v3396 = vmul.f32 %v3395, %v3394
        %v3397 = vmul.f32 0.5, %v3396
        %v3398 = vsub.f32 1.5, %v3397
        %v3399 = vmul.f32 %v3394, %v3398
        %vm3400 = vweird.f32 %v3393
        %vm3401 = vweird.f32 %v3394
        %vm3402 = vmor %vm3400, %vm3401
        %v3403 = vsel %vm3402, %v3394, %v3399
        %v3404 = vmul.f32 %v3388, %v3403
        %v3406 = vperm.slane %v3383, 0
        %v3408 = vmul.f32 %v3404, %v3406
        %v3410 = vperm.slane %v3384, 0
        %v3412 = vadd.f32 %v3408, %v3410
        %v3413 = vmax.f32 %v3412, 0.0
        %v3414 = vpack.c.bf16 %v3413, %v3413
        %v3415 = vld [vmem:[#allocation21] sm:$0xf]
        %v3416 = vld [vmem:[#allocation21 + $0x4] sm:$0xf]
        %v3417 = vld [vmem:[#allocation21 + $0x8] sm:$0xf]
        %v3418 = vld [vmem:[#allocation21 + $0xc] sm:$0xf]
        %v3419 = vld [vmem:[#allocation21 + $0x10] sm:$0xf]
        %v3420 = vld [vmem:[#allocation21 + $0x14] sm:$0xf]
        %v3421 = vld [vmem:[#allocation21 + $0x18] sm:$0xf]
        %v3422 = vld [vmem:[#allocation21 + $0x1c] sm:$0xf]
        %v3423 = vld [vmem:[#allocation21 + $0x20] sm:$0xf]
        %v3424 = vld [vmem:[#allocation21 + $0x24] sm:$0xf]
        %v3425 = vld [vmem:[#allocation21 + $0x28] sm:$0xf]
        %v3426 = vld [vmem:[#allocation21 + $0x2c] sm:$0xf]
        %v3427 = vld [vmem:[#allocation21 + $0x30] sm:$0xf]
        %v3428 = vld [vmem:[#allocation21 + $0x34] sm:$0xf]
        %v3429 = vld [vmem:[#allocation21 + $0x38] sm:$0xf]
        %v3430 = vld [vmem:[#allocation21 + $0x3c] sm:$0xf]
        %v3447 = vunpack.c.l.b16 %v3415
        %v3448 = vunpack.c.l.b16 %v3416
        %v3449 = vunpack.c.l.b16 %v3417
        %v3450 = vunpack.c.l.b16 %v3418
        %v3451 = vunpack.c.l.b16 %v3419
        %v3452 = vunpack.c.l.b16 %v3420
        %v3453 = vunpack.c.l.b16 %v3421
        %v3454 = vunpack.c.l.b16 %v3422
        %v3455 = vunpack.c.l.b16 %v3423
        %v3456 = vunpack.c.l.b16 %v3424
        %v3457 = vunpack.c.l.b16 %v3425
        %v3458 = vunpack.c.l.b16 %v3426
        %v3459 = vunpack.c.l.b16 %v3427
        %v3460 = vunpack.c.l.b16 %v3428
        %v3461 = vunpack.c.l.b16 %v3429
        %v3462 = vunpack.c.l.b16 %v3430
        %v3463 = vpack.c.b16 %v3448, %v3447
        %v3464 = vpack.c.b16 %v3450, %v3449
        %v3465 = vpack.c.b16 %v3452, %v3451
        %v3466 = vpack.c.b16 %v3454, %v3453
        %v3467 = vpack.c.b16 %v3456, %v3455
        %v3468 = vpack.c.b16 %v3458, %v3457
        %v3469 = vpack.c.b16 %v3460, %v3459
        %v3470 = vpack.c.b16 %v3462, %v3461
        %3479 = vmatpush.bf16.msra.mxu0 %v3470
        %3480 = vmatpush.bf16.msra.mxu0 %v3469
        %3481 = vmatpush.bf16.msra.mxu0 %v3468
        %3482 = vmatpush.bf16.msra.mxu0 %v3467
        %3483 = vmatpush.bf16.msra.mxu0 %v3466
        %3484 = vmatpush.bf16.msra.mxu0 %v3465
        %3485 = vmatpush.bf16.msra.mxu0 %v3464
        %3486 = vmatpush.bf16.msra.mxu0 %v3463
        %3487 = vmatmul.bf16.gmra.mxu0 %v3414
        %v3488 = vpop.f32.mrf.mxu0
        %v3489 = vadd.f32 0.0, %v3488
        %v3490 = vpop.f32.mrf.mxu0
        %3491 = vdwg.mxu0
        %v3492 = vld [vmem:[%s23] sm:$0x1]
        %v3493 = vld [vmem:[%s24] sm:$0x1]
        %3494 = vadd.xlane.f32.xlu0 %v3489
        %v3495 = vpop.xlane.xlu0 %3494
        %v3496 = vmul.f32 %v3495, %v1265
        %v3497 = vsub.f32 %v3489, %v3496
        %v3498 = vmul.f32 %v3497, %v3497
        %3499 = vadd.xlane.f32.xlu0 %v3498
        %v3500 = vpop.xlane.xlu0 %3499
        %v3501 = vmul.f32 %v3500, %v1265
        %v3502 = vadd.f32 %v3501, 1e-05
        %v3503 = vrsqrt.pop %v3502
        %v3504 = vmul.f32 %v3503, %v3502
        %v3505 = vmul.f32 %v3504, %v3503
        %v3506 = vmul.f32 0.5, %v3505
        %v3507 = vsub.f32 1.5, %v3506
        %v3508 = vmul.f32 %v3503, %v3507
        %vm3509 = vweird.f32 %v3502
        %vm3510 = vweird.f32 %v3503
        %vm3511 = vmor %vm3509, %vm3510
        %v3512 = vsel %vm3511, %v3503, %v3508
        %v3513 = vmul.f32 %v3497, %v3512
        %v3515 = vperm.slane %v3492, 0
        %v3517 = vmul.f32 %v3513, %v3515
        %v3519 = vperm.slane %v3493, 0
        %v3521 = vadd.f32 %v3517, %v3519
        %v3522 = vadd.f32 %v3521, %v3304
        %v3523 = vmax.f32 %v3522, 0.0
        %v3524 = vld [vmem:[%s25] sm:$0x1]
        %v3526 = vperm.slane %v3524, 0
        %v3528 = vmul.f32 %v3523, %v3526
        %3529 = vadd.xlane.f32.xlu0 %v3528
        %v3530 = vpop.xlane.xlu0 %3529
        %v3531 = vld [vmem:[#allocation2] sm:$0x1]
        %v3533 = vperm.slane %v3531, 0
        %v3535 = vadd.f32 %v3530, %v3533
        %vm3536 = vcmp.eq.s32.totalorder %v1149, 2
        %v3537 = vsel %vm3536, 1, 0
        %vm3538 = vcmp.eq.s32.totalorder %v3537, 1
        %3540 = vset.pattern.permute.xlu0 0
        %3541 = vperm.xlu0 %3540, %v3535
        %v3542 = vpop.permute.xlu0 %3541
        %v3544 = vsel %vm3538, %v3542, 0.0
        %v3545 = vadd.f32 %v2757, %v3544
        %s3546 = scalar_lea.vmem [#allocation3], 192
        %v3547 = vld [vmem:[%s3546] sm:$0xf]
        %v3548 = vld [vmem:[%s3546 + $0x4] sm:$0xf]
        %v3549 = vld [vmem:[%s3546 + $0x8] sm:$0xf]
        %v3550 = vld [vmem:[%s3546 + $0xc] sm:$0xf]
        %v3551 = vld [vmem:[%s3546 + $0x10] sm:$0xf]
        %v3552 = vld [vmem:[%s3546 + $0x14] sm:$0xf]
        %v3553 = vld [vmem:[%s3546 + $0x18] sm:$0xf]
        %v3554 = vld [vmem:[%s3546 + $0x1c] sm:$0xf]
        %v3555 = vld [vmem:[%s3546 + $0x20] sm:$0xf]
        %v3556 = vld [vmem:[%s3546 + $0x24] sm:$0xf]
        %v3557 = vld [vmem:[%s3546 + $0x28] sm:$0xf]
        %v3558 = vld [vmem:[%s3546 + $0x2c] sm:$0xf]
        %v3559 = vld [vmem:[%s3546 + $0x30] sm:$0xf]
        %v3560 = vld [vmem:[%s3546 + $0x34] sm:$0xf]
        %v3561 = vld [vmem:[%s3546 + $0x38] sm:$0xf]
        %v3562 = vld [vmem:[%s3546 + $0x3c] sm:$0xf]
        %v3579 = vunpack.c.l.b16 %v3547
        %v3580 = vunpack.c.l.b16 %v3548
        %v3581 = vunpack.c.l.b16 %v3549
        %v3582 = vunpack.c.l.b16 %v3550
        %v3583 = vunpack.c.l.b16 %v3551
        %v3584 = vunpack.c.l.b16 %v3552
        %v3585 = vunpack.c.l.b16 %v3553
        %v3586 = vunpack.c.l.b16 %v3554
        %v3587 = vunpack.c.l.b16 %v3555
        %v3588 = vunpack.c.l.b16 %v3556
        %v3589 = vunpack.c.l.b16 %v3557
        %v3590 = vunpack.c.l.b16 %v3558
        %v3591 = vunpack.c.l.b16 %v3559
        %v3592 = vunpack.c.l.b16 %v3560
        %v3593 = vunpack.c.l.b16 %v3561
        %v3594 = vunpack.c.l.b16 %v3562
        %v3595 = vpack.c.b16 %v3580, %v3579
        %v3596 = vpack.c.b16 %v3582, %v3581
        %v3597 = vpack.c.b16 %v3584, %v3583
        %v3598 = vpack.c.b16 %v3586, %v3585
        %v3599 = vpack.c.b16 %v3588, %v3587
        %v3600 = vpack.c.b16 %v3590, %v3589
        %v3601 = vpack.c.b16 %v3592, %v3591
        %v3602 = vpack.c.b16 %v3594, %v3593
        %3611 = vmatpush.bf16.msra.mxu0 %v3602
        %3612 = vmatpush.bf16.msra.mxu0 %v3601
        %3613 = vmatpush.bf16.msra.mxu0 %v3600
        %3614 = vmatpush.bf16.msra.mxu0 %v3599
        %3615 = vmatpush.bf16.msra.mxu0 %v3598
        %3616 = vmatpush.bf16.msra.mxu0 %v3597
        %3617 = vmatpush.bf16.msra.mxu0 %v3596
        %3618 = vmatpush.bf16.msra.mxu0 %v3595
        %3619 = vmatmul.bf16.gmra.mxu0 %v1069
        %v3620 = vpop.f32.mrf.mxu0
        %v3621 = vadd.f32 0.0, %v3620
        %v3622 = vpop.f32.mrf.mxu0
        %3623 = vdwg.mxu0
        %s3624 = scalar_lea.vmem %s3, 3
        %v3625 = vld [vmem:[%s3624] sm:$0x1]
        %s3626 = scalar_lea.vmem [#allocation6], 3
        %v3627 = vld [vmem:[%s3626] sm:$0x1]
        %3628 = vadd.xlane.f32.xlu0 %v3621
        %v3629 = vpop.xlane.xlu0 %3628
        %v3630 = vmul.f32 %v3629, %v1265
        %v3631 = vsub.f32 %v3621, %v3630
        %v3632 = vmul.f32 %v3631, %v3631
        %3633 = vadd.xlane.f32.xlu0 %v3632
        %v3634 = vpop.xlane.xlu0 %3633
        %v3635 = vmul.f32 %v3634, %v1265
        %v3636 = vadd.f32 %v3635, 1e-05
        %v3637 = vrsqrt.pop %v3636
        %v3638 = vmul.f32 %v3637, %v3636
        %v3639 = vmul.f32 %v3638, %v3637
        %v3640 = vmul.f32 0.5, %v3639
        %v3641 = vsub.f32 1.5, %v3640
        %v3642 = vmul.f32 %v3637, %v3641
        %vm3643 = vweird.f32 %v3636
        %vm3644 = vweird.f32 %v3637
        %vm3645 = vmor %vm3643, %vm3644
        %v3646 = vsel %vm3645, %v3637, %v3642
        %v3647 = vmul.f32 %v3631, %v3646
        %v3649 = vperm.slane %v3625, 0
        %v3651 = vmul.f32 %v3647, %v3649
        %v3653 = vperm.slane %v3627, 0
        %v3655 = vadd.f32 %v3651, %v3653
        %v3656 = vmax.f32 %v3655, 0.0
        %v3657 = vpack.c.bf16 %v3656, %v3656
        %s3658 = scalar_lea.vmem [#allocation8], 192
        %v3659 = vld [vmem:[%s3658] sm:$0xf]
        %v3660 = vld [vmem:[%s3658 + $0x4] sm:$0xf]
        %v3661 = vld [vmem:[%s3658 + $0x8] sm:$0xf]
        %v3662 = vld [vmem:[%s3658 + $0xc] sm:$0xf]
        %v3663 = vld [vmem:[%s3658 + $0x10] sm:$0xf]
        %v3664 = vld [vmem:[%s3658 + $0x14] sm:$0xf]
        %v3665 = vld [vmem:[%s3658 + $0x18] sm:$0xf]
        %v3666 = vld [vmem:[%s3658 + $0x1c] sm:$0xf]
        %v3667 = vld [vmem:[%s3658 + $0x20] sm:$0xf]
        %v3668 = vld [vmem:[%s3658 + $0x24] sm:$0xf]
        %v3669 = vld [vmem:[%s3658 + $0x28] sm:$0xf]
        %v3670 = vld [vmem:[%s3658 + $0x2c] sm:$0xf]
        %v3671 = vld [vmem:[%s3658 + $0x30] sm:$0xf]
        %v3672 = vld [vmem:[%s3658 + $0x34] sm:$0xf]
        %v3673 = vld [vmem:[%s3658 + $0x38] sm:$0xf]
        %v3674 = vld [vmem:[%s3658 + $0x3c] sm:$0xf]
        %v3691 = vunpack.c.l.b16 %v3659
        %v3692 = vunpack.c.l.b16 %v3660
        %v3693 = vunpack.c.l.b16 %v3661
        %v3694 = vunpack.c.l.b16 %v3662
        %v3695 = vunpack.c.l.b16 %v3663
        %v3696 = vunpack.c.l.b16 %v3664
        %v3697 = vunpack.c.l.b16 %v3665
        %v3698 = vunpack.c.l.b16 %v3666
        %v3699 = vunpack.c.l.b16 %v3667
        %v3700 = vunpack.c.l.b16 %v3668
        %v3701 = vunpack.c.l.b16 %v3669
        %v3702 = vunpack.c.l.b16 %v3670
        %v3703 = vunpack.c.l.b16 %v3671
        %v3704 = vunpack.c.l.b16 %v3672
        %v3705 = vunpack.c.l.b16 %v3673
        %v3706 = vunpack.c.l.b16 %v3674
        %v3707 = vpack.c.b16 %v3692, %v3691
        %v3708 = vpack.c.b16 %v3694, %v3693
        %v3709 = vpack.c.b16 %v3696, %v3695
        %v3710 = vpack.c.b16 %v3698, %v3697
        %v3711 = vpack.c.b16 %v3700, %v3699
        %v3712 = vpack.c.b16 %v3702, %v3701
        %v3713 = vpack.c.b16 %v3704, %v3703
        %v3714 = vpack.c.b16 %v3706, %v3705
        %3723 = vmatpush.bf16.msra.mxu0 %v3714
        %3724 = vmatpush.bf16.msra.mxu0 %v3713
        %3725 = vmatpush.bf16.msra.mxu0 %v3712
        %3726 = vmatpush.bf16.msra.mxu0 %v3711
        %3727 = vmatpush.bf16.msra.mxu0 %v3710
        %3728 = vmatpush.bf16.msra.mxu0 %v3709
        %3729 = vmatpush.bf16.msra.mxu0 %v3708
        %3730 = vmatpush.bf16.msra.mxu0 %v3707
        %3731 = vmatmul.bf16.gmra.mxu0 %v3657
        %v3732 = vpop.f32.mrf.mxu0
        %v3733 = vadd.f32 0.0, %v3732
        %v3734 = vpop.f32.mrf.mxu0
        %3735 = vdwg.mxu0
        %s3736 = scalar_lea.vmem [#allocation9], 3
        %v3737 = vld [vmem:[%s3736] sm:$0x1]
        %s3738 = scalar_lea.vmem [#allocation11], 3
        %v3739 = vld [vmem:[%s3738] sm:$0x1]
        %3740 = vadd.xlane.f32.xlu0 %v3733
        %v3741 = vpop.xlane.xlu0 %3740
        %v3742 = vmul.f32 %v3741, %v1265
        %v3743 = vsub.f32 %v3733, %v3742
        %v3744 = vmul.f32 %v3743, %v3743
        %3745 = vadd.xlane.f32.xlu0 %v3744
        %v3746 = vpop.xlane.xlu0 %3745
        %v3747 = vmul.f32 %v3746, %v1265
        %v3748 = vadd.f32 %v3747, 1e-05
        %v3749 = vrsqrt.pop %v3748
        %v3750 = vmul.f32 %v3749, %v3748
        %v3751 = vmul.f32 %v3750, %v3749
        %v3752 = vmul.f32 0.5, %v3751
        %v3753 = vsub.f32 1.5, %v3752
        %v3754 = vmul.f32 %v3749, %v3753
        %vm3755 = vweird.f32 %v3748
        %vm3756 = vweird.f32 %v3749
        %vm3757 = vmor %vm3755, %vm3756
        %v3758 = vsel %vm3757, %v3749, %v3754
        %v3759 = vmul.f32 %v3743, %v3758
        %v3761 = vperm.slane %v3737, 0
        %v3763 = vmul.f32 %v3759, %v3761
        %v3765 = vperm.slane %v3739, 0
        %v3767 = vadd.f32 %v3763, %v3765
        %v3768 = vadd.f32 %v3767, %v1068
        %v3769 = vmax.f32 %v3768, 0.0
        %v3770 = vpack.c.bf16 %v3769, %v3769
        %s3771 = scalar_lea.vmem [#allocation12], 192
        %v3772 = vld [vmem:[%s3771] sm:$0xf]
        %v3773 = vld [vmem:[%s3771 + $0x4] sm:$0xf]
        %v3774 = vld [vmem:[%s3771 + $0x8] sm:$0xf]
        %v3775 = vld [vmem:[%s3771 + $0xc] sm:$0xf]
        %v3776 = vld [vmem:[%s3771 + $0x10] sm:$0xf]
        %v3777 = vld [vmem:[%s3771 + $0x14] sm:$0xf]
        %v3778 = vld [vmem:[%s3771 + $0x18] sm:$0xf]
        %v3779 = vld [vmem:[%s3771 + $0x1c] sm:$0xf]
        %v3780 = vld [vmem:[%s3771 + $0x20] sm:$0xf]
        %v3781 = vld [vmem:[%s3771 + $0x24] sm:$0xf]
        %v3782 = vld [vmem:[%s3771 + $0x28] sm:$0xf]
        %v3783 = vld [vmem:[%s3771 + $0x2c] sm:$0xf]
        %v3784 = vld [vmem:[%s3771 + $0x30] sm:$0xf]
        %v3785 = vld [vmem:[%s3771 + $0x34] sm:$0xf]
        %v3786 = vld [vmem:[%s3771 + $0x38] sm:$0xf]
        %v3787 = vld [vmem:[%s3771 + $0x3c] sm:$0xf]
        %s3788 = scalar_lea.vmem %s9, 3
        %v3789 = vld [vmem:[%s3788] sm:$0x1]
        %v3791 = vperm.slane %v3789, 0
        %v3809 = vunpack.c.l.b16 %v3772
        %v3810 = vunpack.c.l.b16 %v3773
        %v3811 = vunpack.c.l.b16 %v3774
        %v3812 = vunpack.c.l.b16 %v3775
        %v3813 = vunpack.c.l.b16 %v3776
        %v3814 = vunpack.c.l.b16 %v3777
        %v3815 = vunpack.c.l.b16 %v3778
        %v3816 = vunpack.c.l.b16 %v3779
        %v3817 = vunpack.c.l.b16 %v3780
        %v3818 = vunpack.c.l.b16 %v3781
        %v3819 = vunpack.c.l.b16 %v3782
        %v3820 = vunpack.c.l.b16 %v3783
        %v3821 = vunpack.c.l.b16 %v3784
        %v3822 = vunpack.c.l.b16 %v3785
        %v3823 = vunpack.c.l.b16 %v3786
        %v3824 = vunpack.c.l.b16 %v3787
        %v3825 = vpack.c.b16 %v3810, %v3809
        %v3826 = vpack.c.b16 %v3812, %v3811
        %v3827 = vpack.c.b16 %v3814, %v3813
        %v3828 = vpack.c.b16 %v3816, %v3815
        %v3829 = vpack.c.b16 %v3818, %v3817
        %v3830 = vpack.c.b16 %v3820, %v3819
        %v3831 = vpack.c.b16 %v3822, %v3821
        %v3832 = vpack.c.b16 %v3824, %v3823
        %3841 = vmatpush.bf16.msra.mxu0 %v3832
        %3842 = vmatpush.bf16.msra.mxu0 %v3831
        %3843 = vmatpush.bf16.msra.mxu0 %v3830
        %3844 = vmatpush.bf16.msra.mxu0 %v3829
        %3845 = vmatpush.bf16.msra.mxu0 %v3828
        %3846 = vmatpush.bf16.msra.mxu0 %v3827
        %3847 = vmatpush.bf16.msra.mxu0 %v3826
        %3848 = vmatpush.bf16.msra.mxu0 %v3825
        %3849 = vmatmul.bf16.gmra.mxu0 %v3770
        %v3850 = vpop.f32.mrf.mxu0
        %v3851 = vadd.f32 %v3791, %v3850
        %v3852 = vpop.f32.mrf.mxu0
        %3853 = vdwg.mxu0
        %v3854 = vadd.f32 %v3851, %v1174
        %3855 = vst [vmem:[%s1052 + $0x18] sm:$0xff] %v3854
        %3857 = vrot.lane.b32.xlu0 %v3854, 70
        %v3858 = vpop.permute.xlu0 %3857
        %v3860 = vsub.f32 %v1070, %v3858
        %3862 = vset.pattern.permute.xlu0 0
        %3863 = vperm.xlu0 %3862, %v3860
        %v3864 = vpop.permute.xlu0 %3863
        %v3866 = vmul.f32 %v3864, %v1497
        %3867 = vset.pattern.permute.xlu0 1
        %3868 = vperm.xlu0 %3867, %v3860
        %v3869 = vpop.permute.xlu0 %3868
        %v3871 = vmul.f32 %v3869, %v1503
        %v3872 = vadd.f32 %v3866, %v3871
        %v3873 = vadd.f32 %v3872, %v1507
        %v3874 = vmax.f32 %v3873, 0.0
        %v3875 = vpack.c.bf16 %v3874, %v3874
        %v3876 = vld [vmem:[#allocation15] sm:$0xf]
        %v3877 = vld [vmem:[#allocation15 + $0x4] sm:$0xf]
        %v3878 = vld [vmem:[#allocation15 + $0x8] sm:$0xf]
        %v3879 = vld [vmem:[#allocation15 + $0xc] sm:$0xf]
        %v3880 = vld [vmem:[#allocation15 + $0x10] sm:$0xf]
        %v3881 = vld [vmem:[#allocation15 + $0x14] sm:$0xf]
        %v3882 = vld [vmem:[#allocation15 + $0x18] sm:$0xf]
        %v3883 = vld [vmem:[#allocation15 + $0x1c] sm:$0xf]
        %v3884 = vld [vmem:[#allocation15 + $0x20] sm:$0xf]
        %v3885 = vld [vmem:[#allocation15 + $0x24] sm:$0xf]
        %v3886 = vld [vmem:[#allocation15 + $0x28] sm:$0xf]
        %v3887 = vld [vmem:[#allocation15 + $0x2c] sm:$0xf]
        %v3888 = vld [vmem:[#allocation15 + $0x30] sm:$0xf]
        %v3889 = vld [vmem:[#allocation15 + $0x34] sm:$0xf]
        %v3890 = vld [vmem:[#allocation15 + $0x38] sm:$0xf]
        %v3891 = vld [vmem:[#allocation15 + $0x3c] sm:$0xf]
        %v3908 = vunpack.c.l.b16 %v3876
        %v3909 = vunpack.c.l.b16 %v3877
        %v3910 = vunpack.c.l.b16 %v3878
        %v3911 = vunpack.c.l.b16 %v3879
        %v3912 = vunpack.c.l.b16 %v3880
        %v3913 = vunpack.c.l.b16 %v3881
        %v3914 = vunpack.c.l.b16 %v3882
        %v3915 = vunpack.c.l.b16 %v3883
        %v3916 = vunpack.c.l.b16 %v3884
        %v3917 = vunpack.c.l.b16 %v3885
        %v3918 = vunpack.c.l.b16 %v3886
        %v3919 = vunpack.c.l.b16 %v3887
        %v3920 = vunpack.c.l.b16 %v3888
        %v3921 = vunpack.c.l.b16 %v3889
        %v3922 = vunpack.c.l.b16 %v3890
        %v3923 = vunpack.c.l.b16 %v3891
        %v3924 = vpack.c.b16 %v3909, %v3908
        %v3925 = vpack.c.b16 %v3911, %v3910
        %v3926 = vpack.c.b16 %v3913, %v3912
        %v3927 = vpack.c.b16 %v3915, %v3914
        %v3928 = vpack.c.b16 %v3917, %v3916
        %v3929 = vpack.c.b16 %v3919, %v3918
        %v3930 = vpack.c.b16 %v3921, %v3920
        %v3931 = vpack.c.b16 %v3923, %v3922
        %3940 = vmatpush.bf16.msra.mxu0 %v3931
        %3941 = vmatpush.bf16.msra.mxu0 %v3930
        %3942 = vmatpush.bf16.msra.mxu0 %v3929
        %3943 = vmatpush.bf16.msra.mxu0 %v3928
        %3944 = vmatpush.bf16.msra.mxu0 %v3927
        %3945 = vmatpush.bf16.msra.mxu0 %v3926
        %3946 = vmatpush.bf16.msra.mxu0 %v3925
        %3947 = vmatpush.bf16.msra.mxu0 %v3924
        %3948 = vmatmul.bf16.gmra.mxu0 %v3875
        %v3949 = vpop.f32.mrf.mxu0
        %v3950 = vadd.f32 0.0, %v3949
        %v3951 = vpop.f32.mrf.mxu0
        %3952 = vdwg.mxu0
        %v3953 = vld [vmem:[%s13] sm:$0x1]
        %v3954 = vld [vmem:[%s14] sm:$0x1]
        %3955 = vadd.xlane.f32.xlu0 %v3950
        %v3956 = vpop.xlane.xlu0 %3955
        %v3957 = vmul.f32 %v3956, %v1265
        %v3958 = vsub.f32 %v3950, %v3957
        %v3959 = vmul.f32 %v3958, %v3958
        %3960 = vadd.xlane.f32.xlu0 %v3959
        %v3961 = vpop.xlane.xlu0 %3960
        %v3962 = vmul.f32 %v3961, %v1265
        %v3963 = vadd.f32 %v3962, 1e-05
        %v3964 = vrsqrt.pop %v3963
        %v3965 = vmul.f32 %v3964, %v3963
        %v3966 = vmul.f32 %v3965, %v3964
        %v3967 = vmul.f32 0.5, %v3966
        %v3968 = vsub.f32 1.5, %v3967
        %v3969 = vmul.f32 %v3964, %v3968
        %vm3970 = vweird.f32 %v3963
        %vm3971 = vweird.f32 %v3964
        %vm3972 = vmor %vm3970, %vm3971
        %v3973 = vsel %vm3972, %v3964, %v3969
        %v3974 = vmul.f32 %v3958, %v3973
        %v3976 = vperm.slane %v3953, 0
        %v3978 = vmul.f32 %v3974, %v3976
        %v3980 = vperm.slane %v3954, 0
        %v3982 = vadd.f32 %v3978, %v3980
        %v3983 = vmax.f32 %v3982, 0.0
        %v3984 = vpack.c.bf16 %v3983, %v3983
        %v3985 = vld [vmem:[#allocation17] sm:$0xf]
        %v3986 = vld [vmem:[#allocation17 + $0x4] sm:$0xf]
        %v3987 = vld [vmem:[#allocation17 + $0x8] sm:$0xf]
        %v3988 = vld [vmem:[#allocation17 + $0xc] sm:$0xf]
        %v3989 = vld [vmem:[#allocation17 + $0x10] sm:$0xf]
        %v3990 = vld [vmem:[#allocation17 + $0x14] sm:$0xf]
        %v3991 = vld [vmem:[#allocation17 + $0x18] sm:$0xf]
        %v3992 = vld [vmem:[#allocation17 + $0x1c] sm:$0xf]
        %v3993 = vld [vmem:[#allocation17 + $0x20] sm:$0xf]
        %v3994 = vld [vmem:[#allocation17 + $0x24] sm:$0xf]
        %v3995 = vld [vmem:[#allocation17 + $0x28] sm:$0xf]
        %v3996 = vld [vmem:[#allocation17 + $0x2c] sm:$0xf]
        %v3997 = vld [vmem:[#allocation17 + $0x30] sm:$0xf]
        %v3998 = vld [vmem:[#allocation17 + $0x34] sm:$0xf]
        %v3999 = vld [vmem:[#allocation17 + $0x38] sm:$0xf]
        %v4000 = vld [vmem:[#allocation17 + $0x3c] sm:$0xf]
        %v4017 = vunpack.c.l.b16 %v3985
        %v4018 = vunpack.c.l.b16 %v3986
        %v4019 = vunpack.c.l.b16 %v3987
        %v4020 = vunpack.c.l.b16 %v3988
        %v4021 = vunpack.c.l.b16 %v3989
        %v4022 = vunpack.c.l.b16 %v3990
        %v4023 = vunpack.c.l.b16 %v3991
        %v4024 = vunpack.c.l.b16 %v3992
        %v4025 = vunpack.c.l.b16 %v3993
        %v4026 = vunpack.c.l.b16 %v3994
        %v4027 = vunpack.c.l.b16 %v3995
        %v4028 = vunpack.c.l.b16 %v3996
        %v4029 = vunpack.c.l.b16 %v3997
        %v4030 = vunpack.c.l.b16 %v3998
        %v4031 = vunpack.c.l.b16 %v3999
        %v4032 = vunpack.c.l.b16 %v4000
        %v4033 = vpack.c.b16 %v4018, %v4017
        %v4034 = vpack.c.b16 %v4020, %v4019
        %v4035 = vpack.c.b16 %v4022, %v4021
        %v4036 = vpack.c.b16 %v4024, %v4023
        %v4037 = vpack.c.b16 %v4026, %v4025
        %v4038 = vpack.c.b16 %v4028, %v4027
        %v4039 = vpack.c.b16 %v4030, %v4029
        %v4040 = vpack.c.b16 %v4032, %v4031
        %4049 = vmatpush.bf16.msra.mxu0 %v4040
        %4050 = vmatpush.bf16.msra.mxu0 %v4039
        %4051 = vmatpush.bf16.msra.mxu0 %v4038
        %4052 = vmatpush.bf16.msra.mxu0 %v4037
        %4053 = vmatpush.bf16.msra.mxu0 %v4036
        %4054 = vmatpush.bf16.msra.mxu0 %v4035
        %4055 = vmatpush.bf16.msra.mxu0 %v4034
        %4056 = vmatpush.bf16.msra.mxu0 %v4033
        %4057 = vmatmul.bf16.gmra.mxu0 %v3984
        %v4058 = vpop.f32.mrf.mxu0
        %v4059 = vadd.f32 %v1145, %v4058
        %v4060 = vpop.f32.mrf.mxu0
        %4061 = vdwg.mxu0
        %v4062 = vld [vmem:[%s17] sm:$0x1]
        %v4063 = vld [vmem:[%s18] sm:$0x1]
        %4064 = vadd.xlane.f32.xlu0 %v4059
        %v4065 = vpop.xlane.xlu0 %4064
        %v4066 = vmul.f32 %v4065, %v1265
        %v4067 = vsub.f32 %v4059, %v4066
        %v4068 = vmul.f32 %v4067, %v4067
        %4069 = vadd.xlane.f32.xlu0 %v4068
        %v4070 = vpop.xlane.xlu0 %4069
        %v4071 = vmul.f32 %v4070, %v1265
        %v4072 = vadd.f32 %v4071, 1e-05
        %v4073 = vrsqrt.pop %v4072
        %v4074 = vmul.f32 %v4073, %v4072
        %v4075 = vmul.f32 %v4074, %v4073
        %v4076 = vmul.f32 0.5, %v4075
        %v4077 = vsub.f32 1.5, %v4076
        %v4078 = vmul.f32 %v4073, %v4077
        %vm4079 = vweird.f32 %v4072
        %vm4080 = vweird.f32 %v4073
        %vm4081 = vmor %vm4079, %vm4080
        %v4082 = vsel %vm4081, %v4073, %v4078
        %v4083 = vmul.f32 %v4067, %v4082
        %v4085 = vperm.slane %v4062, 0
        %v4087 = vmul.f32 %v4083, %v4085
        %v4089 = vperm.slane %v4063, 0
        %v4091 = vadd.f32 %v4087, %v4089
        %v4092 = vmax.f32 %v4091, 0.0
        %v4093 = vpack.c.bf16 %v4092, %v4092
        %v4094 = vld [vmem:[#allocation20] sm:$0xf]
        %v4095 = vld [vmem:[#allocation20 + $0x4] sm:$0xf]
        %v4096 = vld [vmem:[#allocation20 + $0x8] sm:$0xf]
        %v4097 = vld [vmem:[#allocation20 + $0xc] sm:$0xf]
        %v4098 = vld [vmem:[#allocation20 + $0x10] sm:$0xf]
        %v4099 = vld [vmem:[#allocation20 + $0x14] sm:$0xf]
        %v4100 = vld [vmem:[#allocation20 + $0x18] sm:$0xf]
        %v4101 = vld [vmem:[#allocation20 + $0x1c] sm:$0xf]
        %v4102 = vld [vmem:[#allocation20 + $0x20] sm:$0xf]
        %v4103 = vld [vmem:[#allocation20 + $0x24] sm:$0xf]
        %v4104 = vld [vmem:[#allocation20 + $0x28] sm:$0xf]
        %v4105 = vld [vmem:[#allocation20 + $0x2c] sm:$0xf]
        %v4106 = vld [vmem:[#allocation20 + $0x30] sm:$0xf]
        %v4107 = vld [vmem:[#allocation20 + $0x34] sm:$0xf]
        %v4108 = vld [vmem:[#allocation20 + $0x38] sm:$0xf]
        %v4109 = vld [vmem:[#allocation20 + $0x3c] sm:$0xf]
        %v4126 = vunpack.c.l.b16 %v4094
        %v4127 = vunpack.c.l.b16 %v4095
        %v4128 = vunpack.c.l.b16 %v4096
        %v4129 = vunpack.c.l.b16 %v4097
        %v4130 = vunpack.c.l.b16 %v4098
        %v4131 = vunpack.c.l.b16 %v4099
        %v4132 = vunpack.c.l.b16 %v4100
        %v4133 = vunpack.c.l.b16 %v4101
        %v4134 = vunpack.c.l.b16 %v4102
        %v4135 = vunpack.c.l.b16 %v4103
        %v4136 = vunpack.c.l.b16 %v4104
        %v4137 = vunpack.c.l.b16 %v4105
        %v4138 = vunpack.c.l.b16 %v4106
        %v4139 = vunpack.c.l.b16 %v4107
        %v4140 = vunpack.c.l.b16 %v4108
        %v4141 = vunpack.c.l.b16 %v4109
        %v4142 = vpack.c.b16 %v4127, %v4126
        %v4143 = vpack.c.b16 %v4129, %v4128
        %v4144 = vpack.c.b16 %v4131, %v4130
        %v4145 = vpack.c.b16 %v4133, %v4132
        %v4146 = vpack.c.b16 %v4135, %v4134
        %v4147 = vpack.c.b16 %v4137, %v4136
        %v4148 = vpack.c.b16 %v4139, %v4138
        %v4149 = vpack.c.b16 %v4141, %v4140
        %4158 = vmatpush.bf16.msra.mxu0 %v4149
        %4159 = vmatpush.bf16.msra.mxu0 %v4148
        %4160 = vmatpush.bf16.msra.mxu0 %v4147
        %4161 = vmatpush.bf16.msra.mxu0 %v4146
        %4162 = vmatpush.bf16.msra.mxu0 %v4145
        %4163 = vmatpush.bf16.msra.mxu0 %v4144
        %4164 = vmatpush.bf16.msra.mxu0 %v4143
        %4165 = vmatpush.bf16.msra.mxu0 %v4142
        %4166 = vmatmul.bf16.gmra.mxu0 %v4093
        %v4167 = vpop.f32.mrf.mxu0
        %v4168 = vadd.f32 0.0, %v4167
        %v4169 = vpop.f32.mrf.mxu0
        %4170 = vdwg.mxu0
        %v4171 = vld [vmem:[%s20] sm:$0x1]
        %v4172 = vld [vmem:[%s21] sm:$0x1]
        %4173 = vadd.xlane.f32.xlu0 %v4168
        %v4174 = vpop.xlane.xlu0 %4173
        %v4175 = vmul.f32 %v4174, %v1265
        %v4176 = vsub.f32 %v4168, %v4175
        %v4177 = vmul.f32 %v4176, %v4176
        %4178 = vadd.xlane.f32.xlu0 %v4177
        %v4179 = vpop.xlane.xlu0 %4178
        %v4180 = vmul.f32 %v4179, %v1265
        %v4181 = vadd.f32 %v4180, 1e-05
        %v4182 = vrsqrt.pop %v4181
        %v4183 = vmul.f32 %v4182, %v4181
        %v4184 = vmul.f32 %v4183, %v4182
        %v4185 = vmul.f32 0.5, %v4184
        %v4186 = vsub.f32 1.5, %v4185
        %v4187 = vmul.f32 %v4182, %v4186
        %vm4188 = vweird.f32 %v4181
        %vm4189 = vweird.f32 %v4182
        %vm4190 = vmor %vm4188, %vm4189
        %v4191 = vsel %vm4190, %v4182, %v4187
        %v4192 = vmul.f32 %v4176, %v4191
        %v4194 = vperm.slane %v4171, 0
        %v4196 = vmul.f32 %v4192, %v4194
        %v4198 = vperm.slane %v4172, 0
        %v4200 = vadd.f32 %v4196, %v4198
        %v4201 = vmax.f32 %v4200, 0.0
        %v4202 = vpack.c.bf16 %v4201, %v4201
        %v4203 = vld [vmem:[#allocation21] sm:$0xf]
        %v4204 = vld [vmem:[#allocation21 + $0x4] sm:$0xf]
        %v4205 = vld [vmem:[#allocation21 + $0x8] sm:$0xf]
        %v4206 = vld [vmem:[#allocation21 + $0xc] sm:$0xf]
        %v4207 = vld [vmem:[#allocation21 + $0x10] sm:$0xf]
        %v4208 = vld [vmem:[#allocation21 + $0x14] sm:$0xf]
        %v4209 = vld [vmem:[#allocation21 + $0x18] sm:$0xf]
        %v4210 = vld [vmem:[#allocation21 + $0x1c] sm:$0xf]
        %v4211 = vld [vmem:[#allocation21 + $0x20] sm:$0xf]
        %v4212 = vld [vmem:[#allocation21 + $0x24] sm:$0xf]
        %v4213 = vld [vmem:[#allocation21 + $0x28] sm:$0xf]
        %v4214 = vld [vmem:[#allocation21 + $0x2c] sm:$0xf]
        %v4215 = vld [vmem:[#allocation21 + $0x30] sm:$0xf]
        %v4216 = vld [vmem:[#allocation21 + $0x34] sm:$0xf]
        %v4217 = vld [vmem:[#allocation21 + $0x38] sm:$0xf]
        %v4218 = vld [vmem:[#allocation21 + $0x3c] sm:$0xf]
        %v4235 = vunpack.c.l.b16 %v4203
        %v4236 = vunpack.c.l.b16 %v4204
        %v4237 = vunpack.c.l.b16 %v4205
        %v4238 = vunpack.c.l.b16 %v4206
        %v4239 = vunpack.c.l.b16 %v4207
        %v4240 = vunpack.c.l.b16 %v4208
        %v4241 = vunpack.c.l.b16 %v4209
        %v4242 = vunpack.c.l.b16 %v4210
        %v4243 = vunpack.c.l.b16 %v4211
        %v4244 = vunpack.c.l.b16 %v4212
        %v4245 = vunpack.c.l.b16 %v4213
        %v4246 = vunpack.c.l.b16 %v4214
        %v4247 = vunpack.c.l.b16 %v4215
        %v4248 = vunpack.c.l.b16 %v4216
        %v4249 = vunpack.c.l.b16 %v4217
        %v4250 = vunpack.c.l.b16 %v4218
        %v4251 = vpack.c.b16 %v4236, %v4235
        %v4252 = vpack.c.b16 %v4238, %v4237
        %v4253 = vpack.c.b16 %v4240, %v4239
        %v4254 = vpack.c.b16 %v4242, %v4241
        %v4255 = vpack.c.b16 %v4244, %v4243
        %v4256 = vpack.c.b16 %v4246, %v4245
        %v4257 = vpack.c.b16 %v4248, %v4247
        %v4258 = vpack.c.b16 %v4250, %v4249
        %4267 = vmatpush.bf16.msra.mxu0 %v4258
        %4268 = vmatpush.bf16.msra.mxu0 %v4257
        %4269 = vmatpush.bf16.msra.mxu0 %v4256
        %4270 = vmatpush.bf16.msra.mxu0 %v4255
        %4271 = vmatpush.bf16.msra.mxu0 %v4254
        %4272 = vmatpush.bf16.msra.mxu0 %v4253
        %4273 = vmatpush.bf16.msra.mxu0 %v4252
        %4274 = vmatpush.bf16.msra.mxu0 %v4251
        %4275 = vmatmul.bf16.gmra.mxu0 %v4202
        %v4276 = vpop.f32.mrf.mxu0
        %v4277 = vadd.f32 0.0, %v4276
        %v4278 = vpop.f32.mrf.mxu0
        %4279 = vdwg.mxu0
        %v4280 = vld [vmem:[%s23] sm:$0x1]
        %v4281 = vld [vmem:[%s24] sm:$0x1]
        %4282 = vadd.xlane.f32.xlu0 %v4277
        %v4283 = vpop.xlane.xlu0 %4282
        %v4284 = vmul.f32 %v4283, %v1265
        %v4285 = vsub.f32 %v4277, %v4284
        %v4286 = vmul.f32 %v4285, %v4285
        %4287 = vadd.xlane.f32.xlu0 %v4286
        %v4288 = vpop.xlane.xlu0 %4287
        %v4289 = vmul.f32 %v4288, %v1265
        %v4290 = vadd.f32 %v4289, 1e-05
        %v4291 = vrsqrt.pop %v4290
        %v4292 = vmul.f32 %v4291, %v4290
        %v4293 = vmul.f32 %v4292, %v4291
        %v4294 = vmul.f32 0.5, %v4293
        %v4295 = vsub.f32 1.5, %v4294
        %v4296 = vmul.f32 %v4291, %v4295
        %vm4297 = vweird.f32 %v4290
        %vm4298 = vweird.f32 %v4291
        %vm4299 = vmor %vm4297, %vm4298
        %v4300 = vsel %vm4299, %v4291, %v4296
        %v4301 = vmul.f32 %v4285, %v4300
        %v4303 = vperm.slane %v4280, 0
        %v4305 = vmul.f32 %v4301, %v4303
        %v4307 = vperm.slane %v4281, 0
        %v4309 = vadd.f32 %v4305, %v4307
        %v4310 = vadd.f32 %v4309, %v4092
        %v4311 = vmax.f32 %v4310, 0.0
        %v4312 = vld [vmem:[%s25] sm:$0x1]
        %v4314 = vperm.slane %v4312, 0
        %v4316 = vmul.f32 %v4311, %v4314
        %4317 = vadd.xlane.f32.xlu0 %v4316
        %v4318 = vpop.xlane.xlu0 %4317
        %v4319 = vld [vmem:[#allocation2] sm:$0x1]
        %v4321 = vperm.slane %v4319, 0
        %v4323 = vadd.f32 %v4318, %v4321
        %vm4324 = vcmp.eq.s32.totalorder %v1149, 3
        %v4325 = vsel %vm4324, 1, 0
        %vm4326 = vcmp.eq.s32.totalorder %v4325, 1
        %4328 = vset.pattern.permute.xlu0 0
        %4329 = vperm.xlu0 %4328, %v4323
        %v4330 = vpop.permute.xlu0 %4329
        %v4332 = vsel %vm4326, %v4330, 0.0
        %v4333 = vadd.f32 %v3545, %v4332
        %s4334 = scalar_lea.vmem [#allocation3], 256
        %v4335 = vld [vmem:[%s4334] sm:$0xf]
        %v4336 = vld [vmem:[%s4334 + $0x4] sm:$0xf]
        %v4337 = vld [vmem:[%s4334 + $0x8] sm:$0xf]
        %v4338 = vld [vmem:[%s4334 + $0xc] sm:$0xf]
        %v4339 = vld [vmem:[%s4334 + $0x10] sm:$0xf]
        %v4340 = vld [vmem:[%s4334 + $0x14] sm:$0xf]
        %v4341 = vld [vmem:[%s4334 + $0x18] sm:$0xf]
        %v4342 = vld [vmem:[%s4334 + $0x1c] sm:$0xf]
        %v4343 = vld [vmem:[%s4334 + $0x20] sm:$0xf]
        %v4344 = vld [vmem:[%s4334 + $0x24] sm:$0xf]
        %v4345 = vld [vmem:[%s4334 + $0x28] sm:$0xf]
        %v4346 = vld [vmem:[%s4334 + $0x2c] sm:$0xf]
        %v4347 = vld [vmem:[%s4334 + $0x30] sm:$0xf]
        %v4348 = vld [vmem:[%s4334 + $0x34] sm:$0xf]
        %v4349 = vld [vmem:[%s4334 + $0x38] sm:$0xf]
        %v4350 = vld [vmem:[%s4334 + $0x3c] sm:$0xf]
        %v4367 = vunpack.c.l.b16 %v4335
        %v4368 = vunpack.c.l.b16 %v4336
        %v4369 = vunpack.c.l.b16 %v4337
        %v4370 = vunpack.c.l.b16 %v4338
        %v4371 = vunpack.c.l.b16 %v4339
        %v4372 = vunpack.c.l.b16 %v4340
        %v4373 = vunpack.c.l.b16 %v4341
        %v4374 = vunpack.c.l.b16 %v4342
        %v4375 = vunpack.c.l.b16 %v4343
        %v4376 = vunpack.c.l.b16 %v4344
        %v4377 = vunpack.c.l.b16 %v4345
        %v4378 = vunpack.c.l.b16 %v4346
        %v4379 = vunpack.c.l.b16 %v4347
        %v4380 = vunpack.c.l.b16 %v4348
        %v4381 = vunpack.c.l.b16 %v4349
        %v4382 = vunpack.c.l.b16 %v4350
        %v4383 = vpack.c.b16 %v4368, %v4367
        %v4384 = vpack.c.b16 %v4370, %v4369
        %v4385 = vpack.c.b16 %v4372, %v4371
        %v4386 = vpack.c.b16 %v4374, %v4373
        %v4387 = vpack.c.b16 %v4376, %v4375
        %v4388 = vpack.c.b16 %v4378, %v4377
        %v4389 = vpack.c.b16 %v4380, %v4379
        %v4390 = vpack.c.b16 %v4382, %v4381
        %4399 = vmatpush.bf16.msra.mxu0 %v4390
        %4400 = vmatpush.bf16.msra.mxu0 %v4389
        %4401 = vmatpush.bf16.msra.mxu0 %v4388
        %4402 = vmatpush.bf16.msra.mxu0 %v4387
        %4403 = vmatpush.bf16.msra.mxu0 %v4386
        %4404 = vmatpush.bf16.msra.mxu0 %v4385
        %4405 = vmatpush.bf16.msra.mxu0 %v4384
        %4406 = vmatpush.bf16.msra.mxu0 %v4383
        %4407 = vmatmul.bf16.gmra.mxu0 %v1069
        %v4408 = vpop.f32.mrf.mxu0
        %v4409 = vadd.f32 0.0, %v4408
        %v4410 = vpop.f32.mrf.mxu0
        %4411 = vdwg.mxu0
        %s4412 = scalar_lea.vmem %s3, 4
        %v4413 = vld [vmem:[%s4412] sm:$0x1]
        %s4414 = scalar_lea.vmem [#allocation6], 4
        %v4415 = vld [vmem:[%s4414] sm:$0x1]
        %4416 = vadd.xlane.f32.xlu0 %v4409
        %v4417 = vpop.xlane.xlu0 %4416
        %v4418 = vmul.f32 %v4417, %v1265
        %v4419 = vsub.f32 %v4409, %v4418
        %v4420 = vmul.f32 %v4419, %v4419
        %4421 = vadd.xlane.f32.xlu0 %v4420
        %v4422 = vpop.xlane.xlu0 %4421
        %v4423 = vmul.f32 %v4422, %v1265
        %v4424 = vadd.f32 %v4423, 1e-05
        %v4425 = vrsqrt.pop %v4424
        %v4426 = vmul.f32 %v4425, %v4424
        %v4427 = vmul.f32 %v4426, %v4425
        %v4428 = vmul.f32 0.5, %v4427
        %v4429 = vsub.f32 1.5, %v4428
        %v4430 = vmul.f32 %v4425, %v4429
        %vm4431 = vweird.f32 %v4424
        %vm4432 = vweird.f32 %v4425
        %vm4433 = vmor %vm4431, %vm4432
        %v4434 = vsel %vm4433, %v4425, %v4430
        %v4435 = vmul.f32 %v4419, %v4434
        %v4437 = vperm.slane %v4413, 0
        %v4439 = vmul.f32 %v4435, %v4437
        %v4441 = vperm.slane %v4415, 0
        %v4443 = vadd.f32 %v4439, %v4441
        %v4444 = vmax.f32 %v4443, 0.0
        %v4445 = vpack.c.bf16 %v4444, %v4444
        %s4446 = scalar_lea.vmem [#allocation8], 256
        %v4447 = vld [vmem:[%s4446] sm:$0xf]
        %v4448 = vld [vmem:[%s4446 + $0x4] sm:$0xf]
        %v4449 = vld [vmem:[%s4446 + $0x8] sm:$0xf]
        %v4450 = vld [vmem:[%s4446 + $0xc] sm:$0xf]
        %v4451 = vld [vmem:[%s4446 + $0x10] sm:$0xf]
        %v4452 = vld [vmem:[%s4446 + $0x14] sm:$0xf]
        %v4453 = vld [vmem:[%s4446 + $0x18] sm:$0xf]
        %v4454 = vld [vmem:[%s4446 + $0x1c] sm:$0xf]
        %v4455 = vld [vmem:[%s4446 + $0x20] sm:$0xf]
        %v4456 = vld [vmem:[%s4446 + $0x24] sm:$0xf]
        %v4457 = vld [vmem:[%s4446 + $0x28] sm:$0xf]
        %v4458 = vld [vmem:[%s4446 + $0x2c] sm:$0xf]
        %v4459 = vld [vmem:[%s4446 + $0x30] sm:$0xf]
        %v4460 = vld [vmem:[%s4446 + $0x34] sm:$0xf]
        %v4461 = vld [vmem:[%s4446 + $0x38] sm:$0xf]
        %v4462 = vld [vmem:[%s4446 + $0x3c] sm:$0xf]
        %v4479 = vunpack.c.l.b16 %v4447
        %v4480 = vunpack.c.l.b16 %v4448
        %v4481 = vunpack.c.l.b16 %v4449
        %v4482 = vunpack.c.l.b16 %v4450
        %v4483 = vunpack.c.l.b16 %v4451
        %v4484 = vunpack.c.l.b16 %v4452
        %v4485 = vunpack.c.l.b16 %v4453
        %v4486 = vunpack.c.l.b16 %v4454
        %v4487 = vunpack.c.l.b16 %v4455
        %v4488 = vunpack.c.l.b16 %v4456
        %v4489 = vunpack.c.l.b16 %v4457
        %v4490 = vunpack.c.l.b16 %v4458
        %v4491 = vunpack.c.l.b16 %v4459
        %v4492 = vunpack.c.l.b16 %v4460
        %v4493 = vunpack.c.l.b16 %v4461
        %v4494 = vunpack.c.l.b16 %v4462
        %v4495 = vpack.c.b16 %v4480, %v4479
        %v4496 = vpack.c.b16 %v4482, %v4481
        %v4497 = vpack.c.b16 %v4484, %v4483
        %v4498 = vpack.c.b16 %v4486, %v4485
        %v4499 = vpack.c.b16 %v4488, %v4487
        %v4500 = vpack.c.b16 %v4490, %v4489
        %v4501 = vpack.c.b16 %v4492, %v4491
        %v4502 = vpack.c.b16 %v4494, %v4493
        %4511 = vmatpush.bf16.msra.mxu0 %v4502
        %4512 = vmatpush.bf16.msra.mxu0 %v4501
        %4513 = vmatpush.bf16.msra.mxu0 %v4500
        %4514 = vmatpush.bf16.msra.mxu0 %v4499
        %4515 = vmatpush.bf16.msra.mxu0 %v4498
        %4516 = vmatpush.bf16.msra.mxu0 %v4497
        %4517 = vmatpush.bf16.msra.mxu0 %v4496
        %4518 = vmatpush.bf16.msra.mxu0 %v4495
        %4519 = vmatmul.bf16.gmra.mxu0 %v4445
        %v4520 = vpop.f32.mrf.mxu0
        %v4521 = vadd.f32 0.0, %v4520
        %v4522 = vpop.f32.mrf.mxu0
        %4523 = vdwg.mxu0
        %s4524 = scalar_lea.vmem [#allocation9], 4
        %v4525 = vld [vmem:[%s4524] sm:$0x1]
        %s4526 = scalar_lea.vmem [#allocation11], 4
        %v4527 = vld [vmem:[%s4526] sm:$0x1]
        %4528 = vadd.xlane.f32.xlu0 %v4521
        %v4529 = vpop.xlane.xlu0 %4528
        %v4530 = vmul.f32 %v4529, %v1265
        %v4531 = vsub.f32 %v4521, %v4530
        %v4532 = vmul.f32 %v4531, %v4531
        %4533 = vadd.xlane.f32.xlu0 %v4532
        %v4534 = vpop.xlane.xlu0 %4533
        %v4535 = vmul.f32 %v4534, %v1265
        %v4536 = vadd.f32 %v4535, 1e-05
        %v4537 = vrsqrt.pop %v4536
        %v4538 = vmul.f32 %v4537, %v4536
        %v4539 = vmul.f32 %v4538, %v4537
        %v4540 = vmul.f32 0.5, %v4539
        %v4541 = vsub.f32 1.5, %v4540
        %v4542 = vmul.f32 %v4537, %v4541
        %vm4543 = vweird.f32 %v4536
        %vm4544 = vweird.f32 %v4537
        %vm4545 = vmor %vm4543, %vm4544
        %v4546 = vsel %vm4545, %v4537, %v4542
        %v4547 = vmul.f32 %v4531, %v4546
        %v4549 = vperm.slane %v4525, 0
        %v4551 = vmul.f32 %v4547, %v4549
        %v4553 = vperm.slane %v4527, 0
        %v4555 = vadd.f32 %v4551, %v4553
        %v4556 = vadd.f32 %v4555, %v1068
        %v4557 = vmax.f32 %v4556, 0.0
        %v4558 = vpack.c.bf16 %v4557, %v4557
        %s4559 = scalar_lea.vmem [#allocation12], 256
        %v4560 = vld [vmem:[%s4559] sm:$0xf]
        %v4561 = vld [vmem:[%s4559 + $0x4] sm:$0xf]
        %v4562 = vld [vmem:[%s4559 + $0x8] sm:$0xf]
        %v4563 = vld [vmem:[%s4559 + $0xc] sm:$0xf]
        %v4564 = vld [vmem:[%s4559 + $0x10] sm:$0xf]
        %v4565 = vld [vmem:[%s4559 + $0x14] sm:$0xf]
        %v4566 = vld [vmem:[%s4559 + $0x18] sm:$0xf]
        %v4567 = vld [vmem:[%s4559 + $0x1c] sm:$0xf]
        %v4568 = vld [vmem:[%s4559 + $0x20] sm:$0xf]
        %v4569 = vld [vmem:[%s4559 + $0x24] sm:$0xf]
        %v4570 = vld [vmem:[%s4559 + $0x28] sm:$0xf]
        %v4571 = vld [vmem:[%s4559 + $0x2c] sm:$0xf]
        %v4572 = vld [vmem:[%s4559 + $0x30] sm:$0xf]
        %v4573 = vld [vmem:[%s4559 + $0x34] sm:$0xf]
        %v4574 = vld [vmem:[%s4559 + $0x38] sm:$0xf]
        %v4575 = vld [vmem:[%s4559 + $0x3c] sm:$0xf]
        %s4576 = scalar_lea.vmem %s9, 4
        %v4577 = vld [vmem:[%s4576] sm:$0x1]
        %v4579 = vperm.slane %v4577, 0
        %v4597 = vunpack.c.l.b16 %v4560
        %v4598 = vunpack.c.l.b16 %v4561
        %v4599 = vunpack.c.l.b16 %v4562
        %v4600 = vunpack.c.l.b16 %v4563
        %v4601 = vunpack.c.l.b16 %v4564
        %v4602 = vunpack.c.l.b16 %v4565
        %v4603 = vunpack.c.l.b16 %v4566
        %v4604 = vunpack.c.l.b16 %v4567
        %v4605 = vunpack.c.l.b16 %v4568
        %v4606 = vunpack.c.l.b16 %v4569
        %v4607 = vunpack.c.l.b16 %v4570
        %v4608 = vunpack.c.l.b16 %v4571
        %v4609 = vunpack.c.l.b16 %v4572
        %v4610 = vunpack.c.l.b16 %v4573
        %v4611 = vunpack.c.l.b16 %v4574
        %v4612 = vunpack.c.l.b16 %v4575
        %v4613 = vpack.c.b16 %v4598, %v4597
        %v4614 = vpack.c.b16 %v4600, %v4599
        %v4615 = vpack.c.b16 %v4602, %v4601
        %v4616 = vpack.c.b16 %v4604, %v4603
        %v4617 = vpack.c.b16 %v4606, %v4605
        %v4618 = vpack.c.b16 %v4608, %v4607
        %v4619 = vpack.c.b16 %v4610, %v4609
        %v4620 = vpack.c.b16 %v4612, %v4611
        %4629 = vmatpush.bf16.msra.mxu0 %v4620
        %4630 = vmatpush.bf16.msra.mxu0 %v4619
        %4631 = vmatpush.bf16.msra.mxu0 %v4618
        %4632 = vmatpush.bf16.msra.mxu0 %v4617
        %4633 = vmatpush.bf16.msra.mxu0 %v4616
        %4634 = vmatpush.bf16.msra.mxu0 %v4615
        %4635 = vmatpush.bf16.msra.mxu0 %v4614
        %4636 = vmatpush.bf16.msra.mxu0 %v4613
        %4637 = vmatmul.bf16.gmra.mxu0 %v4558
        %v4638 = vpop.f32.mrf.mxu0
        %v4639 = vadd.f32 %v4579, %v4638
        %v4640 = vpop.f32.mrf.mxu0
        %4641 = vdwg.mxu0
        %v4642 = vadd.f32 %v4639, %v1174
        %4643 = vst [vmem:[%s1052 + $0x20] sm:$0xff] %v4642
        %4645 = vrot.lane.b32.xlu0 %v4642, 70
        %v4646 = vpop.permute.xlu0 %4645
        %v4648 = vsub.f32 %v1070, %v4646
        %4650 = vset.pattern.permute.xlu0 0
        %4651 = vperm.xlu0 %4650, %v4648
        %v4652 = vpop.permute.xlu0 %4651
        %v4654 = vmul.f32 %v4652, %v1497
        %4655 = vset.pattern.permute.xlu0 1
        %4656 = vperm.xlu0 %4655, %v4648
        %v4657 = vpop.permute.xlu0 %4656
        %v4659 = vmul.f32 %v4657, %v1503
        %v4660 = vadd.f32 %v4654, %v4659
        %v4661 = vadd.f32 %v4660, %v1507
        %v4662 = vmax.f32 %v4661, 0.0
        %v4663 = vpack.c.bf16 %v4662, %v4662
        %v4664 = vld [vmem:[#allocation15] sm:$0xf]
        %v4665 = vld [vmem:[#allocation15 + $0x4] sm:$0xf]
        %v4666 = vld [vmem:[#allocation15 + $0x8] sm:$0xf]
        %v4667 = vld [vmem:[#allocation15 + $0xc] sm:$0xf]
        %v4668 = vld [vmem:[#allocation15 + $0x10] sm:$0xf]
        %v4669 = vld [vmem:[#allocation15 + $0x14] sm:$0xf]
        %v4670 = vld [vmem:[#allocation15 + $0x18] sm:$0xf]
        %v4671 = vld [vmem:[#allocation15 + $0x1c] sm:$0xf]
        %v4672 = vld [vmem:[#allocation15 + $0x20] sm:$0xf]
        %v4673 = vld [vmem:[#allocation15 + $0x24] sm:$0xf]
        %v4674 = vld [vmem:[#allocation15 + $0x28] sm:$0xf]
        %v4675 = vld [vmem:[#allocation15 + $0x2c] sm:$0xf]
        %v4676 = vld [vmem:[#allocation15 + $0x30] sm:$0xf]
        %v4677 = vld [vmem:[#allocation15 + $0x34] sm:$0xf]
        %v4678 = vld [vmem:[#allocation15 + $0x38] sm:$0xf]
        %v4679 = vld [vmem:[#allocation15 + $0x3c] sm:$0xf]
        %v4696 = vunpack.c.l.b16 %v4664
        %v4697 = vunpack.c.l.b16 %v4665
        %v4698 = vunpack.c.l.b16 %v4666
        %v4699 = vunpack.c.l.b16 %v4667
        %v4700 = vunpack.c.l.b16 %v4668
        %v4701 = vunpack.c.l.b16 %v4669
        %v4702 = vunpack.c.l.b16 %v4670
        %v4703 = vunpack.c.l.b16 %v4671
        %v4704 = vunpack.c.l.b16 %v4672
        %v4705 = vunpack.c.l.b16 %v4673
        %v4706 = vunpack.c.l.b16 %v4674
        %v4707 = vunpack.c.l.b16 %v4675
        %v4708 = vunpack.c.l.b16 %v4676
        %v4709 = vunpack.c.l.b16 %v4677
        %v4710 = vunpack.c.l.b16 %v4678
        %v4711 = vunpack.c.l.b16 %v4679
        %v4712 = vpack.c.b16 %v4697, %v4696
        %v4713 = vpack.c.b16 %v4699, %v4698
        %v4714 = vpack.c.b16 %v4701, %v4700
        %v4715 = vpack.c.b16 %v4703, %v4702
        %v4716 = vpack.c.b16 %v4705, %v4704
        %v4717 = vpack.c.b16 %v4707, %v4706
        %v4718 = vpack.c.b16 %v4709, %v4708
        %v4719 = vpack.c.b16 %v4711, %v4710
        %4728 = vmatpush.bf16.msra.mxu0 %v4719
        %4729 = vmatpush.bf16.msra.mxu0 %v4718
        %4730 = vmatpush.bf16.msra.mxu0 %v4717
        %4731 = vmatpush.bf16.msra.mxu0 %v4716
        %4732 = vmatpush.bf16.msra.mxu0 %v4715
        %4733 = vmatpush.bf16.msra.mxu0 %v4714
        %4734 = vmatpush.bf16.msra.mxu0 %v4713
        %4735 = vmatpush.bf16.msra.mxu0 %v4712
        %4736 = vmatmul.bf16.gmra.mxu0 %v4663
        %v4737 = vpop.f32.mrf.mxu0
        %v4738 = vadd.f32 0.0, %v4737
        %v4739 = vpop.f32.mrf.mxu0
        %4740 = vdwg.mxu0
        %v4741 = vld [vmem:[%s13] sm:$0x1]
        %v4742 = vld [vmem:[%s14] sm:$0x1]
        %4743 = vadd.xlane.f32.xlu0 %v4738
        %v4744 = vpop.xlane.xlu0 %4743
        %v4745 = vmul.f32 %v4744, %v1265
        %v4746 = vsub.f32 %v4738, %v4745
        %v4747 = vmul.f32 %v4746, %v4746
        %4748 = vadd.xlane.f32.xlu0 %v4747
        %v4749 = vpop.xlane.xlu0 %4748
        %v4750 = vmul.f32 %v4749, %v1265
        %v4751 = vadd.f32 %v4750, 1e-05
        %v4752 = vrsqrt.pop %v4751
        %v4753 = vmul.f32 %v4752, %v4751
        %v4754 = vmul.f32 %v4753, %v4752
        %v4755 = vmul.f32 0.5, %v4754
        %v4756 = vsub.f32 1.5, %v4755
        %v4757 = vmul.f32 %v4752, %v4756
        %vm4758 = vweird.f32 %v4751
        %vm4759 = vweird.f32 %v4752
        %vm4760 = vmor %vm4758, %vm4759
        %v4761 = vsel %vm4760, %v4752, %v4757
        %v4762 = vmul.f32 %v4746, %v4761
        %v4764 = vperm.slane %v4741, 0
        %v4766 = vmul.f32 %v4762, %v4764
        %v4768 = vperm.slane %v4742, 0
        %v4770 = vadd.f32 %v4766, %v4768
        %v4771 = vmax.f32 %v4770, 0.0
        %v4772 = vpack.c.bf16 %v4771, %v4771
        %v4773 = vld [vmem:[#allocation17] sm:$0xf]
        %v4774 = vld [vmem:[#allocation17 + $0x4] sm:$0xf]
        %v4775 = vld [vmem:[#allocation17 + $0x8] sm:$0xf]
        %v4776 = vld [vmem:[#allocation17 + $0xc] sm:$0xf]
        %v4777 = vld [vmem:[#allocation17 + $0x10] sm:$0xf]
        %v4778 = vld [vmem:[#allocation17 + $0x14] sm:$0xf]
        %v4779 = vld [vmem:[#allocation17 + $0x18] sm:$0xf]
        %v4780 = vld [vmem:[#allocation17 + $0x1c] sm:$0xf]
        %v4781 = vld [vmem:[#allocation17 + $0x20] sm:$0xf]
        %v4782 = vld [vmem:[#allocation17 + $0x24] sm:$0xf]
        %v4783 = vld [vmem:[#allocation17 + $0x28] sm:$0xf]
        %v4784 = vld [vmem:[#allocation17 + $0x2c] sm:$0xf]
        %v4785 = vld [vmem:[#allocation17 + $0x30] sm:$0xf]
        %v4786 = vld [vmem:[#allocation17 + $0x34] sm:$0xf]
        %v4787 = vld [vmem:[#allocation17 + $0x38] sm:$0xf]
        %v4788 = vld [vmem:[#allocation17 + $0x3c] sm:$0xf]
        %v4805 = vunpack.c.l.b16 %v4773
        %v4806 = vunpack.c.l.b16 %v4774
        %v4807 = vunpack.c.l.b16 %v4775
        %v4808 = vunpack.c.l.b16 %v4776
        %v4809 = vunpack.c.l.b16 %v4777
        %v4810 = vunpack.c.l.b16 %v4778
        %v4811 = vunpack.c.l.b16 %v4779
        %v4812 = vunpack.c.l.b16 %v4780
        %v4813 = vunpack.c.l.b16 %v4781
        %v4814 = vunpack.c.l.b16 %v4782
        %v4815 = vunpack.c.l.b16 %v4783
        %v4816 = vunpack.c.l.b16 %v4784
        %v4817 = vunpack.c.l.b16 %v4785
        %v4818 = vunpack.c.l.b16 %v4786
        %v4819 = vunpack.c.l.b16 %v4787
        %v4820 = vunpack.c.l.b16 %v4788
        %v4821 = vpack.c.b16 %v4806, %v4805
        %v4822 = vpack.c.b16 %v4808, %v4807
        %v4823 = vpack.c.b16 %v4810, %v4809
        %v4824 = vpack.c.b16 %v4812, %v4811
        %v4825 = vpack.c.b16 %v4814, %v4813
        %v4826 = vpack.c.b16 %v4816, %v4815
        %v4827 = vpack.c.b16 %v4818, %v4817
        %v4828 = vpack.c.b16 %v4820, %v4819
        %4837 = vmatpush.bf16.msra.mxu0 %v4828
        %4838 = vmatpush.bf16.msra.mxu0 %v4827
        %4839 = vmatpush.bf16.msra.mxu0 %v4826
        %4840 = vmatpush.bf16.msra.mxu0 %v4825
        %4841 = vmatpush.bf16.msra.mxu0 %v4824
        %4842 = vmatpush.bf16.msra.mxu0 %v4823
        %4843 = vmatpush.bf16.msra.mxu0 %v4822
        %4844 = vmatpush.bf16.msra.mxu0 %v4821
        %4845 = vmatmul.bf16.gmra.mxu0 %v4772
        %v4846 = vpop.f32.mrf.mxu0
        %v4847 = vadd.f32 %v1145, %v4846
        %v4848 = vpop.f32.mrf.mxu0
        %4849 = vdwg.mxu0
        %v4850 = vld [vmem:[%s17] sm:$0x1]
        %v4851 = vld [vmem:[%s18] sm:$0x1]
        %4852 = vadd.xlane.f32.xlu0 %v4847
        %v4853 = vpop.xlane.xlu0 %4852
        %v4854 = vmul.f32 %v4853, %v1265
        %v4855 = vsub.f32 %v4847, %v4854
        %v4856 = vmul.f32 %v4855, %v4855
        %4857 = vadd.xlane.f32.xlu0 %v4856
        %v4858 = vpop.xlane.xlu0 %4857
        %v4859 = vmul.f32 %v4858, %v1265
        %v4860 = vadd.f32 %v4859, 1e-05
        %v4861 = vrsqrt.pop %v4860
        %v4862 = vmul.f32 %v4861, %v4860
        %v4863 = vmul.f32 %v4862, %v4861
        %v4864 = vmul.f32 0.5, %v4863
        %v4865 = vsub.f32 1.5, %v4864
        %v4866 = vmul.f32 %v4861, %v4865
        %vm4867 = vweird.f32 %v4860
        %vm4868 = vweird.f32 %v4861
        %vm4869 = vmor %vm4867, %vm4868
        %v4870 = vsel %vm4869, %v4861, %v4866
        %v4871 = vmul.f32 %v4855, %v4870
        %v4873 = vperm.slane %v4850, 0
        %v4875 = vmul.f32 %v4871, %v4873
        %v4877 = vperm.slane %v4851, 0
        %v4879 = vadd.f32 %v4875, %v4877
        %v4880 = vmax.f32 %v4879, 0.0
        %v4881 = vpack.c.bf16 %v4880, %v4880
        %v4882 = vld [vmem:[#allocation20] sm:$0xf]
        %v4883 = vld [vmem:[#allocation20 + $0x4] sm:$0xf]
        %v4884 = vld [vmem:[#allocation20 + $0x8] sm:$0xf]
        %v4885 = vld [vmem:[#allocation20 + $0xc] sm:$0xf]
        %v4886 = vld [vmem:[#allocation20 + $0x10] sm:$0xf]
        %v4887 = vld [vmem:[#allocation20 + $0x14] sm:$0xf]
        %v4888 = vld [vmem:[#allocation20 + $0x18] sm:$0xf]
        %v4889 = vld [vmem:[#allocation20 + $0x1c] sm:$0xf]
        %v4890 = vld [vmem:[#allocation20 + $0x20] sm:$0xf]
        %v4891 = vld [vmem:[#allocation20 + $0x24] sm:$0xf]
        %v4892 = vld [vmem:[#allocation20 + $0x28] sm:$0xf]
        %v4893 = vld [vmem:[#allocation20 + $0x2c] sm:$0xf]
        %v4894 = vld [vmem:[#allocation20 + $0x30] sm:$0xf]
        %v4895 = vld [vmem:[#allocation20 + $0x34] sm:$0xf]
        %v4896 = vld [vmem:[#allocation20 + $0x38] sm:$0xf]
        %v4897 = vld [vmem:[#allocation20 + $0x3c] sm:$0xf]
        %v4914 = vunpack.c.l.b16 %v4882
        %v4915 = vunpack.c.l.b16 %v4883
        %v4916 = vunpack.c.l.b16 %v4884
        %v4917 = vunpack.c.l.b16 %v4885
        %v4918 = vunpack.c.l.b16 %v4886
        %v4919 = vunpack.c.l.b16 %v4887
        %v4920 = vunpack.c.l.b16 %v4888
        %v4921 = vunpack.c.l.b16 %v4889
        %v4922 = vunpack.c.l.b16 %v4890
        %v4923 = vunpack.c.l.b16 %v4891
        %v4924 = vunpack.c.l.b16 %v4892
        %v4925 = vunpack.c.l.b16 %v4893
        %v4926 = vunpack.c.l.b16 %v4894
        %v4927 = vunpack.c.l.b16 %v4895
        %v4928 = vunpack.c.l.b16 %v4896
        %v4929 = vunpack.c.l.b16 %v4897
        %v4930 = vpack.c.b16 %v4915, %v4914
        %v4931 = vpack.c.b16 %v4917, %v4916
        %v4932 = vpack.c.b16 %v4919, %v4918
        %v4933 = vpack.c.b16 %v4921, %v4920
        %v4934 = vpack.c.b16 %v4923, %v4922
        %v4935 = vpack.c.b16 %v4925, %v4924
        %v4936 = vpack.c.b16 %v4927, %v4926
        %v4937 = vpack.c.b16 %v4929, %v4928
        %4946 = vmatpush.bf16.msra.mxu0 %v4937
        %4947 = vmatpush.bf16.msra.mxu0 %v4936
        %4948 = vmatpush.bf16.msra.mxu0 %v4935
        %4949 = vmatpush.bf16.msra.mxu0 %v4934
        %4950 = vmatpush.bf16.msra.mxu0 %v4933
        %4951 = vmatpush.bf16.msra.mxu0 %v4932
        %4952 = vmatpush.bf16.msra.mxu0 %v4931
        %4953 = vmatpush.bf16.msra.mxu0 %v4930
        %4954 = vmatmul.bf16.gmra.mxu0 %v4881
        %v4955 = vpop.f32.mrf.mxu0
        %v4956 = vadd.f32 0.0, %v4955
        %v4957 = vpop.f32.mrf.mxu0
        %4958 = vdwg.mxu0
        %v4959 = vld [vmem:[%s20] sm:$0x1]
        %v4960 = vld [vmem:[%s21] sm:$0x1]
        %4961 = vadd.xlane.f32.xlu0 %v4956
        %v4962 = vpop.xlane.xlu0 %4961
        %v4963 = vmul.f32 %v4962, %v1265
        %v4964 = vsub.f32 %v4956, %v4963
        %v4965 = vmul.f32 %v4964, %v4964
        %4966 = vadd.xlane.f32.xlu0 %v4965
        %v4967 = vpop.xlane.xlu0 %4966
        %v4968 = vmul.f32 %v4967, %v1265
        %v4969 = vadd.f32 %v4968, 1e-05
        %v4970 = vrsqrt.pop %v4969
        %v4971 = vmul.f32 %v4970, %v4969
        %v4972 = vmul.f32 %v4971, %v4970
        %v4973 = vmul.f32 0.5, %v4972
        %v4974 = vsub.f32 1.5, %v4973
        %v4975 = vmul.f32 %v4970, %v4974
        %vm4976 = vweird.f32 %v4969
        %vm4977 = vweird.f32 %v4970
        %vm4978 = vmor %vm4976, %vm4977
        %v4979 = vsel %vm4978, %v4970, %v4975
        %v4980 = vmul.f32 %v4964, %v4979
        %v4982 = vperm.slane %v4959, 0
        %v4984 = vmul.f32 %v4980, %v4982
        %v4986 = vperm.slane %v4960, 0
        %v4988 = vadd.f32 %v4984, %v4986
        %v4989 = vmax.f32 %v4988, 0.0
        %v4990 = vpack.c.bf16 %v4989, %v4989
        %v4991 = vld [vmem:[#allocation21] sm:$0xf]
        %v4992 = vld [vmem:[#allocation21 + $0x4] sm:$0xf]
        %v4993 = vld [vmem:[#allocation21 + $0x8] sm:$0xf]
        %v4994 = vld [vmem:[#allocation21 + $0xc] sm:$0xf]
        %v4995 = vld [vmem:[#allocation21 + $0x10] sm:$0xf]
        %v4996 = vld [vmem:[#allocation21 + $0x14] sm:$0xf]
        %v4997 = vld [vmem:[#allocation21 + $0x18] sm:$0xf]
        %v4998 = vld [vmem:[#allocation21 + $0x1c] sm:$0xf]
        %v4999 = vld [vmem:[#allocation21 + $0x20] sm:$0xf]
        %v5000 = vld [vmem:[#allocation21 + $0x24] sm:$0xf]
        %v5001 = vld [vmem:[#allocation21 + $0x28] sm:$0xf]
        %v5002 = vld [vmem:[#allocation21 + $0x2c] sm:$0xf]
        %v5003 = vld [vmem:[#allocation21 + $0x30] sm:$0xf]
        %v5004 = vld [vmem:[#allocation21 + $0x34] sm:$0xf]
        %v5005 = vld [vmem:[#allocation21 + $0x38] sm:$0xf]
        %v5006 = vld [vmem:[#allocation21 + $0x3c] sm:$0xf]
        %v5023 = vunpack.c.l.b16 %v4991
        %v5024 = vunpack.c.l.b16 %v4992
        %v5025 = vunpack.c.l.b16 %v4993
        %v5026 = vunpack.c.l.b16 %v4994
        %v5027 = vunpack.c.l.b16 %v4995
        %v5028 = vunpack.c.l.b16 %v4996
        %v5029 = vunpack.c.l.b16 %v4997
        %v5030 = vunpack.c.l.b16 %v4998
        %v5031 = vunpack.c.l.b16 %v4999
        %v5032 = vunpack.c.l.b16 %v5000
        %v5033 = vunpack.c.l.b16 %v5001
        %v5034 = vunpack.c.l.b16 %v5002
        %v5035 = vunpack.c.l.b16 %v5003
        %v5036 = vunpack.c.l.b16 %v5004
        %v5037 = vunpack.c.l.b16 %v5005
        %v5038 = vunpack.c.l.b16 %v5006
        %v5039 = vpack.c.b16 %v5024, %v5023
        %v5040 = vpack.c.b16 %v5026, %v5025
        %v5041 = vpack.c.b16 %v5028, %v5027
        %v5042 = vpack.c.b16 %v5030, %v5029
        %v5043 = vpack.c.b16 %v5032, %v5031
        %v5044 = vpack.c.b16 %v5034, %v5033
        %v5045 = vpack.c.b16 %v5036, %v5035
        %v5046 = vpack.c.b16 %v5038, %v5037
        %5055 = vmatpush.bf16.msra.mxu0 %v5046
        %5056 = vmatpush.bf16.msra.mxu0 %v5045
        %5057 = vmatpush.bf16.msra.mxu0 %v5044
        %5058 = vmatpush.bf16.msra.mxu0 %v5043
        %5059 = vmatpush.bf16.msra.mxu0 %v5042
        %5060 = vmatpush.bf16.msra.mxu0 %v5041
        %5061 = vmatpush.bf16.msra.mxu0 %v5040
        %5062 = vmatpush.bf16.msra.mxu0 %v5039
        %5063 = vmatmul.bf16.gmra.mxu0 %v4990
        %v5064 = vpop.f32.mrf.mxu0
        %v5065 = vadd.f32 0.0, %v5064
        %v5066 = vpop.f32.mrf.mxu0
        %5067 = vdwg.mxu0
        %v5068 = vld [vmem:[%s23] sm:$0x1]
        %v5069 = vld [vmem:[%s24] sm:$0x1]
        %5070 = vadd.xlane.f32.xlu0 %v5065
        %v5071 = vpop.xlane.xlu0 %5070
        %v5072 = vmul.f32 %v5071, %v1265
        %v5073 = vsub.f32 %v5065, %v5072
        %v5074 = vmul.f32 %v5073, %v5073
        %5075 = vadd.xlane.f32.xlu0 %v5074
        %v5076 = vpop.xlane.xlu0 %5075
        %v5077 = vmul.f32 %v5076, %v1265
        %v5078 = vadd.f32 %v5077, 1e-05
        %v5079 = vrsqrt.pop %v5078
        %v5080 = vmul.f32 %v5079, %v5078
        %v5081 = vmul.f32 %v5080, %v5079
        %v5082 = vmul.f32 0.5, %v5081
        %v5083 = vsub.f32 1.5, %v5082
        %v5084 = vmul.f32 %v5079, %v5083
        %vm5085 = vweird.f32 %v5078
        %vm5086 = vweird.f32 %v5079
        %vm5087 = vmor %vm5085, %vm5086
        %v5088 = vsel %vm5087, %v5079, %v5084
        %v5089 = vmul.f32 %v5073, %v5088
        %v5091 = vperm.slane %v5068, 0
        %v5093 = vmul.f32 %v5089, %v5091
        %v5095 = vperm.slane %v5069, 0
        %v5097 = vadd.f32 %v5093, %v5095
        %v5098 = vadd.f32 %v5097, %v4880
        %v5099 = vmax.f32 %v5098, 0.0
        %v5100 = vld [vmem:[%s25] sm:$0x1]
        %v5102 = vperm.slane %v5100, 0
        %v5104 = vmul.f32 %v5099, %v5102
        %5105 = vadd.xlane.f32.xlu0 %v5104
        %v5106 = vpop.xlane.xlu0 %5105
        %v5107 = vld [vmem:[#allocation2] sm:$0x1]
        %v5109 = vperm.slane %v5107, 0
        %v5111 = vadd.f32 %v5106, %v5109
        %vm5112 = vcmp.eq.s32.totalorder %v1149, 4
        %v5113 = vsel %vm5112, 1, 0
        %vm5114 = vcmp.eq.s32.totalorder %v5113, 1
        %5116 = vset.pattern.permute.xlu0 0
        %5117 = vperm.xlu0 %5116, %v5111
        %v5118 = vpop.permute.xlu0 %5117
        %v5120 = vsel %vm5114, %v5118, 0.0
        %v5121 = vadd.f32 %v4333, %v5120
        %s5122 = scalar_lea.vmem [#allocation3], 320
        %v5123 = vld [vmem:[%s5122] sm:$0xf]
        %v5124 = vld [vmem:[%s5122 + $0x4] sm:$0xf]
        %v5125 = vld [vmem:[%s5122 + $0x8] sm:$0xf]
        %v5126 = vld [vmem:[%s5122 + $0xc] sm:$0xf]
        %v5127 = vld [vmem:[%s5122 + $0x10] sm:$0xf]
        %v5128 = vld [vmem:[%s5122 + $0x14] sm:$0xf]
        %v5129 = vld [vmem:[%s5122 + $0x18] sm:$0xf]
        %v5130 = vld [vmem:[%s5122 + $0x1c] sm:$0xf]
        %v5131 = vld [vmem:[%s5122 + $0x20] sm:$0xf]
        %v5132 = vld [vmem:[%s5122 + $0x24] sm:$0xf]
        %v5133 = vld [vmem:[%s5122 + $0x28] sm:$0xf]
        %v5134 = vld [vmem:[%s5122 + $0x2c] sm:$0xf]
        %v5135 = vld [vmem:[%s5122 + $0x30] sm:$0xf]
        %v5136 = vld [vmem:[%s5122 + $0x34] sm:$0xf]
        %v5137 = vld [vmem:[%s5122 + $0x38] sm:$0xf]
        %v5138 = vld [vmem:[%s5122 + $0x3c] sm:$0xf]
        %v5155 = vunpack.c.l.b16 %v5123
        %v5156 = vunpack.c.l.b16 %v5124
        %v5157 = vunpack.c.l.b16 %v5125
        %v5158 = vunpack.c.l.b16 %v5126
        %v5159 = vunpack.c.l.b16 %v5127
        %v5160 = vunpack.c.l.b16 %v5128
        %v5161 = vunpack.c.l.b16 %v5129
        %v5162 = vunpack.c.l.b16 %v5130
        %v5163 = vunpack.c.l.b16 %v5131
        %v5164 = vunpack.c.l.b16 %v5132
        %v5165 = vunpack.c.l.b16 %v5133
        %v5166 = vunpack.c.l.b16 %v5134
        %v5167 = vunpack.c.l.b16 %v5135
        %v5168 = vunpack.c.l.b16 %v5136
        %v5169 = vunpack.c.l.b16 %v5137
        %v5170 = vunpack.c.l.b16 %v5138
        %v5171 = vpack.c.b16 %v5156, %v5155
        %v5172 = vpack.c.b16 %v5158, %v5157
        %v5173 = vpack.c.b16 %v5160, %v5159
        %v5174 = vpack.c.b16 %v5162, %v5161
        %v5175 = vpack.c.b16 %v5164, %v5163
        %v5176 = vpack.c.b16 %v5166, %v5165
        %v5177 = vpack.c.b16 %v5168, %v5167
        %v5178 = vpack.c.b16 %v5170, %v5169
        %5187 = vmatpush.bf16.msra.mxu0 %v5178
        %5188 = vmatpush.bf16.msra.mxu0 %v5177
        %5189 = vmatpush.bf16.msra.mxu0 %v5176
        %5190 = vmatpush.bf16.msra.mxu0 %v5175
        %5191 = vmatpush.bf16.msra.mxu0 %v5174
        %5192 = vmatpush.bf16.msra.mxu0 %v5173
        %5193 = vmatpush.bf16.msra.mxu0 %v5172
        %5194 = vmatpush.bf16.msra.mxu0 %v5171
        %5195 = vmatmul.bf16.gmra.mxu0 %v1069
        %v5196 = vpop.f32.mrf.mxu0
        %v5197 = vadd.f32 0.0, %v5196
        %v5198 = vpop.f32.mrf.mxu0
        %5199 = vdwg.mxu0
        %s5200 = scalar_lea.vmem %s3, 5
        %v5201 = vld [vmem:[%s5200] sm:$0x1]
        %s5202 = scalar_lea.vmem [#allocation6], 5
        %v5203 = vld [vmem:[%s5202] sm:$0x1]
        %5204 = vadd.xlane.f32.xlu0 %v5197
        %v5205 = vpop.xlane.xlu0 %5204
        %v5206 = vmul.f32 %v5205, %v1265
        %v5207 = vsub.f32 %v5197, %v5206
        %v5208 = vmul.f32 %v5207, %v5207
        %5209 = vadd.xlane.f32.xlu0 %v5208
        %v5210 = vpop.xlane.xlu0 %5209
        %v5211 = vmul.f32 %v5210, %v1265
        %v5212 = vadd.f32 %v5211, 1e-05
        %v5213 = vrsqrt.pop %v5212
        %v5214 = vmul.f32 %v5213, %v5212
        %v5215 = vmul.f32 %v5214, %v5213
        %v5216 = vmul.f32 0.5, %v5215
        %v5217 = vsub.f32 1.5, %v5216
        %v5218 = vmul.f32 %v5213, %v5217
        %vm5219 = vweird.f32 %v5212
        %vm5220 = vweird.f32 %v5213
        %vm5221 = vmor %vm5219, %vm5220
        %v5222 = vsel %vm5221, %v5213, %v5218
        %v5223 = vmul.f32 %v5207, %v5222
        %v5225 = vperm.slane %v5201, 0
        %v5227 = vmul.f32 %v5223, %v5225
        %v5229 = vperm.slane %v5203, 0
        %v5231 = vadd.f32 %v5227, %v5229
        %v5232 = vmax.f32 %v5231, 0.0
        %v5233 = vpack.c.bf16 %v5232, %v5232
        %s5234 = scalar_lea.vmem [#allocation8], 320
        %v5235 = vld [vmem:[%s5234] sm:$0xf]
        %v5236 = vld [vmem:[%s5234 + $0x4] sm:$0xf]
        %v5237 = vld [vmem:[%s5234 + $0x8] sm:$0xf]
        %v5238 = vld [vmem:[%s5234 + $0xc] sm:$0xf]
        %v5239 = vld [vmem:[%s5234 + $0x10] sm:$0xf]
        %v5240 = vld [vmem:[%s5234 + $0x14] sm:$0xf]
        %v5241 = vld [vmem:[%s5234 + $0x18] sm:$0xf]
        %v5242 = vld [vmem:[%s5234 + $0x1c] sm:$0xf]
        %v5243 = vld [vmem:[%s5234 + $0x20] sm:$0xf]
        %v5244 = vld [vmem:[%s5234 + $0x24] sm:$0xf]
        %v5245 = vld [vmem:[%s5234 + $0x28] sm:$0xf]
        %v5246 = vld [vmem:[%s5234 + $0x2c] sm:$0xf]
        %v5247 = vld [vmem:[%s5234 + $0x30] sm:$0xf]
        %v5248 = vld [vmem:[%s5234 + $0x34] sm:$0xf]
        %v5249 = vld [vmem:[%s5234 + $0x38] sm:$0xf]
        %v5250 = vld [vmem:[%s5234 + $0x3c] sm:$0xf]
        %v5267 = vunpack.c.l.b16 %v5235
        %v5268 = vunpack.c.l.b16 %v5236
        %v5269 = vunpack.c.l.b16 %v5237
        %v5270 = vunpack.c.l.b16 %v5238
        %v5271 = vunpack.c.l.b16 %v5239
        %v5272 = vunpack.c.l.b16 %v5240
        %v5273 = vunpack.c.l.b16 %v5241
        %v5274 = vunpack.c.l.b16 %v5242
        %v5275 = vunpack.c.l.b16 %v5243
        %v5276 = vunpack.c.l.b16 %v5244
        %v5277 = vunpack.c.l.b16 %v5245
        %v5278 = vunpack.c.l.b16 %v5246
        %v5279 = vunpack.c.l.b16 %v5247
        %v5280 = vunpack.c.l.b16 %v5248
        %v5281 = vunpack.c.l.b16 %v5249
        %v5282 = vunpack.c.l.b16 %v5250
        %v5283 = vpack.c.b16 %v5268, %v5267
        %v5284 = vpack.c.b16 %v5270, %v5269
        %v5285 = vpack.c.b16 %v5272, %v5271
        %v5286 = vpack.c.b16 %v5274, %v5273
        %v5287 = vpack.c.b16 %v5276, %v5275
        %v5288 = vpack.c.b16 %v5278, %v5277
        %v5289 = vpack.c.b16 %v5280, %v5279
        %v5290 = vpack.c.b16 %v5282, %v5281
        %5299 = vmatpush.bf16.msra.mxu0 %v5290
        %5300 = vmatpush.bf16.msra.mxu0 %v5289
        %5301 = vmatpush.bf16.msra.mxu0 %v5288
        %5302 = vmatpush.bf16.msra.mxu0 %v5287
        %5303 = vmatpush.bf16.msra.mxu0 %v5286
        %5304 = vmatpush.bf16.msra.mxu0 %v5285
        %5305 = vmatpush.bf16.msra.mxu0 %v5284
        %5306 = vmatpush.bf16.msra.mxu0 %v5283
        %5307 = vmatmul.bf16.gmra.mxu0 %v5233
        %v5308 = vpop.f32.mrf.mxu0
        %v5309 = vadd.f32 0.0, %v5308
        %v5310 = vpop.f32.mrf.mxu0
        %5311 = vdwg.mxu0
        %s5312 = scalar_lea.vmem [#allocation9], 5
        %v5313 = vld [vmem:[%s5312] sm:$0x1]
        %s5314 = scalar_lea.vmem [#allocation11], 5
        %v5315 = vld [vmem:[%s5314] sm:$0x1]
        %5316 = vadd.xlane.f32.xlu0 %v5309
        %v5317 = vpop.xlane.xlu0 %5316
        %v5318 = vmul.f32 %v5317, %v1265
        %v5319 = vsub.f32 %v5309, %v5318
        %v5320 = vmul.f32 %v5319, %v5319
        %5321 = vadd.xlane.f32.xlu0 %v5320
        %v5322 = vpop.xlane.xlu0 %5321
        %v5323 = vmul.f32 %v5322, %v1265
        %v5324 = vadd.f32 %v5323, 1e-05
        %v5325 = vrsqrt.pop %v5324
        %v5326 = vmul.f32 %v5325, %v5324
        %v5327 = vmul.f32 %v5326, %v5325
        %v5328 = vmul.f32 0.5, %v5327
        %v5329 = vsub.f32 1.5, %v5328
        %v5330 = vmul.f32 %v5325, %v5329
        %vm5331 = vweird.f32 %v5324
        %vm5332 = vweird.f32 %v5325
        %vm5333 = vmor %vm5331, %vm5332
        %v5334 = vsel %vm5333, %v5325, %v5330
        %v5335 = vmul.f32 %v5319, %v5334
        %v5337 = vperm.slane %v5313, 0
        %v5339 = vmul.f32 %v5335, %v5337
        %v5341 = vperm.slane %v5315, 0
        %v5343 = vadd.f32 %v5339, %v5341
        %v5344 = vadd.f32 %v5343, %v1068
        %v5345 = vmax.f32 %v5344, 0.0
        %v5346 = vpack.c.bf16 %v5345, %v5345
        %s5347 = scalar_lea.vmem [#allocation12], 320
        %v5348 = vld [vmem:[%s5347] sm:$0xf]
        %v5349 = vld [vmem:[%s5347 + $0x4] sm:$0xf]
        %v5350 = vld [vmem:[%s5347 + $0x8] sm:$0xf]
        %v5351 = vld [vmem:[%s5347 + $0xc] sm:$0xf]
        %v5352 = vld [vmem:[%s5347 + $0x10] sm:$0xf]
        %v5353 = vld [vmem:[%s5347 + $0x14] sm:$0xf]
        %v5354 = vld [vmem:[%s5347 + $0x18] sm:$0xf]
        %v5355 = vld [vmem:[%s5347 + $0x1c] sm:$0xf]
        %v5356 = vld [vmem:[%s5347 + $0x20] sm:$0xf]
        %v5357 = vld [vmem:[%s5347 + $0x24] sm:$0xf]
        %v5358 = vld [vmem:[%s5347 + $0x28] sm:$0xf]
        %v5359 = vld [vmem:[%s5347 + $0x2c] sm:$0xf]
        %v5360 = vld [vmem:[%s5347 + $0x30] sm:$0xf]
        %v5361 = vld [vmem:[%s5347 + $0x34] sm:$0xf]
        %v5362 = vld [vmem:[%s5347 + $0x38] sm:$0xf]
        %v5363 = vld [vmem:[%s5347 + $0x3c] sm:$0xf]
        %s5364 = scalar_lea.vmem %s9, 5
        %v5365 = vld [vmem:[%s5364] sm:$0x1]
        %v5367 = vperm.slane %v5365, 0
        %v5385 = vunpack.c.l.b16 %v5348
        %v5386 = vunpack.c.l.b16 %v5349
        %v5387 = vunpack.c.l.b16 %v5350
        %v5388 = vunpack.c.l.b16 %v5351
        %v5389 = vunpack.c.l.b16 %v5352
        %v5390 = vunpack.c.l.b16 %v5353
        %v5391 = vunpack.c.l.b16 %v5354
        %v5392 = vunpack.c.l.b16 %v5355
        %v5393 = vunpack.c.l.b16 %v5356
        %v5394 = vunpack.c.l.b16 %v5357
        %v5395 = vunpack.c.l.b16 %v5358
        %v5396 = vunpack.c.l.b16 %v5359
        %v5397 = vunpack.c.l.b16 %v5360
        %v5398 = vunpack.c.l.b16 %v5361
        %v5399 = vunpack.c.l.b16 %v5362
        %v5400 = vunpack.c.l.b16 %v5363
        %v5401 = vpack.c.b16 %v5386, %v5385
        %v5402 = vpack.c.b16 %v5388, %v5387
        %v5403 = vpack.c.b16 %v5390, %v5389
        %v5404 = vpack.c.b16 %v5392, %v5391
        %v5405 = vpack.c.b16 %v5394, %v5393
        %v5406 = vpack.c.b16 %v5396, %v5395
        %v5407 = vpack.c.b16 %v5398, %v5397
        %v5408 = vpack.c.b16 %v5400, %v5399
        %5417 = vmatpush.bf16.msra.mxu0 %v5408
        %5418 = vmatpush.bf16.msra.mxu0 %v5407
        %5419 = vmatpush.bf16.msra.mxu0 %v5406
        %5420 = vmatpush.bf16.msra.mxu0 %v5405
        %5421 = vmatpush.bf16.msra.mxu0 %v5404
        %5422 = vmatpush.bf16.msra.mxu0 %v5403
        %5423 = vmatpush.bf16.msra.mxu0 %v5402
        %5424 = vmatpush.bf16.msra.mxu0 %v5401
        %5425 = vmatmul.bf16.gmra.mxu0 %v5346
        %v5426 = vpop.f32.mrf.mxu0
        %v5427 = vadd.f32 %v5367, %v5426
        %v5428 = vpop.f32.mrf.mxu0
        %5429 = vdwg.mxu0
        %v5430 = vadd.f32 %v5427, %v1174
        %5431 = vst [vmem:[%s1052 + $0x28] sm:$0xff] %v5430
        %5433 = vrot.lane.b32.xlu0 %v5430, 70
        %v5434 = vpop.permute.xlu0 %5433
        %v5436 = vsub.f32 %v1070, %v5434
        %5438 = vset.pattern.permute.xlu0 0
        %5439 = vperm.xlu0 %5438, %v5436
        %v5440 = vpop.permute.xlu0 %5439
        %v5442 = vmul.f32 %v5440, %v1497
        %5443 = vset.pattern.permute.xlu0 1
        %5444 = vperm.xlu0 %5443, %v5436
        %v5445 = vpop.permute.xlu0 %5444
        %v5447 = vmul.f32 %v5445, %v1503
        %v5448 = vadd.f32 %v5442, %v5447
        %v5449 = vadd.f32 %v5448, %v1507
        %v5450 = vmax.f32 %v5449, 0.0
        %v5451 = vpack.c.bf16 %v5450, %v5450
        %v5452 = vld [vmem:[#allocation15] sm:$0xf]
        %v5453 = vld [vmem:[#allocation15 + $0x4] sm:$0xf]
        %v5454 = vld [vmem:[#allocation15 + $0x8] sm:$0xf]
        %v5455 = vld [vmem:[#allocation15 + $0xc] sm:$0xf]
        %v5456 = vld [vmem:[#allocation15 + $0x10] sm:$0xf]
        %v5457 = vld [vmem:[#allocation15 + $0x14] sm:$0xf]
        %v5458 = vld [vmem:[#allocation15 + $0x18] sm:$0xf]
        %v5459 = vld [vmem:[#allocation15 + $0x1c] sm:$0xf]
        %v5460 = vld [vmem:[#allocation15 + $0x20] sm:$0xf]
        %v5461 = vld [vmem:[#allocation15 + $0x24] sm:$0xf]
        %v5462 = vld [vmem:[#allocation15 + $0x28] sm:$0xf]
        %v5463 = vld [vmem:[#allocation15 + $0x2c] sm:$0xf]
        %v5464 = vld [vmem:[#allocation15 + $0x30] sm:$0xf]
        %v5465 = vld [vmem:[#allocation15 + $0x34] sm:$0xf]
        %v5466 = vld [vmem:[#allocation15 + $0x38] sm:$0xf]
        %v5467 = vld [vmem:[#allocation15 + $0x3c] sm:$0xf]
        %v5484 = vunpack.c.l.b16 %v5452
        %v5485 = vunpack.c.l.b16 %v5453
        %v5486 = vunpack.c.l.b16 %v5454
        %v5487 = vunpack.c.l.b16 %v5455
        %v5488 = vunpack.c.l.b16 %v5456
        %v5489 = vunpack.c.l.b16 %v5457
        %v5490 = vunpack.c.l.b16 %v5458
        %v5491 = vunpack.c.l.b16 %v5459
        %v5492 = vunpack.c.l.b16 %v5460
        %v5493 = vunpack.c.l.b16 %v5461
        %v5494 = vunpack.c.l.b16 %v5462
        %v5495 = vunpack.c.l.b16 %v5463
        %v5496 = vunpack.c.l.b16 %v5464
        %v5497 = vunpack.c.l.b16 %v5465
        %v5498 = vunpack.c.l.b16 %v5466
        %v5499 = vunpack.c.l.b16 %v5467
        %v5500 = vpack.c.b16 %v5485, %v5484
        %v5501 = vpack.c.b16 %v5487, %v5486
        %v5502 = vpack.c.b16 %v5489, %v5488
        %v5503 = vpack.c.b16 %v5491, %v5490
        %v5504 = vpack.c.b16 %v5493, %v5492
        %v5505 = vpack.c.b16 %v5495, %v5494
        %v5506 = vpack.c.b16 %v5497, %v5496
        %v5507 = vpack.c.b16 %v5499, %v5498
        %5516 = vmatpush.bf16.msra.mxu0 %v5507
        %5517 = vmatpush.bf16.msra.mxu0 %v5506
        %5518 = vmatpush.bf16.msra.mxu0 %v5505
        %5519 = vmatpush.bf16.msra.mxu0 %v5504
        %5520 = vmatpush.bf16.msra.mxu0 %v5503
        %5521 = vmatpush.bf16.msra.mxu0 %v5502
        %5522 = vmatpush.bf16.msra.mxu0 %v5501
        %5523 = vmatpush.bf16.msra.mxu0 %v5500
        %5524 = vmatmul.bf16.gmra.mxu0 %v5451
        %v5525 = vpop.f32.mrf.mxu0
        %v5526 = vadd.f32 0.0, %v5525
        %v5527 = vpop.f32.mrf.mxu0
        %5528 = vdwg.mxu0
        %v5529 = vld [vmem:[%s13] sm:$0x1]
        %v5530 = vld [vmem:[%s14] sm:$0x1]
        %5531 = vadd.xlane.f32.xlu0 %v5526
        %v5532 = vpop.xlane.xlu0 %5531
        %v5533 = vmul.f32 %v5532, %v1265
        %v5534 = vsub.f32 %v5526, %v5533
        %v5535 = vmul.f32 %v5534, %v5534
        %5536 = vadd.xlane.f32.xlu0 %v5535
        %v5537 = vpop.xlane.xlu0 %5536
        %v5538 = vmul.f32 %v5537, %v1265
        %v5539 = vadd.f32 %v5538, 1e-05
        %v5540 = vrsqrt.pop %v5539
        %v5541 = vmul.f32 %v5540, %v5539
        %v5542 = vmul.f32 %v5541, %v5540
        %v5543 = vmul.f32 0.5, %v5542
        %v5544 = vsub.f32 1.5, %v5543
        %v5545 = vmul.f32 %v5540, %v5544
        %vm5546 = vweird.f32 %v5539
        %vm5547 = vweird.f32 %v5540
        %vm5548 = vmor %vm5546, %vm5547
        %v5549 = vsel %vm5548, %v5540, %v5545
        %v5550 = vmul.f32 %v5534, %v5549
        %v5552 = vperm.slane %v5529, 0
        %v5554 = vmul.f32 %v5550, %v5552
        %v5556 = vperm.slane %v5530, 0
        %v5558 = vadd.f32 %v5554, %v5556
        %v5559 = vmax.f32 %v5558, 0.0
        %v5560 = vpack.c.bf16 %v5559, %v5559
        %v5561 = vld [vmem:[#allocation17] sm:$0xf]
        %v5562 = vld [vmem:[#allocation17 + $0x4] sm:$0xf]
        %v5563 = vld [vmem:[#allocation17 + $0x8] sm:$0xf]
        %v5564 = vld [vmem:[#allocation17 + $0xc] sm:$0xf]
        %v5565 = vld [vmem:[#allocation17 + $0x10] sm:$0xf]
        %v5566 = vld [vmem:[#allocation17 + $0x14] sm:$0xf]
        %v5567 = vld [vmem:[#allocation17 + $0x18] sm:$0xf]
        %v5568 = vld [vmem:[#allocation17 + $0x1c] sm:$0xf]
        %v5569 = vld [vmem:[#allocation17 + $0x20] sm:$0xf]
        %v5570 = vld [vmem:[#allocation17 + $0x24] sm:$0xf]
        %v5571 = vld [vmem:[#allocation17 + $0x28] sm:$0xf]
        %v5572 = vld [vmem:[#allocation17 + $0x2c] sm:$0xf]
        %v5573 = vld [vmem:[#allocation17 + $0x30] sm:$0xf]
        %v5574 = vld [vmem:[#allocation17 + $0x34] sm:$0xf]
        %v5575 = vld [vmem:[#allocation17 + $0x38] sm:$0xf]
        %v5576 = vld [vmem:[#allocation17 + $0x3c] sm:$0xf]
        %v5593 = vunpack.c.l.b16 %v5561
        %v5594 = vunpack.c.l.b16 %v5562
        %v5595 = vunpack.c.l.b16 %v5563
        %v5596 = vunpack.c.l.b16 %v5564
        %v5597 = vunpack.c.l.b16 %v5565
        %v5598 = vunpack.c.l.b16 %v5566
        %v5599 = vunpack.c.l.b16 %v5567
        %v5600 = vunpack.c.l.b16 %v5568
        %v5601 = vunpack.c.l.b16 %v5569
        %v5602 = vunpack.c.l.b16 %v5570
        %v5603 = vunpack.c.l.b16 %v5571
        %v5604 = vunpack.c.l.b16 %v5572
        %v5605 = vunpack.c.l.b16 %v5573
        %v5606 = vunpack.c.l.b16 %v5574
        %v5607 = vunpack.c.l.b16 %v5575
        %v5608 = vunpack.c.l.b16 %v5576
        %v5609 = vpack.c.b16 %v5594, %v5593
        %v5610 = vpack.c.b16 %v5596, %v5595
        %v5611 = vpack.c.b16 %v5598, %v5597
        %v5612 = vpack.c.b16 %v5600, %v5599
        %v5613 = vpack.c.b16 %v5602, %v5601
        %v5614 = vpack.c.b16 %v5604, %v5603
        %v5615 = vpack.c.b16 %v5606, %v5605
        %v5616 = vpack.c.b16 %v5608, %v5607
        %5625 = vmatpush.bf16.msra.mxu0 %v5616
        %5626 = vmatpush.bf16.msra.mxu0 %v5615
        %5627 = vmatpush.bf16.msra.mxu0 %v5614
        %5628 = vmatpush.bf16.msra.mxu0 %v5613
        %5629 = vmatpush.bf16.msra.mxu0 %v5612
        %5630 = vmatpush.bf16.msra.mxu0 %v5611
        %5631 = vmatpush.bf16.msra.mxu0 %v5610
        %5632 = vmatpush.bf16.msra.mxu0 %v5609
        %5633 = vmatmul.bf16.gmra.mxu0 %v5560
        %v5634 = vpop.f32.mrf.mxu0
        %v5635 = vadd.f32 %v1145, %v5634
        %v5636 = vpop.f32.mrf.mxu0
        %5637 = vdwg.mxu0
        %v5638 = vld [vmem:[%s17] sm:$0x1]
        %v5639 = vld [vmem:[%s18] sm:$0x1]
        %5640 = vadd.xlane.f32.xlu0 %v5635
        %v5641 = vpop.xlane.xlu0 %5640
        %v5642 = vmul.f32 %v5641, %v1265
        %v5643 = vsub.f32 %v5635, %v5642
        %v5644 = vmul.f32 %v5643, %v5643
        %5645 = vadd.xlane.f32.xlu0 %v5644
        %v5646 = vpop.xlane.xlu0 %5645
        %v5647 = vmul.f32 %v5646, %v1265
        %v5648 = vadd.f32 %v5647, 1e-05
        %v5649 = vrsqrt.pop %v5648
        %v5650 = vmul.f32 %v5649, %v5648
        %v5651 = vmul.f32 %v5650, %v5649
        %v5652 = vmul.f32 0.5, %v5651
        %v5653 = vsub.f32 1.5, %v5652
        %v5654 = vmul.f32 %v5649, %v5653
        %vm5655 = vweird.f32 %v5648
        %vm5656 = vweird.f32 %v5649
        %vm5657 = vmor %vm5655, %vm5656
        %v5658 = vsel %vm5657, %v5649, %v5654
        %v5659 = vmul.f32 %v5643, %v5658
        %v5661 = vperm.slane %v5638, 0
        %v5663 = vmul.f32 %v5659, %v5661
        %v5665 = vperm.slane %v5639, 0
        %v5667 = vadd.f32 %v5663, %v5665
        %v5668 = vmax.f32 %v5667, 0.0
        %v5669 = vpack.c.bf16 %v5668, %v5668
        %v5670 = vld [vmem:[#allocation20] sm:$0xf]
        %v5671 = vld [vmem:[#allocation20 + $0x4] sm:$0xf]
        %v5672 = vld [vmem:[#allocation20 + $0x8] sm:$0xf]
        %v5673 = vld [vmem:[#allocation20 + $0xc] sm:$0xf]
        %v5674 = vld [vmem:[#allocation20 + $0x10] sm:$0xf]
        %v5675 = vld [vmem:[#allocation20 + $0x14] sm:$0xf]
        %v5676 = vld [vmem:[#allocation20 + $0x18] sm:$0xf]
        %v5677 = vld [vmem:[#allocation20 + $0x1c] sm:$0xf]
        %v5678 = vld [vmem:[#allocation20 + $0x20] sm:$0xf]
        %v5679 = vld [vmem:[#allocation20 + $0x24] sm:$0xf]
        %v5680 = vld [vmem:[#allocation20 + $0x28] sm:$0xf]
        %v5681 = vld [vmem:[#allocation20 + $0x2c] sm:$0xf]
        %v5682 = vld [vmem:[#allocation20 + $0x30] sm:$0xf]
        %v5683 = vld [vmem:[#allocation20 + $0x34] sm:$0xf]
        %v5684 = vld [vmem:[#allocation20 + $0x38] sm:$0xf]
        %v5685 = vld [vmem:[#allocation20 + $0x3c] sm:$0xf]
        %v5702 = vunpack.c.l.b16 %v5670
        %v5703 = vunpack.c.l.b16 %v5671
        %v5704 = vunpack.c.l.b16 %v5672
        %v5705 = vunpack.c.l.b16 %v5673
        %v5706 = vunpack.c.l.b16 %v5674
        %v5707 = vunpack.c.l.b16 %v5675
        %v5708 = vunpack.c.l.b16 %v5676
        %v5709 = vunpack.c.l.b16 %v5677
        %v5710 = vunpack.c.l.b16 %v5678
        %v5711 = vunpack.c.l.b16 %v5679
        %v5712 = vunpack.c.l.b16 %v5680
        %v5713 = vunpack.c.l.b16 %v5681
        %v5714 = vunpack.c.l.b16 %v5682
        %v5715 = vunpack.c.l.b16 %v5683
        %v5716 = vunpack.c.l.b16 %v5684
        %v5717 = vunpack.c.l.b16 %v5685
        %v5718 = vpack.c.b16 %v5703, %v5702
        %v5719 = vpack.c.b16 %v5705, %v5704
        %v5720 = vpack.c.b16 %v5707, %v5706
        %v5721 = vpack.c.b16 %v5709, %v5708
        %v5722 = vpack.c.b16 %v5711, %v5710
        %v5723 = vpack.c.b16 %v5713, %v5712
        %v5724 = vpack.c.b16 %v5715, %v5714
        %v5725 = vpack.c.b16 %v5717, %v5716
        %5734 = vmatpush.bf16.msra.mxu0 %v5725
        %5735 = vmatpush.bf16.msra.mxu0 %v5724
        %5736 = vmatpush.bf16.msra.mxu0 %v5723
        %5737 = vmatpush.bf16.msra.mxu0 %v5722
        %5738 = vmatpush.bf16.msra.mxu0 %v5721
        %5739 = vmatpush.bf16.msra.mxu0 %v5720
        %5740 = vmatpush.bf16.msra.mxu0 %v5719
        %5741 = vmatpush.bf16.msra.mxu0 %v5718
        %5742 = vmatmul.bf16.gmra.mxu0 %v5669
        %v5743 = vpop.f32.mrf.mxu0
        %v5744 = vadd.f32 0.0, %v5743
        %v5745 = vpop.f32.mrf.mxu0
        %5746 = vdwg.mxu0
        %v5747 = vld [vmem:[%s20] sm:$0x1]
        %v5748 = vld [vmem:[%s21] sm:$0x1]
        %5749 = vadd.xlane.f32.xlu0 %v5744
        %v5750 = vpop.xlane.xlu0 %5749
        %v5751 = vmul.f32 %v5750, %v1265
        %v5752 = vsub.f32 %v5744, %v5751
        %v5753 = vmul.f32 %v5752, %v5752
        %5754 = vadd.xlane.f32.xlu0 %v5753
        %v5755 = vpop.xlane.xlu0 %5754
        %v5756 = vmul.f32 %v5755, %v1265
        %v5757 = vadd.f32 %v5756, 1e-05
        %v5758 = vrsqrt.pop %v5757
        %v5759 = vmul.f32 %v5758, %v5757
        %v5760 = vmul.f32 %v5759, %v5758
        %v5761 = vmul.f32 0.5, %v5760
        %v5762 = vsub.f32 1.5, %v5761
        %v5763 = vmul.f32 %v5758, %v5762
        %vm5764 = vweird.f32 %v5757
        %vm5765 = vweird.f32 %v5758
        %vm5766 = vmor %vm5764, %vm5765
        %v5767 = vsel %vm5766, %v5758, %v5763
        %v5768 = vmul.f32 %v5752, %v5767
        %v5770 = vperm.slane %v5747, 0
        %v5772 = vmul.f32 %v5768, %v5770
        %v5774 = vperm.slane %v5748, 0
        %v5776 = vadd.f32 %v5772, %v5774
        %v5777 = vmax.f32 %v5776, 0.0
        %v5778 = vpack.c.bf16 %v5777, %v5777
        %v5779 = vld [vmem:[#allocation21] sm:$0xf]
        %v5780 = vld [vmem:[#allocation21 + $0x4] sm:$0xf]
        %v5781 = vld [vmem:[#allocation21 + $0x8] sm:$0xf]
        %v5782 = vld [vmem:[#allocation21 + $0xc] sm:$0xf]
        %v5783 = vld [vmem:[#allocation21 + $0x10] sm:$0xf]
        %v5784 = vld [vmem:[#allocation21 + $0x14] sm:$0xf]
        %v5785 = vld [vmem:[#allocation21 + $0x18] sm:$0xf]
        %v5786 = vld [vmem:[#allocation21 + $0x1c] sm:$0xf]
        %v5787 = vld [vmem:[#allocation21 + $0x20] sm:$0xf]
        %v5788 = vld [vmem:[#allocation21 + $0x24] sm:$0xf]
        %v5789 = vld [vmem:[#allocation21 + $0x28] sm:$0xf]
        %v5790 = vld [vmem:[#allocation21 + $0x2c] sm:$0xf]
        %v5791 = vld [vmem:[#allocation21 + $0x30] sm:$0xf]
        %v5792 = vld [vmem:[#allocation21 + $0x34] sm:$0xf]
        %v5793 = vld [vmem:[#allocation21 + $0x38] sm:$0xf]
        %v5794 = vld [vmem:[#allocation21 + $0x3c] sm:$0xf]
        %v5811 = vunpack.c.l.b16 %v5779
        %v5812 = vunpack.c.l.b16 %v5780
        %v5813 = vunpack.c.l.b16 %v5781
        %v5814 = vunpack.c.l.b16 %v5782
        %v5815 = vunpack.c.l.b16 %v5783
        %v5816 = vunpack.c.l.b16 %v5784
        %v5817 = vunpack.c.l.b16 %v5785
        %v5818 = vunpack.c.l.b16 %v5786
        %v5819 = vunpack.c.l.b16 %v5787
        %v5820 = vunpack.c.l.b16 %v5788
        %v5821 = vunpack.c.l.b16 %v5789
        %v5822 = vunpack.c.l.b16 %v5790
        %v5823 = vunpack.c.l.b16 %v5791
        %v5824 = vunpack.c.l.b16 %v5792
        %v5825 = vunpack.c.l.b16 %v5793
        %v5826 = vunpack.c.l.b16 %v5794
        %v5827 = vpack.c.b16 %v5812, %v5811
        %v5828 = vpack.c.b16 %v5814, %v5813
        %v5829 = vpack.c.b16 %v5816, %v5815
        %v5830 = vpack.c.b16 %v5818, %v5817
        %v5831 = vpack.c.b16 %v5820, %v5819
        %v5832 = vpack.c.b16 %v5822, %v5821
        %v5833 = vpack.c.b16 %v5824, %v5823
        %v5834 = vpack.c.b16 %v5826, %v5825
        %5843 = vmatpush.bf16.msra.mxu0 %v5834
        %5844 = vmatpush.bf16.msra.mxu0 %v5833
        %5845 = vmatpush.bf16.msra.mxu0 %v5832
        %5846 = vmatpush.bf16.msra.mxu0 %v5831
        %5847 = vmatpush.bf16.msra.mxu0 %v5830
        %5848 = vmatpush.bf16.msra.mxu0 %v5829
        %5849 = vmatpush.bf16.msra.mxu0 %v5828
        %5850 = vmatpush.bf16.msra.mxu0 %v5827
        %5851 = vmatmul.bf16.gmra.mxu0 %v5778
        %v5852 = vpop.f32.mrf.mxu0
        %v5853 = vadd.f32 0.0, %v5852
        %v5854 = vpop.f32.mrf.mxu0
        %5855 = vdwg.mxu0
        %v5856 = vld [vmem:[%s23] sm:$0x1]
        %v5857 = vld [vmem:[%s24] sm:$0x1]
        %5858 = vadd.xlane.f32.xlu0 %v5853
        %v5859 = vpop.xlane.xlu0 %5858
        %v5860 = vmul.f32 %v5859, %v1265
        %v5861 = vsub.f32 %v5853, %v5860
        %v5862 = vmul.f32 %v5861, %v5861
        %5863 = vadd.xlane.f32.xlu0 %v5862
        %v5864 = vpop.xlane.xlu0 %5863
        %v5865 = vmul.f32 %v5864, %v1265
        %v5866 = vadd.f32 %v5865, 1e-05
        %v5867 = vrsqrt.pop %v5866
        %v5868 = vmul.f32 %v5867, %v5866
        %v5869 = vmul.f32 %v5868, %v5867
        %v5870 = vmul.f32 0.5, %v5869
        %v5871 = vsub.f32 1.5, %v5870
        %v5872 = vmul.f32 %v5867, %v5871
        %vm5873 = vweird.f32 %v5866
        %vm5874 = vweird.f32 %v5867
        %vm5875 = vmor %vm5873, %vm5874
        %v5876 = vsel %vm5875, %v5867, %v5872
        %v5877 = vmul.f32 %v5861, %v5876
        %v5879 = vperm.slane %v5856, 0
        %v5881 = vmul.f32 %v5877, %v5879
        %v5883 = vperm.slane %v5857, 0
        %v5885 = vadd.f32 %v5881, %v5883
        %v5886 = vadd.f32 %v5885, %v5668
        %v5887 = vmax.f32 %v5886, 0.0
        %v5888 = vld [vmem:[%s25] sm:$0x1]
        %v5890 = vperm.slane %v5888, 0
        %v5892 = vmul.f32 %v5887, %v5890
        %5893 = vadd.xlane.f32.xlu0 %v5892
        %v5894 = vpop.xlane.xlu0 %5893
        %v5895 = vld [vmem:[#allocation2] sm:$0x1]
        %v5897 = vperm.slane %v5895, 0
        %v5899 = vadd.f32 %v5894, %v5897
        %vm5900 = vcmp.eq.s32.totalorder %v1149, 5
        %v5901 = vsel %vm5900, 1, 0
        %vm5902 = vcmp.eq.s32.totalorder %v5901, 1
        %5904 = vset.pattern.permute.xlu0 0
        %5905 = vperm.xlu0 %5904, %v5899
        %v5906 = vpop.permute.xlu0 %5905
        %v5908 = vsel %vm5902, %v5906, 0.0
        %v5909 = vadd.f32 %v5121, %v5908
        %5910 = vst [vmem:[%s1059] sm:$0xff] %v5909
        %s5911 = sand.u32 %s640, 1
        %s5912 = scalar_lea.sflag [#allocation5], %s5911
        %s5913 = sand.u32 %s640, 1
        %s5914 = smul.addr %s5913, 48
        %s5915 = scalar_lea.vmem [#allocation23], %s5914
        %s5916 = sand.u32 %s666, 1
        %s5917 = scalar_lea.sflag [#allocation25], %s5916
        %s5918 = sand.u32 %s666, 1
        %s5919 = smul.addr %s5918, 8
        %s5920 = scalar_lea.vmem [#allocation24], %s5919
        // Predicated region
        $region177: #{tpu_custom_call.1} parent=127 // pred_check
          %p5921 = pneg %p650
        $region178: #{tpu_custom_call.1} parent=127 // pred_check_branch
          %5923 = sbr.rel (%p5921) target = $region180
        $region179: #{tpu_custom_call.1} parent=127 // pred_region
          %5925 = vsyncadd %s5912, 0
          %s5926 = smul.addr %s55, 6
          %s5927 = smul.addr %s5926, 8
          %s5928 = scalar_lea.hbm %s27, %s5927
          %s5930 = sshll.u32 %s5915, 4
          %s5931 = int_to_ptr.vmem [resolvable:$true] %s5930
          %s5932 = sshll.u32 %s5928, 4
          %s5933 = int_to_ptr.hbm [resolvable:$true] %s5932
          %5935 = dma.vmem_to_hbm [thread:$0]  %s5931, 768, %s5933, %s5912
        $region180: #{tpu_custom_call.1} parent=127 // pred_fallthru
          _
        // Predicated region
        $region181: #{tpu_custom_call.1} parent=127 // pred_check
          %p5936 = pneg %p676
        $region182: #{tpu_custom_call.1} parent=127 // pred_check_branch
          %5938 = sbr.rel (%p5936) target = $region184
        $region183: #{tpu_custom_call.1} parent=127 // pred_region
          %5940 = vsyncadd %s5917, 0
          %s5941 = smul.addr %s55, 8
          %s5942 = scalar_lea.hbm %s28, %s5941
          %s5944 = sshll.u32 %s5920, 4
          %s5945 = int_to_ptr.vmem [resolvable:$true] %s5944
          %s5946 = sshll.u32 %s5942, 4
          %s5947 = int_to_ptr.hbm [resolvable:$true] %s5946
          %5949 = dma.vmem_to_hbm [thread:$0]  %s5945, 128, %s5947, %s5917
        $region184: #{tpu_custom_call.1} parent=127 // pred_fallthru
          _
      $region128: #{tpu_custom_call.1} parent=5 // pred_fallthru
        _
      %p5950 = scmp.le.s32.totalorder 2, %s50
      // Predicated region
      $region185: #{tpu_custom_call.1} parent=5 // pred_check
        %p5951 = pneg %p5950
      $region186: #{tpu_custom_call.1} parent=5 // pred_check_branch
        %5953 = sbr.rel (%p5951) target = $region188
      $region187: #{tpu_custom_call.1} parent=5 // pred_region
        %s5954 = ssub.s32 %s50, 2
        // Predicated region
        $region189: #{tpu_custom_call.1} parent=187 // pred_check
          %p5955 = pneg %p656
        $region190: #{tpu_custom_call.1} parent=187 // pred_check_branch
          %5957 = sbr.rel (%p5955) target = $region192
        $region191: #{tpu_custom_call.1} parent=187 // pred_region
          %s5958 = sand.u32 %s641, 1
          %s5959 = scalar_lea.sflag [#allocation5], %s5958
          %s5960 = sand.u32 %s641, 1
          %s5961 = smul.addr %s5960, 48
          %s5962 = scalar_lea.vmem [#allocation23], %s5961
          %5964 = dma.done %s5959, 768
        $region192: #{tpu_custom_call.1} parent=187 // pred_fallthru
          _
        // Predicated region
        $region193: #{tpu_custom_call.1} parent=187 // pred_check
          %p5965 = pneg %p682
        $region194: #{tpu_custom_call.1} parent=187 // pred_check_branch
          %5967 = sbr.rel (%p5965) target = $region196
        $region195: #{tpu_custom_call.1} parent=187 // pred_region
          %s5968 = sand.u32 %s667, 1
          %s5969 = scalar_lea.sflag [#allocation25], %s5968
          %s5970 = sand.u32 %s667, 1
          %s5971 = smul.addr %s5970, 8
          %s5972 = scalar_lea.vmem [#allocation24], %s5971
          %5974 = dma.done %s5969, 128
        $region196: #{tpu_custom_call.1} parent=187 // pred_fallthru
          _
      $region188: #{tpu_custom_call.1} parent=5 // pred_fallthru
        _
    $region6: #{tpu_custom_call.1} parent=1 // loop_footer
      %s54 = sadd.s32 1, %s50
    $region7: #{tpu_custom_call.1} parent=1 // loop_footer_branch
      %49 = sbr.rel target = $region3
    $region8: #{tpu_custom_call.1} parent=1 // loop_exit
      _
    %5975 = vsyncpa [#allocation4], 1
    %s5976 = scalar_lea.sflag [#allocation4], 1
    %5977 = vsyncpa %s5976, 1
    %5978 = vsyncpa [#allocation7], 1
    %5979 = vsyncpa [#allocation10], 1
    %5980 = vsyncpa [#allocation13], 1
    %5981 = vsyncpa [#allocation16], 1
    %5982 = vsyncpa [#allocation19], 1
    %5983 = vsyncpa [#allocation22], 1
    %5984 = vsyncpa [#allocation5], 1
    %s5985 = scalar_lea.sflag [#allocation5], 1
    %5986 = vsyncpa %s5985, 1
    %5987 = vsyncpa [#allocation25], 1
    %s5988 = scalar_lea.sflag [#allocation25], 1
    %5989 = vsyncpa %s5988, 1

</llo_original>
